<compile_context>
chip_gen: v7x
topology: tpu7x:2x2x1
jax: 0.10.0
libtpu: 0.0.40
codegen_flags: <defaults>
</compile_context>

<pallas_src>
import jax
import jax.numpy as jnp
from jax import lax
from jax.experimental import pallas as pl
from jax.experimental.pallas import tpu as pltpu


def _make_layer_kernel(H, W, cin, hid, KH, KW, pad_lo, L):
    """Build the fused per-layer kernel (all shape params are Python ints)."""
    HW = H * W
    Cc = cin + hid
    C4 = 4 * hid
    PH, PW = KH // 2, KW // 2

    def kernel(x_ref, w_ref, b_ref, g_ref, be_ref,      # inputs
               h_seq_ref, c_last_ref,                   # outputs
               pad_ref, h_st, c_st):                    # scratch
        t = pl.program_id(1)

        @pl.when(t == 0)
        def _init():
            pad_ref[...] = jnp.zeros_like(pad_ref)      # zero halo regions once per b
            h_st[...] = jnp.zeros_like(h_st)
            c_st[...] = jnp.zeros_like(c_st)

        x = x_ref[0, 0]                                 # (cin, HW) f32

        # combined = concat([x_t, h_cur], channels), cast to bf16 (MXU operand)
        # and stored into the zero-padded flattened buffer (lane-aligned store).
        pad_ref[0:cin, pad_lo:pad_lo + HW] = x.astype(pad_ref.dtype)
        pad_ref[cin:Cc, pad_lo:pad_lo + HW] = h_st[...].astype(pad_ref.dtype)

        # Output-column index (along lanes) for masking horizontal wrap-around.
        pos = lax.broadcasted_iota(jnp.int32, (1, HW), 1) % W

        # Convolution as KH*KW accumulating matmuls: (C4,Cc)x(Cc,HW) -> f32.
        acc = jnp.zeros((C4, HW), jnp.float32)
        for dy in range(KH):
            for dx in range(KW):
                start = pad_lo + (dy - PH) * W + (dx - PW)   # static offset
                sl = pad_ref[:, start:start + HW]            # (Cc, HW) bf16
                ox = dx - PW
                if ox != 0:
                    ok = jnp.logical_and(pos + ox >= 0, pos + ox <= W - 1)
                    sl = jnp.where(ok, sl, jnp.zeros_like(sl))
                acc = acc + jnp.dot(w_ref[dy * KW + dx], sl,
                                    preferred_element_type=jnp.float32)
        acc = acc + b_ref[...]                               # (C4,1) bias broadcast

        # One-pass LayerNorm over the full (4*hid, H, W) block (PyTorch semantics).
        n = float(C4 * HW)
        s = jnp.sum(acc, keepdims=True)                      # (1, 1)
        ss = jnp.sum(acc * acc, keepdims=True)               # (1, 1)
        mean = s / n
        var = ss / n - mean * mean
        norm = (acc - mean) * lax.rsqrt(var + 1e-5)
        norm = norm * g_ref[...].astype(jnp.float32) + be_ref[...].astype(jnp.float32)

        # Gates, channel order (i, f, o, g) along the sublane axis (lane-dense).
        i_g = jax.nn.sigmoid(norm[0:hid])
        f_g = jax.nn.sigmoid(norm[hid:2 * hid])
        o_g = jax.nn.sigmoid(norm[2 * hid:3 * hid])
        g_g = jnp.tanh(norm[3 * hid:4 * hid])

        c_next = f_g * c_st[...] + i_g * g_g
        h_new = o_g * jnp.tanh(c_next) + x                   # residual h = h + x_t

        h_st[...] = h_new
        c_st[...] = c_next
        h_seq_ref[0, 0] = h_new.astype(h_seq_ref.dtype)
        c_last_ref[0] = c_next.astype(c_last_ref.dtype)

    return kernel


def convlstm_layer(x_seq, w_oihw, b, gamma, beta):
    """One ConvLSTM layer over the whole sequence with a single pallas_call.

    x_seq : (B, T, cin, H, W) float32 (channels-first).
    w_oihw: (4*hid, cin+hid, KH, KW) PyTorch Conv2d weight; b: (4*hid,)
    gamma/beta: (4*hid, H, W) LayerNorm affine params.
    Returns (h_seq (B,T,hid,H,W), c_last (B,hid,H,W)).
    """
    B, T, cin, H, W = x_seq.shape
    C4, Cc, KH, KW = w_oihw.shape
    hid = C4 // 4
    assert Cc == cin + hid
    assert cin == hid, "residual h = h + x_t requires input_dim == hidden_dim"
    HW = H * W
    PH, PW = KH // 2, KW // 2

    # Flattened spatial buffer: [pad_lo zeros | H*W data | tail zeros]; data start
    # lane-aligned so per-step x/h stores are unmasked; halo covers all 9 taps.
    halo = PH * W + PW
    pad_lo = ((halo + 127) // 128) * 128
    L = ((pad_lo + HW + halo + 127) // 128) * 128

    x_flat = x_seq.reshape(B, T, cin, HW)
    w9 = jnp.transpose(w_oihw, (2, 3, 0, 1)).reshape(KH * KW, C4, Cc).astype(jnp.bfloat16)
    b2 = b.reshape(C4, 1).astype(jnp.float32)
    g2 = gamma.reshape(C4, HW).astype(jnp.bfloat16)
    be2 = beta.reshape(C4, HW).astype(jnp.bfloat16)

    kernel = _make_layer_kernel(H, W, cin, hid, KH, KW, pad_lo, L)

    h_seq, c_last = pl.pallas_call(
        kernel,
        out_shape=(jax.ShapeDtypeStruct((B, T, hid, HW), jnp.float32),
                   jax.ShapeDtypeStruct((B, hid, HW), jnp.float32)),
        grid_spec=pltpu.PrefetchScalarGridSpec(
            num_scalar_prefetch=0,
            grid=(B, T),
            in_specs=[
                pl.BlockSpec((1, 1, cin, HW), lambda bb, tt: (bb, tt, 0, 0)),
                pl.BlockSpec((KH * KW, C4, Cc), lambda bb, tt: (0, 0, 0)),
                pl.BlockSpec((C4, 1), lambda bb, tt: (0, 0)),
                pl.BlockSpec((C4, HW), lambda bb, tt: (0, 0)),
                pl.BlockSpec((C4, HW), lambda bb, tt: (0, 0)),
            ],
            out_specs=[
                pl.BlockSpec((1, 1, hid, HW), lambda bb, tt: (bb, tt, 0, 0)),
                pl.BlockSpec((1, hid, HW), lambda bb, tt: (bb, 0, 0)),
            ],
            scratch_shapes=[
                pltpu.VMEM((Cc, L), jnp.bfloat16),     # zero-padded combined (x_t | h)
                pltpu.VMEM((hid, HW), jnp.float32),    # h state (resident across T)
                pltpu.VMEM((hid, HW), jnp.float32),    # c state (resident across T)
            ],
        ),
        compiler_params=pltpu.CompilerParams(
            dimension_semantics=("parallel", "arbitrary"),
            vmem_limit_bytes=32 * 1024 * 1024),
    )(x_flat, w9, b2, g2, be2)

    return h_seq.reshape(B, T, hid, H, W), c_last.reshape(B, hid, H, W)


@jax.jit
def convlstm_forward(x_seq_tbchw, params):
    """ConvLSTM.forward (batch_first=False, return_all_layers=False)."""
    cur = jnp.transpose(x_seq_tbchw, (1, 0, 2, 3, 4))    # (B, T, C, H, W)
    last_h = last_c = None
    for (w_oihw, b, gamma, beta) in params:
        cur, last_c = convlstm_layer(cur, w_oihw, b, gamma, beta)
        last_h = cur[:, -1]
    # Output layout matches PyTorch: (B, T, C, H, W); last state (B, C, H, W).
    return cur, (last_h, last_c)


def convlstm_forward_ref(x_seq_tbchw, params):
    """Pure-JAX float32 reference mirroring the PyTorch forward (NCHW)."""
    x = jnp.transpose(x_seq_tbchw, (1, 0, 2, 3, 4))
    B, T, C, H, W = x.shape
    cur = x
    h = c = None
    for (w_oihw, b, gamma, beta) in params:
        hid = w_oihw.shape[0] // 4
        KH, KW = w_oihw.shape[2], w_oihw.shape[3]
        h = jnp.zeros((B, hid, H, W), jnp.float32)
        c = jnp.zeros((B, hid, H, W), jnp.float32)
        outs = []
        for t in range(T):
            x_t = cur[:, t]
            combined = jnp.concatenate([x_t, h], axis=1)
            conv = lax.conv_general_dilated(
                combined, w_oihw, window_strides=(1, 1),
                padding=((KH // 2, KH // 2), (KW // 2, KW // 2)),
                dimension_numbers=("NCHW", "OIHW", "NCHW"))
            conv = conv + b[None, :, None, None]
            mean = jnp.mean(conv, axis=(1, 2, 3), keepdims=True)
            var = jnp.mean((conv - mean) ** 2, axis=(1, 2, 3), keepdims=True)
            norm = (conv - mean) / jnp.sqrt(var + 1e-5)
            norm = norm * gamma[None] + beta[None]
            i_g = jax.nn.sigmoid(norm[:, 0:hid])
            f_g = jax.nn.sigmoid(norm[:, hid:2 * hid])
            o_g = jax.nn.sigmoid(norm[:, 2 * hid:3 * hid])
            g_g = jnp.tanh(norm[:, 3 * hid:4 * hid])
            c = f_g * c + i_g * g_g
            h = o_g * jnp.tanh(c) + x_t
            outs.append(h)
        cur = jnp.stack(outs, axis=1)
    return cur, (h, c)


if __name__ == "__main__":
    key = jax.random.PRNGKey(0)
    # size=4 -> LayerNorm normalized_shape = [4*hidden, 64/size, 64/size] = [128, 16, 16]
    B, T, H, W = 2, 4, 16, 16
    input_dim = 32
    hidden_dim = 32     # residual (h = h + x_t) requires input_dim == hidden_dim
    num_layers = 2
    KH = KW = 3

    k_x, k_p = jax.random.split(key)
    # PyTorch layout with batch_first=False: (T, B, C, H, W)
    x_seq = jax.random.normal(k_x, (T, B, input_dim, H, W), dtype=jnp.float32)

    params = []
    for layer in range(num_layers):
        cin_l = input_dim if layer == 0 else hidden_dim
        cc = cin_l + hidden_dim
        kw_, kb_ = jax.random.split(jax.random.fold_in(k_p, layer))
        fan_in = cc * KH * KW
        bound = 1.0 / (fan_in ** 0.5)
        w = jax.random.uniform(kw_, (4 * hidden_dim, cc, KH, KW), jnp.float32, -bound, bound)
        b = jax.random.uniform(kb_, (4 * hidden_dim,), jnp.float32, -bound, bound)
        gamma = jnp.ones((4 * hidden_dim, H, W), jnp.float32)   # LayerNorm default affine
        beta = jnp.zeros((4 * hidden_dim, H, W), jnp.float32)
        params.append((w, b, gamma, beta))
    # TODO(synk): dropout_prob is stored by the PyTorch module but never used in forward; omitted.

    out, (h_last, c_last) = convlstm_forward(x_seq, params)
    jax.block_until_ready((out, h_last, c_last))

    ref_out, (h_ref, c_ref) = convlstm_forward_ref(x_seq, params)
    # Tolerance relaxed vs the f32-matmul version because the MXU operands
    # (combined activations + conv weights) are now bf16 (f32 accumulation),
    # and the error compounds over T*num_layers recurrent cell steps.
    assert jnp.allclose(out, ref_out, atol=3e-2, rtol=3e-2), float(jnp.max(jnp.abs(out - ref_out)))
    assert jnp.allclose(h_last, h_ref, atol=3e-2, rtol=3e-2)
    assert jnp.allclose(c_last, c_ref, atol=3e-2, rtol=3e-2)

    print("KERNEL_OK")
</pallas_src>

<mosaic_0001>
module attributes {stable_mosaic.version = 11 : i64} {
  func.func @kernel(%arg0: i32, %arg1: i32, %arg2: memref<1x1x32x256xf32, #tpu.memory_space<vmem>>, %arg3: memref<9x128x64xbf16, #tpu.memory_space<vmem>>, %arg4: memref<128x1xf32, #tpu.memory_space<vmem>>, %arg5: memref<128x256xbf16, #tpu.memory_space<vmem>>, %arg6: memref<128x256xbf16, #tpu.memory_space<vmem>>, %arg7: memref<1x1x32x256xf32, #tpu.memory_space<vmem>>, %arg8: memref<1x32x256xf32, #tpu.memory_space<vmem>>, %arg9: memref<64x512xbf16, #tpu.memory_space<vmem>>, %arg10: memref<32x256xf32, #tpu.memory_space<vmem>>, %arg11: memref<32x256xf32, #tpu.memory_space<vmem>>) attributes {dimension_semantics = [#tpu.dimension_semantics<parallel>, #tpu.dimension_semantics<arbitrary>], iteration_bounds = array<i64: 2, 4>, scalar_prefetch = 0 : i64, scratch_operands = 3 : i64, tpu.core_type = #tpu.core_type<tc>, window_params = [{transform_indices = @transform_0, window_bounds = array<i64: 1, 1, 32, 256>}, {pipeline_mode = #tpu.pipeline_mode<synchronous>, transform_indices = @transform_1, window_bounds = array<i64: 9, 128, 64>}, {pipeline_mode = #tpu.pipeline_mode<synchronous>, transform_indices = @transform_2, window_bounds = array<i64: 128, 1>}, {pipeline_mode = #tpu.pipeline_mode<synchronous>, transform_indices = @transform_3, window_bounds = array<i64: 128, 256>}, {pipeline_mode = #tpu.pipeline_mode<synchronous>, transform_indices = @transform_4, window_bounds = array<i64: 128, 256>}, {transform_indices = @transform_5, window_bounds = array<i64: 1, 1, 32, 256>}, {transform_indices = @transform_6, window_bounds = array<i64: 1, 32, 256>}]} {
    %c0_i32 = arith.constant 0 : i32
    %0 = arith.cmpi eq, %arg1, %c0_i32 : i32
    %1 = arith.extui %0 : i1 to i32
    %c0_i32_0 = arith.constant 0 : i32
    %2 = arith.cmpi ne, %1, %c0_i32_0 : i32
    scf.if %2 {
      %cst_105 = arith.constant 0.000000e+00 : bf16
      %219 = vector.broadcast %cst_105 : bf16 to vector<64x512xbf16>
      %c0_106 = arith.constant 0 : index
      %c0_107 = arith.constant 0 : index
      %220 = vector.load %arg9[%c0_106, %c0_107] : memref<64x512xbf16, #tpu.memory_space<vmem>>, vector<64x512xbf16>
      tpu.vector_store %arg9[%c0_106, %c0_107], %219 {strides = array<i32>} : memref<64x512xbf16, #tpu.memory_space<vmem>>, vector<64x512xbf16>,
      %cst_108 = arith.constant 0.000000e+00 : f32
      %221 = vector.broadcast %cst_108 : f32 to vector<32x256xf32>
      %c0_109 = arith.constant 0 : index
      %c0_110 = arith.constant 0 : index
      %222 = vector.load %arg10[%c0_109, %c0_110] : memref<32x256xf32, #tpu.memory_space<vmem>>, vector<32x256xf32>
      tpu.vector_store %arg10[%c0_109, %c0_110], %221 {strides = array<i32>} : memref<32x256xf32, #tpu.memory_space<vmem>>, vector<32x256xf32>,
      %cst_111 = arith.constant 0.000000e+00 : f32
      %223 = vector.broadcast %cst_111 : f32 to vector<32x256xf32>
      %c0_112 = arith.constant 0 : index
      %c0_113 = arith.constant 0 : index
      %224 = vector.load %arg11[%c0_112, %c0_113] : memref<32x256xf32, #tpu.memory_space<vmem>>, vector<32x256xf32>
      tpu.vector_store %arg11[%c0_112, %c0_113], %223 {strides = array<i32>} : memref<32x256xf32, #tpu.memory_space<vmem>>, vector<32x256xf32>,
    } else {
    }
    %c0 = arith.constant 0 : index
    %c0_1 = arith.constant 0 : index
    %c0_2 = arith.constant 0 : index
    %c0_3 = arith.constant 0 : index
    %3 = vector.load %arg2[%c0, %c0_1, %c0_2, %c0_3] : memref<1x1x32x256xf32, #tpu.memory_space<vmem>>, vector<1x1x32x256xf32>
    %4 = vector.shape_cast %3 : vector<1x1x32x256xf32> to vector<32x256xf32>
    %5 = arith.truncf %4 : vector<32x256xf32> to vector<32x256xbf16>
    %c0_4 = arith.constant 0 : index
    %c128 = arith.constant 128 : index
    %6 = vector.load %arg9[%c0_4, %c128] : memref<64x512xbf16, #tpu.memory_space<vmem>>, vector<32x256xbf16>
    tpu.vector_store %arg9[%c0_4, %c128], %5 {strides = array<i32>} : memref<64x512xbf16, #tpu.memory_space<vmem>>, vector<32x256xbf16>,
    %c0_5 = arith.constant 0 : index
    %c0_6 = arith.constant 0 : index
    %7 = vector.load %arg10[%c0_5, %c0_6] : memref<32x256xf32, #tpu.memory_space<vmem>>, vector<32x256xf32>
    %8 = arith.truncf %7 : vector<32x256xf32> to vector<32x256xbf16>
    %c32 = arith.constant 32 : index
    %c128_7 = arith.constant 128 : index
    %9 = vector.load %arg9[%c32, %c128_7] : memref<64x512xbf16, #tpu.memory_space<vmem>>, vector<32x256xbf16>
    tpu.vector_store %arg9[%c32, %c128_7], %8 {strides = array<i32>} : memref<64x512xbf16, #tpu.memory_space<vmem>>, vector<32x256xbf16>,
    %10 = tpu.iota {dimensions = array<i32: 1>} : vector<1x256xi32>
    %c16_i32 = arith.constant 16 : i32
    %c0_i32_8 = arith.constant 0 : i32
    %11 = arith.cmpi eq, %c16_i32, %c0_i32_8 : i32
    %c1_i32 = arith.constant 1 : i32
    %12 = arith.select %11, %c1_i32, %c16_i32 : i32
    %13 = vector.broadcast %12 : i32 to vector<1x256xi32>
    %14 = arith.remsi %10, %13 : vector<1x256xi32>
    %c0_i32_9 = arith.constant 0 : i32
    %15 = vector.broadcast %c0_i32_9 : i32 to vector<1x256xi32>
    %16 = arith.cmpi ne, %14, %15 : vector<1x256xi32>
    %c0_i32_10 = arith.constant 0 : i32
    %17 = vector.broadcast %c0_i32_10 : i32 to vector<1x256xi32>
    %18 = arith.cmpi slt, %14, %17 : vector<1x256xi32>
    %c0_i32_11 = arith.constant 0 : i32
    %19 = arith.cmpi slt, %12, %c0_i32_11 : i32
    %20 = vector.broadcast %19 : i1 to vector<1x256xi1>
    %21 = vector.broadcast %20 : vector<1x256xi1> to vector<1x256xi1>
    %22 = arith.xori %18, %21 : vector<1x256xi1>
    %23 = arith.andi %22, %16 : vector<1x256xi1>
    %24 = vector.broadcast %12 : i32 to vector<1x256xi32>
    %25 = arith.addi %14, %24 : vector<1x256xi32>
    %26 = arith.select %23, %25, %14 : vector<1x256xi1>, vector<1x256xi32>
    %cst = arith.constant 0.000000e+00 : f32
    %27 = vector.broadcast %cst : f32 to vector<128x256xf32>
    %c0_12 = arith.constant 0 : index
    %c111 = arith.constant 111 : index
    %28 = vector.load %arg9[%c0_12, %c111] : memref<64x512xbf16, #tpu.memory_space<vmem>>, vector<64x256xbf16>
    %c-1_i32 = arith.constant -1 : i32
    %29 = vector.broadcast %c-1_i32 : i32 to vector<1x256xi32>
    %30 = arith.addi %26, %29 : vector<1x256xi32>
    %c0_i32_13 = arith.constant 0 : i32
    %31 = vector.broadcast %c0_i32_13 : i32 to vector<1x256xi32>
    %32 = arith.cmpi sge, %30, %31 : vector<1x256xi32>
    %c-1_i32_14 = arith.constant -1 : i32
    %33 = vector.broadcast %c-1_i32_14 : i32 to vector<1x256xi32>
    %34 = arith.addi %26, %33 : vector<1x256xi32>
    %c15_i32 = arith.constant 15 : i32
    %35 = vector.broadcast %c15_i32 : i32 to vector<1x256xi32>
    %36 = arith.cmpi sle, %34, %35 : vector<1x256xi32>
    %37 = arith.andi %32, %36 : vector<1x256xi1>
    %cst_15 = arith.constant 0.000000e+00 : bf16
    %38 = vector.broadcast %cst_15 : bf16 to vector<64x256xbf16>
    %39 = vector.shape_cast %37 : vector<1x256xi1> to vector<1x256xi1>
    %40 = vector.broadcast %39 : vector<1x256xi1> to vector<64x256xi1>
    %41 = arith.select %40, %28, %38 : vector<64x256xi1>, vector<64x256xbf16>
    %c0_16 = arith.constant 0 : index
    %c0_17 = arith.constant 0 : index
    %c0_18 = arith.constant 0 : index
    %42 = vector.load %arg3[%c0_16, %c0_17, %c0_18] : memref<9x128x64xbf16, #tpu.memory_space<vmem>>, vector<1x128x64xbf16>
    %43 = vector.shape_cast %42 : vector<1x128x64xbf16> to vector<128x64xbf16>
    %cst_19 = arith.constant dense<0.000000e+00> : vector<128x256xf32>
    %44 = tpu.matmul %43, %41, %cst_19 {dimension_numbers = #tpu.dot_dimension_numbers<[1], [0], [0], [1], [0, 0, 1, 1], [], []>} : vector<128x64xbf16>, vector<64x256xbf16>, vector<128x256xf32> -> vector<128x256xf32>
    %45 = arith.addf %27, %44 : vector<128x256xf32>
    %c0_20 = arith.constant 0 : index
    %c112 = arith.constant 112 : index
    %46 = vector.load %arg9[%c0_20, %c112] : memref<64x512xbf16, #tpu.memory_space<vmem>>, vector<64x256xbf16>
    %c1 = arith.constant 1 : index
    %c0_21 = arith.constant 0 : index
    %c0_22 = arith.constant 0 : index
    %47 = vector.load %arg3[%c1, %c0_21, %c0_22] : memref<9x128x64xbf16, #tpu.memory_space<vmem>>, vector<1x128x64xbf16>
    %48 = vector.shape_cast %47 : vector<1x128x64xbf16> to vector<128x64xbf16>
    %cst_23 = arith.constant dense<0.000000e+00> : vector<128x256xf32>
    %49 = tpu.matmul %48, %46, %cst_23 {dimension_numbers = #tpu.dot_dimension_numbers<[1], [0], [0], [1], [0, 0, 1, 1], [], []>} : vector<128x64xbf16>, vector<64x256xbf16>, vector<128x256xf32> -> vector<128x256xf32>
    %50 = arith.addf %45, %49 : vector<128x256xf32>
    %c0_24 = arith.constant 0 : index
    %c113 = arith.constant 113 : index
    %51 = vector.load %arg9[%c0_24, %c113] : memref<64x512xbf16, #tpu.memory_space<vmem>>, vector<64x256xbf16>
    %c1_i32_25 = arith.constant 1 : i32
    %52 = vector.broadcast %c1_i32_25 : i32 to vector<1x256xi32>
    %53 = arith.addi %26, %52 : vector<1x256xi32>
    %c0_i32_26 = arith.constant 0 : i32
    %54 = vector.broadcast %c0_i32_26 : i32 to vector<1x256xi32>
    %55 = arith.cmpi sge, %53, %54 : vector<1x256xi32>
    %c1_i32_27 = arith.constant 1 : i32
    %56 = vector.broadcast %c1_i32_27 : i32 to vector<1x256xi32>
    %57 = arith.addi %26, %56 : vector<1x256xi32>
    %c15_i32_28 = arith.constant 15 : i32
    %58 = vector.broadcast %c15_i32_28 : i32 to vector<1x256xi32>
    %59 = arith.cmpi sle, %57, %58 : vector<1x256xi32>
    %60 = arith.andi %55, %59 : vector<1x256xi1>
    %cst_29 = arith.constant 0.000000e+00 : bf16
    %61 = vector.broadcast %cst_29 : bf16 to vector<64x256xbf16>
    %62 = vector.shape_cast %60 : vector<1x256xi1> to vector<1x256xi1>
    %63 = vector.broadcast %62 : vector<1x256xi1> to vector<64x256xi1>
    %64 = arith.select %63, %51, %61 : vector<64x256xi1>, vector<64x256xbf16>
    %c2 = arith.constant 2 : index
    %c0_30 = arith.constant 0 : index
    %c0_31 = arith.constant 0 : index
    %65 = vector.load %arg3[%c2, %c0_30, %c0_31] : memref<9x128x64xbf16, #tpu.memory_space<vmem>>, vector<1x128x64xbf16>
    %66 = vector.shape_cast %65 : vector<1x128x64xbf16> to vector<128x64xbf16>
    %cst_32 = arith.constant dense<0.000000e+00> : vector<128x256xf32>
    %67 = tpu.matmul %66, %64, %cst_32 {dimension_numbers = #tpu.dot_dimension_numbers<[1], [0], [0], [1], [0, 0, 1, 1], [], []>} : vector<128x64xbf16>, vector<64x256xbf16>, vector<128x256xf32> -> vector<128x256xf32>
    %68 = arith.addf %50, %67 : vector<128x256xf32>
    %c0_33 = arith.constant 0 : index
    %c127 = arith.constant 127 : index
    %69 = vector.load %arg9[%c0_33, %c127] : memref<64x512xbf16, #tpu.memory_space<vmem>>, vector<64x256xbf16>
    %c-1_i32_34 = arith.constant -1 : i32
    %70 = vector.broadcast %c-1_i32_34 : i32 to vector<1x256xi32>
    %71 = arith.addi %26, %70 : vector<1x256xi32>
    %c0_i32_35 = arith.constant 0 : i32
    %72 = vector.broadcast %c0_i32_35 : i32 to vector<1x256xi32>
    %73 = arith.cmpi sge, %71, %72 : vector<1x256xi32>
    %c-1_i32_36 = arith.constant -1 : i32
    %74 = vector.broadcast %c-1_i32_36 : i32 to vector<1x256xi32>
    %75 = arith.addi %26, %74 : vector<1x256xi32>
    %c15_i32_37 = arith.constant 15 : i32
    %76 = vector.broadcast %c15_i32_37 : i32 to vector<1x256xi32>
    %77 = arith.cmpi sle, %75, %76 : vector<1x256xi32>
    %78 = arith.andi %73, %77 : vector<1x256xi1>
    %cst_38 = arith.constant 0.000000e+00 : bf16
    %79 = vector.broadcast %cst_38 : bf16 to vector<64x256xbf16>
    %80 = vector.shape_cast %78 : vector<1x256xi1> to vector<1x256xi1>
    %81 = vector.broadcast %80 : vector<1x256xi1> to vector<64x256xi1>
    %82 = arith.select %81, %69, %79 : vector<64x256xi1>, vector<64x256xbf16>
    %c3 = arith.constant 3 : index
    %c0_39 = arith.constant 0 : index
    %c0_40 = arith.constant 0 : index
    %83 = vector.load %arg3[%c3, %c0_39, %c0_40] : memref<9x128x64xbf16, #tpu.memory_space<vmem>>, vector<1x128x64xbf16>
    %84 = vector.shape_cast %83 : vector<1x128x64xbf16> to vector<128x64xbf16>
    %cst_41 = arith.constant dense<0.000000e+00> : vector<128x256xf32>
    %85 = tpu.matmul %84, %82, %cst_41 {dimension_numbers = #tpu.dot_dimension_numbers<[1], [0], [0], [1], [0, 0, 1, 1], [], []>} : vector<128x64xbf16>, vector<64x256xbf16>, vector<128x256xf32> -> vector<128x256xf32>
    %86 = arith.addf %68, %85 : vector<128x256xf32>
    %c0_42 = arith.constant 0 : index
    %c128_43 = arith.constant 128 : index
    %87 = vector.load %arg9[%c0_42, %c128_43] : memref<64x512xbf16, #tpu.memory_space<vmem>>, vector<64x256xbf16>
    %c4 = arith.constant 4 : index
    %c0_44 = arith.constant 0 : index
    %c0_45 = arith.constant 0 : index
    %88 = vector.load %arg3[%c4, %c0_44, %c0_45] : memref<9x128x64xbf16, #tpu.memory_space<vmem>>, vector<1x128x64xbf16>
    %89 = vector.shape_cast %88 : vector<1x128x64xbf16> to vector<128x64xbf16>
    %cst_46 = arith.constant dense<0.000000e+00> : vector<128x256xf32>
    %90 = tpu.matmul %89, %87, %cst_46 {dimension_numbers = #tpu.dot_dimension_numbers<[1], [0], [0], [1], [0, 0, 1, 1], [], []>} : vector<128x64xbf16>, vector<64x256xbf16>, vector<128x256xf32> -> vector<128x256xf32>
    %91 = arith.addf %86, %90 : vector<128x256xf32>
    %c0_47 = arith.constant 0 : index
    %c129 = arith.constant 129 : index
    %92 = vector.load %arg9[%c0_47, %c129] : memref<64x512xbf16, #tpu.memory_space<vmem>>, vector<64x256xbf16>
    %c1_i32_48 = arith.constant 1 : i32
    %93 = vector.broadcast %c1_i32_48 : i32 to vector<1x256xi32>
    %94 = arith.addi %26, %93 : vector<1x256xi32>
    %c0_i32_49 = arith.constant 0 : i32
    %95 = vector.broadcast %c0_i32_49 : i32 to vector<1x256xi32>
    %96 = arith.cmpi sge, %94, %95 : vector<1x256xi32>
    %c1_i32_50 = arith.constant 1 : i32
    %97 = vector.broadcast %c1_i32_50 : i32 to vector<1x256xi32>
    %98 = arith.addi %26, %97 : vector<1x256xi32>
    %c15_i32_51 = arith.constant 15 : i32
    %99 = vector.broadcast %c15_i32_51 : i32 to vector<1x256xi32>
    %100 = arith.cmpi sle, %98, %99 : vector<1x256xi32>
    %101 = arith.andi %96, %100 : vector<1x256xi1>
    %cst_52 = arith.constant 0.000000e+00 : bf16
    %102 = vector.broadcast %cst_52 : bf16 to vector<64x256xbf16>
    %103 = vector.shape_cast %101 : vector<1x256xi1> to vector<1x256xi1>
    %104 = vector.broadcast %103 : vector<1x256xi1> to vector<64x256xi1>
    %105 = arith.select %104, %92, %102 : vector<64x256xi1>, vector<64x256xbf16>
    %c5 = arith.constant 5 : index
    %c0_53 = arith.constant 0 : index
    %c0_54 = arith.constant 0 : index
    %106 = vector.load %arg3[%c5, %c0_53, %c0_54] : memref<9x128x64xbf16, #tpu.memory_space<vmem>>, vector<1x128x64xbf16>
    %107 = vector.shape_cast %106 : vector<1x128x64xbf16> to vector<128x64xbf16>
    %cst_55 = arith.constant dense<0.000000e+00> : vector<128x256xf32>
    %108 = tpu.matmul %107, %105, %cst_55 {dimension_numbers = #tpu.dot_dimension_numbers<[1], [0], [0], [1], [0, 0, 1, 1], [], []>} : vector<128x64xbf16>, vector<64x256xbf16>, vector<128x256xf32> -> vector<128x256xf32>
    %109 = arith.addf %91, %108 : vector<128x256xf32>
    %c0_56 = arith.constant 0 : index
    %c143 = arith.constant 143 : index
    %110 = vector.load %arg9[%c0_56, %c143] : memref<64x512xbf16, #tpu.memory_space<vmem>>, vector<64x256xbf16>
    %c-1_i32_57 = arith.constant -1 : i32
    %111 = vector.broadcast %c-1_i32_57 : i32 to vector<1x256xi32>
    %112 = arith.addi %26, %111 : vector<1x256xi32>
    %c0_i32_58 = arith.constant 0 : i32
    %113 = vector.broadcast %c0_i32_58 : i32 to vector<1x256xi32>
    %114 = arith.cmpi sge, %112, %113 : vector<1x256xi32>
    %c-1_i32_59 = arith.constant -1 : i32
    %115 = vector.broadcast %c-1_i32_59 : i32 to vector<1x256xi32>
    %116 = arith.addi %26, %115 : vector<1x256xi32>
    %c15_i32_60 = arith.constant 15 : i32
    %117 = vector.broadcast %c15_i32_60 : i32 to vector<1x256xi32>
    %118 = arith.cmpi sle, %116, %117 : vector<1x256xi32>
    %119 = arith.andi %114, %118 : vector<1x256xi1>
    %cst_61 = arith.constant 0.000000e+00 : bf16
    %120 = vector.broadcast %cst_61 : bf16 to vector<64x256xbf16>
    %121 = vector.shape_cast %119 : vector<1x256xi1> to vector<1x256xi1>
    %122 = vector.broadcast %121 : vector<1x256xi1> to vector<64x256xi1>
    %123 = arith.select %122, %110, %120 : vector<64x256xi1>, vector<64x256xbf16>
    %c6 = arith.constant 6 : index
    %c0_62 = arith.constant 0 : index
    %c0_63 = arith.constant 0 : index
    %124 = vector.load %arg3[%c6, %c0_62, %c0_63] : memref<9x128x64xbf16, #tpu.memory_space<vmem>>, vector<1x128x64xbf16>
    %125 = vector.shape_cast %124 : vector<1x128x64xbf16> to vector<128x64xbf16>
    %cst_64 = arith.constant dense<0.000000e+00> : vector<128x256xf32>
    %126 = tpu.matmul %125, %123, %cst_64 {dimension_numbers = #tpu.dot_dimension_numbers<[1], [0], [0], [1], [0, 0, 1, 1], [], []>} : vector<128x64xbf16>, vector<64x256xbf16>, vector<128x256xf32> -> vector<128x256xf32>
    %127 = arith.addf %109, %126 : vector<128x256xf32>
    %c0_65 = arith.constant 0 : index
    %c144 = arith.constant 144 : index
    %128 = vector.load %arg9[%c0_65, %c144] : memref<64x512xbf16, #tpu.memory_space<vmem>>, vector<64x256xbf16>
    %c7 = arith.constant 7 : index
    %c0_66 = arith.constant 0 : index
    %c0_67 = arith.constant 0 : index
    %129 = vector.load %arg3[%c7, %c0_66, %c0_67] : memref<9x128x64xbf16, #tpu.memory_space<vmem>>, vector<1x128x64xbf16>
    %130 = vector.shape_cast %129 : vector<1x128x64xbf16> to vector<128x64xbf16>
    %cst_68 = arith.constant dense<0.000000e+00> : vector<128x256xf32>
    %131 = tpu.matmul %130, %128, %cst_68 {dimension_numbers = #tpu.dot_dimension_numbers<[1], [0], [0], [1], [0, 0, 1, 1], [], []>} : vector<128x64xbf16>, vector<64x256xbf16>, vector<128x256xf32> -> vector<128x256xf32>
    %132 = arith.addf %127, %131 : vector<128x256xf32>
    %c0_69 = arith.constant 0 : index
    %c145 = arith.constant 145 : index
    %133 = vector.load %arg9[%c0_69, %c145] : memref<64x512xbf16, #tpu.memory_space<vmem>>, vector<64x256xbf16>
    %c1_i32_70 = arith.constant 1 : i32
    %134 = vector.broadcast %c1_i32_70 : i32 to vector<1x256xi32>
    %135 = arith.addi %26, %134 : vector<1x256xi32>
    %c0_i32_71 = arith.constant 0 : i32
    %136 = vector.broadcast %c0_i32_71 : i32 to vector<1x256xi32>
    %137 = arith.cmpi sge, %135, %136 : vector<1x256xi32>
    %c1_i32_72 = arith.constant 1 : i32
    %138 = vector.broadcast %c1_i32_72 : i32 to vector<1x256xi32>
    %139 = arith.addi %26, %138 : vector<1x256xi32>
    %c15_i32_73 = arith.constant 15 : i32
    %140 = vector.broadcast %c15_i32_73 : i32 to vector<1x256xi32>
    %141 = arith.cmpi sle, %139, %140 : vector<1x256xi32>
    %142 = arith.andi %137, %141 : vector<1x256xi1>
    %cst_74 = arith.constant 0.000000e+00 : bf16
    %143 = vector.broadcast %cst_74 : bf16 to vector<64x256xbf16>
    %144 = vector.shape_cast %142 : vector<1x256xi1> to vector<1x256xi1>
    %145 = vector.broadcast %144 : vector<1x256xi1> to vector<64x256xi1>
    %146 = arith.select %145, %133, %143 : vector<64x256xi1>, vector<64x256xbf16>
    %c8 = arith.constant 8 : index
    %c0_75 = arith.constant 0 : index
    %c0_76 = arith.constant 0 : index
    %147 = vector.load %arg3[%c8, %c0_75, %c0_76] : memref<9x128x64xbf16, #tpu.memory_space<vmem>>, vector<1x128x64xbf16>
    %148 = vector.shape_cast %147 : vector<1x128x64xbf16> to vector<128x64xbf16>
    %cst_77 = arith.constant dense<0.000000e+00> : vector<128x256xf32>
    %149 = tpu.matmul %148, %146, %cst_77 {dimension_numbers = #tpu.dot_dimension_numbers<[1], [0], [0], [1], [0, 0, 1, 1], [], []>} : vector<128x64xbf16>, vector<64x256xbf16>, vector<128x256xf32> -> vector<128x256xf32>
    %150 = arith.addf %132, %149 : vector<128x256xf32>
    %c0_78 = arith.constant 0 : index
    %c0_79 = arith.constant 0 : index
    %151 = vector.load %arg4[%c0_78, %c0_79] : memref<128x1xf32, #tpu.memory_space<vmem>>, vector<128x1xf32>
    %152 = vector.broadcast %151 : vector<128x1xf32> to vector<128x256xf32>
    %153 = arith.addf %150, %152 : vector<128x256xf32>
    %154 = vector.shape_cast %153 : vector<128x256xf32> to vector<1x128x256xf32>
    %cst_80 = arith.constant dense<0.000000e+00> : vector<1xf32>
    %155 = vector.multi_reduction <add>, %154, %cst_80 [1, 2] : vector<1x128x256xf32> to vector<1xf32>
    %156 = vector.shape_cast %155 : vector<1xf32> to vector<1x1x1xf32>
    %157 = vector.extract %156[0, 0, 0] : f32 from vector<1x1x1xf32>
    %158 = vector.broadcast %157 : f32 to vector<1x1xf32>
    %159 = arith.mulf %153, %153 : vector<128x256xf32>
    %160 = vector.shape_cast %159 : vector<128x256xf32> to vector<1x128x256xf32>
    %cst_81 = arith.constant dense<0.000000e+00> : vector<1xf32>
    %161 = vector.multi_reduction <add>, %160, %cst_81 [1, 2] : vector<1x128x256xf32> to vector<1xf32>
    %162 = vector.shape_cast %161 : vector<1xf32> to vector<1x1x1xf32>
    %163 = vector.extract %162[0, 0, 0] : f32 from vector<1x1x1xf32>
    %164 = vector.broadcast %163 : f32 to vector<1x1xf32>
    %cst_82 = arith.constant 3.276800e+04 : f32
    %165 = vector.broadcast %cst_82 : f32 to vector<1x1xf32>
    %166 = arith.divf %158, %165 : vector<1x1xf32>
    %cst_83 = arith.constant 3.276800e+04 : f32
    %167 = vector.broadcast %cst_83 : f32 to vector<1x1xf32>
    %168 = arith.divf %164, %167 : vector<1x1xf32>
    %169 = arith.mulf %166, %166 : vector<1x1xf32>
    %170 = arith.subf %168, %169 : vector<1x1xf32>
    %171 = vector.broadcast %166 : vector<1x1xf32> to vector<128x256xf32>
    %172 = arith.subf %153, %171 : vector<128x256xf32>
    %cst_84 = arith.constant 9.99999974E-6 : f32
    %173 = vector.broadcast %cst_84 : f32 to vector<1x1xf32>
    %174 = arith.addf %170, %173 : vector<1x1xf32>
    %175 = math.rsqrt %174 : vector<1x1xf32>
    %176 = vector.broadcast %175 : vector<1x1xf32> to vector<128x256xf32>
    %177 = arith.mulf %172, %176 : vector<128x256xf32>
    %c0_85 = arith.constant 0 : index
    %c0_86 = arith.constant 0 : index
    %178 = vector.load %arg5[%c0_85, %c0_86] : memref<128x256xbf16, #tpu.memory_space<vmem>>, vector<128x256xbf16>
    %179 = arith.extf %178 : vector<128x256xbf16> to vector<128x256xf32>
    %180 = arith.mulf %177, %179 : vector<128x256xf32>
    %c0_87 = arith.constant 0 : index
    %c0_88 = arith.constant 0 : index
    %181 = vector.load %arg6[%c0_87, %c0_88] : memref<128x256xbf16, #tpu.memory_space<vmem>>, vector<128x256xbf16>
    %182 = arith.extf %181 : vector<128x256xbf16> to vector<128x256xf32>
    %183 = arith.addf %180, %182 : vector<128x256xf32>
    %184 = vector.extract_strided_slice %183 {offsets = [0, 0], sizes = [32, 256], strides = [1, 1]} : vector<128x256xf32> to vector<32x256xf32>
    %185 = arith.negf %184 : vector<32x256xf32>
    %186 = math.exp %185 : vector<32x256xf32>
    %cst_89 = arith.constant 1.000000e+00 : f32
    %187 = vector.broadcast %cst_89 : f32 to vector<32x256xf32>
    %188 = arith.addf %187, %186 : vector<32x256xf32>
    %189 = arith.divf %187, %188 : vector<32x256xf32>
    %190 = vector.extract_strided_slice %183 {offsets = [32, 0], sizes = [32, 256], strides = [1, 1]} : vector<128x256xf32> to vector<32x256xf32>
    %191 = arith.negf %190 : vector<32x256xf32>
    %192 = math.exp %191 : vector<32x256xf32>
    %cst_90 = arith.constant 1.000000e+00 : f32
    %193 = vector.broadcast %cst_90 : f32 to vector<32x256xf32>
    %194 = arith.addf %193, %192 : vector<32x256xf32>
    %195 = arith.divf %193, %194 : vector<32x256xf32>
    %196 = vector.extract_strided_slice %183 {offsets = [64, 0], sizes = [32, 256], strides = [1, 1]} : vector<128x256xf32> to vector<32x256xf32>
    %197 = arith.negf %196 : vector<32x256xf32>
    %198 = math.exp %197 : vector<32x256xf32>
    %cst_91 = arith.constant 1.000000e+00 : f32
    %199 = vector.broadcast %cst_91 : f32 to vector<32x256xf32>
    %200 = arith.addf %199, %198 : vector<32x256xf32>
    %201 = arith.divf %199, %200 : vector<32x256xf32>
    %202 = vector.extract_strided_slice %183 {offsets = [96, 0], sizes = [32, 256], strides = [1, 1]} : vector<128x256xf32> to vector<32x256xf32>
    %203 = math.tanh %202 : vector<32x256xf32>
    %c0_92 = arith.constant 0 : index
    %c0_93 = arith.constant 0 : index
    %204 = vector.load %arg11[%c0_92, %c0_93] : memref<32x256xf32, #tpu.memory_space<vmem>>, vector<32x256xf32>
    %205 = arith.mulf %195, %204 : vector<32x256xf32>
    %206 = arith.mulf %189, %203 : vector<32x256xf32>
    %207 = arith.addf %205, %206 : vector<32x256xf32>
    %208 = math.tanh %207 : vector<32x256xf32>
    %209 = arith.mulf %201, %208 : vector<32x256xf32>
    %210 = arith.addf %209, %4 : vector<32x256xf32>
    %c0_94 = arith.constant 0 : index
    %c0_95 = arith.constant 0 : index
    %211 = vector.load %arg10[%c0_94, %c0_95] : memref<32x256xf32, #tpu.memory_space<vmem>>, vector<32x256xf32>
    tpu.vector_store %arg10[%c0_94, %c0_95], %210 {strides = array<i32>} : memref<32x256xf32, #tpu.memory_space<vmem>>, vector<32x256xf32>,
    %c0_96 = arith.constant 0 : index
    %c0_97 = arith.constant 0 : index
    %212 = vector.load %arg11[%c0_96, %c0_97] : memref<32x256xf32, #tpu.memory_space<vmem>>, vector<32x256xf32>
    tpu.vector_store %arg11[%c0_96, %c0_97], %207 {strides = array<i32>} : memref<32x256xf32, #tpu.memory_space<vmem>>, vector<32x256xf32>,
    %c0_98 = arith.constant 0 : index
    %c0_99 = arith.constant 0 : index
    %c0_100 = arith.constant 0 : index
    %c0_101 = arith.constant 0 : index
    %213 = vector.load %arg7[%c0_98, %c0_99, %c0_100, %c0_101] : memref<1x1x32x256xf32, #tpu.memory_space<vmem>>, vector<1x1x32x256xf32>
    %214 = vector.shape_cast %213 : vector<1x1x32x256xf32> to vector<32x256xf32>
    %215 = vector.shape_cast %210 : vector<32x256xf32> to vector<1x1x32x256xf32>
    tpu.vector_store %arg7[%c0_98, %c0_99, %c0_100, %c0_101], %215 {strides = array<i32>} : memref<1x1x32x256xf32, #tpu.memory_space<vmem>>, vector<1x1x32x256xf32>,
    %c0_102 = arith.constant 0 : index
    %c0_103 = arith.constant 0 : index
    %c0_104 = arith.constant 0 : index
    %216 = vector.load %arg8[%c0_102, %c0_103, %c0_104] : memref<1x32x256xf32, #tpu.memory_space<vmem>>, vector<1x32x256xf32>
    %217 = vector.shape_cast %216 : vector<1x32x256xf32> to vector<32x256xf32>
    %218 = vector.shape_cast %207 : vector<32x256xf32> to vector<1x32x256xf32>
    tpu.vector_store %arg8[%c0_102, %c0_103, %c0_104], %218 {strides = array<i32>} : memref<1x32x256xf32, #tpu.memory_space<vmem>>, vector<1x32x256xf32>,
    return
  }
  func.func @transform_0(%arg0: i32, %arg1: i32) -> (i32, i32, i32, i32) {
    %c0_i32 = arith.constant 0 : i32
    %c0_i32_0 = arith.constant 0 : i32
    %c0_i32_1 = arith.constant 0 : i32
    return %arg0, %arg1, %c0_i32, %c0_i32_0 : i32, i32, i32, i32
  }
  func.func @transform_1(%arg0: i32, %arg1: i32) -> (i32, i32, i32) {
    %c0_i32 = arith.constant 0 : i32
    %c0_i32_0 = arith.constant 0 : i32
    %c0_i32_1 = arith.constant 0 : i32
    %c0_i32_2 = arith.constant 0 : i32
    return %c0_i32, %c0_i32_0, %c0_i32_1 : i32, i32, i32
  }
  func.func @transform_2(%arg0: i32, %arg1: i32) -> (i32, i32) {
    %c0_i32 = arith.constant 0 : i32
    %c0_i32_0 = arith.constant 0 : i32
    %c0_i32_1 = arith.constant 0 : i32
    return %c0_i32, %c0_i32_0 : i32, i32
  }
  func.func @transform_3(%arg0: i32, %arg1: i32) -> (i32, i32) {
    %c0_i32 = arith.constant 0 : i32
    %c0_i32_0 = arith.constant 0 : i32
    %c0_i32_1 = arith.constant 0 : i32
    return %c0_i32, %c0_i32_0 : i32, i32
  }
  func.func @transform_4(%arg0: i32, %arg1: i32) -> (i32, i32) {
    %c0_i32 = arith.constant 0 : i32
    %c0_i32_0 = arith.constant 0 : i32
    %c0_i32_1 = arith.constant 0 : i32
    return %c0_i32, %c0_i32_0 : i32, i32
  }
  func.func @transform_5(%arg0: i32, %arg1: i32) -> (i32, i32, i32, i32) {
    %c0_i32 = arith.constant 0 : i32
    %c0_i32_0 = arith.constant 0 : i32
    %c0_i32_1 = arith.constant 0 : i32
    return %arg0, %arg1, %c0_i32, %c0_i32_0 : i32, i32, i32, i32
  }
  func.func @transform_6(%arg0: i32, %arg1: i32) -> (i32, i32, i32) {
    %c0_i32 = arith.constant 0 : i32
    %c0_i32_0 = arith.constant 0 : i32
    %c0_i32_1 = arith.constant 0 : i32
    return %arg0, %c0_i32, %c0_i32_0 : i32, i32, i32
  }
}

module attributes {stable_mosaic.version = 11 : i64} {
  func.func @kernel(%arg0: i32, %arg1: i32, %arg2: memref<1x1x32x256xf32, #tpu.memory_space<vmem>>, %arg3: memref<9x128x64xbf16, #tpu.memory_space<vmem>>, %arg4: memref<128x1xf32, #tpu.memory_space<vmem>>, %arg5: memref<128x256xbf16, #tpu.memory_space<vmem>>, %arg6: memref<128x256xbf16, #tpu.memory_space<vmem>>, %arg7: memref<1x1x32x256xf32, #tpu.memory_space<vmem>>, %arg8: memref<1x32x256xf32, #tpu.memory_space<vmem>>, %arg9: memref<64x512xbf16, #tpu.memory_space<vmem>>, %arg10: memref<32x256xf32, #tpu.memory_space<vmem>>, %arg11: memref<32x256xf32, #tpu.memory_space<vmem>>) attributes {dimension_semantics = [#tpu.dimension_semantics<parallel>, #tpu.dimension_semantics<arbitrary>], iteration_bounds = array<i64: 2, 4>, scalar_prefetch = 0 : i64, scratch_operands = 3 : i64, tpu.core_type = #tpu.core_type<tc>, window_params = [{transform_indices = @transform_0, window_bounds = array<i64: 1, 1, 32, 256>}, {pipeline_mode = #tpu.pipeline_mode<synchronous>, transform_indices = @transform_1, window_bounds = array<i64: 9, 128, 64>}, {pipeline_mode = #tpu.pipeline_mode<synchronous>, transform_indices = @transform_2, window_bounds = array<i64: 128, 1>}, {pipeline_mode = #tpu.pipeline_mode<synchronous>, transform_indices = @transform_3, window_bounds = array<i64: 128, 256>}, {pipeline_mode = #tpu.pipeline_mode<synchronous>, transform_indices = @transform_4, window_bounds = array<i64: 128, 256>}, {transform_indices = @transform_5, window_bounds = array<i64: 1, 1, 32, 256>}, {transform_indices = @transform_6, window_bounds = array<i64: 1, 32, 256>}]} {
    %c0_i32 = arith.constant 0 : i32
    %0 = arith.cmpi eq, %arg1, %c0_i32 : i32
    %1 = arith.extui %0 : i1 to i32
    %c0_i32_0 = arith.constant 0 : i32
    %2 = arith.cmpi ne, %1, %c0_i32_0 : i32
    scf.if %2 {
      %cst_105 = arith.constant 0.000000e+00 : bf16
      %219 = vector.broadcast %cst_105 : bf16 to vector<64x512xbf16>
      %c0_106 = arith.constant 0 : index
      %c0_107 = arith.constant 0 : index
      %220 = vector.load %arg9[%c0_106, %c0_107] : memref<64x512xbf16, #tpu.memory_space<vmem>>, vector<64x512xbf16>
      tpu.vector_store %arg9[%c0_106, %c0_107], %219 {strides = array<i32>} : memref<64x512xbf16, #tpu.memory_space<vmem>>, vector<64x512xbf16>,
      %cst_108 = arith.constant 0.000000e+00 : f32
      %221 = vector.broadcast %cst_108 : f32 to vector<32x256xf32>
      %c0_109 = arith.constant 0 : index
      %c0_110 = arith.constant 0 : index
      %222 = vector.load %arg10[%c0_109, %c0_110] : memref<32x256xf32, #tpu.memory_space<vmem>>, vector<32x256xf32>
      tpu.vector_store %arg10[%c0_109, %c0_110], %221 {strides = array<i32>} : memref<32x256xf32, #tpu.memory_space<vmem>>, vector<32x256xf32>,
      %cst_111 = arith.constant 0.000000e+00 : f32
      %223 = vector.broadcast %cst_111 : f32 to vector<32x256xf32>
      %c0_112 = arith.constant 0 : index
      %c0_113 = arith.constant 0 : index
      %224 = vector.load %arg11[%c0_112, %c0_113] : memref<32x256xf32, #tpu.memory_space<vmem>>, vector<32x256xf32>
      tpu.vector_store %arg11[%c0_112, %c0_113], %223 {strides = array<i32>} : memref<32x256xf32, #tpu.memory_space<vmem>>, vector<32x256xf32>,
    } else {
    }
    %c0 = arith.constant 0 : index
    %c0_1 = arith.constant 0 : index
    %c0_2 = arith.constant 0 : index
    %c0_3 = arith.constant 0 : index
    %3 = vector.load %arg2[%c0, %c0_1, %c0_2, %c0_3] : memref<1x1x32x256xf32, #tpu.memory_space<vmem>>, vector<1x1x32x256xf32>
    %4 = vector.shape_cast %3 : vector<1x1x32x256xf32> to vector<32x256xf32>
    %5 = arith.truncf %4 : vector<32x256xf32> to vector<32x256xbf16>
    %c0_4 = arith.constant 0 : index
    %c128 = arith.constant 128 : index
    %6 = vector.load %arg9[%c0_4, %c128] : memref<64x512xbf16, #tpu.memory_space<vmem>>, vector<32x256xbf16>
    tpu.vector_store %arg9[%c0_4, %c128], %5 {strides = array<i32>} : memref<64x512xbf16, #tpu.memory_space<vmem>>, vector<32x256xbf16>,
    %c0_5 = arith.constant 0 : index
    %c0_6 = arith.constant 0 : index
    %7 = vector.load %arg10[%c0_5, %c0_6] : memref<32x256xf32, #tpu.memory_space<vmem>>, vector<32x256xf32>
    %8 = arith.truncf %7 : vector<32x256xf32> to vector<32x256xbf16>
    %c32 = arith.constant 32 : index
    %c128_7 = arith.constant 128 : index
    %9 = vector.load %arg9[%c32, %c128_7] : memref<64x512xbf16, #tpu.memory_space<vmem>>, vector<32x256xbf16>
    tpu.vector_store %arg9[%c32, %c128_7], %8 {strides = array<i32>} : memref<64x512xbf16, #tpu.memory_space<vmem>>, vector<32x256xbf16>,
    %10 = tpu.iota {dimensions = array<i32: 1>} : vector<1x256xi32>
    %c16_i32 = arith.constant 16 : i32
    %c0_i32_8 = arith.constant 0 : i32
    %11 = arith.cmpi eq, %c16_i32, %c0_i32_8 : i32
    %c1_i32 = arith.constant 1 : i32
    %12 = arith.select %11, %c1_i32, %c16_i32 : i32
    %13 = vector.broadcast %12 : i32 to vector<1x256xi32>
    %14 = arith.remsi %10, %13 : vector<1x256xi32>
    %c0_i32_9 = arith.constant 0 : i32
    %15 = vector.broadcast %c0_i32_9 : i32 to vector<1x256xi32>
    %16 = arith.cmpi ne, %14, %15 : vector<1x256xi32>
    %c0_i32_10 = arith.constant 0 : i32
    %17 = vector.broadcast %c0_i32_10 : i32 to vector<1x256xi32>
    %18 = arith.cmpi slt, %14, %17 : vector<1x256xi32>
    %c0_i32_11 = arith.constant 0 : i32
    %19 = arith.cmpi slt, %12, %c0_i32_11 : i32
    %20 = vector.broadcast %19 : i1 to vector<1x256xi1>
    %21 = vector.broadcast %20 : vector<1x256xi1> to vector<1x256xi1>
    %22 = arith.xori %18, %21 : vector<1x256xi1>
    %23 = arith.andi %22, %16 : vector<1x256xi1>
    %24 = vector.broadcast %12 : i32 to vector<1x256xi32>
    %25 = arith.addi %14, %24 : vector<1x256xi32>
    %26 = arith.select %23, %25, %14 : vector<1x256xi1>, vector<1x256xi32>
    %cst = arith.constant 0.000000e+00 : f32
    %27 = vector.broadcast %cst : f32 to vector<128x256xf32>
    %c0_12 = arith.constant 0 : index
    %c111 = arith.constant 111 : index
    %28 = vector.load %arg9[%c0_12, %c111] : memref<64x512xbf16, #tpu.memory_space<vmem>>, vector<64x256xbf16>
    %c-1_i32 = arith.constant -1 : i32
    %29 = vector.broadcast %c-1_i32 : i32 to vector<1x256xi32>
    %30 = arith.addi %26, %29 : vector<1x256xi32>
    %c0_i32_13 = arith.constant 0 : i32
    %31 = vector.broadcast %c0_i32_13 : i32 to vector<1x256xi32>
    %32 = arith.cmpi sge, %30, %31 : vector<1x256xi32>
    %c-1_i32_14 = arith.constant -1 : i32
    %33 = vector.broadcast %c-1_i32_14 : i32 to vector<1x256xi32>
    %34 = arith.addi %26, %33 : vector<1x256xi32>
    %c15_i32 = arith.constant 15 : i32
    %35 = vector.broadcast %c15_i32 : i32 to vector<1x256xi32>
    %36 = arith.cmpi sle, %34, %35 : vector<1x256xi32>
    %37 = arith.andi %32, %36 : vector<1x256xi1>
    %cst_15 = arith.constant 0.000000e+00 : bf16
    %38 = vector.broadcast %cst_15 : bf16 to vector<64x256xbf16>
    %39 = vector.shape_cast %37 : vector<1x256xi1> to vector<1x256xi1>
    %40 = vector.broadcast %39 : vector<1x256xi1> to vector<64x256xi1>
    %41 = arith.select %40, %28, %38 : vector<64x256xi1>, vector<64x256xbf16>
    %c0_16 = arith.constant 0 : index
    %c0_17 = arith.constant 0 : index
    %c0_18 = arith.constant 0 : index
    %42 = vector.load %arg3[%c0_16, %c0_17, %c0_18] : memref<9x128x64xbf16, #tpu.memory_space<vmem>>, vector<1x128x64xbf16>
    %43 = vector.shape_cast %42 : vector<1x128x64xbf16> to vector<128x64xbf16>
    %cst_19 = arith.constant dense<0.000000e+00> : vector<128x256xf32>
    %44 = tpu.matmul %43, %41, %cst_19 {dimension_numbers = #tpu.dot_dimension_numbers<[1], [0], [0], [1], [0, 0, 1, 1], [], []>} : vector<128x64xbf16>, vector<64x256xbf16>, vector<128x256xf32> -> vector<128x256xf32>
    %45 = arith.addf %27, %44 : vector<128x256xf32>
    %c0_20 = arith.constant 0 : index
    %c112 = arith.constant 112 : index
    %46 = vector.load %arg9[%c0_20, %c112] : memref<64x512xbf16, #tpu.memory_space<vmem>>, vector<64x256xbf16>
    %c1 = arith.constant 1 : index
    %c0_21 = arith.constant 0 : index
    %c0_22 = arith.constant 0 : index
    %47 = vector.load %arg3[%c1, %c0_21, %c0_22] : memref<9x128x64xbf16, #tpu.memory_space<vmem>>, vector<1x128x64xbf16>
    %48 = vector.shape_cast %47 : vector<1x128x64xbf16> to vector<128x64xbf16>
    %cst_23 = arith.constant dense<0.000000e+00> : vector<128x256xf32>
    %49 = tpu.matmul %48, %46, %cst_23 {dimension_numbers = #tpu.dot_dimension_numbers<[1], [0], [0], [1], [0, 0, 1, 1], [], []>} : vector<128x64xbf16>, vector<64x256xbf16>, vector<128x256xf32> -> vector<128x256xf32>
    %50 = arith.addf %45, %49 : vector<128x256xf32>
    %c0_24 = arith.constant 0 : index
    %c113 = arith.constant 113 : index
    %51 = vector.load %arg9[%c0_24, %c113] : memref<64x512xbf16, #tpu.memory_space<vmem>>, vector<64x256xbf16>
    %c1_i32_25 = arith.constant 1 : i32
    %52 = vector.broadcast %c1_i32_25 : i32 to vector<1x256xi32>
    %53 = arith.addi %26, %52 : vector<1x256xi32>
    %c0_i32_26 = arith.constant 0 : i32
    %54 = vector.broadcast %c0_i32_26 : i32 to vector<1x256xi32>
    %55 = arith.cmpi sge, %53, %54 : vector<1x256xi32>
    %c1_i32_27 = arith.constant 1 : i32
    %56 = vector.broadcast %c1_i32_27 : i32 to vector<1x256xi32>
    %57 = arith.addi %26, %56 : vector<1x256xi32>
    %c15_i32_28 = arith.constant 15 : i32
    %58 = vector.broadcast %c15_i32_28 : i32 to vector<1x256xi32>
    %59 = arith.cmpi sle, %57, %58 : vector<1x256xi32>
    %60 = arith.andi %55, %59 : vector<1x256xi1>
    %cst_29 = arith.constant 0.000000e+00 : bf16
    %61 = vector.broadcast %cst_29 : bf16 to vector<64x256xbf16>
    %62 = vector.shape_cast %60 : vector<1x256xi1> to vector<1x256xi1>
    %63 = vector.broadcast %62 : vector<1x256xi1> to vector<64x256xi1>
    %64 = arith.select %63, %51, %61 : vector<64x256xi1>, vector<64x256xbf16>
    %c2 = arith.constant 2 : index
    %c0_30 = arith.constant 0 : index
    %c0_31 = arith.constant 0 : index
    %65 = vector.load %arg3[%c2, %c0_30, %c0_31] : memref<9x128x64xbf16, #tpu.memory_space<vmem>>, vector<1x128x64xbf16>
    %66 = vector.shape_cast %65 : vector<1x128x64xbf16> to vector<128x64xbf16>
    %cst_32 = arith.constant dense<0.000000e+00> : vector<128x256xf32>
    %67 = tpu.matmul %66, %64, %cst_32 {dimension_numbers = #tpu.dot_dimension_numbers<[1], [0], [0], [1], [0, 0, 1, 1], [], []>} : vector<128x64xbf16>, vector<64x256xbf16>, vector<128x256xf32> -> vector<128x256xf32>
    %68 = arith.addf %50, %67 : vector<128x256xf32>
    %c0_33 = arith.constant 0 : index
    %c127 = arith.constant 127 : index
    %69 = vector.load %arg9[%c0_33, %c127] : memref<64x512xbf16, #tpu.memory_space<vmem>>, vector<64x256xbf16>
    %c-1_i32_34 = arith.constant -1 : i32
    %70 = vector.broadcast %c-1_i32_34 : i32 to vector<1x256xi32>
    %71 = arith.addi %26, %70 : vector<1x256xi32>
    %c0_i32_35 = arith.constant 0 : i32
    %72 = vector.broadcast %c0_i32_35 : i32 to vector<1x256xi32>
    %73 = arith.cmpi sge, %71, %72 : vector<1x256xi32>
    %c-1_i32_36 = arith.constant -1 : i32
    %74 = vector.broadcast %c-1_i32_36 : i32 to vector<1x256xi32>
    %75 = arith.addi %26, %74 : vector<1x256xi32>
    %c15_i32_37 = arith.constant 15 : i32
    %76 = vector.broadcast %c15_i32_37 : i32 to vector<1x256xi32>
    %77 = arith.cmpi sle, %75, %76 : vector<1x256xi32>
    %78 = arith.andi %73, %77 : vector<1x256xi1>
    %cst_38 = arith.constant 0.000000e+00 : bf16
    %79 = vector.broadcast %cst_38 : bf16 to vector<64x256xbf16>
    %80 = vector.shape_cast %78 : vector<1x256xi1> to vector<1x256xi1>
    %81 = vector.broadcast %80 : vector<1x256xi1> to vector<64x256xi1>
    %82 = arith.select %81, %69, %79 : vector<64x256xi1>, vector<64x256xbf16>
    %c3 = arith.constant 3 : index
    %c0_39 = arith.constant 0 : index
    %c0_40 = arith.constant 0 : index
    %83 = vector.load %arg3[%c3, %c0_39, %c0_40] : memref<9x128x64xbf16, #tpu.memory_space<vmem>>, vector<1x128x64xbf16>
    %84 = vector.shape_cast %83 : vector<1x128x64xbf16> to vector<128x64xbf16>
    %cst_41 = arith.constant dense<0.000000e+00> : vector<128x256xf32>
    %85 = tpu.matmul %84, %82, %cst_41 {dimension_numbers = #tpu.dot_dimension_numbers<[1], [0], [0], [1], [0, 0, 1, 1], [], []>} : vector<128x64xbf16>, vector<64x256xbf16>, vector<128x256xf32> -> vector<128x256xf32>
    %86 = arith.addf %68, %85 : vector<128x256xf32>
    %c0_42 = arith.constant 0 : index
    %c128_43 = arith.constant 128 : index
    %87 = vector.load %arg9[%c0_42, %c128_43] : memref<64x512xbf16, #tpu.memory_space<vmem>>, vector<64x256xbf16>
    %c4 = arith.constant 4 : index
    %c0_44 = arith.constant 0 : index
    %c0_45 = arith.constant 0 : index
    %88 = vector.load %arg3[%c4, %c0_44, %c0_45] : memref<9x128x64xbf16, #tpu.memory_space<vmem>>, vector<1x128x64xbf16>
    %89 = vector.shape_cast %88 : vector<1x128x64xbf16> to vector<128x64xbf16>
    %cst_46 = arith.constant dense<0.000000e+00> : vector<128x256xf32>
    %90 = tpu.matmul %89, %87, %cst_46 {dimension_numbers = #tpu.dot_dimension_numbers<[1], [0], [0], [1], [0, 0, 1, 1], [], []>} : vector<128x64xbf16>, vector<64x256xbf16>, vector<128x256xf32> -> vector<128x256xf32>
    %91 = arith.addf %86, %90 : vector<128x256xf32>
    %c0_47 = arith.constant 0 : index
    %c129 = arith.constant 129 : index
    %92 = vector.load %arg9[%c0_47, %c129] : memref<64x512xbf16, #tpu.memory_space<vmem>>, vector<64x256xbf16>
    %c1_i32_48 = arith.constant 1 : i32
    %93 = vector.broadcast %c1_i32_48 : i32 to vector<1x256xi32>
    %94 = arith.addi %26, %93 : vector<1x256xi32>
    %c0_i32_49 = arith.constant 0 : i32
    %95 = vector.broadcast %c0_i32_49 : i32 to vector<1x256xi32>
    %96 = arith.cmpi sge, %94, %95 : vector<1x256xi32>
    %c1_i32_50 = arith.constant 1 : i32
    %97 = vector.broadcast %c1_i32_50 : i32 to vector<1x256xi32>
    %98 = arith.addi %26, %97 : vector<1x256xi32>
    %c15_i32_51 = arith.constant 15 : i32
    %99 = vector.broadcast %c15_i32_51 : i32 to vector<1x256xi32>
    %100 = arith.cmpi sle, %98, %99 : vector<1x256xi32>
    %101 = arith.andi %96, %100 : vector<1x256xi1>
    %cst_52 = arith.constant 0.000000e+00 : bf16
    %102 = vector.broadcast %cst_52 : bf16 to vector<64x256xbf16>
    %103 = vector.shape_cast %101 : vector<1x256xi1> to vector<1x256xi1>
    %104 = vector.broadcast %103 : vector<1x256xi1> to vector<64x256xi1>
    %105 = arith.select %104, %92, %102 : vector<64x256xi1>, vector<64x256xbf16>
    %c5 = arith.constant 5 : index
    %c0_53 = arith.constant 0 : index
    %c0_54 = arith.constant 0 : index
    %106 = vector.load %arg3[%c5, %c0_53, %c0_54] : memref<9x128x64xbf16, #tpu.memory_space<vmem>>, vector<1x128x64xbf16>
    %107 = vector.shape_cast %106 : vector<1x128x64xbf16> to vector<128x64xbf16>
    %cst_55 = arith.constant dense<0.000000e+00> : vector<128x256xf32>
    %108 = tpu.matmul %107, %105, %cst_55 {dimension_numbers = #tpu.dot_dimension_numbers<[1], [0], [0], [1], [0, 0, 1, 1], [], []>} : vector<128x64xbf16>, vector<64x256xbf16>, vector<128x256xf32> -> vector<128x256xf32>
    %109 = arith.addf %91, %108 : vector<128x256xf32>
    %c0_56 = arith.constant 0 : index
    %c143 = arith.constant 143 : index
    %110 = vector.load %arg9[%c0_56, %c143] : memref<64x512xbf16, #tpu.memory_space<vmem>>, vector<64x256xbf16>
    %c-1_i32_57 = arith.constant -1 : i32
    %111 = vector.broadcast %c-1_i32_57 : i32 to vector<1x256xi32>
    %112 = arith.addi %26, %111 : vector<1x256xi32>
    %c0_i32_58 = arith.constant 0 : i32
    %113 = vector.broadcast %c0_i32_58 : i32 to vector<1x256xi32>
    %114 = arith.cmpi sge, %112, %113 : vector<1x256xi32>
    %c-1_i32_59 = arith.constant -1 : i32
    %115 = vector.broadcast %c-1_i32_59 : i32 to vector<1x256xi32>
    %116 = arith.addi %26, %115 : vector<1x256xi32>
    %c15_i32_60 = arith.constant 15 : i32
    %117 = vector.broadcast %c15_i32_60 : i32 to vector<1x256xi32>
    %118 = arith.cmpi sle, %116, %117 : vector<1x256xi32>
    %119 = arith.andi %114, %118 : vector<1x256xi1>
    %cst_61 = arith.constant 0.000000e+00 : bf16
    %120 = vector.broadcast %cst_61 : bf16 to vector<64x256xbf16>
    %121 = vector.shape_cast %119 : vector<1x256xi1> to vector<1x256xi1>
    %122 = vector.broadcast %121 : vector<1x256xi1> to vector<64x256xi1>
    %123 = arith.select %122, %110, %120 : vector<64x256xi1>, vector<64x256xbf16>
    %c6 = arith.constant 6 : index
    %c0_62 = arith.constant 0 : index
    %c0_63 = arith.constant 0 : index
    %124 = vector.load %arg3[%c6, %c0_62, %c0_63] : memref<9x128x64xbf16, #tpu.memory_space<vmem>>, vector<1x128x64xbf16>
    %125 = vector.shape_cast %124 : vector<1x128x64xbf16> to vector<128x64xbf16>
    %cst_64 = arith.constant dense<0.000000e+00> : vector<128x256xf32>
    %126 = tpu.matmul %125, %123, %cst_64 {dimension_numbers = #tpu.dot_dimension_numbers<[1], [0], [0], [1], [0, 0, 1, 1], [], []>} : vector<128x64xbf16>, vector<64x256xbf16>, vector<128x256xf32> -> vector<128x256xf32>
    %127 = arith.addf %109, %126 : vector<128x256xf32>
    %c0_65 = arith.constant 0 : index
    %c144 = arith.constant 144 : index
    %128 = vector.load %arg9[%c0_65, %c144] : memref<64x512xbf16, #tpu.memory_space<vmem>>, vector<64x256xbf16>
    %c7 = arith.constant 7 : index
    %c0_66 = arith.constant 0 : index
    %c0_67 = arith.constant 0 : index
    %129 = vector.load %arg3[%c7, %c0_66, %c0_67] : memref<9x128x64xbf16, #tpu.memory_space<vmem>>, vector<1x128x64xbf16>
    %130 = vector.shape_cast %129 : vector<1x128x64xbf16> to vector<128x64xbf16>
    %cst_68 = arith.constant dense<0.000000e+00> : vector<128x256xf32>
    %131 = tpu.matmul %130, %128, %cst_68 {dimension_numbers = #tpu.dot_dimension_numbers<[1], [0], [0], [1], [0, 0, 1, 1], [], []>} : vector<128x64xbf16>, vector<64x256xbf16>, vector<128x256xf32> -> vector<128x256xf32>
    %132 = arith.addf %127, %131 : vector<128x256xf32>
    %c0_69 = arith.constant 0 : index
    %c145 = arith.constant 145 : index
    %133 = vector.load %arg9[%c0_69, %c145] : memref<64x512xbf16, #tpu.memory_space<vmem>>, vector<64x256xbf16>
    %c1_i32_70 = arith.constant 1 : i32
    %134 = vector.broadcast %c1_i32_70 : i32 to vector<1x256xi32>
    %135 = arith.addi %26, %134 : vector<1x256xi32>
    %c0_i32_71 = arith.constant 0 : i32
    %136 = vector.broadcast %c0_i32_71 : i32 to vector<1x256xi32>
    %137 = arith.cmpi sge, %135, %136 : vector<1x256xi32>
    %c1_i32_72 = arith.constant 1 : i32
    %138 = vector.broadcast %c1_i32_72 : i32 to vector<1x256xi32>
    %139 = arith.addi %26, %138 : vector<1x256xi32>
    %c15_i32_73 = arith.constant 15 : i32
    %140 = vector.broadcast %c15_i32_73 : i32 to vector<1x256xi32>
    %141 = arith.cmpi sle, %139, %140 : vector<1x256xi32>
    %142 = arith.andi %137, %141 : vector<1x256xi1>
    %cst_74 = arith.constant 0.000000e+00 : bf16
    %143 = vector.broadcast %cst_74 : bf16 to vector<64x256xbf16>
    %144 = vector.shape_cast %142 : vector<1x256xi1> to vector<1x256xi1>
    %145 = vector.broadcast %144 : vector<1x256xi1> to vector<64x256xi1>
    %146 = arith.select %145, %133, %143 : vector<64x256xi1>, vector<64x256xbf16>
    %c8 = arith.constant 8 : index
    %c0_75 = arith.constant 0 : index
    %c0_76 = arith.constant 0 : index
    %147 = vector.load %arg3[%c8, %c0_75, %c0_76] : memref<9x128x64xbf16, #tpu.memory_space<vmem>>, vector<1x128x64xbf16>
    %148 = vector.shape_cast %147 : vector<1x128x64xbf16> to vector<128x64xbf16>
    %cst_77 = arith.constant dense<0.000000e+00> : vector<128x256xf32>
    %149 = tpu.matmul %148, %146, %cst_77 {dimension_numbers = #tpu.dot_dimension_numbers<[1], [0], [0], [1], [0, 0, 1, 1], [], []>} : vector<128x64xbf16>, vector<64x256xbf16>, vector<128x256xf32> -> vector<128x256xf32>
    %150 = arith.addf %132, %149 : vector<128x256xf32>
    %c0_78 = arith.constant 0 : index
    %c0_79 = arith.constant 0 : index
    %151 = vector.load %arg4[%c0_78, %c0_79] : memref<128x1xf32, #tpu.memory_space<vmem>>, vector<128x1xf32>
    %152 = vector.broadcast %151 : vector<128x1xf32> to vector<128x256xf32>
    %153 = arith.addf %150, %152 : vector<128x256xf32>
    %154 = vector.shape_cast %153 : vector<128x256xf32> to vector<1x128x256xf32>
    %cst_80 = arith.constant dense<0.000000e+00> : vector<1xf32>
    %155 = vector.multi_reduction <add>, %154, %cst_80 [1, 2] : vector<1x128x256xf32> to vector<1xf32>
    %156 = vector.shape_cast %155 : vector<1xf32> to vector<1x1x1xf32>
    %157 = vector.extract %156[0, 0, 0] : f32 from vector<1x1x1xf32>
    %158 = vector.broadcast %157 : f32 to vector<1x1xf32>
    %159 = arith.mulf %153, %153 : vector<128x256xf32>
    %160 = vector.shape_cast %159 : vector<128x256xf32> to vector<1x128x256xf32>
    %cst_81 = arith.constant dense<0.000000e+00> : vector<1xf32>
    %161 = vector.multi_reduction <add>, %160, %cst_81 [1, 2] : vector<1x128x256xf32> to vector<1xf32>
    %162 = vector.shape_cast %161 : vector<1xf32> to vector<1x1x1xf32>
    %163 = vector.extract %162[0, 0, 0] : f32 from vector<1x1x1xf32>
    %164 = vector.broadcast %163 : f32 to vector<1x1xf32>
    %cst_82 = arith.constant 3.276800e+04 : f32
    %165 = vector.broadcast %cst_82 : f32 to vector<1x1xf32>
    %166 = arith.divf %158, %165 : vector<1x1xf32>
    %cst_83 = arith.constant 3.276800e+04 : f32
    %167 = vector.broadcast %cst_83 : f32 to vector<1x1xf32>
    %168 = arith.divf %164, %167 : vector<1x1xf32>
    %169 = arith.mulf %166, %166 : vector<1x1xf32>
    %170 = arith.subf %168, %169 : vector<1x1xf32>
    %171 = vector.broadcast %166 : vector<1x1xf32> to vector<128x256xf32>
    %172 = arith.subf %153, %171 : vector<128x256xf32>
    %cst_84 = arith.constant 9.99999974E-6 : f32
    %173 = vector.broadcast %cst_84 : f32 to vector<1x1xf32>
    %174 = arith.addf %170, %173 : vector<1x1xf32>
    %175 = math.rsqrt %174 : vector<1x1xf32>
    %176 = vector.broadcast %175 : vector<1x1xf32> to vector<128x256xf32>
    %177 = arith.mulf %172, %176 : vector<128x256xf32>
    %c0_85 = arith.constant 0 : index
    %c0_86 = arith.constant 0 : index
    %178 = vector.load %arg5[%c0_85, %c0_86] : memref<128x256xbf16, #tpu.memory_space<vmem>>, vector<128x256xbf16>
    %179 = arith.extf %178 : vector<128x256xbf16> to vector<128x256xf32>
    %180 = arith.mulf %177, %179 : vector<128x256xf32>
    %c0_87 = arith.constant 0 : index
    %c0_88 = arith.constant 0 : index
    %181 = vector.load %arg6[%c0_87, %c0_88] : memref<128x256xbf16, #tpu.memory_space<vmem>>, vector<128x256xbf16>
    %182 = arith.extf %181 : vector<128x256xbf16> to vector<128x256xf32>
    %183 = arith.addf %180, %182 : vector<128x256xf32>
    %184 = vector.extract_strided_slice %183 {offsets = [0, 0], sizes = [32, 256], strides = [1, 1]} : vector<128x256xf32> to vector<32x256xf32>
    %185 = arith.negf %184 : vector<32x256xf32>
    %186 = math.exp %185 : vector<32x256xf32>
    %cst_89 = arith.constant 1.000000e+00 : f32
    %187 = vector.broadcast %cst_89 : f32 to vector<32x256xf32>
    %188 = arith.addf %187, %186 : vector<32x256xf32>
    %189 = arith.divf %187, %188 : vector<32x256xf32>
    %190 = vector.extract_strided_slice %183 {offsets = [32, 0], sizes = [32, 256], strides = [1, 1]} : vector<128x256xf32> to vector<32x256xf32>
    %191 = arith.negf %190 : vector<32x256xf32>
    %192 = math.exp %191 : vector<32x256xf32>
    %cst_90 = arith.constant 1.000000e+00 : f32
    %193 = vector.broadcast %cst_90 : f32 to vector<32x256xf32>
    %194 = arith.addf %193, %192 : vector<32x256xf32>
    %195 = arith.divf %193, %194 : vector<32x256xf32>
    %196 = vector.extract_strided_slice %183 {offsets = [64, 0], sizes = [32, 256], strides = [1, 1]} : vector<128x256xf32> to vector<32x256xf32>
    %197 = arith.negf %196 : vector<32x256xf32>
    %198 = math.exp %197 : vector<32x256xf32>
    %cst_91 = arith.constant 1.000000e+00 : f32
    %199 = vector.broadcast %cst_91 : f32 to vector<32x256xf32>
    %200 = arith.addf %199, %198 : vector<32x256xf32>
    %201 = arith.divf %199, %200 : vector<32x256xf32>
    %202 = vector.extract_strided_slice %183 {offsets = [96, 0], sizes = [32, 256], strides = [1, 1]} : vector<128x256xf32> to vector<32x256xf32>
    %203 = math.tanh %202 : vector<32x256xf32>
    %c0_92 = arith.constant 0 : index
    %c0_93 = arith.constant 0 : index
    %204 = vector.load %arg11[%c0_92, %c0_93] : memref<32x256xf32, #tpu.memory_space<vmem>>, vector<32x256xf32>
    %205 = arith.mulf %195, %204 : vector<32x256xf32>
    %206 = arith.mulf %189, %203 : vector<32x256xf32>
    %207 = arith.addf %205, %206 : vector<32x256xf32>
    %208 = math.tanh %207 : vector<32x256xf32>
    %209 = arith.mulf %201, %208 : vector<32x256xf32>
    %210 = arith.addf %209, %4 : vector<32x256xf32>
    %c0_94 = arith.constant 0 : index
    %c0_95 = arith.constant 0 : index
    %211 = vector.load %arg10[%c0_94, %c0_95] : memref<32x256xf32, #tpu.memory_space<vmem>>, vector<32x256xf32>
    tpu.vector_store %arg10[%c0_94, %c0_95], %210 {strides = array<i32>} : memref<32x256xf32, #tpu.memory_space<vmem>>, vector<32x256xf32>,
    %c0_96 = arith.constant 0 : index
    %c0_97 = arith.constant 0 : index
    %212 = vector.load %arg11[%c0_96, %c0_97] : memref<32x256xf32, #tpu.memory_space<vmem>>, vector<32x256xf32>
    tpu.vector_store %arg11[%c0_96, %c0_97], %207 {strides = array<i32>} : memref<32x256xf32, #tpu.memory_space<vmem>>, vector<32x256xf32>,
    %c0_98 = arith.constant 0 : index
    %c0_99 = arith.constant 0 : index
    %c0_100 = arith.constant 0 : index
    %c0_101 = arith.constant 0 : index
    %213 = vector.load %arg7[%c0_98, %c0_99, %c0_100, %c0_101] : memref<1x1x32x256xf32, #tpu.memory_space<vmem>>, vector<1x1x32x256xf32>
    %214 = vector.shape_cast %213 : vector<1x1x32x256xf32> to vector<32x256xf32>
    %215 = vector.shape_cast %210 : vector<32x256xf32> to vector<1x1x32x256xf32>
    tpu.vector_store %arg7[%c0_98, %c0_99, %c0_100, %c0_101], %215 {strides = array<i32>} : memref<1x1x32x256xf32, #tpu.memory_space<vmem>>, vector<1x1x32x256xf32>,
    %c0_102 = arith.constant 0 : index
    %c0_103 = arith.constant 0 : index
    %c0_104 = arith.constant 0 : index
    %216 = vector.load %arg8[%c0_102, %c0_103, %c0_104] : memref<1x32x256xf32, #tpu.memory_space<vmem>>, vector<1x32x256xf32>
    %217 = vector.shape_cast %216 : vector<1x32x256xf32> to vector<32x256xf32>
    %218 = vector.shape_cast %207 : vector<32x256xf32> to vector<1x32x256xf32>
    tpu.vector_store %arg8[%c0_102, %c0_103, %c0_104], %218 {strides = array<i32>} : memref<1x32x256xf32, #tpu.memory_space<vmem>>, vector<1x32x256xf32>,
    return
  }
  func.func @transform_0(%arg0: i32, %arg1: i32) -> (i32, i32, i32, i32) {
    %c0_i32 = arith.constant 0 : i32
    %c0_i32_0 = arith.constant 0 : i32
    %c0_i32_1 = arith.constant 0 : i32
    return %arg0, %arg1, %c0_i32, %c0_i32_0 : i32, i32, i32, i32
  }
  func.func @transform_1(%arg0: i32, %arg1: i32) -> (i32, i32, i32) {
    %c0_i32 = arith.constant 0 : i32
    %c0_i32_0 = arith.constant 0 : i32
    %c0_i32_1 = arith.constant 0 : i32
    %c0_i32_2 = arith.constant 0 : i32
    return %c0_i32, %c0_i32_0, %c0_i32_1 : i32, i32, i32
  }
  func.func @transform_2(%arg0: i32, %arg1: i32) -> (i32, i32) {
    %c0_i32 = arith.constant 0 : i32
    %c0_i32_0 = arith.constant 0 : i32
    %c0_i32_1 = arith.constant 0 : i32
    return %c0_i32, %c0_i32_0 : i32, i32
  }
  func.func @transform_3(%arg0: i32, %arg1: i32) -> (i32, i32) {
    %c0_i32 = arith.constant 0 : i32
    %c0_i32_0 = arith.constant 0 : i32
    %c0_i32_1 = arith.constant 0 : i32
    return %c0_i32, %c0_i32_0 : i32, i32
  }
  func.func @transform_4(%arg0: i32, %arg1: i32) -> (i32, i32) {
    %c0_i32 = arith.constant 0 : i32
    %c0_i32_0 = arith.constant 0 : i32
    %c0_i32_1 = arith.constant 0 : i32
    return %c0_i32, %c0_i32_0 : i32, i32
  }
  func.func @transform_5(%arg0: i32, %arg1: i32) -> (i32, i32, i32, i32) {
    %c0_i32 = arith.constant 0 : i32
    %c0_i32_0 = arith.constant 0 : i32
    %c0_i32_1 = arith.constant 0 : i32
    return %arg0, %arg1, %c0_i32, %c0_i32_0 : i32, i32, i32, i32
  }
  func.func @transform_6(%arg0: i32, %arg1: i32) -> (i32, i32, i32) {
    %c0_i32 = arith.constant 0 : i32
    %c0_i32_0 = arith.constant 0 : i32
    %c0_i32_1 = arith.constant 0 : i32
    return %arg0, %c0_i32, %c0_i32_0 : i32, i32, i32
  }
}

</mosaic_0001>

<llo_original>
// kernel: convlstm_forward.2
$region0: #{convlstm_forward.2}
  #allocation0 [shape = 'u32[]', space=smem, size = 0x4, offset = 0x4, fixed_abs, tag = 'smem constant byte address 0x4 - core index']
  #allocation1 [shape = 'u32[144,128]{1,0:T(1,128)}', space=vmem, size = 0x12000, scoped, tag = 'internal scratch']
  #allocation2 [shape = 'bf16[64,512]{1,0:T(16,128)(2,1)}', space=vmem, size = 0x10000, scoped, tag = 'scratch operand']
  #allocation3 [shape = 'f32[32,256]{1,0:T(8,128)}', space=vmem, size = 0x8000, scoped, tag = 'scratch operand']
  #allocation4 [shape = 'f32[32,256]{1,0:T(8,128)}', space=vmem, size = 0x8000, scoped, tag = 'scratch operand']
  %s0 = inlined_call_operand.vmem [shape: f32[2,4,32,256], index: 0, kind: input, shape index: {}]
  %s1 = inlined_call_operand.vmem [shape: bf16[9,128,64], index: 1, kind: input, shape index: {}]
  %s2 = inlined_call_operand.vmem [shape: f32[128,1], index: 2, kind: input, shape index: {}]
  %s3 = inlined_call_operand.vmem [shape: bf16[128,256], index: 3, kind: input, shape index: {}]
  %s4 = inlined_call_operand.vmem [shape: bf16[128,256], index: 4, kind: input, shape index: {}]
  %s5 = inlined_call_operand.vmem [shape: f32[2,4,32,256], index: 5, kind: output, shape index: {0}]
  %s6 = inlined_call_operand.hbm [shape: f32[2,32,256], index: 6, kind: output, shape index: {1}]
  %7 = xla_tuple %s5, %s6
  %s8 = sld [smem:[#allocation0]]
  $region65: #{convlstm_forward.2} parent=0
    _
  %s10 = ssub.s32 1, %s8
  %s11 = scalar_select 0, %s10, %s8
  $region1: #{convlstm_forward.2} parent=0
    #allocation5 [shape = 'u8[65536]{0}', space=vmem, size = 0x10000, scoped, tag = 'output window, operand 1']
    #allocation6 [shape = 's32[2]{0}', space=sflag, size = 0x8, scoped, tag = 'scoped memory for convlstm_forward.2']
    %12 = vsyncpa [#allocation6], 0
    %s13 = scalar_lea.sflag [#allocation6], 1
    %14 = vsyncpa %s13, 0
    loop: start=0, step=1, limit=10
    $region2: #{convlstm_forward.2} parent=1 // loop_pre_header
      _
    $region3: #{convlstm_forward.2} parent=1 // loop_header
      %s16 = sphi 0, %s20
      %p17 = scmp.ge.s32.totalorder %s16, 10
      %s23 = sphi 0, %s35
      %s24 = sphi 0, %s31
      %s25 = sphi 0, %s23
      %s26 = sphi 0, %s24
      %s27 = sphi 0, %s25
      %s28 = sphi 0, %s26
      %s40 = sphi 0, %s42
      %s43 = sphi 0, %s40
      %s44 = sphi 0, %s43
      %s60 = sphi 0, %s44
      %s64 = sphi 0, %s64
      %s66 = sphi 0, %s64
      %s67 = sphi 0, %s66
      %s81 = sphi 0, %s67
      %s85 = sphi 0, %s85
      %s87 = sphi 0, %s85
      %s88 = sphi 0, %s87
      %s102 = sphi 0, %s88
      %s106 = sphi 0, %s106
      %s108 = sphi 0, %s106
      %s109 = sphi 0, %s108
      %s123 = sphi 0, %s109
      %s127 = sphi 0, %s127
      %s129 = sphi 0, %s127
      %s130 = sphi 0, %s129
      %s144 = sphi 0, %s130
      %s152 = sphi 0, %s154
      %s155 = sphi 0, %s152
      %s156 = sphi 0, %s155
      %s172 = sphi 0, %s156
      %s178 = sphi 0, %s180
      %s181 = sphi 0, %s178
      %s182 = sphi 0, %s181
      %s198 = sphi 0, %s182
    $region4: #{convlstm_forward.2} parent=1 // loop_header_branch
      %19 = sbr.rel (%p17) target = $region8
    $region5: #{convlstm_forward.2} parent=1 // loop_body
      %s21 = ssub.s32 %s16, 1
      %s22 = ssub.s32 %s16, 2
      %s29 = sadd.s32 1, %s24
      %p30 = scmp.ge.s32.totalorder %s29, 4
      %s31 = scalar_select %p30, 0, %s29
      %s32 = sadd.s32 1, %s23
      %s33 = scalar_select %p30, %s32, %s23
      %p34 = scmp.ge.s32.totalorder %s33, 2
      %s35 = scalar_select %p34, 0, %s33
      %s36 = ssub.s32 %s23, %s35
      %s37 = ssub.s32 %s24, %s31
      %s38 = sor.u32 %s36, %s37
      %p39 = scmp.eq.s32.totalorder %s38, 0
      %s41 = sadd.s32 %s40, 1
      %s42 = scalar_select %p39, %s40, %s41
      %p45 = pneg %p39
      %p46 = scmp.eq.s32.totalorder %s16, 7
      %p47 = por %p45, %p46
      %p48 = scmp.ne.s32.totalorder %s40, %s43
      %p49 = scmp.eq.s32.totalorder %s16, 0
      %p50 = por %p48, %p49
      %p51 = scmp.ne.s32.totalorder %s40, %s43
      %p52 = scmp.eq.s32.totalorder %s21, 7
      %p53 = por %p51, %p52
      %p54 = scmp.ne.s32.totalorder %s43, %s44
      %p55 = scmp.eq.s32.totalorder %s21, 0
      %p56 = por %p54, %p55
      %p57 = scmp.ne.s32.totalorder %s43, %s44
      %p58 = scmp.eq.s32.totalorder %s22, 7
      %p59 = por %p57, %p58
      %p61 = scmp.ne.s32.totalorder %s44, %s60
      %p62 = scmp.eq.s32.totalorder %s22, 0
      %p63 = por %p61, %p62
      %s65 = sadd.s32 %s64, 1
      %p68 = scmp.eq.s32.totalorder %s16, 7
      %p69 = scmp.ne.s32.totalorder %s64, %s66
      %p70 = scmp.eq.s32.totalorder %s16, 0
      %p71 = por %p69, %p70
      %p72 = scmp.ne.s32.totalorder %s64, %s66
      %p73 = scmp.eq.s32.totalorder %s21, 7
      %p74 = por %p72, %p73
      %p75 = scmp.ne.s32.totalorder %s66, %s67
      %p76 = scmp.eq.s32.totalorder %s21, 0
      %p77 = por %p75, %p76
      %p78 = scmp.ne.s32.totalorder %s66, %s67
      %p79 = scmp.eq.s32.totalorder %s22, 7
      %p80 = por %p78, %p79
      %p82 = scmp.ne.s32.totalorder %s67, %s81
      %p83 = scmp.eq.s32.totalorder %s22, 0
      %p84 = por %p82, %p83
      %s86 = sadd.s32 %s85, 1
      %p89 = scmp.eq.s32.totalorder %s16, 7
      %p90 = scmp.ne.s32.totalorder %s85, %s87
      %p91 = scmp.eq.s32.totalorder %s16, 0
      %p92 = por %p90, %p91
      %p93 = scmp.ne.s32.totalorder %s85, %s87
      %p94 = scmp.eq.s32.totalorder %s21, 7
      %p95 = por %p93, %p94
      %p96 = scmp.ne.s32.totalorder %s87, %s88
      %p97 = scmp.eq.s32.totalorder %s21, 0
      %p98 = por %p96, %p97
      %p99 = scmp.ne.s32.totalorder %s87, %s88
      %p100 = scmp.eq.s32.totalorder %s22, 7
      %p101 = por %p99, %p100
      %p103 = scmp.ne.s32.totalorder %s88, %s102
      %p104 = scmp.eq.s32.totalorder %s22, 0
      %p105 = por %p103, %p104
      %s107 = sadd.s32 %s106, 1
      %p110 = scmp.eq.s32.totalorder %s16, 7
      %p111 = scmp.ne.s32.totalorder %s106, %s108
      %p112 = scmp.eq.s32.totalorder %s16, 0
      %p113 = por %p111, %p112
      %p114 = scmp.ne.s32.totalorder %s106, %s108
      %p115 = scmp.eq.s32.totalorder %s21, 7
      %p116 = por %p114, %p115
      %p117 = scmp.ne.s32.totalorder %s108, %s109
      %p118 = scmp.eq.s32.totalorder %s21, 0
      %p119 = por %p117, %p118
      %p120 = scmp.ne.s32.totalorder %s108, %s109
      %p121 = scmp.eq.s32.totalorder %s22, 7
      %p122 = por %p120, %p121
      %p124 = scmp.ne.s32.totalorder %s109, %s123
      %p125 = scmp.eq.s32.totalorder %s22, 0
      %p126 = por %p124, %p125
      %s128 = sadd.s32 %s127, 1
      %p131 = scmp.eq.s32.totalorder %s16, 7
      %p132 = scmp.ne.s32.totalorder %s127, %s129
      %p133 = scmp.eq.s32.totalorder %s16, 0
      %p134 = por %p132, %p133
      %p135 = scmp.ne.s32.totalorder %s127, %s129
      %p136 = scmp.eq.s32.totalorder %s21, 7
      %p137 = por %p135, %p136
      %p138 = scmp.ne.s32.totalorder %s129, %s130
      %p139 = scmp.eq.s32.totalorder %s21, 0
      %p140 = por %p138, %p139
      %p141 = scmp.ne.s32.totalorder %s129, %s130
      %p142 = scmp.eq.s32.totalorder %s22, 7
      %p143 = por %p141, %p142
      %p145 = scmp.ne.s32.totalorder %s130, %s144
      %p146 = scmp.eq.s32.totalorder %s22, 0
      %p147 = por %p145, %p146
      %s148 = ssub.s32 %s23, %s35
      %s149 = ssub.s32 %s24, %s31
      %s150 = sor.u32 %s148, %s149
      %p151 = scmp.eq.s32.totalorder %s150, 0
      %s153 = sadd.s32 %s152, 1
      %s154 = scalar_select %p151, %s152, %s153
      %p157 = pneg %p151
      %p158 = scmp.eq.s32.totalorder %s16, 7
      %p159 = por %p157, %p158
      %p160 = scmp.ne.s32.totalorder %s152, %s155
      %p161 = scmp.eq.s32.totalorder %s16, 0
      %p162 = por %p160, %p161
      %p163 = scmp.ne.s32.totalorder %s152, %s155
      %p164 = scmp.eq.s32.totalorder %s21, 7
      %p165 = por %p163, %p164
      %p166 = scmp.ne.s32.totalorder %s155, %s156
      %p167 = scmp.eq.s32.totalorder %s21, 0
      %p168 = por %p166, %p167
      %p169 = scmp.ne.s32.totalorder %s155, %s156
      %p170 = scmp.eq.s32.totalorder %s22, 7
      %p171 = por %p169, %p170
      %p173 = scmp.ne.s32.totalorder %s156, %s172
      %p174 = scmp.eq.s32.totalorder %s22, 0
      %p175 = por %p173, %p174
      %s176 = ssub.s32 %s23, %s35
      %p177 = scmp.eq.s32.totalorder %s176, 0
      %s179 = sadd.s32 %s178, 1
      %s180 = scalar_select %p177, %s178, %s179
      %p183 = pneg %p177
      %p184 = scmp.eq.s32.totalorder %s16, 7
      %p185 = por %p183, %p184
      %p186 = scmp.ne.s32.totalorder %s178, %s181
      %p187 = scmp.eq.s32.totalorder %s16, 0
      %p188 = por %p186, %p187
      %p189 = scmp.ne.s32.totalorder %s178, %s181
      %p190 = scmp.eq.s32.totalorder %s21, 7
      %p191 = por %p189, %p190
      %p192 = scmp.ne.s32.totalorder %s181, %s182
      %p193 = scmp.eq.s32.totalorder %s21, 0
      %p194 = por %p192, %p193
      %p195 = scmp.ne.s32.totalorder %s181, %s182
      %p196 = scmp.eq.s32.totalorder %s22, 7
      %p197 = por %p195, %p196
      %p199 = scmp.ne.s32.totalorder %s182, %s198
      %p200 = scmp.eq.s32.totalorder %s22, 0
      %p201 = por %p199, %p200
      %p202 = scmp.le.s32.totalorder 1, %s16
      %p203 = scmp.lt.s32.totalorder %s16, 9
      %p204 = pnand %p202, %p203
      %p205 = pneg %p204
      // Predicated region
      $region9: #{convlstm_forward.2} parent=5 // pred_check
        _
      $region10: #{convlstm_forward.2} parent=5 // pred_check_branch
        %207 = sbr.rel (%p204) target = $region12
      $region11: #{convlstm_forward.2} parent=5 // pred_region
        %s208 = ssub.s32 %s16, 1
        // Predicated region
        $region13: #{convlstm_forward.2} parent=11 // pred_check
          %p209 = pneg %p77
        $region14: #{convlstm_forward.2} parent=11 // pred_check_branch
          %211 = sbr.rel (%p209) target = $region16
        $region15: #{convlstm_forward.2} parent=11 // pred_region
          _
        $region16: #{convlstm_forward.2} parent=11 // pred_fallthru
          _
        // Predicated region
        $region17: #{convlstm_forward.2} parent=11 // pred_check
          %p212 = pneg %p98
        $region18: #{convlstm_forward.2} parent=11 // pred_check_branch
          %214 = sbr.rel (%p212) target = $region20
        $region19: #{convlstm_forward.2} parent=11 // pred_region
          _
        $region20: #{convlstm_forward.2} parent=11 // pred_fallthru
          _
        // Predicated region
        $region21: #{convlstm_forward.2} parent=11 // pred_check
          %p215 = pneg %p119
        $region22: #{convlstm_forward.2} parent=11 // pred_check_branch
          %217 = sbr.rel (%p215) target = $region24
        $region23: #{convlstm_forward.2} parent=11 // pred_region
          _
        $region24: #{convlstm_forward.2} parent=11 // pred_fallthru
          _
        // Predicated region
        $region25: #{convlstm_forward.2} parent=11 // pred_check
          %p218 = pneg %p140
        $region26: #{convlstm_forward.2} parent=11 // pred_check_branch
          %220 = sbr.rel (%p218) target = $region28
        $region27: #{convlstm_forward.2} parent=11 // pred_region
          _
        $region28: #{convlstm_forward.2} parent=11 // pred_fallthru
          _
      $region12: #{convlstm_forward.2} parent=5 // pred_fallthru
        _
      %p221 = scmp.lt.s32.totalorder %s16, 8
      // Predicated region
      $region29: #{convlstm_forward.2} parent=5 // pred_check
        %p222 = pneg %p221
      $region30: #{convlstm_forward.2} parent=5 // pred_check_branch
        %224 = sbr.rel (%p222) target = $region32
      $region31: #{convlstm_forward.2} parent=5 // pred_region
        // Predicated region
        $region33: #{convlstm_forward.2} parent=31 // pred_check
          %p225 = pneg %p50
        $region34: #{convlstm_forward.2} parent=31 // pred_check_branch
          %227 = sbr.rel (%p225) target = $region36
        $region35: #{convlstm_forward.2} parent=31 // pred_region
          %p228 = scmp.lt.s32.totalorder %s23, 1
          %s229 = scalar_select %p228, %s23, 1
          %p230 = scmp.lt.s32.totalorder %s24, 3
          %s231 = scalar_select %p230, %s24, 3
          %s232 = smul.addr %s231, 8
          %s233 = smul.addr %s229, 32
          %s234 = sadd.s32 %s232, %s233
          %s235 = smul.addr %s234, 8
          %s236 = scalar_lea.vmem %s0, %s235
        $region36: #{convlstm_forward.2} parent=31 // pred_fallthru
          _
      $region32: #{convlstm_forward.2} parent=5 // pred_fallthru
        _
      %p237 = scmp.le.s32.totalorder 1, %s16
      %p238 = scmp.lt.s32.totalorder %s16, 9
      %p239 = pnand %p237, %p238
      %p240 = pneg %p239
      // Predicated region
      $region37: #{convlstm_forward.2} parent=5 // pred_check
        _
      $region38: #{convlstm_forward.2} parent=5 // pred_check_branch
        %242 = sbr.rel (%p239) target = $region40
      $region39: #{convlstm_forward.2} parent=5 // pred_region
        %s243 = ssub.s32 %s16, 1
        %p244 = scmp.lt.s32.totalorder %s25, 1
        %s245 = scalar_select %p244, %s25, 1
        %p246 = scmp.lt.s32.totalorder %s26, 3
        %s247 = scalar_select %p246, %s26, 3
        %s248 = smul.addr %s247, 8
        %s249 = smul.addr %s245, 32
        %s250 = sadd.s32 %s248, %s249
        %s251 = smul.addr %s250, 8
        %s252 = scalar_lea.vmem %s0, %s251
        %p253 = pneg %p56
        %p254 = pneg %p53
        %p255 = pneg %p77
        %p256 = pneg %p74
        %p257 = pneg %p98
        %p258 = pneg %p95
        %p259 = pneg %p119
        %p260 = pneg %p116
        %p261 = pneg %p140
        %p262 = pneg %p137
        %p263 = pneg %p168
        %p264 = pneg %p165
        %p265 = scmp.lt.s32.totalorder %s25, 1
        %s266 = scalar_select %p265, %s25, 1
        %p267 = scmp.lt.s32.totalorder %s26, 3
        %s268 = scalar_select %p267, %s26, 3
        %s269 = smul.addr %s268, 8
        %s270 = smul.addr %s266, 32
        %s271 = sadd.s32 %s269, %s270
        %s272 = smul.addr %s271, 8
        %s273 = scalar_lea.vmem %s5, %s272
        %p274 = pneg %p194
        %p275 = pneg %p191
        %s276 = sand.u32 %s181, 1
        %s277 = scalar_lea.sflag [#allocation6], %s276
        %s278 = sand.u32 %s181, 1
        %s279 = smul.addr %s278, 64
        %s280 = scalar_lea.vmem [#allocation5], %s279
        %p281 = scmp.lt.s32.totalorder %s25, 1
        %s282 = scalar_select %p281, %s25, 1
        %p283 = scmp.lt.s32.totalorder %s26, 3
        %s284 = scalar_select %p283, %s26, 3
        %s285 = smul.addr %s284, 8
        %s286 = smul.addr %s282, 32
        %s287 = sadd.s32 %s285, %s286
        %s288 = smul.addr %s287, 8
        %s289 = scalar_lea.vmem %s0, %s288
        %p290 = scmp.lt.s32.totalorder %s25, 1
        %s291 = scalar_select %p290, %s25, 1
        %p292 = scmp.lt.s32.totalorder %s26, 3
        %s293 = scalar_select %p292, %s26, 3
        %s294 = smul.addr %s293, 8
        %s295 = smul.addr %s291, 32
        %s296 = sadd.s32 %s294, %s295
        %s297 = smul.addr %s296, 8
        %s298 = scalar_lea.vmem %s5, %s297
        %p302 = scmp.eq.s32.totalorder %s26, 0
        // Predicated region
        $region41: #{convlstm_forward.2} parent=39 // pred_check
          %p303 = pneg %p302
        $region42: #{convlstm_forward.2} parent=39 // pred_check_branch
          %305 = sbr.rel (%p303) target = $region44
        $region43: #{convlstm_forward.2} parent=39 // pred_region
          %306 = vst [vmem:[#allocation2] sm:$0xff] 0
          %307 = vst [vmem:[#allocation2 + $0x8] sm:$0xff] 0
          %308 = vst [vmem:[#allocation2 + $0x10] sm:$0xff] 0
          %309 = vst [vmem:[#allocation2 + $0x18] sm:$0xff] 0
          %310 = vst [vmem:[#allocation2 + $0x20] sm:$0xff] 0
          %311 = vst [vmem:[#allocation2 + $0x28] sm:$0xff] 0
          %312 = vst [vmem:[#allocation2 + $0x30] sm:$0xff] 0
          %313 = vst [vmem:[#allocation2 + $0x38] sm:$0xff] 0
          %314 = vst [vmem:[#allocation2 + $0x40] sm:$0xff] 0
          %315 = vst [vmem:[#allocation2 + $0x48] sm:$0xff] 0
          %316 = vst [vmem:[#allocation2 + $0x50] sm:$0xff] 0
          %317 = vst [vmem:[#allocation2 + $0x58] sm:$0xff] 0
          %318 = vst [vmem:[#allocation2 + $0x60] sm:$0xff] 0
          %319 = vst [vmem:[#allocation2 + $0x68] sm:$0xff] 0
          %320 = vst [vmem:[#allocation2 + $0x70] sm:$0xff] 0
          %321 = vst [vmem:[#allocation2 + $0x78] sm:$0xff] 0
          %322 = vst [vmem:[#allocation3] sm:$0xff] 0.0
          %323 = vst [vmem:[#allocation3 + $0x8] sm:$0xff] 0.0
          %324 = vst [vmem:[#allocation3 + $0x10] sm:$0xff] 0.0
          %325 = vst [vmem:[#allocation3 + $0x18] sm:$0xff] 0.0
          %326 = vst [vmem:[#allocation3 + $0x20] sm:$0xff] 0.0
          %327 = vst [vmem:[#allocation3 + $0x28] sm:$0xff] 0.0
          %328 = vst [vmem:[#allocation3 + $0x30] sm:$0xff] 0.0
          %329 = vst [vmem:[#allocation3 + $0x38] sm:$0xff] 0.0
          %330 = vst [vmem:[#allocation4] sm:$0xff] 0.0
          %331 = vst [vmem:[#allocation4 + $0x8] sm:$0xff] 0.0
          %332 = vst [vmem:[#allocation4 + $0x10] sm:$0xff] 0.0
          %333 = vst [vmem:[#allocation4 + $0x18] sm:$0xff] 0.0
          %334 = vst [vmem:[#allocation4 + $0x20] sm:$0xff] 0.0
          %335 = vst [vmem:[#allocation4 + $0x28] sm:$0xff] 0.0
          %336 = vst [vmem:[#allocation4 + $0x30] sm:$0xff] 0.0
          %337 = vst [vmem:[#allocation4 + $0x38] sm:$0xff] 0.0
        $region44: #{convlstm_forward.2} parent=39 // pred_fallthru
          _
        %v338 = vld [vmem:[%s289] sm:$0xff]
        %v339 = vld [vmem:[%s289 + $0x8] sm:$0xff]
        %v340 = vld [vmem:[%s289 + $0x10] sm:$0xff]
        %v341 = vld [vmem:[%s289 + $0x18] sm:$0xff]
        %v342 = vld [vmem:[%s289 + $0x20] sm:$0xff]
        %v343 = vld [vmem:[%s289 + $0x28] sm:$0xff]
        %v344 = vld [vmem:[%s289 + $0x30] sm:$0xff]
        %v345 = vld [vmem:[%s289 + $0x38] sm:$0xff]
        %v346 = vpack.c.bf16 %v340, %v338
        %v347 = vpack.c.bf16 %v341, %v339
        %v348 = vpack.c.bf16 %v344, %v342
        %v349 = vpack.c.bf16 %v345, %v343
        %350 = vst [vmem:[#allocation2 + $0x8] sm:$0xff] %v346
        %351 = vst [vmem:[#allocation2 + $0x10] sm:$0xff] %v347
        %352 = vst [vmem:[#allocation2 + $0x28] sm:$0xff] %v348
        %353 = vst [vmem:[#allocation2 + $0x30] sm:$0xff] %v349
        %v354 = vld [vmem:[#allocation3] sm:$0xff]
        %v355 = vld [vmem:[#allocation3 + $0x8] sm:$0xff]
        %v356 = vld [vmem:[#allocation3 + $0x10] sm:$0xff]
        %v357 = vld [vmem:[#allocation3 + $0x18] sm:$0xff]
        %v358 = vld [vmem:[#allocation3 + $0x20] sm:$0xff]
        %v359 = vld [vmem:[#allocation3 + $0x28] sm:$0xff]
        %v360 = vld [vmem:[#allocation3 + $0x30] sm:$0xff]
        %v361 = vld [vmem:[#allocation3 + $0x38] sm:$0xff]
        %v362 = vpack.c.bf16 %v356, %v354
        %v363 = vpack.c.bf16 %v357, %v355
        %v364 = vpack.c.bf16 %v360, %v358
        %v365 = vpack.c.bf16 %v361, %v359
        %366 = vst [vmem:[#allocation2 + $0x48] sm:$0xff] %v362
        %367 = vst [vmem:[#allocation2 + $0x50] sm:$0xff] %v363
        %368 = vst [vmem:[#allocation2 + $0x68] sm:$0xff] %v364
        %369 = vst [vmem:[#allocation2 + $0x70] sm:$0xff] %v365
        %v370 = vlaneseq
        %v371 = vand.u32 %v370, 127
        %v372 = vadd.s32 %v371, 128
        %vm373 = vcmp.lt.s32.totalorder %v371, 0
        %v374 = vsub.s32 0, %v371
        %v375 = vsel %vm373, %v374, %v371
        %v376 = vshrl.u32 %v375, 4
        %v377 = vand.u32 %v375, 15
        %v378 = vsub.s32 0, %v377
        %v379 = vsel %vm373, %v378, %v377
        %vm380 = vcmp.lt.s32.totalorder %v372, 0
        %v381 = vsub.s32 0, %v372
        %v382 = vsel %vm380, %v381, %v372
        %v383 = vshrl.u32 %v382, 4
        %v384 = vand.u32 %v382, 15
        %v385 = vsub.s32 0, %v384
        %v386 = vsel %vm380, %v385, %v384
        %vm387 = vcmp.ne.s32.totalorder %v379, 0
        %vm388 = vcmp.ne.s32.totalorder %v386, 0
        %vm389 = vcmp.lt.s32.totalorder %v379, 0
        %vm390 = vcmp.lt.s32.totalorder %v386, 0
        %vm391 = vmand %vm389, %vm387
        %vm392 = vmand %vm390, %vm388
        %v393 = vadd.s32 %v379, 16
        %v394 = vadd.s32 %v386, 16
        %v395 = vsel %vm391, %v393, %v379
        %v396 = vsel %vm392, %v394, %v386
        %v397 = vld [vmem:[#allocation2] sm:$0xff]
        %v398 = vld [vmem:[#allocation2 + $0x8] sm:$0xff]
        %v399 = vld [vmem:[#allocation2 + $0x10] sm:$0xff]
        %v400 = vld [vmem:[#allocation2 + $0x20] sm:$0xff]
        %v401 = vld [vmem:[#allocation2 + $0x28] sm:$0xff]
        %v402 = vld [vmem:[#allocation2 + $0x30] sm:$0xff]
        %v403 = vld [vmem:[#allocation2 + $0x40] sm:$0xff]
        %v404 = vld [vmem:[#allocation2 + $0x48] sm:$0xff]
        %v405 = vld [vmem:[#allocation2 + $0x50] sm:$0xff]
        %v406 = vld [vmem:[#allocation2 + $0x60] sm:$0xff]
        %v407 = vld [vmem:[#allocation2 + $0x68] sm:$0xff]
        %v408 = vld [vmem:[#allocation2 + $0x70] sm:$0xff]
        %v409 = vadd.s32 %v395, 4294967295
        %v410 = vadd.s32 %v396, 4294967295
        %vm411 = vcmp.ge.s32.totalorder %v409, 0
        %vm412 = vcmp.ge.s32.totalorder %v410, 0
        %vm413 = vcmp.le.s32.totalorder %v409, 15
        %vm414 = vcmp.le.s32.totalorder %v410, 15
        %vm415 = vmand %vm411, %vm413
        %vm416 = vmand %vm412, %vm414
        %v417 = vsel %vm415, 1, 0
        %v418 = vsel %vm416, 1, 0
        %vm419 = vcmp.eq.s32.totalorder %v417, 1
        %vm420 = vcmp.eq.s32.totalorder %v418, 1
        %vm421 = vmpackc.low %vm420, %vm419
        %v422 = vsel %vm421, 65537, 0
        %v423 = vlaneseq
        %v424 = vshrl.u32 %v423, 7
        %v425 = vsub.s32 0, %v424
        %v426 = vrot.slane %v422, %v425
        %v427 = vlaneseq
        %v428 = vshrl.u32 %v427, 7
        %v429 = vsub.s32 4, %v428
        %v430 = vrot.slane %v422, %v429
        %431 = vrot.lane.b32.xlu0 %v426, 111
        %v432 = vpop.permute.xlu0 %431
        %433 = vrot.lane.b32.xlu0 %v430, 111
        %v434 = vpop.permute.xlu0 %433
        %vm435 = vcmask 908288
        %v436 = vsel %vm435, %v432, %v434
        %vm437 = vcmp.ne.s16.totalorder %v432, 0
        %vm438 = vcmp.ne.s16.totalorder %v436, 0
        %vm439 = vcmp.ne.s16.totalorder %v434, 0
        %v440 = vsel %vm437, %v397, 0
        %v441 = vsel %vm438, %v398, 0
        %v442 = vsel %vm439, %v399, 0
        %v443 = vsel %vm437, %v400, 0
        %v444 = vsel %vm438, %v401, 0
        %v445 = vsel %vm439, %v402, 0
        %v446 = vsel %vm437, %v403, 0
        %v447 = vsel %vm438, %v404, 0
        %v448 = vsel %vm439, %v405, 0
        %v449 = vsel %vm437, %v406, 0
        %v450 = vsel %vm438, %v407, 0
        %v451 = vsel %vm439, %v408, 0
        %v452 = vld [vmem:[%s1] sm:$0xf]
        %v453 = vld [vmem:[%s1 + $0x4] sm:$0xf]
        %v454 = vld [vmem:[%s1 + $0x8] sm:$0xf]
        %v455 = vld [vmem:[%s1 + $0xc] sm:$0xf]
        %v456 = vld [vmem:[%s1 + $0x10] sm:$0xf]
        %v457 = vld [vmem:[%s1 + $0x14] sm:$0xf]
        %v458 = vld [vmem:[%s1 + $0x18] sm:$0xf]
        %v459 = vld [vmem:[%s1 + $0x1c] sm:$0xf]
        %v460 = vld [vmem:[%s1 + $0x20] sm:$0xf]
        %v461 = vld [vmem:[%s1 + $0x24] sm:$0xf]
        %v462 = vld [vmem:[%s1 + $0x28] sm:$0xf]
        %v463 = vld [vmem:[%s1 + $0x2c] sm:$0xf]
        %v464 = vld [vmem:[%s1 + $0x30] sm:$0xf]
        %v465 = vld [vmem:[%s1 + $0x34] sm:$0xf]
        %v466 = vld [vmem:[%s1 + $0x38] sm:$0xf]
        %v467 = vld [vmem:[%s1 + $0x3c] sm:$0xf]
        %s468 = scalar_lea.vmem %s1, 64
        %v469 = vld [vmem:[%s468] sm:$0xf]
        %v470 = vld [vmem:[%s468 + $0x4] sm:$0xf]
        %v471 = vld [vmem:[%s468 + $0x8] sm:$0xf]
        %v472 = vld [vmem:[%s468 + $0xc] sm:$0xf]
        %v473 = vld [vmem:[%s468 + $0x10] sm:$0xf]
        %v474 = vld [vmem:[%s468 + $0x14] sm:$0xf]
        %v475 = vld [vmem:[%s468 + $0x18] sm:$0xf]
        %v476 = vld [vmem:[%s468 + $0x1c] sm:$0xf]
        %v477 = vld [vmem:[%s468 + $0x20] sm:$0xf]
        %v478 = vld [vmem:[%s468 + $0x24] sm:$0xf]
        %v479 = vld [vmem:[%s468 + $0x28] sm:$0xf]
        %v480 = vld [vmem:[%s468 + $0x2c] sm:$0xf]
        %v481 = vld [vmem:[%s468 + $0x30] sm:$0xf]
        %v482 = vld [vmem:[%s468 + $0x34] sm:$0xf]
        %v483 = vld [vmem:[%s468 + $0x38] sm:$0xf]
        %v484 = vld [vmem:[%s468 + $0x3c] sm:$0xf]
        %v501 = vunpack.c.l.b16 %v469
        %v502 = vunpack.c.l.b16 %v470
        %v503 = vunpack.c.l.b16 %v471
        %v504 = vunpack.c.l.b16 %v472
        %v505 = vunpack.c.l.b16 %v473
        %v506 = vunpack.c.l.b16 %v474
        %v507 = vunpack.c.l.b16 %v475
        %v508 = vunpack.c.l.b16 %v476
        %v509 = vunpack.c.l.b16 %v477
        %v510 = vunpack.c.l.b16 %v478
        %v511 = vunpack.c.l.b16 %v479
        %v512 = vunpack.c.l.b16 %v480
        %v513 = vunpack.c.l.b16 %v481
        %v514 = vunpack.c.l.b16 %v482
        %v515 = vunpack.c.l.b16 %v483
        %v516 = vunpack.c.l.b16 %v484
        %v517 = vpack.c.b16 %v502, %v501
        %v518 = vpack.c.b16 %v504, %v503
        %v519 = vpack.c.b16 %v506, %v505
        %v520 = vpack.c.b16 %v508, %v507
        %v521 = vpack.c.b16 %v510, %v509
        %v522 = vpack.c.b16 %v512, %v511
        %v523 = vpack.c.b16 %v514, %v513
        %v524 = vpack.c.b16 %v516, %v515
        %537 = vrot.lane.b32.xlu0 %v397, 16
        %v538 = vpop.permute.xlu0 %537
        %539 = vrot.lane.b32.xlu0 %v398, 16
        %v540 = vpop.permute.xlu0 %539
        %541 = vrot.lane.b32.xlu0 %v399, 16
        %v542 = vpop.permute.xlu0 %541
        %543 = vrot.lane.b32.xlu0 %v400, 16
        %v544 = vpop.permute.xlu0 %543
        %545 = vrot.lane.b32.xlu0 %v401, 16
        %v546 = vpop.permute.xlu0 %545
        %547 = vrot.lane.b32.xlu0 %v402, 16
        %v548 = vpop.permute.xlu0 %547
        %549 = vrot.lane.b32.xlu0 %v403, 16
        %v550 = vpop.permute.xlu0 %549
        %551 = vrot.lane.b32.xlu0 %v404, 16
        %v552 = vpop.permute.xlu0 %551
        %553 = vrot.lane.b32.xlu0 %v405, 16
        %v554 = vpop.permute.xlu0 %553
        %555 = vrot.lane.b32.xlu0 %v406, 16
        %v556 = vpop.permute.xlu0 %555
        %557 = vrot.lane.b32.xlu0 %v407, 16
        %v558 = vpop.permute.xlu0 %557
        %559 = vrot.lane.b32.xlu0 %v408, 16
        %v560 = vpop.permute.xlu0 %559
        %vm561 = vcmask 130048
        %v562 = vsel %vm561, %v538, %v540
        %v563 = vsel %vm561, %v540, %v542
        %v564 = vsel %vm561, %v544, %v546
        %v565 = vsel %vm561, %v546, %v548
        %v566 = vsel %vm561, %v550, %v552
        %v567 = vsel %vm561, %v552, %v554
        %v568 = vsel %vm561, %v556, %v558
        %v569 = vsel %vm561, %v558, %v560
        %vm578 = vcmask 523264
        %v580 = vsel %vm578, %v517, 0
        %v583 = vsel %vm578, %v518, 0
        %v586 = vsel %vm578, %v519, 0
        %v589 = vsel %vm578, %v520, 0
        %v592 = vsel %vm578, %v521, 0
        %v595 = vsel %vm578, %v522, 0
        %v598 = vsel %vm578, %v523, 0
        %v601 = vsel %vm578, %v524, 0
        %603 = vmatprep.subr.bf16.mxu0 %v563
        %604 = vmatpush1.bf16.msra.mxu0 %v562
        %605 = vmatprep.subr.bf16.mxu0 %v565
        %606 = vmatpush1.bf16.msra.mxu0 %v564
        %607 = vmatprep.subr.bf16.mxu0 %v567
        %608 = vmatpush1.bf16.msra.mxu0 %v566
        %609 = vmatprep.subr.bf16.mxu0 %v569
        %610 = vmatpush1.bf16.msra.mxu0 %v568
        %611 = vmatprep.subr.bf16.mxu0 0
        %612 = vmatpush1.bf16.msra.mxu0 0
        %613 = vmatprep.subr.bf16.mxu0 0
        %614 = vmatpush1.bf16.msra.mxu0 0
        %615 = vmatprep.subr.bf16.mxu0 0
        %616 = vmatpush1.bf16.msra.mxu0 0
        %617 = vmatprep.subr.bf16.mxu0 0
        %618 = vmatpush1.bf16.msra.mxu0 0
        %619 = vmatprep.subr.bf16.mxu0 0
        %620 = vmatpush1.bf16.msra.mxu0 0
        %621 = vmatprep.subr.bf16.mxu0 0
        %622 = vmatpush1.bf16.msra.mxu0 0
        %623 = vmatprep.subr.bf16.mxu0 0
        %624 = vmatpush1.bf16.msra.mxu0 0
        %625 = vmatprep.subr.bf16.mxu0 0
        %626 = vmatpush1.bf16.msra.mxu0 0
        %627 = vmatprep.subr.bf16.mxu0 0
        %628 = vmatpush1.bf16.msra.mxu0 0
        %629 = vmatprep.subr.bf16.mxu0 0
        %630 = vmatpush1.bf16.msra.mxu0 0
        %631 = vmatprep.subr.bf16.mxu0 0
        %632 = vmatpush1.bf16.msra.mxu0 0
        %633 = vmatprep.subr.bf16.mxu0 0
        %634 = vmatpush1.bf16.msra.mxu0 0
        %635 = vmatprep.mubr.bf16.mxu0 0
        %636 = vmatmul.mubr.bf16.gmra.mrb[0].mxu0 %v580
        %v637 = vpop.f32.mrb[0].mxu0
        %v638 = vadd.f32 0.0, %v637
        %v639 = vpop.f32.mrb[0].mxu0
        %v640 = vadd.f32 0.0, %v639
        %v641 = vpop.f32.mrb[0].mxu0
        %v642 = vadd.f32 0.0, %v641
        %v643 = vpop.f32.mrb[0].mxu0
        %v644 = vadd.f32 0.0, %v643
        %645 = vmatprep.mubr.bf16.mxu0 0
        %646 = vmatmul.mubr.bf16.gmra.mrb[0].mxu0 %v583
        %v647 = vpop.f32.mrb[0].mxu0
        %v648 = vadd.f32 0.0, %v647
        %v649 = vpop.f32.mrb[0].mxu0
        %v650 = vadd.f32 0.0, %v649
        %v651 = vpop.f32.mrb[0].mxu0
        %v652 = vadd.f32 0.0, %v651
        %v653 = vpop.f32.mrb[0].mxu0
        %v654 = vadd.f32 0.0, %v653
        %655 = vmatprep.mubr.bf16.mxu0 0
        %656 = vmatmul.mubr.bf16.gmra.mrb[0].mxu0 %v586
        %v657 = vpop.f32.mrb[0].mxu0
        %v658 = vadd.f32 0.0, %v657
        %v659 = vpop.f32.mrb[0].mxu0
        %v660 = vadd.f32 0.0, %v659
        %v661 = vpop.f32.mrb[0].mxu0
        %v662 = vadd.f32 0.0, %v661
        %v663 = vpop.f32.mrb[0].mxu0
        %v664 = vadd.f32 0.0, %v663
        %665 = vmatprep.mubr.bf16.mxu0 0
        %666 = vmatmul.mubr.bf16.gmra.mrb[0].mxu0 %v589
        %v667 = vpop.f32.mrb[0].mxu0
        %v668 = vadd.f32 0.0, %v667
        %v669 = vpop.f32.mrb[0].mxu0
        %v670 = vadd.f32 0.0, %v669
        %v671 = vpop.f32.mrb[0].mxu0
        %v672 = vadd.f32 0.0, %v671
        %v673 = vpop.f32.mrb[0].mxu0
        %v674 = vadd.f32 0.0, %v673
        %675 = vmatprep.mubr.bf16.mxu0 0
        %676 = vmatmul.mubr.bf16.gmra.mrb[0].mxu0 %v592
        %v677 = vpop.f32.mrb[0].mxu0
        %v678 = vadd.f32 0.0, %v677
        %v679 = vpop.f32.mrb[0].mxu0
        %v680 = vadd.f32 0.0, %v679
        %v681 = vpop.f32.mrb[0].mxu0
        %v682 = vadd.f32 0.0, %v681
        %v683 = vpop.f32.mrb[0].mxu0
        %v684 = vadd.f32 0.0, %v683
        %685 = vmatprep.mubr.bf16.mxu0 0
        %686 = vmatmul.mubr.bf16.gmra.mrb[0].mxu0 %v595
        %v687 = vpop.f32.mrb[0].mxu0
        %v688 = vadd.f32 0.0, %v687
        %v689 = vpop.f32.mrb[0].mxu0
        %v690 = vadd.f32 0.0, %v689
        %v691 = vpop.f32.mrb[0].mxu0
        %v692 = vadd.f32 0.0, %v691
        %v693 = vpop.f32.mrb[0].mxu0
        %v694 = vadd.f32 0.0, %v693
        %695 = vmatprep.mubr.bf16.mxu0 0
        %696 = vmatmul.mubr.bf16.gmra.mrb[0].mxu0 %v598
        %v697 = vpop.f32.mrb[0].mxu0
        %v698 = vadd.f32 0.0, %v697
        %v699 = vpop.f32.mrb[0].mxu0
        %v700 = vadd.f32 0.0, %v699
        %v701 = vpop.f32.mrb[0].mxu0
        %v702 = vadd.f32 0.0, %v701
        %v703 = vpop.f32.mrb[0].mxu0
        %v704 = vadd.f32 0.0, %v703
        %705 = vmatprep.mubr.bf16.mxu0 0
        %706 = vmatmul.mubr.bf16.gmra.mrb[0].mxu0 %v601
        %v707 = vpop.f32.mrb[0].mxu0
        %v708 = vadd.f32 0.0, %v707
        %v709 = vpop.f32.mrb[0].mxu0
        %v710 = vadd.f32 0.0, %v709
        %v711 = vpop.f32.mrb[0].mxu0
        %v712 = vadd.f32 0.0, %v711
        %v713 = vpop.f32.mrb[0].mxu0
        %v714 = vadd.f32 0.0, %v713
        %715 = vdwg.mxu0
        %v732 = vunpack.c.l.b16 %v452
        %v733 = vunpack.c.l.b16 %v453
        %v734 = vunpack.c.l.b16 %v454
        %v735 = vunpack.c.l.b16 %v455
        %v736 = vunpack.c.l.b16 %v456
        %v737 = vunpack.c.l.b16 %v457
        %v738 = vunpack.c.l.b16 %v458
        %v739 = vunpack.c.l.b16 %v459
        %v740 = vunpack.c.l.b16 %v460
        %v741 = vunpack.c.l.b16 %v461
        %v742 = vunpack.c.l.b16 %v462
        %v743 = vunpack.c.l.b16 %v463
        %v744 = vunpack.c.l.b16 %v464
        %v745 = vunpack.c.l.b16 %v465
        %v746 = vunpack.c.l.b16 %v466
        %v747 = vunpack.c.l.b16 %v467
        %v748 = vpack.c.b16 %v733, %v732
        %v749 = vpack.c.b16 %v735, %v734
        %v750 = vpack.c.b16 %v737, %v736
        %v751 = vpack.c.b16 %v739, %v738
        %v752 = vpack.c.b16 %v741, %v740
        %v753 = vpack.c.b16 %v743, %v742
        %v754 = vpack.c.b16 %v745, %v744
        %v755 = vpack.c.b16 %v747, %v746
        %768 = vrot.lane.b32.xlu0 %v440, 17
        %v769 = vpop.permute.xlu0 %768
        %770 = vrot.lane.b32.xlu0 %v441, 17
        %v771 = vpop.permute.xlu0 %770
        %772 = vrot.lane.b32.xlu0 %v442, 17
        %v773 = vpop.permute.xlu0 %772
        %774 = vrot.lane.b32.xlu0 %v443, 17
        %v775 = vpop.permute.xlu0 %774
        %776 = vrot.lane.b32.xlu0 %v444, 17
        %v777 = vpop.permute.xlu0 %776
        %778 = vrot.lane.b32.xlu0 %v445, 17
        %v779 = vpop.permute.xlu0 %778
        %780 = vrot.lane.b32.xlu0 %v446, 17
        %v781 = vpop.permute.xlu0 %780
        %782 = vrot.lane.b32.xlu0 %v447, 17
        %v783 = vpop.permute.xlu0 %782
        %784 = vrot.lane.b32.xlu0 %v448, 17
        %v785 = vpop.permute.xlu0 %784
        %786 = vrot.lane.b32.xlu0 %v449, 17
        %v787 = vpop.permute.xlu0 %786
        %788 = vrot.lane.b32.xlu0 %v450, 17
        %v789 = vpop.permute.xlu0 %788
        %790 = vrot.lane.b32.xlu0 %v451, 17
        %v791 = vpop.permute.xlu0 %790
        %vm792 = vcmask 138240
        %v793 = vsel %vm792, %v769, %v771
        %v794 = vsel %vm792, %v771, %v773
        %v795 = vsel %vm792, %v775, %v777
        %v796 = vsel %vm792, %v777, %v779
        %v797 = vsel %vm792, %v781, %v783
        %v798 = vsel %vm792, %v783, %v785
        %v799 = vsel %vm792, %v787, %v789
        %v800 = vsel %vm792, %v789, %v791
        %v810 = vsel %vm578, %v748, 0
        %v813 = vsel %vm578, %v749, 0
        %v816 = vsel %vm578, %v750, 0
        %v819 = vsel %vm578, %v751, 0
        %v822 = vsel %vm578, %v752, 0
        %v825 = vsel %vm578, %v753, 0
        %v828 = vsel %vm578, %v754, 0
        %v831 = vsel %vm578, %v755, 0
        %833 = vmatprep.subr.bf16.mxu0 %v794
        %834 = vmatpush1.bf16.msra.mxu0 %v793
        %835 = vmatprep.subr.bf16.mxu0 %v796
        %836 = vmatpush1.bf16.msra.mxu0 %v795
        %837 = vmatprep.subr.bf16.mxu0 %v798
        %838 = vmatpush1.bf16.msra.mxu0 %v797
        %839 = vmatprep.subr.bf16.mxu0 %v800
        %840 = vmatpush1.bf16.msra.mxu0 %v799
        %841 = vmatprep.subr.bf16.mxu0 0
        %842 = vmatpush1.bf16.msra.mxu0 0
        %843 = vmatprep.subr.bf16.mxu0 0
        %844 = vmatpush1.bf16.msra.mxu0 0
        %845 = vmatprep.subr.bf16.mxu0 0
        %846 = vmatpush1.bf16.msra.mxu0 0
        %847 = vmatprep.subr.bf16.mxu0 0
        %848 = vmatpush1.bf16.msra.mxu0 0
        %849 = vmatprep.subr.bf16.mxu0 0
        %850 = vmatpush1.bf16.msra.mxu0 0
        %851 = vmatprep.subr.bf16.mxu0 0
        %852 = vmatpush1.bf16.msra.mxu0 0
        %853 = vmatprep.subr.bf16.mxu0 0
        %854 = vmatpush1.bf16.msra.mxu0 0
        %855 = vmatprep.subr.bf16.mxu0 0
        %856 = vmatpush1.bf16.msra.mxu0 0
        %857 = vmatprep.subr.bf16.mxu0 0
        %858 = vmatpush1.bf16.msra.mxu0 0
        %859 = vmatprep.subr.bf16.mxu0 0
        %860 = vmatpush1.bf16.msra.mxu0 0
        %861 = vmatprep.subr.bf16.mxu0 0
        %862 = vmatpush1.bf16.msra.mxu0 0
        %863 = vmatprep.subr.bf16.mxu0 0
        %864 = vmatpush1.bf16.msra.mxu0 0
        %865 = vmatprep.mubr.bf16.mxu0 0
        %866 = vmatmul.mubr.bf16.gmra.mrb[0].mxu0 %v810
        %v867 = vpop.f32.mrb[0].mxu0
        %v868 = vadd.f32 %v638, %v867
        %v869 = vpop.f32.mrb[0].mxu0
        %v870 = vadd.f32 %v640, %v869
        %v871 = vpop.f32.mrb[0].mxu0
        %v872 = vadd.f32 %v642, %v871
        %v873 = vpop.f32.mrb[0].mxu0
        %v874 = vadd.f32 %v644, %v873
        %875 = vmatprep.mubr.bf16.mxu0 0
        %876 = vmatmul.mubr.bf16.gmra.mrb[0].mxu0 %v813
        %v877 = vpop.f32.mrb[0].mxu0
        %v878 = vadd.f32 %v648, %v877
        %v879 = vpop.f32.mrb[0].mxu0
        %v880 = vadd.f32 %v650, %v879
        %v881 = vpop.f32.mrb[0].mxu0
        %v882 = vadd.f32 %v652, %v881
        %v883 = vpop.f32.mrb[0].mxu0
        %v884 = vadd.f32 %v654, %v883
        %885 = vmatprep.mubr.bf16.mxu0 0
        %886 = vmatmul.mubr.bf16.gmra.mrb[0].mxu0 %v816
        %v887 = vpop.f32.mrb[0].mxu0
        %v888 = vadd.f32 %v658, %v887
        %v889 = vpop.f32.mrb[0].mxu0
        %v890 = vadd.f32 %v660, %v889
        %v891 = vpop.f32.mrb[0].mxu0
        %v892 = vadd.f32 %v662, %v891
        %v893 = vpop.f32.mrb[0].mxu0
        %v894 = vadd.f32 %v664, %v893
        %895 = vmatprep.mubr.bf16.mxu0 0
        %896 = vmatmul.mubr.bf16.gmra.mrb[0].mxu0 %v819
        %v897 = vpop.f32.mrb[0].mxu0
        %v898 = vadd.f32 %v668, %v897
        %v899 = vpop.f32.mrb[0].mxu0
        %v900 = vadd.f32 %v670, %v899
        %v901 = vpop.f32.mrb[0].mxu0
        %v902 = vadd.f32 %v672, %v901
        %v903 = vpop.f32.mrb[0].mxu0
        %v904 = vadd.f32 %v674, %v903
        %905 = vmatprep.mubr.bf16.mxu0 0
        %906 = vmatmul.mubr.bf16.gmra.mrb[0].mxu0 %v822
        %v907 = vpop.f32.mrb[0].mxu0
        %v908 = vadd.f32 %v678, %v907
        %v909 = vpop.f32.mrb[0].mxu0
        %v910 = vadd.f32 %v680, %v909
        %v911 = vpop.f32.mrb[0].mxu0
        %v912 = vadd.f32 %v682, %v911
        %v913 = vpop.f32.mrb[0].mxu0
        %v914 = vadd.f32 %v684, %v913
        %915 = vmatprep.mubr.bf16.mxu0 0
        %916 = vmatmul.mubr.bf16.gmra.mrb[0].mxu0 %v825
        %v917 = vpop.f32.mrb[0].mxu0
        %v918 = vadd.f32 %v688, %v917
        %v919 = vpop.f32.mrb[0].mxu0
        %v920 = vadd.f32 %v690, %v919
        %v921 = vpop.f32.mrb[0].mxu0
        %v922 = vadd.f32 %v692, %v921
        %v923 = vpop.f32.mrb[0].mxu0
        %v924 = vadd.f32 %v694, %v923
        %925 = vmatprep.mubr.bf16.mxu0 0
        %926 = vmatmul.mubr.bf16.gmra.mrb[0].mxu0 %v828
        %v927 = vpop.f32.mrb[0].mxu0
        %v928 = vadd.f32 %v698, %v927
        %v929 = vpop.f32.mrb[0].mxu0
        %v930 = vadd.f32 %v700, %v929
        %v931 = vpop.f32.mrb[0].mxu0
        %v932 = vadd.f32 %v702, %v931
        %v933 = vpop.f32.mrb[0].mxu0
        %v934 = vadd.f32 %v704, %v933
        %935 = vmatprep.mubr.bf16.mxu0 0
        %936 = vmatmul.mubr.bf16.gmra.mrb[0].mxu0 %v831
        %v937 = vpop.f32.mrb[0].mxu0
        %v938 = vadd.f32 %v708, %v937
        %v939 = vpop.f32.mrb[0].mxu0
        %v940 = vadd.f32 %v710, %v939
        %v941 = vpop.f32.mrb[0].mxu0
        %v942 = vadd.f32 %v712, %v941
        %v943 = vpop.f32.mrb[0].mxu0
        %v944 = vadd.f32 %v714, %v943
        %945 = vdwg.mxu0
        %v946 = vadd.s32 %v395, 1
        %v947 = vadd.s32 %v396, 1
        %vm948 = vcmp.ge.s32.totalorder %v946, 0
        %vm949 = vcmp.ge.s32.totalorder %v947, 0
        %vm950 = vcmp.le.s32.totalorder %v946, 15
        %vm951 = vcmp.le.s32.totalorder %v947, 15
        %vm952 = vmand %vm948, %vm950
        %vm953 = vmand %vm949, %vm951
        %v954 = vsel %vm952, 1, 0
        %v955 = vsel %vm953, 1, 0
        %vm956 = vcmp.eq.s32.totalorder %v954, 1
        %vm957 = vcmp.eq.s32.totalorder %v955, 1
        %vm958 = vmpackc.low %vm957, %vm956
        %v959 = vsel %vm958, 65537, 0
        %v960 = vlaneseq
        %v961 = vshrl.u32 %v960, 7
        %v962 = vsub.s32 0, %v961
        %v963 = vrot.slane %v959, %v962
        %v964 = vlaneseq
        %v965 = vshrl.u32 %v964, 7
        %v966 = vsub.s32 4, %v965
        %v967 = vrot.slane %v959, %v966
        %968 = vrot.lane.b32.xlu0 %v963, 113
        %v969 = vpop.permute.xlu0 %968
        %970 = vrot.lane.b32.xlu0 %v967, 113
        %v971 = vpop.permute.xlu0 %970
        %vm972 = vcmask 924672
        %v973 = vsel %vm972, %v969, %v971
        %vm974 = vcmp.ne.s16.totalorder %v969, 0
        %vm975 = vcmp.ne.s16.totalorder %v973, 0
        %vm976 = vcmp.ne.s16.totalorder %v971, 0
        %v977 = vsel %vm974, %v397, 0
        %v978 = vsel %vm975, %v398, 0
        %v979 = vsel %vm976, %v399, 0
        %v980 = vsel %vm974, %v400, 0
        %v981 = vsel %vm975, %v401, 0
        %v982 = vsel %vm976, %v402, 0
        %v983 = vsel %vm974, %v403, 0
        %v984 = vsel %vm975, %v404, 0
        %v985 = vsel %vm976, %v405, 0
        %v986 = vsel %vm974, %v406, 0
        %v987 = vsel %vm975, %v407, 0
        %v988 = vsel %vm976, %v408, 0
        %s989 = scalar_lea.vmem %s1, 128
        %v990 = vld [vmem:[%s989] sm:$0xf]
        %v991 = vld [vmem:[%s989 + $0x4] sm:$0xf]
        %v992 = vld [vmem:[%s989 + $0x8] sm:$0xf]
        %v993 = vld [vmem:[%s989 + $0xc] sm:$0xf]
        %v994 = vld [vmem:[%s989 + $0x10] sm:$0xf]
        %v995 = vld [vmem:[%s989 + $0x14] sm:$0xf]
        %v996 = vld [vmem:[%s989 + $0x18] sm:$0xf]
        %v997 = vld [vmem:[%s989 + $0x1c] sm:$0xf]
        %v998 = vld [vmem:[%s989 + $0x20] sm:$0xf]
        %v999 = vld [vmem:[%s989 + $0x24] sm:$0xf]
        %v1000 = vld [vmem:[%s989 + $0x28] sm:$0xf]
        %v1001 = vld [vmem:[%s989 + $0x2c] sm:$0xf]
        %v1002 = vld [vmem:[%s989 + $0x30] sm:$0xf]
        %v1003 = vld [vmem:[%s989 + $0x34] sm:$0xf]
        %v1004 = vld [vmem:[%s989 + $0x38] sm:$0xf]
        %v1005 = vld [vmem:[%s989 + $0x3c] sm:$0xf]
        %v1022 = vunpack.c.l.b16 %v990
        %v1023 = vunpack.c.l.b16 %v991
        %v1024 = vunpack.c.l.b16 %v992
        %v1025 = vunpack.c.l.b16 %v993
        %v1026 = vunpack.c.l.b16 %v994
        %v1027 = vunpack.c.l.b16 %v995
        %v1028 = vunpack.c.l.b16 %v996
        %v1029 = vunpack.c.l.b16 %v997
        %v1030 = vunpack.c.l.b16 %v998
        %v1031 = vunpack.c.l.b16 %v999
        %v1032 = vunpack.c.l.b16 %v1000
        %v1033 = vunpack.c.l.b16 %v1001
        %v1034 = vunpack.c.l.b16 %v1002
        %v1035 = vunpack.c.l.b16 %v1003
        %v1036 = vunpack.c.l.b16 %v1004
        %v1037 = vunpack.c.l.b16 %v1005
        %v1038 = vpack.c.b16 %v1023, %v1022
        %v1039 = vpack.c.b16 %v1025, %v1024
        %v1040 = vpack.c.b16 %v1027, %v1026
        %v1041 = vpack.c.b16 %v1029, %v1028
        %v1042 = vpack.c.b16 %v1031, %v1030
        %v1043 = vpack.c.b16 %v1033, %v1032
        %v1044 = vpack.c.b16 %v1035, %v1034
        %v1045 = vpack.c.b16 %v1037, %v1036
        %1058 = vrot.lane.b32.xlu0 %v977, 15
        %v1059 = vpop.permute.xlu0 %1058
        %1060 = vrot.lane.b32.xlu0 %v978, 15
        %v1061 = vpop.permute.xlu0 %1060
        %1062 = vrot.lane.b32.xlu0 %v979, 15
        %v1063 = vpop.permute.xlu0 %1062
        %1064 = vrot.lane.b32.xlu0 %v980, 15
        %v1065 = vpop.permute.xlu0 %1064
        %1066 = vrot.lane.b32.xlu0 %v981, 15
        %v1067 = vpop.permute.xlu0 %1066
        %1068 = vrot.lane.b32.xlu0 %v982, 15
        %v1069 = vpop.permute.xlu0 %1068
        %1070 = vrot.lane.b32.xlu0 %v983, 15
        %v1071 = vpop.permute.xlu0 %1070
        %1072 = vrot.lane.b32.xlu0 %v984, 15
        %v1073 = vpop.permute.xlu0 %1072
        %1074 = vrot.lane.b32.xlu0 %v985, 15
        %v1075 = vpop.permute.xlu0 %1074
        %1076 = vrot.lane.b32.xlu0 %v986, 15
        %v1077 = vpop.permute.xlu0 %1076
        %1078 = vrot.lane.b32.xlu0 %v987, 15
        %v1079 = vpop.permute.xlu0 %1078
        %1080 = vrot.lane.b32.xlu0 %v988, 15
        %v1081 = vpop.permute.xlu0 %1080
        %vm1082 = vcmask 121856
        %v1083 = vsel %vm1082, %v1059, %v1061
        %v1084 = vsel %vm1082, %v1061, %v1063
        %v1085 = vsel %vm1082, %v1065, %v1067
        %v1086 = vsel %vm1082, %v1067, %v1069
        %v1087 = vsel %vm1082, %v1071, %v1073
        %v1088 = vsel %vm1082, %v1073, %v1075
        %v1089 = vsel %vm1082, %v1077, %v1079
        %v1090 = vsel %vm1082, %v1079, %v1081
        %v1100 = vsel %vm578, %v1038, 0
        %v1103 = vsel %vm578, %v1039, 0
        %v1106 = vsel %vm578, %v1040, 0
        %v1109 = vsel %vm578, %v1041, 0
        %v1112 = vsel %vm578, %v1042, 0
        %v1115 = vsel %vm578, %v1043, 0
        %v1118 = vsel %vm578, %v1044, 0
        %v1121 = vsel %vm578, %v1045, 0
        %1123 = vmatprep.subr.bf16.mxu0 %v1084
        %1124 = vmatpush1.bf16.msra.mxu0 %v1083
        %1125 = vmatprep.subr.bf16.mxu0 %v1086
        %1126 = vmatpush1.bf16.msra.mxu0 %v1085
        %1127 = vmatprep.subr.bf16.mxu0 %v1088
        %1128 = vmatpush1.bf16.msra.mxu0 %v1087
        %1129 = vmatprep.subr.bf16.mxu0 %v1090
        %1130 = vmatpush1.bf16.msra.mxu0 %v1089
        %1131 = vmatprep.subr.bf16.mxu0 0
        %1132 = vmatpush1.bf16.msra.mxu0 0
        %1133 = vmatprep.subr.bf16.mxu0 0
        %1134 = vmatpush1.bf16.msra.mxu0 0
        %1135 = vmatprep.subr.bf16.mxu0 0
        %1136 = vmatpush1.bf16.msra.mxu0 0
        %1137 = vmatprep.subr.bf16.mxu0 0
        %1138 = vmatpush1.bf16.msra.mxu0 0
        %1139 = vmatprep.subr.bf16.mxu0 0
        %1140 = vmatpush1.bf16.msra.mxu0 0
        %1141 = vmatprep.subr.bf16.mxu0 0
        %1142 = vmatpush1.bf16.msra.mxu0 0
        %1143 = vmatprep.subr.bf16.mxu0 0
        %1144 = vmatpush1.bf16.msra.mxu0 0
        %1145 = vmatprep.subr.bf16.mxu0 0
        %1146 = vmatpush1.bf16.msra.mxu0 0
        %1147 = vmatprep.subr.bf16.mxu0 0
        %1148 = vmatpush1.bf16.msra.mxu0 0
        %1149 = vmatprep.subr.bf16.mxu0 0
        %1150 = vmatpush1.bf16.msra.mxu0 0
        %1151 = vmatprep.subr.bf16.mxu0 0
        %1152 = vmatpush1.bf16.msra.mxu0 0
        %1153 = vmatprep.subr.bf16.mxu0 0
        %1154 = vmatpush1.bf16.msra.mxu0 0
        %1155 = vmatprep.mubr.bf16.mxu0 0
        %1156 = vmatmul.mubr.bf16.gmra.mrb[0].mxu0 %v1100
        %v1157 = vpop.f32.mrb[0].mxu0
        %v1158 = vadd.f32 0.0, %v1157
        %v1159 = vpop.f32.mrb[0].mxu0
        %v1160 = vadd.f32 0.0, %v1159
        %v1161 = vpop.f32.mrb[0].mxu0
        %v1162 = vadd.f32 0.0, %v1161
        %v1163 = vpop.f32.mrb[0].mxu0
        %v1164 = vadd.f32 0.0, %v1163
        %1165 = vmatprep.mubr.bf16.mxu0 0
        %1166 = vmatmul.mubr.bf16.gmra.mrb[0].mxu0 %v1103
        %v1167 = vpop.f32.mrb[0].mxu0
        %v1168 = vadd.f32 0.0, %v1167
        %v1169 = vpop.f32.mrb[0].mxu0
        %v1170 = vadd.f32 0.0, %v1169
        %v1171 = vpop.f32.mrb[0].mxu0
        %v1172 = vadd.f32 0.0, %v1171
        %v1173 = vpop.f32.mrb[0].mxu0
        %v1174 = vadd.f32 0.0, %v1173
        %1175 = vmatprep.mubr.bf16.mxu0 0
        %1176 = vmatmul.mubr.bf16.gmra.mrb[0].mxu0 %v1106
        %v1177 = vpop.f32.mrb[0].mxu0
        %v1178 = vadd.f32 0.0, %v1177
        %v1179 = vpop.f32.mrb[0].mxu0
        %v1180 = vadd.f32 0.0, %v1179
        %v1181 = vpop.f32.mrb[0].mxu0
        %v1182 = vadd.f32 0.0, %v1181
        %v1183 = vpop.f32.mrb[0].mxu0
        %v1184 = vadd.f32 0.0, %v1183
        %1185 = vmatprep.mubr.bf16.mxu0 0
        %1186 = vmatmul.mubr.bf16.gmra.mrb[0].mxu0 %v1109
        %v1187 = vpop.f32.mrb[0].mxu0
        %v1188 = vadd.f32 0.0, %v1187
        %v1189 = vpop.f32.mrb[0].mxu0
        %v1190 = vadd.f32 0.0, %v1189
        %v1191 = vpop.f32.mrb[0].mxu0
        %v1192 = vadd.f32 0.0, %v1191
        %v1193 = vpop.f32.mrb[0].mxu0
        %v1194 = vadd.f32 0.0, %v1193
        %1195 = vmatprep.mubr.bf16.mxu0 0
        %1196 = vmatmul.mubr.bf16.gmra.mrb[0].mxu0 %v1112
        %v1197 = vpop.f32.mrb[0].mxu0
        %v1198 = vadd.f32 0.0, %v1197
        %v1199 = vpop.f32.mrb[0].mxu0
        %v1200 = vadd.f32 0.0, %v1199
        %v1201 = vpop.f32.mrb[0].mxu0
        %v1202 = vadd.f32 0.0, %v1201
        %v1203 = vpop.f32.mrb[0].mxu0
        %v1204 = vadd.f32 0.0, %v1203
        %1205 = vmatprep.mubr.bf16.mxu0 0
        %1206 = vmatmul.mubr.bf16.gmra.mrb[0].mxu0 %v1115
        %v1207 = vpop.f32.mrb[0].mxu0
        %v1208 = vadd.f32 0.0, %v1207
        %v1209 = vpop.f32.mrb[0].mxu0
        %v1210 = vadd.f32 0.0, %v1209
        %v1211 = vpop.f32.mrb[0].mxu0
        %v1212 = vadd.f32 0.0, %v1211
        %v1213 = vpop.f32.mrb[0].mxu0
        %v1214 = vadd.f32 0.0, %v1213
        %1215 = vmatprep.mubr.bf16.mxu0 0
        %1216 = vmatmul.mubr.bf16.gmra.mrb[0].mxu0 %v1118
        %v1217 = vpop.f32.mrb[0].mxu0
        %v1218 = vadd.f32 0.0, %v1217
        %v1219 = vpop.f32.mrb[0].mxu0
        %v1220 = vadd.f32 0.0, %v1219
        %v1221 = vpop.f32.mrb[0].mxu0
        %v1222 = vadd.f32 0.0, %v1221
        %v1223 = vpop.f32.mrb[0].mxu0
        %v1224 = vadd.f32 0.0, %v1223
        %1225 = vmatprep.mubr.bf16.mxu0 0
        %1226 = vmatmul.mubr.bf16.gmra.mrb[0].mxu0 %v1121
        %v1227 = vpop.f32.mrb[0].mxu0
        %v1228 = vadd.f32 0.0, %v1227
        %v1229 = vpop.f32.mrb[0].mxu0
        %v1230 = vadd.f32 0.0, %v1229
        %v1231 = vpop.f32.mrb[0].mxu0
        %v1232 = vadd.f32 0.0, %v1231
        %v1233 = vpop.f32.mrb[0].mxu0
        %v1234 = vadd.f32 0.0, %v1233
        %1235 = vdwg.mxu0
        %v1236 = vadd.f32 %v868, %v1158
        %v1237 = vadd.f32 %v870, %v1160
        %v1238 = vadd.f32 %v872, %v1162
        %v1239 = vadd.f32 %v874, %v1164
        %v1240 = vadd.f32 %v878, %v1168
        %v1241 = vadd.f32 %v880, %v1170
        %v1242 = vadd.f32 %v882, %v1172
        %v1243 = vadd.f32 %v884, %v1174
        %v1244 = vadd.f32 %v888, %v1178
        %v1245 = vadd.f32 %v890, %v1180
        %v1246 = vadd.f32 %v892, %v1182
        %v1247 = vadd.f32 %v894, %v1184
        %v1248 = vadd.f32 %v898, %v1188
        %v1249 = vadd.f32 %v900, %v1190
        %v1250 = vadd.f32 %v902, %v1192
        %v1251 = vadd.f32 %v904, %v1194
        %v1252 = vadd.f32 %v908, %v1198
        %v1253 = vadd.f32 %v910, %v1200
        %v1254 = vadd.f32 %v912, %v1202
        %v1255 = vadd.f32 %v914, %v1204
        %v1256 = vadd.f32 %v918, %v1208
        %v1257 = vadd.f32 %v920, %v1210
        %v1258 = vadd.f32 %v922, %v1212
        %v1259 = vadd.f32 %v924, %v1214
        %v1260 = vadd.f32 %v928, %v1218
        %v1261 = vadd.f32 %v930, %v1220
        %v1262 = vadd.f32 %v932, %v1222
        %v1263 = vadd.f32 %v934, %v1224
        %v1264 = vadd.f32 %v938, %v1228
        %v1265 = vadd.f32 %v940, %v1230
        %v1266 = vadd.f32 %v942, %v1232
        %v1267 = vadd.f32 %v944, %v1234
        %1268 = vrot.lane.b32.xlu0 %v426, 127
        %v1269 = vpop.permute.xlu0 %1268
        %1270 = vrot.lane.b32.xlu0 %v430, 127
        %v1271 = vpop.permute.xlu0 %1270
        %vm1272 = vcmask 1039360
        %v1273 = vsel %vm1272, %v1269, %v1271
        %vm1274 = vcmp.ne.s16.totalorder %v1269, 0
        %vm1275 = vcmp.ne.s16.totalorder %v1273, 0
        %vm1276 = vcmp.ne.s16.totalorder %v1271, 0
        %v1277 = vsel %vm1274, %v397, 0
        %v1278 = vsel %vm1275, %v398, 0
        %v1279 = vsel %vm1276, %v399, 0
        %v1280 = vsel %vm1274, %v400, 0
        %v1281 = vsel %vm1275, %v401, 0
        %v1282 = vsel %vm1276, %v402, 0
        %v1283 = vsel %vm1274, %v403, 0
        %v1284 = vsel %vm1275, %v404, 0
        %v1285 = vsel %vm1276, %v405, 0
        %v1286 = vsel %vm1274, %v406, 0
        %v1287 = vsel %vm1275, %v407, 0
        %v1288 = vsel %vm1276, %v408, 0
        %s1289 = scalar_lea.vmem %s1, 192
        %v1290 = vld [vmem:[%s1289] sm:$0xf]
        %v1291 = vld [vmem:[%s1289 + $0x4] sm:$0xf]
        %v1292 = vld [vmem:[%s1289 + $0x8] sm:$0xf]
        %v1293 = vld [vmem:[%s1289 + $0xc] sm:$0xf]
        %v1294 = vld [vmem:[%s1289 + $0x10] sm:$0xf]
        %v1295 = vld [vmem:[%s1289 + $0x14] sm:$0xf]
        %v1296 = vld [vmem:[%s1289 + $0x18] sm:$0xf]
        %v1297 = vld [vmem:[%s1289 + $0x1c] sm:$0xf]
        %v1298 = vld [vmem:[%s1289 + $0x20] sm:$0xf]
        %v1299 = vld [vmem:[%s1289 + $0x24] sm:$0xf]
        %v1300 = vld [vmem:[%s1289 + $0x28] sm:$0xf]
        %v1301 = vld [vmem:[%s1289 + $0x2c] sm:$0xf]
        %v1302 = vld [vmem:[%s1289 + $0x30] sm:$0xf]
        %v1303 = vld [vmem:[%s1289 + $0x34] sm:$0xf]
        %v1304 = vld [vmem:[%s1289 + $0x38] sm:$0xf]
        %v1305 = vld [vmem:[%s1289 + $0x3c] sm:$0xf]
        %v1322 = vunpack.c.l.b16 %v1290
        %v1323 = vunpack.c.l.b16 %v1291
        %v1324 = vunpack.c.l.b16 %v1292
        %v1325 = vunpack.c.l.b16 %v1293
        %v1326 = vunpack.c.l.b16 %v1294
        %v1327 = vunpack.c.l.b16 %v1295
        %v1328 = vunpack.c.l.b16 %v1296
        %v1329 = vunpack.c.l.b16 %v1297
        %v1330 = vunpack.c.l.b16 %v1298
        %v1331 = vunpack.c.l.b16 %v1299
        %v1332 = vunpack.c.l.b16 %v1300
        %v1333 = vunpack.c.l.b16 %v1301
        %v1334 = vunpack.c.l.b16 %v1302
        %v1335 = vunpack.c.l.b16 %v1303
        %v1336 = vunpack.c.l.b16 %v1304
        %v1337 = vunpack.c.l.b16 %v1305
        %v1338 = vpack.c.b16 %v1323, %v1322
        %v1339 = vpack.c.b16 %v1325, %v1324
        %v1340 = vpack.c.b16 %v1327, %v1326
        %v1341 = vpack.c.b16 %v1329, %v1328
        %v1342 = vpack.c.b16 %v1331, %v1330
        %v1343 = vpack.c.b16 %v1333, %v1332
        %v1344 = vpack.c.b16 %v1335, %v1334
        %v1345 = vpack.c.b16 %v1337, %v1336
        %1358 = vrot.lane.b32.xlu0 %v1277, 1
        %v1359 = vpop.permute.xlu0 %1358
        %1360 = vrot.lane.b32.xlu0 %v1278, 1
        %v1361 = vpop.permute.xlu0 %1360
        %1362 = vrot.lane.b32.xlu0 %v1279, 1
        %v1363 = vpop.permute.xlu0 %1362
        %1364 = vrot.lane.b32.xlu0 %v1280, 1
        %v1365 = vpop.permute.xlu0 %1364
        %1366 = vrot.lane.b32.xlu0 %v1281, 1
        %v1367 = vpop.permute.xlu0 %1366
        %1368 = vrot.lane.b32.xlu0 %v1282, 1
        %v1369 = vpop.permute.xlu0 %1368
        %1370 = vrot.lane.b32.xlu0 %v1283, 1
        %v1371 = vpop.permute.xlu0 %1370
        %1372 = vrot.lane.b32.xlu0 %v1284, 1
        %v1373 = vpop.permute.xlu0 %1372
        %1374 = vrot.lane.b32.xlu0 %v1285, 1
        %v1375 = vpop.permute.xlu0 %1374
        %1376 = vrot.lane.b32.xlu0 %v1286, 1
        %v1377 = vpop.permute.xlu0 %1376
        %1378 = vrot.lane.b32.xlu0 %v1287, 1
        %v1379 = vpop.permute.xlu0 %1378
        %1380 = vrot.lane.b32.xlu0 %v1288, 1
        %v1381 = vpop.permute.xlu0 %1380
        %vm1382 = vcmask 7168
        %v1383 = vsel %vm1382, %v1359, %v1361
        %v1384 = vsel %vm1382, %v1361, %v1363
        %v1385 = vsel %vm1382, %v1365, %v1367
        %v1386 = vsel %vm1382, %v1367, %v1369
        %v1387 = vsel %vm1382, %v1371, %v1373
        %v1388 = vsel %vm1382, %v1373, %v1375
        %v1389 = vsel %vm1382, %v1377, %v1379
        %v1390 = vsel %vm1382, %v1379, %v1381
        %v1400 = vsel %vm578, %v1338, 0
        %v1403 = vsel %vm578, %v1339, 0
        %v1406 = vsel %vm578, %v1340, 0
        %v1409 = vsel %vm578, %v1341, 0
        %v1412 = vsel %vm578, %v1342, 0
        %v1415 = vsel %vm578, %v1343, 0
        %v1418 = vsel %vm578, %v1344, 0
        %v1421 = vsel %vm578, %v1345, 0
        %1423 = vmatprep.subr.bf16.mxu0 %v1384
        %1424 = vmatpush1.bf16.msra.mxu0 %v1383
        %1425 = vmatprep.subr.bf16.mxu0 %v1386
        %1426 = vmatpush1.bf16.msra.mxu0 %v1385
        %1427 = vmatprep.subr.bf16.mxu0 %v1388
        %1428 = vmatpush1.bf16.msra.mxu0 %v1387
        %1429 = vmatprep.subr.bf16.mxu0 %v1390
        %1430 = vmatpush1.bf16.msra.mxu0 %v1389
        %1431 = vmatprep.subr.bf16.mxu0 0
        %1432 = vmatpush1.bf16.msra.mxu0 0
        %1433 = vmatprep.subr.bf16.mxu0 0
        %1434 = vmatpush1.bf16.msra.mxu0 0
        %1435 = vmatprep.subr.bf16.mxu0 0
        %1436 = vmatpush1.bf16.msra.mxu0 0
        %1437 = vmatprep.subr.bf16.mxu0 0
        %1438 = vmatpush1.bf16.msra.mxu0 0
        %1439 = vmatprep.subr.bf16.mxu0 0
        %1440 = vmatpush1.bf16.msra.mxu0 0
        %1441 = vmatprep.subr.bf16.mxu0 0
        %1442 = vmatpush1.bf16.msra.mxu0 0
        %1443 = vmatprep.subr.bf16.mxu0 0
        %1444 = vmatpush1.bf16.msra.mxu0 0
        %1445 = vmatprep.subr.bf16.mxu0 0
        %1446 = vmatpush1.bf16.msra.mxu0 0
        %1447 = vmatprep.subr.bf16.mxu0 0
        %1448 = vmatpush1.bf16.msra.mxu0 0
        %1449 = vmatprep.subr.bf16.mxu0 0
        %1450 = vmatpush1.bf16.msra.mxu0 0
        %1451 = vmatprep.subr.bf16.mxu0 0
        %1452 = vmatpush1.bf16.msra.mxu0 0
        %1453 = vmatprep.subr.bf16.mxu0 0
        %1454 = vmatpush1.bf16.msra.mxu0 0
        %1455 = vmatprep.mubr.bf16.mxu0 0
        %1456 = vmatmul.mubr.bf16.gmra.mrb[0].mxu0 %v1400
        %v1457 = vpop.f32.mrb[0].mxu0
        %v1458 = vadd.f32 0.0, %v1457
        %v1459 = vpop.f32.mrb[0].mxu0
        %v1460 = vadd.f32 0.0, %v1459
        %v1461 = vpop.f32.mrb[0].mxu0
        %v1462 = vadd.f32 0.0, %v1461
        %v1463 = vpop.f32.mrb[0].mxu0
        %v1464 = vadd.f32 0.0, %v1463
        %1465 = vmatprep.mubr.bf16.mxu0 0
        %1466 = vmatmul.mubr.bf16.gmra.mrb[0].mxu0 %v1403
        %v1467 = vpop.f32.mrb[0].mxu0
        %v1468 = vadd.f32 0.0, %v1467
        %v1469 = vpop.f32.mrb[0].mxu0
        %v1470 = vadd.f32 0.0, %v1469
        %v1471 = vpop.f32.mrb[0].mxu0
        %v1472 = vadd.f32 0.0, %v1471
        %v1473 = vpop.f32.mrb[0].mxu0
        %v1474 = vadd.f32 0.0, %v1473
        %1475 = vmatprep.mubr.bf16.mxu0 0
        %1476 = vmatmul.mubr.bf16.gmra.mrb[0].mxu0 %v1406
        %v1477 = vpop.f32.mrb[0].mxu0
        %v1478 = vadd.f32 0.0, %v1477
        %v1479 = vpop.f32.mrb[0].mxu0
        %v1480 = vadd.f32 0.0, %v1479
        %v1481 = vpop.f32.mrb[0].mxu0
        %v1482 = vadd.f32 0.0, %v1481
        %v1483 = vpop.f32.mrb[0].mxu0
        %v1484 = vadd.f32 0.0, %v1483
        %1485 = vmatprep.mubr.bf16.mxu0 0
        %1486 = vmatmul.mubr.bf16.gmra.mrb[0].mxu0 %v1409
        %v1487 = vpop.f32.mrb[0].mxu0
        %v1488 = vadd.f32 0.0, %v1487
        %v1489 = vpop.f32.mrb[0].mxu0
        %v1490 = vadd.f32 0.0, %v1489
        %v1491 = vpop.f32.mrb[0].mxu0
        %v1492 = vadd.f32 0.0, %v1491
        %v1493 = vpop.f32.mrb[0].mxu0
        %v1494 = vadd.f32 0.0, %v1493
        %1495 = vmatprep.mubr.bf16.mxu0 0
        %1496 = vmatmul.mubr.bf16.gmra.mrb[0].mxu0 %v1412
        %v1497 = vpop.f32.mrb[0].mxu0
        %v1498 = vadd.f32 0.0, %v1497
        %v1499 = vpop.f32.mrb[0].mxu0
        %v1500 = vadd.f32 0.0, %v1499
        %v1501 = vpop.f32.mrb[0].mxu0
        %v1502 = vadd.f32 0.0, %v1501
        %v1503 = vpop.f32.mrb[0].mxu0
        %v1504 = vadd.f32 0.0, %v1503
        %1505 = vmatprep.mubr.bf16.mxu0 0
        %1506 = vmatmul.mubr.bf16.gmra.mrb[0].mxu0 %v1415
        %v1507 = vpop.f32.mrb[0].mxu0
        %v1508 = vadd.f32 0.0, %v1507
        %v1509 = vpop.f32.mrb[0].mxu0
        %v1510 = vadd.f32 0.0, %v1509
        %v1511 = vpop.f32.mrb[0].mxu0
        %v1512 = vadd.f32 0.0, %v1511
        %v1513 = vpop.f32.mrb[0].mxu0
        %v1514 = vadd.f32 0.0, %v1513
        %1515 = vmatprep.mubr.bf16.mxu0 0
        %1516 = vmatmul.mubr.bf16.gmra.mrb[0].mxu0 %v1418
        %v1517 = vpop.f32.mrb[0].mxu0
        %v1518 = vadd.f32 0.0, %v1517
        %v1519 = vpop.f32.mrb[0].mxu0
        %v1520 = vadd.f32 0.0, %v1519
        %v1521 = vpop.f32.mrb[0].mxu0
        %v1522 = vadd.f32 0.0, %v1521
        %v1523 = vpop.f32.mrb[0].mxu0
        %v1524 = vadd.f32 0.0, %v1523
        %1525 = vmatprep.mubr.bf16.mxu0 0
        %1526 = vmatmul.mubr.bf16.gmra.mrb[0].mxu0 %v1421
        %v1527 = vpop.f32.mrb[0].mxu0
        %v1528 = vadd.f32 0.0, %v1527
        %v1529 = vpop.f32.mrb[0].mxu0
        %v1530 = vadd.f32 0.0, %v1529
        %v1531 = vpop.f32.mrb[0].mxu0
        %v1532 = vadd.f32 0.0, %v1531
        %v1533 = vpop.f32.mrb[0].mxu0
        %v1534 = vadd.f32 0.0, %v1533
        %1535 = vdwg.mxu0
        %v1536 = vadd.f32 %v1236, %v1458
        %v1537 = vadd.f32 %v1237, %v1460
        %v1538 = vadd.f32 %v1238, %v1462
        %v1539 = vadd.f32 %v1239, %v1464
        %v1540 = vadd.f32 %v1240, %v1468
        %v1541 = vadd.f32 %v1241, %v1470
        %v1542 = vadd.f32 %v1242, %v1472
        %v1543 = vadd.f32 %v1243, %v1474
        %v1544 = vadd.f32 %v1244, %v1478
        %v1545 = vadd.f32 %v1245, %v1480
        %v1546 = vadd.f32 %v1246, %v1482
        %v1547 = vadd.f32 %v1247, %v1484
        %v1548 = vadd.f32 %v1248, %v1488
        %v1549 = vadd.f32 %v1249, %v1490
        %v1550 = vadd.f32 %v1250, %v1492
        %v1551 = vadd.f32 %v1251, %v1494
        %v1552 = vadd.f32 %v1252, %v1498
        %v1553 = vadd.f32 %v1253, %v1500
        %v1554 = vadd.f32 %v1254, %v1502
        %v1555 = vadd.f32 %v1255, %v1504
        %v1556 = vadd.f32 %v1256, %v1508
        %v1557 = vadd.f32 %v1257, %v1510
        %v1558 = vadd.f32 %v1258, %v1512
        %v1559 = vadd.f32 %v1259, %v1514
        %v1560 = vadd.f32 %v1260, %v1518
        %v1561 = vadd.f32 %v1261, %v1520
        %v1562 = vadd.f32 %v1262, %v1522
        %v1563 = vadd.f32 %v1263, %v1524
        %v1564 = vadd.f32 %v1264, %v1528
        %v1565 = vadd.f32 %v1265, %v1530
        %v1566 = vadd.f32 %v1266, %v1532
        %v1567 = vadd.f32 %v1267, %v1534
        %s1568 = scalar_lea.vmem %s1, 256
        %v1569 = vld [vmem:[%s1568] sm:$0xf]
        %v1570 = vld [vmem:[%s1568 + $0x4] sm:$0xf]
        %v1571 = vld [vmem:[%s1568 + $0x8] sm:$0xf]
        %v1572 = vld [vmem:[%s1568 + $0xc] sm:$0xf]
        %v1573 = vld [vmem:[%s1568 + $0x10] sm:$0xf]
        %v1574 = vld [vmem:[%s1568 + $0x14] sm:$0xf]
        %v1575 = vld [vmem:[%s1568 + $0x18] sm:$0xf]
        %v1576 = vld [vmem:[%s1568 + $0x1c] sm:$0xf]
        %v1577 = vld [vmem:[%s1568 + $0x20] sm:$0xf]
        %v1578 = vld [vmem:[%s1568 + $0x24] sm:$0xf]
        %v1579 = vld [vmem:[%s1568 + $0x28] sm:$0xf]
        %v1580 = vld [vmem:[%s1568 + $0x2c] sm:$0xf]
        %v1581 = vld [vmem:[%s1568 + $0x30] sm:$0xf]
        %v1582 = vld [vmem:[%s1568 + $0x34] sm:$0xf]
        %v1583 = vld [vmem:[%s1568 + $0x38] sm:$0xf]
        %v1584 = vld [vmem:[%s1568 + $0x3c] sm:$0xf]
        %v1601 = vunpack.c.l.b16 %v1569
        %v1602 = vunpack.c.l.b16 %v1570
        %v1603 = vunpack.c.l.b16 %v1571
        %v1604 = vunpack.c.l.b16 %v1572
        %v1605 = vunpack.c.l.b16 %v1573
        %v1606 = vunpack.c.l.b16 %v1574
        %v1607 = vunpack.c.l.b16 %v1575
        %v1608 = vunpack.c.l.b16 %v1576
        %v1609 = vunpack.c.l.b16 %v1577
        %v1610 = vunpack.c.l.b16 %v1578
        %v1611 = vunpack.c.l.b16 %v1579
        %v1612 = vunpack.c.l.b16 %v1580
        %v1613 = vunpack.c.l.b16 %v1581
        %v1614 = vunpack.c.l.b16 %v1582
        %v1615 = vunpack.c.l.b16 %v1583
        %v1616 = vunpack.c.l.b16 %v1584
        %v1617 = vpack.c.b16 %v1602, %v1601
        %v1618 = vpack.c.b16 %v1604, %v1603
        %v1619 = vpack.c.b16 %v1606, %v1605
        %v1620 = vpack.c.b16 %v1608, %v1607
        %v1621 = vpack.c.b16 %v1610, %v1609
        %v1622 = vpack.c.b16 %v1612, %v1611
        %v1623 = vpack.c.b16 %v1614, %v1613
        %v1624 = vpack.c.b16 %v1616, %v1615
        %v1626 = vsel %vm578, %v1617, 0
        %v1629 = vsel %vm578, %v1618, 0
        %v1632 = vsel %vm578, %v1619, 0
        %v1635 = vsel %vm578, %v1620, 0
        %v1638 = vsel %vm578, %v1621, 0
        %v1641 = vsel %vm578, %v1622, 0
        %v1644 = vsel %vm578, %v1623, 0
        %v1647 = vsel %vm578, %v1624, 0
        %1649 = vmatprep.subr.bf16.mxu0 %v399
        %1650 = vmatpush1.bf16.msra.mxu0 %v398
        %1651 = vmatprep.subr.bf16.mxu0 %v402
        %1652 = vmatpush1.bf16.msra.mxu0 %v401
        %1653 = vmatprep.subr.bf16.mxu0 %v405
        %1654 = vmatpush1.bf16.msra.mxu0 %v404
        %1655 = vmatprep.subr.bf16.mxu0 %v408
        %1656 = vmatpush1.bf16.msra.mxu0 %v407
        %1657 = vmatprep.subr.bf16.mxu0 0
        %1658 = vmatpush1.bf16.msra.mxu0 0
        %1659 = vmatprep.subr.bf16.mxu0 0
        %1660 = vmatpush1.bf16.msra.mxu0 0
        %1661 = vmatprep.subr.bf16.mxu0 0
        %1662 = vmatpush1.bf16.msra.mxu0 0
        %1663 = vmatprep.subr.bf16.mxu0 0
        %1664 = vmatpush1.bf16.msra.mxu0 0
        %1665 = vmatprep.subr.bf16.mxu0 0
        %1666 = vmatpush1.bf16.msra.mxu0 0
        %1667 = vmatprep.subr.bf16.mxu0 0
        %1668 = vmatpush1.bf16.msra.mxu0 0
        %1669 = vmatprep.subr.bf16.mxu0 0
        %1670 = vmatpush1.bf16.msra.mxu0 0
        %1671 = vmatprep.subr.bf16.mxu0 0
        %1672 = vmatpush1.bf16.msra.mxu0 0
        %1673 = vmatprep.subr.bf16.mxu0 0
        %1674 = vmatpush1.bf16.msra.mxu0 0
        %1675 = vmatprep.subr.bf16.mxu0 0
        %1676 = vmatpush1.bf16.msra.mxu0 0
        %1677 = vmatprep.subr.bf16.mxu0 0
        %1678 = vmatpush1.bf16.msra.mxu0 0
        %1679 = vmatprep.subr.bf16.mxu0 0
        %1680 = vmatpush1.bf16.msra.mxu0 0
        %1681 = vmatprep.mubr.bf16.mxu0 0
        %1682 = vmatmul.mubr.bf16.gmra.mrb[0].mxu0 %v1626
        %v1683 = vpop.f32.mrb[0].mxu0
        %v1684 = vadd.f32 0.0, %v1683
        %v1685 = vpop.f32.mrb[0].mxu0
        %v1686 = vadd.f32 0.0, %v1685
        %v1687 = vpop.f32.mrb[0].mxu0
        %v1688 = vadd.f32 0.0, %v1687
        %v1689 = vpop.f32.mrb[0].mxu0
        %v1690 = vadd.f32 0.0, %v1689
        %1691 = vmatprep.mubr.bf16.mxu0 0
        %1692 = vmatmul.mubr.bf16.gmra.mrb[0].mxu0 %v1629
        %v1693 = vpop.f32.mrb[0].mxu0
        %v1694 = vadd.f32 0.0, %v1693
        %v1695 = vpop.f32.mrb[0].mxu0
        %v1696 = vadd.f32 0.0, %v1695
        %v1697 = vpop.f32.mrb[0].mxu0
        %v1698 = vadd.f32 0.0, %v1697
        %v1699 = vpop.f32.mrb[0].mxu0
        %v1700 = vadd.f32 0.0, %v1699
        %1701 = vmatprep.mubr.bf16.mxu0 0
        %1702 = vmatmul.mubr.bf16.gmra.mrb[0].mxu0 %v1632
        %v1703 = vpop.f32.mrb[0].mxu0
        %v1704 = vadd.f32 0.0, %v1703
        %v1705 = vpop.f32.mrb[0].mxu0
        %v1706 = vadd.f32 0.0, %v1705
        %v1707 = vpop.f32.mrb[0].mxu0
        %v1708 = vadd.f32 0.0, %v1707
        %v1709 = vpop.f32.mrb[0].mxu0
        %v1710 = vadd.f32 0.0, %v1709
        %1711 = vmatprep.mubr.bf16.mxu0 0
        %1712 = vmatmul.mubr.bf16.gmra.mrb[0].mxu0 %v1635
        %v1713 = vpop.f32.mrb[0].mxu0
        %v1714 = vadd.f32 0.0, %v1713
        %v1715 = vpop.f32.mrb[0].mxu0
        %v1716 = vadd.f32 0.0, %v1715
        %v1717 = vpop.f32.mrb[0].mxu0
        %v1718 = vadd.f32 0.0, %v1717
        %v1719 = vpop.f32.mrb[0].mxu0
        %v1720 = vadd.f32 0.0, %v1719
        %1721 = vmatprep.mubr.bf16.mxu0 0
        %1722 = vmatmul.mubr.bf16.gmra.mrb[0].mxu0 %v1638
        %v1723 = vpop.f32.mrb[0].mxu0
        %v1724 = vadd.f32 0.0, %v1723
        %v1725 = vpop.f32.mrb[0].mxu0
        %v1726 = vadd.f32 0.0, %v1725
        %v1727 = vpop.f32.mrb[0].mxu0
        %v1728 = vadd.f32 0.0, %v1727
        %v1729 = vpop.f32.mrb[0].mxu0
        %v1730 = vadd.f32 0.0, %v1729
        %1731 = vmatprep.mubr.bf16.mxu0 0
        %1732 = vmatmul.mubr.bf16.gmra.mrb[0].mxu0 %v1641
        %v1733 = vpop.f32.mrb[0].mxu0
        %v1734 = vadd.f32 0.0, %v1733
        %v1735 = vpop.f32.mrb[0].mxu0
        %v1736 = vadd.f32 0.0, %v1735
        %v1737 = vpop.f32.mrb[0].mxu0
        %v1738 = vadd.f32 0.0, %v1737
        %v1739 = vpop.f32.mrb[0].mxu0
        %v1740 = vadd.f32 0.0, %v1739
        %1741 = vmatprep.mubr.bf16.mxu0 0
        %1742 = vmatmul.mubr.bf16.gmra.mrb[0].mxu0 %v1644
        %v1743 = vpop.f32.mrb[0].mxu0
        %v1744 = vadd.f32 0.0, %v1743
        %v1745 = vpop.f32.mrb[0].mxu0
        %v1746 = vadd.f32 0.0, %v1745
        %v1747 = vpop.f32.mrb[0].mxu0
        %v1748 = vadd.f32 0.0, %v1747
        %v1749 = vpop.f32.mrb[0].mxu0
        %v1750 = vadd.f32 0.0, %v1749
        %1751 = vmatprep.mubr.bf16.mxu0 0
        %1752 = vmatmul.mubr.bf16.gmra.mrb[0].mxu0 %v1647
        %v1753 = vpop.f32.mrb[0].mxu0
        %v1754 = vadd.f32 0.0, %v1753
        %v1755 = vpop.f32.mrb[0].mxu0
        %v1756 = vadd.f32 0.0, %v1755
        %v1757 = vpop.f32.mrb[0].mxu0
        %v1758 = vadd.f32 0.0, %v1757
        %v1759 = vpop.f32.mrb[0].mxu0
        %v1760 = vadd.f32 0.0, %v1759
        %1761 = vdwg.mxu0
        %v1762 = vadd.f32 %v1536, %v1684
        %v1763 = vadd.f32 %v1537, %v1686
        %v1764 = vadd.f32 %v1538, %v1688
        %v1765 = vadd.f32 %v1539, %v1690
        %v1766 = vadd.f32 %v1540, %v1694
        %v1767 = vadd.f32 %v1541, %v1696
        %v1768 = vadd.f32 %v1542, %v1698
        %v1769 = vadd.f32 %v1543, %v1700
        %v1770 = vadd.f32 %v1544, %v1704
        %v1771 = vadd.f32 %v1545, %v1706
        %v1772 = vadd.f32 %v1546, %v1708
        %v1773 = vadd.f32 %v1547, %v1710
        %v1774 = vadd.f32 %v1548, %v1714
        %v1775 = vadd.f32 %v1549, %v1716
        %v1776 = vadd.f32 %v1550, %v1718
        %v1777 = vadd.f32 %v1551, %v1720
        %v1778 = vadd.f32 %v1552, %v1724
        %v1779 = vadd.f32 %v1553, %v1726
        %v1780 = vadd.f32 %v1554, %v1728
        %v1781 = vadd.f32 %v1555, %v1730
        %v1782 = vadd.f32 %v1556, %v1734
        %v1783 = vadd.f32 %v1557, %v1736
        %v1784 = vadd.f32 %v1558, %v1738
        %v1785 = vadd.f32 %v1559, %v1740
        %v1786 = vadd.f32 %v1560, %v1744
        %v1787 = vadd.f32 %v1561, %v1746
        %v1788 = vadd.f32 %v1562, %v1748
        %v1789 = vadd.f32 %v1563, %v1750
        %v1790 = vadd.f32 %v1564, %v1754
        %v1791 = vadd.f32 %v1565, %v1756
        %v1792 = vadd.f32 %v1566, %v1758
        %v1793 = vadd.f32 %v1567, %v1760
        %v1794 = vld [vmem:[#allocation2 + $0x8] sm:$0xff]
        %v1795 = vld [vmem:[#allocation2 + $0x10] sm:$0xff]
        %v1796 = vld [vmem:[#allocation2 + $0x18] sm:$0xff]
        %v1797 = vld [vmem:[#allocation2 + $0x28] sm:$0xff]
        %v1798 = vld [vmem:[#allocation2 + $0x30] sm:$0xff]
        %v1799 = vld [vmem:[#allocation2 + $0x38] sm:$0xff]
        %v1800 = vld [vmem:[#allocation2 + $0x48] sm:$0xff]
        %v1801 = vld [vmem:[#allocation2 + $0x50] sm:$0xff]
        %v1802 = vld [vmem:[#allocation2 + $0x58] sm:$0xff]
        %v1803 = vld [vmem:[#allocation2 + $0x68] sm:$0xff]
        %v1804 = vld [vmem:[#allocation2 + $0x70] sm:$0xff]
        %v1805 = vld [vmem:[#allocation2 + $0x78] sm:$0xff]
        %1806 = vrot.lane.b32.xlu0 %v963, 1
        %v1807 = vpop.permute.xlu0 %1806
        %1808 = vrot.lane.b32.xlu0 %v967, 1
        %v1809 = vpop.permute.xlu0 %1808
        %v1810 = vsel %vm1382, %v1807, %v1809
        %vm1811 = vcmp.ne.s16.totalorder %v1807, 0
        %vm1812 = vcmp.ne.s16.totalorder %v1810, 0
        %vm1813 = vcmp.ne.s16.totalorder %v1809, 0
        %v1814 = vsel %vm1811, %v1794, 0
        %v1815 = vsel %vm1812, %v1795, 0
        %v1816 = vsel %vm1813, %v1796, 0
        %v1817 = vsel %vm1811, %v1797, 0
        %v1818 = vsel %vm1812, %v1798, 0
        %v1819 = vsel %vm1813, %v1799, 0
        %v1820 = vsel %vm1811, %v1800, 0
        %v1821 = vsel %vm1812, %v1801, 0
        %v1822 = vsel %vm1813, %v1802, 0
        %v1823 = vsel %vm1811, %v1803, 0
        %v1824 = vsel %vm1812, %v1804, 0
        %v1825 = vsel %vm1813, %v1805, 0
        %s1826 = scalar_lea.vmem %s1, 320
        %v1827 = vld [vmem:[%s1826] sm:$0xf]
        %v1828 = vld [vmem:[%s1826 + $0x4] sm:$0xf]
        %v1829 = vld [vmem:[%s1826 + $0x8] sm:$0xf]
        %v1830 = vld [vmem:[%s1826 + $0xc] sm:$0xf]
        %v1831 = vld [vmem:[%s1826 + $0x10] sm:$0xf]
        %v1832 = vld [vmem:[%s1826 + $0x14] sm:$0xf]
        %v1833 = vld [vmem:[%s1826 + $0x18] sm:$0xf]
        %v1834 = vld [vmem:[%s1826 + $0x1c] sm:$0xf]
        %v1835 = vld [vmem:[%s1826 + $0x20] sm:$0xf]
        %v1836 = vld [vmem:[%s1826 + $0x24] sm:$0xf]
        %v1837 = vld [vmem:[%s1826 + $0x28] sm:$0xf]
        %v1838 = vld [vmem:[%s1826 + $0x2c] sm:$0xf]
        %v1839 = vld [vmem:[%s1826 + $0x30] sm:$0xf]
        %v1840 = vld [vmem:[%s1826 + $0x34] sm:$0xf]
        %v1841 = vld [vmem:[%s1826 + $0x38] sm:$0xf]
        %v1842 = vld [vmem:[%s1826 + $0x3c] sm:$0xf]
        %v1859 = vunpack.c.l.b16 %v1827
        %v1860 = vunpack.c.l.b16 %v1828
        %v1861 = vunpack.c.l.b16 %v1829
        %v1862 = vunpack.c.l.b16 %v1830
        %v1863 = vunpack.c.l.b16 %v1831
        %v1864 = vunpack.c.l.b16 %v1832
        %v1865 = vunpack.c.l.b16 %v1833
        %v1866 = vunpack.c.l.b16 %v1834
        %v1867 = vunpack.c.l.b16 %v1835
        %v1868 = vunpack.c.l.b16 %v1836
        %v1869 = vunpack.c.l.b16 %v1837
        %v1870 = vunpack.c.l.b16 %v1838
        %v1871 = vunpack.c.l.b16 %v1839
        %v1872 = vunpack.c.l.b16 %v1840
        %v1873 = vunpack.c.l.b16 %v1841
        %v1874 = vunpack.c.l.b16 %v1842
        %v1875 = vpack.c.b16 %v1860, %v1859
        %v1876 = vpack.c.b16 %v1862, %v1861
        %v1877 = vpack.c.b16 %v1864, %v1863
        %v1878 = vpack.c.b16 %v1866, %v1865
        %v1879 = vpack.c.b16 %v1868, %v1867
        %v1880 = vpack.c.b16 %v1870, %v1869
        %v1881 = vpack.c.b16 %v1872, %v1871
        %v1882 = vpack.c.b16 %v1874, %v1873
        %1895 = vrot.lane.b32.xlu0 %v1814, 127
        %v1896 = vpop.permute.xlu0 %1895
        %1897 = vrot.lane.b32.xlu0 %v1815, 127
        %v1898 = vpop.permute.xlu0 %1897
        %1899 = vrot.lane.b32.xlu0 %v1816, 127
        %v1900 = vpop.permute.xlu0 %1899
        %1901 = vrot.lane.b32.xlu0 %v1817, 127
        %v1902 = vpop.permute.xlu0 %1901
        %1903 = vrot.lane.b32.xlu0 %v1818, 127
        %v1904 = vpop.permute.xlu0 %1903
        %1905 = vrot.lane.b32.xlu0 %v1819, 127
        %v1906 = vpop.permute.xlu0 %1905
        %1907 = vrot.lane.b32.xlu0 %v1820, 127
        %v1908 = vpop.permute.xlu0 %1907
        %1909 = vrot.lane.b32.xlu0 %v1821, 127
        %v1910 = vpop.permute.xlu0 %1909
        %1911 = vrot.lane.b32.xlu0 %v1822, 127
        %v1912 = vpop.permute.xlu0 %1911
        %1913 = vrot.lane.b32.xlu0 %v1823, 127
        %v1914 = vpop.permute.xlu0 %1913
        %1915 = vrot.lane.b32.xlu0 %v1824, 127
        %v1916 = vpop.permute.xlu0 %1915
        %1917 = vrot.lane.b32.xlu0 %v1825, 127
        %v1918 = vpop.permute.xlu0 %1917
        %v1919 = vsel %vm1272, %v1896, %v1898
        %v1920 = vsel %vm1272, %v1898, %v1900
        %v1921 = vsel %vm1272, %v1902, %v1904
        %v1922 = vsel %vm1272, %v1904, %v1906
        %v1923 = vsel %vm1272, %v1908, %v1910
        %v1924 = vsel %vm1272, %v1910, %v1912
        %v1925 = vsel %vm1272, %v1914, %v1916
        %v1926 = vsel %vm1272, %v1916, %v1918
        %v1936 = vsel %vm578, %v1875, 0
        %v1939 = vsel %vm578, %v1876, 0
        %v1942 = vsel %vm578, %v1877, 0
        %v1945 = vsel %vm578, %v1878, 0
        %v1948 = vsel %vm578, %v1879, 0
        %v1951 = vsel %vm578, %v1880, 0
        %v1954 = vsel %vm578, %v1881, 0
        %v1957 = vsel %vm578, %v1882, 0
        %1959 = vmatprep.subr.bf16.mxu0 %v1920
        %1960 = vmatpush1.bf16.msra.mxu0 %v1919
        %1961 = vmatprep.subr.bf16.mxu0 %v1922
        %1962 = vmatpush1.bf16.msra.mxu0 %v1921
        %1963 = vmatprep.subr.bf16.mxu0 %v1924
        %1964 = vmatpush1.bf16.msra.mxu0 %v1923
        %1965 = vmatprep.subr.bf16.mxu0 %v1926
        %1966 = vmatpush1.bf16.msra.mxu0 %v1925
        %1967 = vmatprep.subr.bf16.mxu0 0
        %1968 = vmatpush1.bf16.msra.mxu0 0
        %1969 = vmatprep.subr.bf16.mxu0 0
        %1970 = vmatpush1.bf16.msra.mxu0 0
        %1971 = vmatprep.subr.bf16.mxu0 0
        %1972 = vmatpush1.bf16.msra.mxu0 0
        %1973 = vmatprep.subr.bf16.mxu0 0
        %1974 = vmatpush1.bf16.msra.mxu0 0
        %1975 = vmatprep.subr.bf16.mxu0 0
        %1976 = vmatpush1.bf16.msra.mxu0 0
        %1977 = vmatprep.subr.bf16.mxu0 0
        %1978 = vmatpush1.bf16.msra.mxu0 0
        %1979 = vmatprep.subr.bf16.mxu0 0
        %1980 = vmatpush1.bf16.msra.mxu0 0
        %1981 = vmatprep.subr.bf16.mxu0 0
        %1982 = vmatpush1.bf16.msra.mxu0 0
        %1983 = vmatprep.subr.bf16.mxu0 0
        %1984 = vmatpush1.bf16.msra.mxu0 0
        %1985 = vmatprep.subr.bf16.mxu0 0
        %1986 = vmatpush1.bf16.msra.mxu0 0
        %1987 = vmatprep.subr.bf16.mxu0 0
        %1988 = vmatpush1.bf16.msra.mxu0 0
        %1989 = vmatprep.subr.bf16.mxu0 0
        %1990 = vmatpush1.bf16.msra.mxu0 0
        %1991 = vmatprep.mubr.bf16.mxu0 0
        %1992 = vmatmul.mubr.bf16.gmra.mrb[0].mxu0 %v1936
        %v1993 = vpop.f32.mrb[0].mxu0
        %v1994 = vadd.f32 0.0, %v1993
        %v1995 = vpop.f32.mrb[0].mxu0
        %v1996 = vadd.f32 0.0, %v1995
        %v1997 = vpop.f32.mrb[0].mxu0
        %v1998 = vadd.f32 0.0, %v1997
        %v1999 = vpop.f32.mrb[0].mxu0
        %v2000 = vadd.f32 0.0, %v1999
        %2001 = vmatprep.mubr.bf16.mxu0 0
        %2002 = vmatmul.mubr.bf16.gmra.mrb[0].mxu0 %v1939
        %v2003 = vpop.f32.mrb[0].mxu0
        %v2004 = vadd.f32 0.0, %v2003
        %v2005 = vpop.f32.mrb[0].mxu0
        %v2006 = vadd.f32 0.0, %v2005
        %v2007 = vpop.f32.mrb[0].mxu0
        %v2008 = vadd.f32 0.0, %v2007
        %v2009 = vpop.f32.mrb[0].mxu0
        %v2010 = vadd.f32 0.0, %v2009
        %2011 = vmatprep.mubr.bf16.mxu0 0
        %2012 = vmatmul.mubr.bf16.gmra.mrb[0].mxu0 %v1942
        %v2013 = vpop.f32.mrb[0].mxu0
        %v2014 = vadd.f32 0.0, %v2013
        %v2015 = vpop.f32.mrb[0].mxu0
        %v2016 = vadd.f32 0.0, %v2015
        %v2017 = vpop.f32.mrb[0].mxu0
        %v2018 = vadd.f32 0.0, %v2017
        %v2019 = vpop.f32.mrb[0].mxu0
        %v2020 = vadd.f32 0.0, %v2019
        %2021 = vmatprep.mubr.bf16.mxu0 0
        %2022 = vmatmul.mubr.bf16.gmra.mrb[0].mxu0 %v1945
        %v2023 = vpop.f32.mrb[0].mxu0
        %v2024 = vadd.f32 0.0, %v2023
        %v2025 = vpop.f32.mrb[0].mxu0
        %v2026 = vadd.f32 0.0, %v2025
        %v2027 = vpop.f32.mrb[0].mxu0
        %v2028 = vadd.f32 0.0, %v2027
        %v2029 = vpop.f32.mrb[0].mxu0
        %v2030 = vadd.f32 0.0, %v2029
        %2031 = vmatprep.mubr.bf16.mxu0 0
        %2032 = vmatmul.mubr.bf16.gmra.mrb[0].mxu0 %v1948
        %v2033 = vpop.f32.mrb[0].mxu0
        %v2034 = vadd.f32 0.0, %v2033
        %v2035 = vpop.f32.mrb[0].mxu0
        %v2036 = vadd.f32 0.0, %v2035
        %v2037 = vpop.f32.mrb[0].mxu0
        %v2038 = vadd.f32 0.0, %v2037
        %v2039 = vpop.f32.mrb[0].mxu0
        %v2040 = vadd.f32 0.0, %v2039
        %2041 = vmatprep.mubr.bf16.mxu0 0
        %2042 = vmatmul.mubr.bf16.gmra.mrb[0].mxu0 %v1951
        %v2043 = vpop.f32.mrb[0].mxu0
        %v2044 = vadd.f32 0.0, %v2043
        %v2045 = vpop.f32.mrb[0].mxu0
        %v2046 = vadd.f32 0.0, %v2045
        %v2047 = vpop.f32.mrb[0].mxu0
        %v2048 = vadd.f32 0.0, %v2047
        %v2049 = vpop.f32.mrb[0].mxu0
        %v2050 = vadd.f32 0.0, %v2049
        %2051 = vmatprep.mubr.bf16.mxu0 0
        %2052 = vmatmul.mubr.bf16.gmra.mrb[0].mxu0 %v1954
        %v2053 = vpop.f32.mrb[0].mxu0
        %v2054 = vadd.f32 0.0, %v2053
        %v2055 = vpop.f32.mrb[0].mxu0
        %v2056 = vadd.f32 0.0, %v2055
        %v2057 = vpop.f32.mrb[0].mxu0
        %v2058 = vadd.f32 0.0, %v2057
        %v2059 = vpop.f32.mrb[0].mxu0
        %v2060 = vadd.f32 0.0, %v2059
        %2061 = vmatprep.mubr.bf16.mxu0 0
        %2062 = vmatmul.mubr.bf16.gmra.mrb[0].mxu0 %v1957
        %v2063 = vpop.f32.mrb[0].mxu0
        %v2064 = vadd.f32 0.0, %v2063
        %v2065 = vpop.f32.mrb[0].mxu0
        %v2066 = vadd.f32 0.0, %v2065
        %v2067 = vpop.f32.mrb[0].mxu0
        %v2068 = vadd.f32 0.0, %v2067
        %v2069 = vpop.f32.mrb[0].mxu0
        %v2070 = vadd.f32 0.0, %v2069
        %2071 = vdwg.mxu0
        %v2072 = vadd.f32 %v1762, %v1994
        %v2073 = vadd.f32 %v1763, %v1996
        %v2074 = vadd.f32 %v1764, %v1998
        %v2075 = vadd.f32 %v1765, %v2000
        %v2076 = vadd.f32 %v1766, %v2004
        %v2077 = vadd.f32 %v1767, %v2006
        %v2078 = vadd.f32 %v1768, %v2008
        %v2079 = vadd.f32 %v1769, %v2010
        %v2080 = vadd.f32 %v1770, %v2014
        %v2081 = vadd.f32 %v1771, %v2016
        %v2082 = vadd.f32 %v1772, %v2018
        %v2083 = vadd.f32 %v1773, %v2020
        %v2084 = vadd.f32 %v1774, %v2024
        %v2085 = vadd.f32 %v1775, %v2026
        %v2086 = vadd.f32 %v1776, %v2028
        %v2087 = vadd.f32 %v1777, %v2030
        %v2088 = vadd.f32 %v1778, %v2034
        %v2089 = vadd.f32 %v1779, %v2036
        %v2090 = vadd.f32 %v1780, %v2038
        %v2091 = vadd.f32 %v1781, %v2040
        %v2092 = vadd.f32 %v1782, %v2044
        %v2093 = vadd.f32 %v1783, %v2046
        %v2094 = vadd.f32 %v1784, %v2048
        %v2095 = vadd.f32 %v1785, %v2050
        %v2096 = vadd.f32 %v1786, %v2054
        %v2097 = vadd.f32 %v1787, %v2056
        %v2098 = vadd.f32 %v1788, %v2058
        %v2099 = vadd.f32 %v1789, %v2060
        %v2100 = vadd.f32 %v1790, %v2064
        %v2101 = vadd.f32 %v1791, %v2066
        %v2102 = vadd.f32 %v1792, %v2068
        %v2103 = vadd.f32 %v1793, %v2070
        %2104 = vrot.lane.b32.xlu0 %v426, 15
        %v2105 = vpop.permute.xlu0 %2104
        %2106 = vrot.lane.b32.xlu0 %v430, 15
        %v2107 = vpop.permute.xlu0 %2106
        %v2108 = vsel %vm1082, %v2105, %v2107
        %vm2109 = vcmp.ne.s16.totalorder %v2105, 0
        %vm2110 = vcmp.ne.s16.totalorder %v2108, 0
        %vm2111 = vcmp.ne.s16.totalorder %v2107, 0
        %v2112 = vsel %vm2109, %v1794, 0
        %v2113 = vsel %vm2110, %v1795, 0
        %v2114 = vsel %vm2111, %v1796, 0
        %v2115 = vsel %vm2109, %v1797, 0
        %v2116 = vsel %vm2110, %v1798, 0
        %v2117 = vsel %vm2111, %v1799, 0
        %v2118 = vsel %vm2109, %v1800, 0
        %v2119 = vsel %vm2110, %v1801, 0
        %v2120 = vsel %vm2111, %v1802, 0
        %v2121 = vsel %vm2109, %v1803, 0
        %v2122 = vsel %vm2110, %v1804, 0
        %v2123 = vsel %vm2111, %v1805, 0
        %s2124 = scalar_lea.vmem %s1, 384
        %v2125 = vld [vmem:[%s2124] sm:$0xf]
        %v2126 = vld [vmem:[%s2124 + $0x4] sm:$0xf]
        %v2127 = vld [vmem:[%s2124 + $0x8] sm:$0xf]
        %v2128 = vld [vmem:[%s2124 + $0xc] sm:$0xf]
        %v2129 = vld [vmem:[%s2124 + $0x10] sm:$0xf]
        %v2130 = vld [vmem:[%s2124 + $0x14] sm:$0xf]
        %v2131 = vld [vmem:[%s2124 + $0x18] sm:$0xf]
        %v2132 = vld [vmem:[%s2124 + $0x1c] sm:$0xf]
        %v2133 = vld [vmem:[%s2124 + $0x20] sm:$0xf]
        %v2134 = vld [vmem:[%s2124 + $0x24] sm:$0xf]
        %v2135 = vld [vmem:[%s2124 + $0x28] sm:$0xf]
        %v2136 = vld [vmem:[%s2124 + $0x2c] sm:$0xf]
        %v2137 = vld [vmem:[%s2124 + $0x30] sm:$0xf]
        %v2138 = vld [vmem:[%s2124 + $0x34] sm:$0xf]
        %v2139 = vld [vmem:[%s2124 + $0x38] sm:$0xf]
        %v2140 = vld [vmem:[%s2124 + $0x3c] sm:$0xf]
        %v2157 = vunpack.c.l.b16 %v2125
        %v2158 = vunpack.c.l.b16 %v2126
        %v2159 = vunpack.c.l.b16 %v2127
        %v2160 = vunpack.c.l.b16 %v2128
        %v2161 = vunpack.c.l.b16 %v2129
        %v2162 = vunpack.c.l.b16 %v2130
        %v2163 = vunpack.c.l.b16 %v2131
        %v2164 = vunpack.c.l.b16 %v2132
        %v2165 = vunpack.c.l.b16 %v2133
        %v2166 = vunpack.c.l.b16 %v2134
        %v2167 = vunpack.c.l.b16 %v2135
        %v2168 = vunpack.c.l.b16 %v2136
        %v2169 = vunpack.c.l.b16 %v2137
        %v2170 = vunpack.c.l.b16 %v2138
        %v2171 = vunpack.c.l.b16 %v2139
        %v2172 = vunpack.c.l.b16 %v2140
        %v2173 = vpack.c.b16 %v2158, %v2157
        %v2174 = vpack.c.b16 %v2160, %v2159
        %v2175 = vpack.c.b16 %v2162, %v2161
        %v2176 = vpack.c.b16 %v2164, %v2163
        %v2177 = vpack.c.b16 %v2166, %v2165
        %v2178 = vpack.c.b16 %v2168, %v2167
        %v2179 = vpack.c.b16 %v2170, %v2169
        %v2180 = vpack.c.b16 %v2172, %v2171
        %2193 = vrot.lane.b32.xlu0 %v2112, 113
        %v2194 = vpop.permute.xlu0 %2193
        %2195 = vrot.lane.b32.xlu0 %v2113, 113
        %v2196 = vpop.permute.xlu0 %2195
        %2197 = vrot.lane.b32.xlu0 %v2114, 113
        %v2198 = vpop.permute.xlu0 %2197
        %2199 = vrot.lane.b32.xlu0 %v2115, 113
        %v2200 = vpop.permute.xlu0 %2199
        %2201 = vrot.lane.b32.xlu0 %v2116, 113
        %v2202 = vpop.permute.xlu0 %2201
        %2203 = vrot.lane.b32.xlu0 %v2117, 113
        %v2204 = vpop.permute.xlu0 %2203
        %2205 = vrot.lane.b32.xlu0 %v2118, 113
        %v2206 = vpop.permute.xlu0 %2205
        %2207 = vrot.lane.b32.xlu0 %v2119, 113
        %v2208 = vpop.permute.xlu0 %2207
        %2209 = vrot.lane.b32.xlu0 %v2120, 113
        %v2210 = vpop.permute.xlu0 %2209
        %2211 = vrot.lane.b32.xlu0 %v2121, 113
        %v2212 = vpop.permute.xlu0 %2211
        %2213 = vrot.lane.b32.xlu0 %v2122, 113
        %v2214 = vpop.permute.xlu0 %2213
        %2215 = vrot.lane.b32.xlu0 %v2123, 113
        %v2216 = vpop.permute.xlu0 %2215
        %v2217 = vsel %vm972, %v2194, %v2196
        %v2218 = vsel %vm972, %v2196, %v2198
        %v2219 = vsel %vm972, %v2200, %v2202
        %v2220 = vsel %vm972, %v2202, %v2204
        %v2221 = vsel %vm972, %v2206, %v2208
        %v2222 = vsel %vm972, %v2208, %v2210
        %v2223 = vsel %vm972, %v2212, %v2214
        %v2224 = vsel %vm972, %v2214, %v2216
        %v2234 = vsel %vm578, %v2173, 0
        %v2237 = vsel %vm578, %v2174, 0
        %v2240 = vsel %vm578, %v2175, 0
        %v2243 = vsel %vm578, %v2176, 0
        %v2246 = vsel %vm578, %v2177, 0
        %v2249 = vsel %vm578, %v2178, 0
        %v2252 = vsel %vm578, %v2179, 0
        %v2255 = vsel %vm578, %v2180, 0
        %2257 = vmatprep.subr.bf16.mxu0 %v2218
        %2258 = vmatpush1.bf16.msra.mxu0 %v2217
        %2259 = vmatprep.subr.bf16.mxu0 %v2220
        %2260 = vmatpush1.bf16.msra.mxu0 %v2219
        %2261 = vmatprep.subr.bf16.mxu0 %v2222
        %2262 = vmatpush1.bf16.msra.mxu0 %v2221
        %2263 = vmatprep.subr.bf16.mxu0 %v2224
        %2264 = vmatpush1.bf16.msra.mxu0 %v2223
        %2265 = vmatprep.subr.bf16.mxu0 0
        %2266 = vmatpush1.bf16.msra.mxu0 0
        %2267 = vmatprep.subr.bf16.mxu0 0
        %2268 = vmatpush1.bf16.msra.mxu0 0
        %2269 = vmatprep.subr.bf16.mxu0 0
        %2270 = vmatpush1.bf16.msra.mxu0 0
        %2271 = vmatprep.subr.bf16.mxu0 0
        %2272 = vmatpush1.bf16.msra.mxu0 0
        %2273 = vmatprep.subr.bf16.mxu0 0
        %2274 = vmatpush1.bf16.msra.mxu0 0
        %2275 = vmatprep.subr.bf16.mxu0 0
        %2276 = vmatpush1.bf16.msra.mxu0 0
        %2277 = vmatprep.subr.bf16.mxu0 0
        %2278 = vmatpush1.bf16.msra.mxu0 0
        %2279 = vmatprep.subr.bf16.mxu0 0
        %2280 = vmatpush1.bf16.msra.mxu0 0
        %2281 = vmatprep.subr.bf16.mxu0 0
        %2282 = vmatpush1.bf16.msra.mxu0 0
        %2283 = vmatprep.subr.bf16.mxu0 0
        %2284 = vmatpush1.bf16.msra.mxu0 0
        %2285 = vmatprep.subr.bf16.mxu0 0
        %2286 = vmatpush1.bf16.msra.mxu0 0
        %2287 = vmatprep.subr.bf16.mxu0 0
        %2288 = vmatpush1.bf16.msra.mxu0 0
        %2289 = vmatprep.mubr.bf16.mxu0 0
        %2290 = vmatmul.mubr.bf16.gmra.mrb[0].mxu0 %v2234
        %v2291 = vpop.f32.mrb[0].mxu0
        %v2292 = vadd.f32 0.0, %v2291
        %v2293 = vpop.f32.mrb[0].mxu0
        %v2294 = vadd.f32 0.0, %v2293
        %v2295 = vpop.f32.mrb[0].mxu0
        %v2296 = vadd.f32 0.0, %v2295
        %v2297 = vpop.f32.mrb[0].mxu0
        %v2298 = vadd.f32 0.0, %v2297
        %2299 = vmatprep.mubr.bf16.mxu0 0
        %2300 = vmatmul.mubr.bf16.gmra.mrb[0].mxu0 %v2237
        %v2301 = vpop.f32.mrb[0].mxu0
        %v2302 = vadd.f32 0.0, %v2301
        %v2303 = vpop.f32.mrb[0].mxu0
        %v2304 = vadd.f32 0.0, %v2303
        %v2305 = vpop.f32.mrb[0].mxu0
        %v2306 = vadd.f32 0.0, %v2305
        %v2307 = vpop.f32.mrb[0].mxu0
        %v2308 = vadd.f32 0.0, %v2307
        %2309 = vmatprep.mubr.bf16.mxu0 0
        %2310 = vmatmul.mubr.bf16.gmra.mrb[0].mxu0 %v2240
        %v2311 = vpop.f32.mrb[0].mxu0
        %v2312 = vadd.f32 0.0, %v2311
        %v2313 = vpop.f32.mrb[0].mxu0
        %v2314 = vadd.f32 0.0, %v2313
        %v2315 = vpop.f32.mrb[0].mxu0
        %v2316 = vadd.f32 0.0, %v2315
        %v2317 = vpop.f32.mrb[0].mxu0
        %v2318 = vadd.f32 0.0, %v2317
        %2319 = vmatprep.mubr.bf16.mxu0 0
        %2320 = vmatmul.mubr.bf16.gmra.mrb[0].mxu0 %v2243
        %v2321 = vpop.f32.mrb[0].mxu0
        %v2322 = vadd.f32 0.0, %v2321
        %v2323 = vpop.f32.mrb[0].mxu0
        %v2324 = vadd.f32 0.0, %v2323
        %v2325 = vpop.f32.mrb[0].mxu0
        %v2326 = vadd.f32 0.0, %v2325
        %v2327 = vpop.f32.mrb[0].mxu0
        %v2328 = vadd.f32 0.0, %v2327
        %2329 = vmatprep.mubr.bf16.mxu0 0
        %2330 = vmatmul.mubr.bf16.gmra.mrb[0].mxu0 %v2246
        %v2331 = vpop.f32.mrb[0].mxu0
        %v2332 = vadd.f32 0.0, %v2331
        %v2333 = vpop.f32.mrb[0].mxu0
        %v2334 = vadd.f32 0.0, %v2333
        %v2335 = vpop.f32.mrb[0].mxu0
        %v2336 = vadd.f32 0.0, %v2335
        %v2337 = vpop.f32.mrb[0].mxu0
        %v2338 = vadd.f32 0.0, %v2337
        %2339 = vmatprep.mubr.bf16.mxu0 0
        %2340 = vmatmul.mubr.bf16.gmra.mrb[0].mxu0 %v2249
        %v2341 = vpop.f32.mrb[0].mxu0
        %v2342 = vadd.f32 0.0, %v2341
        %v2343 = vpop.f32.mrb[0].mxu0
        %v2344 = vadd.f32 0.0, %v2343
        %v2345 = vpop.f32.mrb[0].mxu0
        %v2346 = vadd.f32 0.0, %v2345
        %v2347 = vpop.f32.mrb[0].mxu0
        %v2348 = vadd.f32 0.0, %v2347
        %2349 = vmatprep.mubr.bf16.mxu0 0
        %2350 = vmatmul.mubr.bf16.gmra.mrb[0].mxu0 %v2252
        %v2351 = vpop.f32.mrb[0].mxu0
        %v2352 = vadd.f32 0.0, %v2351
        %v2353 = vpop.f32.mrb[0].mxu0
        %v2354 = vadd.f32 0.0, %v2353
        %v2355 = vpop.f32.mrb[0].mxu0
        %v2356 = vadd.f32 0.0, %v2355
        %v2357 = vpop.f32.mrb[0].mxu0
        %v2358 = vadd.f32 0.0, %v2357
        %2359 = vmatprep.mubr.bf16.mxu0 0
        %2360 = vmatmul.mubr.bf16.gmra.mrb[0].mxu0 %v2255
        %v2361 = vpop.f32.mrb[0].mxu0
        %v2362 = vadd.f32 0.0, %v2361
        %v2363 = vpop.f32.mrb[0].mxu0
        %v2364 = vadd.f32 0.0, %v2363
        %v2365 = vpop.f32.mrb[0].mxu0
        %v2366 = vadd.f32 0.0, %v2365
        %v2367 = vpop.f32.mrb[0].mxu0
        %v2368 = vadd.f32 0.0, %v2367
        %2369 = vdwg.mxu0
        %v2370 = vadd.f32 %v2072, %v2292
        %v2371 = vadd.f32 %v2073, %v2294
        %v2372 = vadd.f32 %v2074, %v2296
        %v2373 = vadd.f32 %v2075, %v2298
        %v2374 = vadd.f32 %v2076, %v2302
        %v2375 = vadd.f32 %v2077, %v2304
        %v2376 = vadd.f32 %v2078, %v2306
        %v2377 = vadd.f32 %v2079, %v2308
        %v2378 = vadd.f32 %v2080, %v2312
        %v2379 = vadd.f32 %v2081, %v2314
        %v2380 = vadd.f32 %v2082, %v2316
        %v2381 = vadd.f32 %v2083, %v2318
        %v2382 = vadd.f32 %v2084, %v2322
        %v2383 = vadd.f32 %v2085, %v2324
        %v2384 = vadd.f32 %v2086, %v2326
        %v2385 = vadd.f32 %v2087, %v2328
        %v2386 = vadd.f32 %v2088, %v2332
        %v2387 = vadd.f32 %v2089, %v2334
        %v2388 = vadd.f32 %v2090, %v2336
        %v2389 = vadd.f32 %v2091, %v2338
        %v2390 = vadd.f32 %v2092, %v2342
        %v2391 = vadd.f32 %v2093, %v2344
        %v2392 = vadd.f32 %v2094, %v2346
        %v2393 = vadd.f32 %v2095, %v2348
        %v2394 = vadd.f32 %v2096, %v2352
        %v2395 = vadd.f32 %v2097, %v2354
        %v2396 = vadd.f32 %v2098, %v2356
        %v2397 = vadd.f32 %v2099, %v2358
        %v2398 = vadd.f32 %v2100, %v2362
        %v2399 = vadd.f32 %v2101, %v2364
        %v2400 = vadd.f32 %v2102, %v2366
        %v2401 = vadd.f32 %v2103, %v2368
        %s2402 = scalar_lea.vmem %s1, 448
        %v2403 = vld [vmem:[%s2402] sm:$0xf]
        %v2404 = vld [vmem:[%s2402 + $0x4] sm:$0xf]
        %v2405 = vld [vmem:[%s2402 + $0x8] sm:$0xf]
        %v2406 = vld [vmem:[%s2402 + $0xc] sm:$0xf]
        %v2407 = vld [vmem:[%s2402 + $0x10] sm:$0xf]
        %v2408 = vld [vmem:[%s2402 + $0x14] sm:$0xf]
        %v2409 = vld [vmem:[%s2402 + $0x18] sm:$0xf]
        %v2410 = vld [vmem:[%s2402 + $0x1c] sm:$0xf]
        %v2411 = vld [vmem:[%s2402 + $0x20] sm:$0xf]
        %v2412 = vld [vmem:[%s2402 + $0x24] sm:$0xf]
        %v2413 = vld [vmem:[%s2402 + $0x28] sm:$0xf]
        %v2414 = vld [vmem:[%s2402 + $0x2c] sm:$0xf]
        %v2415 = vld [vmem:[%s2402 + $0x30] sm:$0xf]
        %v2416 = vld [vmem:[%s2402 + $0x34] sm:$0xf]
        %v2417 = vld [vmem:[%s2402 + $0x38] sm:$0xf]
        %v2418 = vld [vmem:[%s2402 + $0x3c] sm:$0xf]
        %v2435 = vunpack.c.l.b16 %v2403
        %v2436 = vunpack.c.l.b16 %v2404
        %v2437 = vunpack.c.l.b16 %v2405
        %v2438 = vunpack.c.l.b16 %v2406
        %v2439 = vunpack.c.l.b16 %v2407
        %v2440 = vunpack.c.l.b16 %v2408
        %v2441 = vunpack.c.l.b16 %v2409
        %v2442 = vunpack.c.l.b16 %v2410
        %v2443 = vunpack.c.l.b16 %v2411
        %v2444 = vunpack.c.l.b16 %v2412
        %v2445 = vunpack.c.l.b16 %v2413
        %v2446 = vunpack.c.l.b16 %v2414
        %v2447 = vunpack.c.l.b16 %v2415
        %v2448 = vunpack.c.l.b16 %v2416
        %v2449 = vunpack.c.l.b16 %v2417
        %v2450 = vunpack.c.l.b16 %v2418
        %v2451 = vpack.c.b16 %v2436, %v2435
        %v2452 = vpack.c.b16 %v2438, %v2437
        %v2453 = vpack.c.b16 %v2440, %v2439
        %v2454 = vpack.c.b16 %v2442, %v2441
        %v2455 = vpack.c.b16 %v2444, %v2443
        %v2456 = vpack.c.b16 %v2446, %v2445
        %v2457 = vpack.c.b16 %v2448, %v2447
        %v2458 = vpack.c.b16 %v2450, %v2449
        %2471 = vrot.lane.b32.xlu0 %v1794, 112
        %v2472 = vpop.permute.xlu0 %2471
        %2473 = vrot.lane.b32.xlu0 %v1795, 112
        %v2474 = vpop.permute.xlu0 %2473
        %2475 = vrot.lane.b32.xlu0 %v1796, 112
        %v2476 = vpop.permute.xlu0 %2475
        %2477 = vrot.lane.b32.xlu0 %v1797, 112
        %v2478 = vpop.permute.xlu0 %2477
        %2479 = vrot.lane.b32.xlu0 %v1798, 112
        %v2480 = vpop.permute.xlu0 %2479
        %2481 = vrot.lane.b32.xlu0 %v1799, 112
        %v2482 = vpop.permute.xlu0 %2481
        %2483 = vrot.lane.b32.xlu0 %v1800, 112
        %v2484 = vpop.permute.xlu0 %2483
        %2485 = vrot.lane.b32.xlu0 %v1801, 112
        %v2486 = vpop.permute.xlu0 %2485
        %2487 = vrot.lane.b32.xlu0 %v1802, 112
        %v2488 = vpop.permute.xlu0 %2487
        %2489 = vrot.lane.b32.xlu0 %v1803, 112
        %v2490 = vpop.permute.xlu0 %2489
        %2491 = vrot.lane.b32.xlu0 %v1804, 112
        %v2492 = vpop.permute.xlu0 %2491
        %2493 = vrot.lane.b32.xlu0 %v1805, 112
        %v2494 = vpop.permute.xlu0 %2493
        %vm2495 = vcmask 916480
        %v2496 = vsel %vm2495, %v2472, %v2474
        %v2497 = vsel %vm2495, %v2474, %v2476
        %v2498 = vsel %vm2495, %v2478, %v2480
        %v2499 = vsel %vm2495, %v2480, %v2482
        %v2500 = vsel %vm2495, %v2484, %v2486
        %v2501 = vsel %vm2495, %v2486, %v2488
        %v2502 = vsel %vm2495, %v2490, %v2492
        %v2503 = vsel %vm2495, %v2492, %v2494
        %v2513 = vsel %vm578, %v2451, 0
        %v2516 = vsel %vm578, %v2452, 0
        %v2519 = vsel %vm578, %v2453, 0
        %v2522 = vsel %vm578, %v2454, 0
        %v2525 = vsel %vm578, %v2455, 0
        %v2528 = vsel %vm578, %v2456, 0
        %v2531 = vsel %vm578, %v2457, 0
        %v2534 = vsel %vm578, %v2458, 0
        %2536 = vmatprep.subr.bf16.mxu0 %v2497
        %2537 = vmatpush1.bf16.msra.mxu0 %v2496
        %2538 = vmatprep.subr.bf16.mxu0 %v2499
        %2539 = vmatpush1.bf16.msra.mxu0 %v2498
        %2540 = vmatprep.subr.bf16.mxu0 %v2501
        %2541 = vmatpush1.bf16.msra.mxu0 %v2500
        %2542 = vmatprep.subr.bf16.mxu0 %v2503
        %2543 = vmatpush1.bf16.msra.mxu0 %v2502
        %2544 = vmatprep.subr.bf16.mxu0 0
        %2545 = vmatpush1.bf16.msra.mxu0 0
        %2546 = vmatprep.subr.bf16.mxu0 0
        %2547 = vmatpush1.bf16.msra.mxu0 0
        %2548 = vmatprep.subr.bf16.mxu0 0
        %2549 = vmatpush1.bf16.msra.mxu0 0
        %2550 = vmatprep.subr.bf16.mxu0 0
        %2551 = vmatpush1.bf16.msra.mxu0 0
        %2552 = vmatprep.subr.bf16.mxu0 0
        %2553 = vmatpush1.bf16.msra.mxu0 0
        %2554 = vmatprep.subr.bf16.mxu0 0
        %2555 = vmatpush1.bf16.msra.mxu0 0
        %2556 = vmatprep.subr.bf16.mxu0 0
        %2557 = vmatpush1.bf16.msra.mxu0 0
        %2558 = vmatprep.subr.bf16.mxu0 0
        %2559 = vmatpush1.bf16.msra.mxu0 0
        %2560 = vmatprep.subr.bf16.mxu0 0
        %2561 = vmatpush1.bf16.msra.mxu0 0
        %2562 = vmatprep.subr.bf16.mxu0 0
        %2563 = vmatpush1.bf16.msra.mxu0 0
        %2564 = vmatprep.subr.bf16.mxu0 0
        %2565 = vmatpush1.bf16.msra.mxu0 0
        %2566 = vmatprep.subr.bf16.mxu0 0
        %2567 = vmatpush1.bf16.msra.mxu0 0
        %2568 = vmatprep.mubr.bf16.mxu0 0
        %2569 = vmatmul.mubr.bf16.gmra.mrb[0].mxu0 %v2513
        %v2570 = vpop.f32.mrb[0].mxu0
        %v2571 = vadd.f32 0.0, %v2570
        %v2572 = vpop.f32.mrb[0].mxu0
        %v2573 = vadd.f32 0.0, %v2572
        %v2574 = vpop.f32.mrb[0].mxu0
        %v2575 = vadd.f32 0.0, %v2574
        %v2576 = vpop.f32.mrb[0].mxu0
        %v2577 = vadd.f32 0.0, %v2576
        %2578 = vmatprep.mubr.bf16.mxu0 0
        %2579 = vmatmul.mubr.bf16.gmra.mrb[0].mxu0 %v2516
        %v2580 = vpop.f32.mrb[0].mxu0
        %v2581 = vadd.f32 0.0, %v2580
        %v2582 = vpop.f32.mrb[0].mxu0
        %v2583 = vadd.f32 0.0, %v2582
        %v2584 = vpop.f32.mrb[0].mxu0
        %v2585 = vadd.f32 0.0, %v2584
        %v2586 = vpop.f32.mrb[0].mxu0
        %v2587 = vadd.f32 0.0, %v2586
        %2588 = vmatprep.mubr.bf16.mxu0 0
        %2589 = vmatmul.mubr.bf16.gmra.mrb[0].mxu0 %v2519
        %v2590 = vpop.f32.mrb[0].mxu0
        %v2591 = vadd.f32 0.0, %v2590
        %v2592 = vpop.f32.mrb[0].mxu0
        %v2593 = vadd.f32 0.0, %v2592
        %v2594 = vpop.f32.mrb[0].mxu0
        %v2595 = vadd.f32 0.0, %v2594
        %v2596 = vpop.f32.mrb[0].mxu0
        %v2597 = vadd.f32 0.0, %v2596
        %2598 = vmatprep.mubr.bf16.mxu0 0
        %2599 = vmatmul.mubr.bf16.gmra.mrb[0].mxu0 %v2522
        %v2600 = vpop.f32.mrb[0].mxu0
        %v2601 = vadd.f32 0.0, %v2600
        %v2602 = vpop.f32.mrb[0].mxu0
        %v2603 = vadd.f32 0.0, %v2602
        %v2604 = vpop.f32.mrb[0].mxu0
        %v2605 = vadd.f32 0.0, %v2604
        %v2606 = vpop.f32.mrb[0].mxu0
        %v2607 = vadd.f32 0.0, %v2606
        %2608 = vmatprep.mubr.bf16.mxu0 0
        %2609 = vmatmul.mubr.bf16.gmra.mrb[0].mxu0 %v2525
        %v2610 = vpop.f32.mrb[0].mxu0
        %v2611 = vadd.f32 0.0, %v2610
        %v2612 = vpop.f32.mrb[0].mxu0
        %v2613 = vadd.f32 0.0, %v2612
        %v2614 = vpop.f32.mrb[0].mxu0
        %v2615 = vadd.f32 0.0, %v2614
        %v2616 = vpop.f32.mrb[0].mxu0
        %v2617 = vadd.f32 0.0, %v2616
        %2618 = vmatprep.mubr.bf16.mxu0 0
        %2619 = vmatmul.mubr.bf16.gmra.mrb[0].mxu0 %v2528
        %v2620 = vpop.f32.mrb[0].mxu0
        %v2621 = vadd.f32 0.0, %v2620
        %v2622 = vpop.f32.mrb[0].mxu0
        %v2623 = vadd.f32 0.0, %v2622
        %v2624 = vpop.f32.mrb[0].mxu0
        %v2625 = vadd.f32 0.0, %v2624
        %v2626 = vpop.f32.mrb[0].mxu0
        %v2627 = vadd.f32 0.0, %v2626
        %2628 = vmatprep.mubr.bf16.mxu0 0
        %2629 = vmatmul.mubr.bf16.gmra.mrb[0].mxu0 %v2531
        %v2630 = vpop.f32.mrb[0].mxu0
        %v2631 = vadd.f32 0.0, %v2630
        %v2632 = vpop.f32.mrb[0].mxu0
        %v2633 = vadd.f32 0.0, %v2632
        %v2634 = vpop.f32.mrb[0].mxu0
        %v2635 = vadd.f32 0.0, %v2634
        %v2636 = vpop.f32.mrb[0].mxu0
        %v2637 = vadd.f32 0.0, %v2636
        %2638 = vmatprep.mubr.bf16.mxu0 0
        %2639 = vmatmul.mubr.bf16.gmra.mrb[0].mxu0 %v2534
        %v2640 = vpop.f32.mrb[0].mxu0
        %v2641 = vadd.f32 0.0, %v2640
        %v2642 = vpop.f32.mrb[0].mxu0
        %v2643 = vadd.f32 0.0, %v2642
        %v2644 = vpop.f32.mrb[0].mxu0
        %v2645 = vadd.f32 0.0, %v2644
        %v2646 = vpop.f32.mrb[0].mxu0
        %v2647 = vadd.f32 0.0, %v2646
        %2648 = vdwg.mxu0
        %v2649 = vadd.f32 %v2370, %v2571
        %v2650 = vadd.f32 %v2371, %v2573
        %v2651 = vadd.f32 %v2372, %v2575
        %v2652 = vadd.f32 %v2373, %v2577
        %v2653 = vadd.f32 %v2374, %v2581
        %v2654 = vadd.f32 %v2375, %v2583
        %v2655 = vadd.f32 %v2376, %v2585
        %v2656 = vadd.f32 %v2377, %v2587
        %v2657 = vadd.f32 %v2378, %v2591
        %v2658 = vadd.f32 %v2379, %v2593
        %v2659 = vadd.f32 %v2380, %v2595
        %v2660 = vadd.f32 %v2381, %v2597
        %v2661 = vadd.f32 %v2382, %v2601
        %v2662 = vadd.f32 %v2383, %v2603
        %v2663 = vadd.f32 %v2384, %v2605
        %v2664 = vadd.f32 %v2385, %v2607
        %v2665 = vadd.f32 %v2386, %v2611
        %v2666 = vadd.f32 %v2387, %v2613
        %v2667 = vadd.f32 %v2388, %v2615
        %v2668 = vadd.f32 %v2389, %v2617
        %v2669 = vadd.f32 %v2390, %v2621
        %v2670 = vadd.f32 %v2391, %v2623
        %v2671 = vadd.f32 %v2392, %v2625
        %v2672 = vadd.f32 %v2393, %v2627
        %v2673 = vadd.f32 %v2394, %v2631
        %v2674 = vadd.f32 %v2395, %v2633
        %v2675 = vadd.f32 %v2396, %v2635
        %v2676 = vadd.f32 %v2397, %v2637
        %v2677 = vadd.f32 %v2398, %v2641
        %v2678 = vadd.f32 %v2399, %v2643
        %v2679 = vadd.f32 %v2400, %v2645
        %v2680 = vadd.f32 %v2401, %v2647
        %2681 = vrot.lane.b32.xlu0 %v963, 17
        %v2682 = vpop.permute.xlu0 %2681
        %2683 = vrot.lane.b32.xlu0 %v967, 17
        %v2684 = vpop.permute.xlu0 %2683
        %v2685 = vsel %vm792, %v2682, %v2684
        %vm2686 = vcmp.ne.s16.totalorder %v2682, 0
        %vm2687 = vcmp.ne.s16.totalorder %v2685, 0
        %vm2688 = vcmp.ne.s16.totalorder %v2684, 0
        %v2689 = vsel %vm2686, %v1794, 0
        %v2690 = vsel %vm2687, %v1795, 0
        %v2691 = vsel %vm2688, %v1796, 0
        %v2692 = vsel %vm2686, %v1797, 0
        %v2693 = vsel %vm2687, %v1798, 0
        %v2694 = vsel %vm2688, %v1799, 0
        %v2695 = vsel %vm2686, %v1800, 0
        %v2696 = vsel %vm2687, %v1801, 0
        %v2697 = vsel %vm2688, %v1802, 0
        %v2698 = vsel %vm2686, %v1803, 0
        %v2699 = vsel %vm2687, %v1804, 0
        %v2700 = vsel %vm2688, %v1805, 0
        %s2701 = scalar_lea.vmem %s1, 512
        %v2702 = vld [vmem:[%s2701] sm:$0xf]
        %v2703 = vld [vmem:[%s2701 + $0x4] sm:$0xf]
        %v2704 = vld [vmem:[%s2701 + $0x8] sm:$0xf]
        %v2705 = vld [vmem:[%s2701 + $0xc] sm:$0xf]
        %v2706 = vld [vmem:[%s2701 + $0x10] sm:$0xf]
        %v2707 = vld [vmem:[%s2701 + $0x14] sm:$0xf]
        %v2708 = vld [vmem:[%s2701 + $0x18] sm:$0xf]
        %v2709 = vld [vmem:[%s2701 + $0x1c] sm:$0xf]
        %v2710 = vld [vmem:[%s2701 + $0x20] sm:$0xf]
        %v2711 = vld [vmem:[%s2701 + $0x24] sm:$0xf]
        %v2712 = vld [vmem:[%s2701 + $0x28] sm:$0xf]
        %v2713 = vld [vmem:[%s2701 + $0x2c] sm:$0xf]
        %v2714 = vld [vmem:[%s2701 + $0x30] sm:$0xf]
        %v2715 = vld [vmem:[%s2701 + $0x34] sm:$0xf]
        %v2716 = vld [vmem:[%s2701 + $0x38] sm:$0xf]
        %v2717 = vld [vmem:[%s2701 + $0x3c] sm:$0xf]
        %v2734 = vunpack.c.l.b16 %v2702
        %v2735 = vunpack.c.l.b16 %v2703
        %v2736 = vunpack.c.l.b16 %v2704
        %v2737 = vunpack.c.l.b16 %v2705
        %v2738 = vunpack.c.l.b16 %v2706
        %v2739 = vunpack.c.l.b16 %v2707
        %v2740 = vunpack.c.l.b16 %v2708
        %v2741 = vunpack.c.l.b16 %v2709
        %v2742 = vunpack.c.l.b16 %v2710
        %v2743 = vunpack.c.l.b16 %v2711
        %v2744 = vunpack.c.l.b16 %v2712
        %v2745 = vunpack.c.l.b16 %v2713
        %v2746 = vunpack.c.l.b16 %v2714
        %v2747 = vunpack.c.l.b16 %v2715
        %v2748 = vunpack.c.l.b16 %v2716
        %v2749 = vunpack.c.l.b16 %v2717
        %v2750 = vpack.c.b16 %v2735, %v2734
        %v2751 = vpack.c.b16 %v2737, %v2736
        %v2752 = vpack.c.b16 %v2739, %v2738
        %v2753 = vpack.c.b16 %v2741, %v2740
        %v2754 = vpack.c.b16 %v2743, %v2742
        %v2755 = vpack.c.b16 %v2745, %v2744
        %v2756 = vpack.c.b16 %v2747, %v2746
        %v2757 = vpack.c.b16 %v2749, %v2748
        %2770 = vrot.lane.b32.xlu0 %v2689, 111
        %v2771 = vpop.permute.xlu0 %2770
        %2772 = vrot.lane.b32.xlu0 %v2690, 111
        %v2773 = vpop.permute.xlu0 %2772
        %2774 = vrot.lane.b32.xlu0 %v2691, 111
        %v2775 = vpop.permute.xlu0 %2774
        %2776 = vrot.lane.b32.xlu0 %v2692, 111
        %v2777 = vpop.permute.xlu0 %2776
        %2778 = vrot.lane.b32.xlu0 %v2693, 111
        %v2779 = vpop.permute.xlu0 %2778
        %2780 = vrot.lane.b32.xlu0 %v2694, 111
        %v2781 = vpop.permute.xlu0 %2780
        %2782 = vrot.lane.b32.xlu0 %v2695, 111
        %v2783 = vpop.permute.xlu0 %2782
        %2784 = vrot.lane.b32.xlu0 %v2696, 111
        %v2785 = vpop.permute.xlu0 %2784
        %2786 = vrot.lane.b32.xlu0 %v2697, 111
        %v2787 = vpop.permute.xlu0 %2786
        %2788 = vrot.lane.b32.xlu0 %v2698, 111
        %v2789 = vpop.permute.xlu0 %2788
        %2790 = vrot.lane.b32.xlu0 %v2699, 111
        %v2791 = vpop.permute.xlu0 %2790
        %2792 = vrot.lane.b32.xlu0 %v2700, 111
        %v2793 = vpop.permute.xlu0 %2792
        %v2794 = vsel %vm435, %v2771, %v2773
        %v2795 = vsel %vm435, %v2773, %v2775
        %v2796 = vsel %vm435, %v2777, %v2779
        %v2797 = vsel %vm435, %v2779, %v2781
        %v2798 = vsel %vm435, %v2783, %v2785
        %v2799 = vsel %vm435, %v2785, %v2787
        %v2800 = vsel %vm435, %v2789, %v2791
        %v2801 = vsel %vm435, %v2791, %v2793
        %v2811 = vsel %vm578, %v2750, 0
        %v2814 = vsel %vm578, %v2751, 0
        %v2817 = vsel %vm578, %v2752, 0
        %v2820 = vsel %vm578, %v2753, 0
        %v2823 = vsel %vm578, %v2754, 0
        %v2826 = vsel %vm578, %v2755, 0
        %v2829 = vsel %vm578, %v2756, 0
        %v2832 = vsel %vm578, %v2757, 0
        %2834 = vmatprep.subr.bf16.mxu0 %v2795
        %2835 = vmatpush1.bf16.msra.mxu0 %v2794
        %2836 = vmatprep.subr.bf16.mxu0 %v2797
        %2837 = vmatpush1.bf16.msra.mxu0 %v2796
        %2838 = vmatprep.subr.bf16.mxu0 %v2799
        %2839 = vmatpush1.bf16.msra.mxu0 %v2798
        %2840 = vmatprep.subr.bf16.mxu0 %v2801
        %2841 = vmatpush1.bf16.msra.mxu0 %v2800
        %2842 = vmatprep.subr.bf16.mxu0 0
        %2843 = vmatpush1.bf16.msra.mxu0 0
        %2844 = vmatprep.subr.bf16.mxu0 0
        %2845 = vmatpush1.bf16.msra.mxu0 0
        %2846 = vmatprep.subr.bf16.mxu0 0
        %2847 = vmatpush1.bf16.msra.mxu0 0
        %2848 = vmatprep.subr.bf16.mxu0 0
        %2849 = vmatpush1.bf16.msra.mxu0 0
        %2850 = vmatprep.subr.bf16.mxu0 0
        %2851 = vmatpush1.bf16.msra.mxu0 0
        %2852 = vmatprep.subr.bf16.mxu0 0
        %2853 = vmatpush1.bf16.msra.mxu0 0
        %2854 = vmatprep.subr.bf16.mxu0 0
        %2855 = vmatpush1.bf16.msra.mxu0 0
        %2856 = vmatprep.subr.bf16.mxu0 0
        %2857 = vmatpush1.bf16.msra.mxu0 0
        %2858 = vmatprep.subr.bf16.mxu0 0
        %2859 = vmatpush1.bf16.msra.mxu0 0
        %2860 = vmatprep.subr.bf16.mxu0 0
        %2861 = vmatpush1.bf16.msra.mxu0 0
        %2862 = vmatprep.subr.bf16.mxu0 0
        %2863 = vmatpush1.bf16.msra.mxu0 0
        %2864 = vmatprep.subr.bf16.mxu0 0
        %2865 = vmatpush1.bf16.msra.mxu0 0
        %2866 = vmatprep.mubr.bf16.mxu0 0
        %2867 = vmatmul.mubr.bf16.gmra.mrb[0].mxu0 %v2811
        %v2868 = vpop.f32.mrb[0].mxu0
        %v2869 = vadd.f32 0.0, %v2868
        %v2870 = vpop.f32.mrb[0].mxu0
        %v2871 = vadd.f32 0.0, %v2870
        %v2872 = vpop.f32.mrb[0].mxu0
        %v2873 = vadd.f32 0.0, %v2872
        %v2874 = vpop.f32.mrb[0].mxu0
        %v2875 = vadd.f32 0.0, %v2874
        %2876 = vmatprep.mubr.bf16.mxu0 0
        %2877 = vmatmul.mubr.bf16.gmra.mrb[0].mxu0 %v2814
        %v2878 = vpop.f32.mrb[0].mxu0
        %v2879 = vadd.f32 0.0, %v2878
        %v2880 = vpop.f32.mrb[0].mxu0
        %v2881 = vadd.f32 0.0, %v2880
        %v2882 = vpop.f32.mrb[0].mxu0
        %v2883 = vadd.f32 0.0, %v2882
        %v2884 = vpop.f32.mrb[0].mxu0
        %v2885 = vadd.f32 0.0, %v2884
        %2886 = vmatprep.mubr.bf16.mxu0 0
        %2887 = vmatmul.mubr.bf16.gmra.mrb[0].mxu0 %v2817
        %v2888 = vpop.f32.mrb[0].mxu0
        %v2889 = vadd.f32 0.0, %v2888
        %v2890 = vpop.f32.mrb[0].mxu0
        %v2891 = vadd.f32 0.0, %v2890
        %v2892 = vpop.f32.mrb[0].mxu0
        %v2893 = vadd.f32 0.0, %v2892
        %v2894 = vpop.f32.mrb[0].mxu0
        %v2895 = vadd.f32 0.0, %v2894
        %2896 = vmatprep.mubr.bf16.mxu0 0
        %2897 = vmatmul.mubr.bf16.gmra.mrb[0].mxu0 %v2820
        %v2898 = vpop.f32.mrb[0].mxu0
        %v2899 = vadd.f32 0.0, %v2898
        %v2900 = vpop.f32.mrb[0].mxu0
        %v2901 = vadd.f32 0.0, %v2900
        %v2902 = vpop.f32.mrb[0].mxu0
        %v2903 = vadd.f32 0.0, %v2902
        %v2904 = vpop.f32.mrb[0].mxu0
        %v2905 = vadd.f32 0.0, %v2904
        %2906 = vmatprep.mubr.bf16.mxu0 0
        %2907 = vmatmul.mubr.bf16.gmra.mrb[0].mxu0 %v2823
        %v2908 = vpop.f32.mrb[0].mxu0
        %v2909 = vadd.f32 0.0, %v2908
        %v2910 = vpop.f32.mrb[0].mxu0
        %v2911 = vadd.f32 0.0, %v2910
        %v2912 = vpop.f32.mrb[0].mxu0
        %v2913 = vadd.f32 0.0, %v2912
        %v2914 = vpop.f32.mrb[0].mxu0
        %v2915 = vadd.f32 0.0, %v2914
        %2916 = vmatprep.mubr.bf16.mxu0 0
        %2917 = vmatmul.mubr.bf16.gmra.mrb[0].mxu0 %v2826
        %v2918 = vpop.f32.mrb[0].mxu0
        %v2919 = vadd.f32 0.0, %v2918
        %v2920 = vpop.f32.mrb[0].mxu0
        %v2921 = vadd.f32 0.0, %v2920
        %v2922 = vpop.f32.mrb[0].mxu0
        %v2923 = vadd.f32 0.0, %v2922
        %v2924 = vpop.f32.mrb[0].mxu0
        %v2925 = vadd.f32 0.0, %v2924
        %2926 = vmatprep.mubr.bf16.mxu0 0
        %2927 = vmatmul.mubr.bf16.gmra.mrb[0].mxu0 %v2829
        %v2928 = vpop.f32.mrb[0].mxu0
        %v2929 = vadd.f32 0.0, %v2928
        %v2930 = vpop.f32.mrb[0].mxu0
        %v2931 = vadd.f32 0.0, %v2930
        %v2932 = vpop.f32.mrb[0].mxu0
        %v2933 = vadd.f32 0.0, %v2932
        %v2934 = vpop.f32.mrb[0].mxu0
        %v2935 = vadd.f32 0.0, %v2934
        %2936 = vmatprep.mubr.bf16.mxu0 0
        %2937 = vmatmul.mubr.bf16.gmra.mrb[0].mxu0 %v2832
        %v2938 = vpop.f32.mrb[0].mxu0
        %v2939 = vadd.f32 0.0, %v2938
        %v2940 = vpop.f32.mrb[0].mxu0
        %v2941 = vadd.f32 0.0, %v2940
        %v2942 = vpop.f32.mrb[0].mxu0
        %v2943 = vadd.f32 0.0, %v2942
        %v2944 = vpop.f32.mrb[0].mxu0
        %v2945 = vadd.f32 0.0, %v2944
        %2946 = vdwg.mxu0
        %v2947 = vadd.f32 %v2649, %v2869
        %v2948 = vadd.f32 %v2650, %v2871
        %v2949 = vadd.f32 %v2651, %v2873
        %v2950 = vadd.f32 %v2652, %v2875
        %v2951 = vadd.f32 %v2653, %v2879
        %v2952 = vadd.f32 %v2654, %v2881
        %v2953 = vadd.f32 %v2655, %v2883
        %v2954 = vadd.f32 %v2656, %v2885
        %v2955 = vadd.f32 %v2657, %v2889
        %v2956 = vadd.f32 %v2658, %v2891
        %v2957 = vadd.f32 %v2659, %v2893
        %v2958 = vadd.f32 %v2660, %v2895
        %v2959 = vadd.f32 %v2661, %v2899
        %v2960 = vadd.f32 %v2662, %v2901
        %v2961 = vadd.f32 %v2663, %v2903
        %v2962 = vadd.f32 %v2664, %v2905
        %v2963 = vadd.f32 %v2665, %v2909
        %v2964 = vadd.f32 %v2666, %v2911
        %v2965 = vadd.f32 %v2667, %v2913
        %v2966 = vadd.f32 %v2668, %v2915
        %v2967 = vadd.f32 %v2669, %v2919
        %v2968 = vadd.f32 %v2670, %v2921
        %v2969 = vadd.f32 %v2671, %v2923
        %v2970 = vadd.f32 %v2672, %v2925
        %v2971 = vadd.f32 %v2673, %v2929
        %v2972 = vadd.f32 %v2674, %v2931
        %v2973 = vadd.f32 %v2675, %v2933
        %v2974 = vadd.f32 %v2676, %v2935
        %v2975 = vadd.f32 %v2677, %v2939
        %v2976 = vadd.f32 %v2678, %v2941
        %v2977 = vadd.f32 %v2679, %v2943
        %v2978 = vadd.f32 %v2680, %v2945
        %v2979 = vld [vmem:[%s2] sm:$0xff]
        %v2980 = vld [vmem:[%s2 + $0x8] sm:$0xff]
        %v2981 = vld [vmem:[%s2 + $0x10] sm:$0xff]
        %v2982 = vld [vmem:[%s2 + $0x18] sm:$0xff]
        %v2983 = vld [vmem:[%s2 + $0x20] sm:$0xff]
        %v2984 = vld [vmem:[%s2 + $0x28] sm:$0xff]
        %v2985 = vld [vmem:[%s2 + $0x30] sm:$0xff]
        %v2986 = vld [vmem:[%s2 + $0x38] sm:$0xff]
        %v2987 = vld [vmem:[%s2 + $0x40] sm:$0xff]
        %v2988 = vld [vmem:[%s2 + $0x48] sm:$0xff]
        %v2989 = vld [vmem:[%s2 + $0x50] sm:$0xff]
        %v2990 = vld [vmem:[%s2 + $0x58] sm:$0xff]
        %v2991 = vld [vmem:[%s2 + $0x60] sm:$0xff]
        %v2992 = vld [vmem:[%s2 + $0x68] sm:$0xff]
        %v2993 = vld [vmem:[%s2 + $0x70] sm:$0xff]
        %v2994 = vld [vmem:[%s2 + $0x78] sm:$0xff]
        %2996 = vset.pattern.permute.xlu0 0
        %2997 = vperm.xlu0 %2996, %v2979
        %v2998 = vpop.permute.xlu0 %2997
        %3001 = vset.pattern.permute.xlu0 0
        %3002 = vperm.xlu0 %3001, %v2980
        %v3003 = vpop.permute.xlu0 %3002
        %3006 = vset.pattern.permute.xlu0 0
        %3007 = vperm.xlu0 %3006, %v2981
        %v3008 = vpop.permute.xlu0 %3007
        %3011 = vset.pattern.permute.xlu0 0
        %3012 = vperm.xlu0 %3011, %v2982
        %v3013 = vpop.permute.xlu0 %3012
        %3016 = vset.pattern.permute.xlu0 0
        %3017 = vperm.xlu0 %3016, %v2983
        %v3018 = vpop.permute.xlu0 %3017
        %3021 = vset.pattern.permute.xlu0 0
        %3022 = vperm.xlu0 %3021, %v2984
        %v3023 = vpop.permute.xlu0 %3022
        %3026 = vset.pattern.permute.xlu0 0
        %3027 = vperm.xlu0 %3026, %v2985
        %v3028 = vpop.permute.xlu0 %3027
        %3031 = vset.pattern.permute.xlu0 0
        %3032 = vperm.xlu0 %3031, %v2986
        %v3033 = vpop.permute.xlu0 %3032
        %3036 = vset.pattern.permute.xlu0 0
        %3037 = vperm.xlu0 %3036, %v2987
        %v3038 = vpop.permute.xlu0 %3037
        %3041 = vset.pattern.permute.xlu0 0
        %3042 = vperm.xlu0 %3041, %v2988
        %v3043 = vpop.permute.xlu0 %3042
        %3046 = vset.pattern.permute.xlu0 0
        %3047 = vperm.xlu0 %3046, %v2989
        %v3048 = vpop.permute.xlu0 %3047
        %3051 = vset.pattern.permute.xlu0 0
        %3052 = vperm.xlu0 %3051, %v2990
        %v3053 = vpop.permute.xlu0 %3052
        %3056 = vset.pattern.permute.xlu0 0
        %3057 = vperm.xlu0 %3056, %v2991
        %v3058 = vpop.permute.xlu0 %3057
        %3061 = vset.pattern.permute.xlu0 0
        %3062 = vperm.xlu0 %3061, %v2992
        %v3063 = vpop.permute.xlu0 %3062
        %3066 = vset.pattern.permute.xlu0 0
        %3067 = vperm.xlu0 %3066, %v2993
        %v3068 = vpop.permute.xlu0 %3067
        %3071 = vset.pattern.permute.xlu0 0
        %3072 = vperm.xlu0 %3071, %v2994
        %v3073 = vpop.permute.xlu0 %3072
        %v3075 = vadd.f32 %v2947, %v2998
        %v3076 = vadd.f32 %v2948, %v2998
        %v3077 = vadd.f32 %v2949, %v3003
        %v3078 = vadd.f32 %v2950, %v3003
        %v3079 = vadd.f32 %v2951, %v3008
        %v3080 = vadd.f32 %v2952, %v3008
        %v3081 = vadd.f32 %v2953, %v3013
        %v3082 = vadd.f32 %v2954, %v3013
        %v3083 = vadd.f32 %v2955, %v3018
        %v3084 = vadd.f32 %v2956, %v3018
        %v3085 = vadd.f32 %v2957, %v3023
        %v3086 = vadd.f32 %v2958, %v3023
        %v3087 = vadd.f32 %v2959, %v3028
        %v3088 = vadd.f32 %v2960, %v3028
        %v3089 = vadd.f32 %v2961, %v3033
        %v3090 = vadd.f32 %v2962, %v3033
        %v3091 = vadd.f32 %v2963, %v3038
        %v3092 = vadd.f32 %v2964, %v3038
        %v3093 = vadd.f32 %v2965, %v3043
        %v3094 = vadd.f32 %v2966, %v3043
        %v3095 = vadd.f32 %v2967, %v3048
        %v3096 = vadd.f32 %v2968, %v3048
        %v3097 = vadd.f32 %v2969, %v3053
        %v3098 = vadd.f32 %v2970, %v3053
        %v3099 = vadd.f32 %v2971, %v3058
        %v3100 = vadd.f32 %v2972, %v3058
        %v3101 = vadd.f32 %v2973, %v3063
        %v3102 = vadd.f32 %v2974, %v3063
        %v3103 = vadd.f32 %v2975, %v3068
        %v3104 = vadd.f32 %v2976, %v3068
        %v3105 = vadd.f32 %v2977, %v3073
        %v3106 = vadd.f32 %v2978, %v3073
        %v3107 = vadd.f32 %v3075, %v3076
        %v3108 = vadd.f32 %v3107, %v3077
        %v3109 = vadd.f32 %v3108, %v3078
        %v3110 = vadd.f32 %v3109, %v3079
        %v3111 = vadd.f32 %v3110, %v3080
        %v3112 = vadd.f32 %v3111, %v3081
        %v3113 = vadd.f32 %v3112, %v3082
        %v3114 = vadd.f32 %v3113, %v3083
        %v3115 = vadd.f32 %v3114, %v3084
        %v3116 = vadd.f32 %v3115, %v3085
        %v3117 = vadd.f32 %v3116, %v3086
        %v3118 = vadd.f32 %v3117, %v3087
        %v3119 = vadd.f32 %v3118, %v3088
        %v3120 = vadd.f32 %v3119, %v3089
        %v3121 = vadd.f32 %v3120, %v3090
        %v3122 = vadd.f32 %v3121, %v3091
        %v3123 = vadd.f32 %v3122, %v3092
        %v3124 = vadd.f32 %v3123, %v3093
        %v3125 = vadd.f32 %v3124, %v3094
        %v3126 = vadd.f32 %v3125, %v3095
        %v3127 = vadd.f32 %v3126, %v3096
        %v3128 = vadd.f32 %v3127, %v3097
        %v3129 = vadd.f32 %v3128, %v3098
        %v3130 = vadd.f32 %v3129, %v3099
        %v3131 = vadd.f32 %v3130, %v3100
        %v3132 = vadd.f32 %v3131, %v3101
        %v3133 = vadd.f32 %v3132, %v3102
        %v3134 = vadd.f32 %v3133, %v3103
        %v3135 = vadd.f32 %v3134, %v3104
        %v3136 = vadd.f32 %v3135, %v3105
        %v3137 = vadd.f32 %v3136, %v3106
        %3138 = vadd.xlane.f32.xlu0 %v3137
        %v3139 = vpop.xlane.xlu0 %3138
        %v3140 = vrot.slane %v3139, 4
        %v3141 = vadd.f32 %v3139, %v3140
        %v3142 = vrot.slane %v3141, 2
        %v3143 = vadd.f32 %v3141, %v3142
        %v3144 = vrot.slane %v3143, 1
        %v3145 = vadd.f32 %v3143, %v3144
        %s3146 = vtos %v3145
        %v3147 = vstv %s3146
        %v3148 = vmul.f32 %v3075, %v3075
        %v3149 = vmul.f32 %v3076, %v3076
        %v3150 = vmul.f32 %v3077, %v3077
        %v3151 = vmul.f32 %v3078, %v3078
        %v3152 = vmul.f32 %v3079, %v3079
        %v3153 = vmul.f32 %v3080, %v3080
        %v3154 = vmul.f32 %v3081, %v3081
        %v3155 = vmul.f32 %v3082, %v3082
        %v3156 = vmul.f32 %v3083, %v3083
        %v3157 = vmul.f32 %v3084, %v3084
        %v3158 = vmul.f32 %v3085, %v3085
        %v3159 = vmul.f32 %v3086, %v3086
        %v3160 = vmul.f32 %v3087, %v3087
        %v3161 = vmul.f32 %v3088, %v3088
        %v3162 = vmul.f32 %v3089, %v3089
        %v3163 = vmul.f32 %v3090, %v3090
        %v3164 = vmul.f32 %v3091, %v3091
        %v3165 = vmul.f32 %v3092, %v3092
        %v3166 = vmul.f32 %v3093, %v3093
        %v3167 = vmul.f32 %v3094, %v3094
        %v3168 = vmul.f32 %v3095, %v3095
        %v3169 = vmul.f32 %v3096, %v3096
        %v3170 = vmul.f32 %v3097, %v3097
        %v3171 = vmul.f32 %v3098, %v3098
        %v3172 = vmul.f32 %v3099, %v3099
        %v3173 = vmul.f32 %v3100, %v3100
        %v3174 = vmul.f32 %v3101, %v3101
        %v3175 = vmul.f32 %v3102, %v3102
        %v3176 = vmul.f32 %v3103, %v3103
        %v3177 = vmul.f32 %v3104, %v3104
        %v3178 = vmul.f32 %v3105, %v3105
        %v3179 = vmul.f32 %v3106, %v3106
        %v3180 = vadd.f32 %v3148, %v3149
        %v3181 = vadd.f32 %v3180, %v3150
        %v3182 = vadd.f32 %v3181, %v3151
        %v3183 = vadd.f32 %v3182, %v3152
        %v3184 = vadd.f32 %v3183, %v3153
        %v3185 = vadd.f32 %v3184, %v3154
        %v3186 = vadd.f32 %v3185, %v3155
        %v3187 = vadd.f32 %v3186, %v3156
        %v3188 = vadd.f32 %v3187, %v3157
        %v3189 = vadd.f32 %v3188, %v3158
        %v3190 = vadd.f32 %v3189, %v3159
        %v3191 = vadd.f32 %v3190, %v3160
        %v3192 = vadd.f32 %v3191, %v3161
        %v3193 = vadd.f32 %v3192, %v3162
        %v3194 = vadd.f32 %v3193, %v3163
        %v3195 = vadd.f32 %v3194, %v3164
        %v3196 = vadd.f32 %v3195, %v3165
        %v3197 = vadd.f32 %v3196, %v3166
        %v3198 = vadd.f32 %v3197, %v3167
        %v3199 = vadd.f32 %v3198, %v3168
        %v3200 = vadd.f32 %v3199, %v3169
        %v3201 = vadd.f32 %v3200, %v3170
        %v3202 = vadd.f32 %v3201, %v3171
        %v3203 = vadd.f32 %v3202, %v3172
        %v3204 = vadd.f32 %v3203, %v3173
        %v3205 = vadd.f32 %v3204, %v3174
        %v3206 = vadd.f32 %v3205, %v3175
        %v3207 = vadd.f32 %v3206, %v3176
        %v3208 = vadd.f32 %v3207, %v3177
        %v3209 = vadd.f32 %v3208, %v3178
        %v3210 = vadd.f32 %v3209, %v3179
        %3211 = vadd.xlane.f32.xlu0 %v3210
        %v3212 = vpop.xlane.xlu0 %3211
        %v3213 = vrot.slane %v3212, 4
        %v3214 = vadd.f32 %v3212, %v3213
        %v3215 = vrot.slane %v3214, 2
        %v3216 = vadd.f32 %v3214, %v3215
        %v3217 = vrot.slane %v3216, 1
        %v3218 = vadd.f32 %v3216, %v3217
        %s3219 = vtos %v3218
        %v3220 = vstv %s3219
        %v3221 = vrcp.pop 32768.0
        %v3222 = vmul.f32 %v3147, %v3221
        %v3223 = vmul.f32 %v3220, %v3221
        %v3224 = vmul.f32 %v3222, %v3222
        %v3225 = vsub.f32 %v3223, %v3224
        %v3226 = vsub.f32 %v3075, %v3222
        %v3227 = vsub.f32 %v3076, %v3222
        %v3228 = vsub.f32 %v3077, %v3222
        %v3229 = vsub.f32 %v3078, %v3222
        %v3230 = vsub.f32 %v3079, %v3222
        %v3231 = vsub.f32 %v3080, %v3222
        %v3232 = vsub.f32 %v3081, %v3222
        %v3233 = vsub.f32 %v3082, %v3222
        %v3234 = vsub.f32 %v3083, %v3222
        %v3235 = vsub.f32 %v3084, %v3222
        %v3236 = vsub.f32 %v3085, %v3222
        %v3237 = vsub.f32 %v3086, %v3222
        %v3238 = vsub.f32 %v3087, %v3222
        %v3239 = vsub.f32 %v3088, %v3222
        %v3240 = vsub.f32 %v3089, %v3222
        %v3241 = vsub.f32 %v3090, %v3222
        %v3242 = vsub.f32 %v3091, %v3222
        %v3243 = vsub.f32 %v3092, %v3222
        %v3244 = vsub.f32 %v3093, %v3222
        %v3245 = vsub.f32 %v3094, %v3222
        %v3246 = vsub.f32 %v3095, %v3222
        %v3247 = vsub.f32 %v3096, %v3222
        %v3248 = vsub.f32 %v3097, %v3222
        %v3249 = vsub.f32 %v3098, %v3222
        %v3250 = vsub.f32 %v3099, %v3222
        %v3251 = vsub.f32 %v3100, %v3222
        %v3252 = vsub.f32 %v3101, %v3222
        %v3253 = vsub.f32 %v3102, %v3222
        %v3254 = vsub.f32 %v3103, %v3222
        %v3255 = vsub.f32 %v3104, %v3222
        %v3256 = vsub.f32 %v3105, %v3222
        %v3257 = vsub.f32 %v3106, %v3222
        %v3258 = vadd.f32 %v3225, 1e-05
        %v3259 = vrsqrt.pop %v3258
        %v3260 = vmul.f32 %v3226, %v3259
        %v3261 = vmul.f32 %v3227, %v3259
        %v3262 = vmul.f32 %v3228, %v3259
        %v3263 = vmul.f32 %v3229, %v3259
        %v3264 = vmul.f32 %v3230, %v3259
        %v3265 = vmul.f32 %v3231, %v3259
        %v3266 = vmul.f32 %v3232, %v3259
        %v3267 = vmul.f32 %v3233, %v3259
        %v3268 = vmul.f32 %v3234, %v3259
        %v3269 = vmul.f32 %v3235, %v3259
        %v3270 = vmul.f32 %v3236, %v3259
        %v3271 = vmul.f32 %v3237, %v3259
        %v3272 = vmul.f32 %v3238, %v3259
        %v3273 = vmul.f32 %v3239, %v3259
        %v3274 = vmul.f32 %v3240, %v3259
        %v3275 = vmul.f32 %v3241, %v3259
        %v3276 = vmul.f32 %v3242, %v3259
        %v3277 = vmul.f32 %v3243, %v3259
        %v3278 = vmul.f32 %v3244, %v3259
        %v3279 = vmul.f32 %v3245, %v3259
        %v3280 = vmul.f32 %v3246, %v3259
        %v3281 = vmul.f32 %v3247, %v3259
        %v3282 = vmul.f32 %v3248, %v3259
        %v3283 = vmul.f32 %v3249, %v3259
        %v3284 = vmul.f32 %v3250, %v3259
        %v3285 = vmul.f32 %v3251, %v3259
        %v3286 = vmul.f32 %v3252, %v3259
        %v3287 = vmul.f32 %v3253, %v3259
        %v3288 = vmul.f32 %v3254, %v3259
        %v3289 = vmul.f32 %v3255, %v3259
        %v3290 = vmul.f32 %v3256, %v3259
        %v3291 = vmul.f32 %v3257, %v3259
        %v3292 = vld [vmem:[%s3] sm:$0xff]
        %v3293 = vld [vmem:[%s3 + $0x8] sm:$0xff]
        %v3294 = vld [vmem:[%s3 + $0x10] sm:$0xff]
        %v3295 = vld [vmem:[%s3 + $0x18] sm:$0xff]
        %v3296 = vld [vmem:[%s3 + $0x20] sm:$0xff]
        %v3297 = vld [vmem:[%s3 + $0x28] sm:$0xff]
        %v3298 = vld [vmem:[%s3 + $0x30] sm:$0xff]
        %v3299 = vld [vmem:[%s3 + $0x38] sm:$0xff]
        %v3300 = vld [vmem:[%s3 + $0x40] sm:$0xff]
        %v3301 = vld [vmem:[%s3 + $0x48] sm:$0xff]
        %v3302 = vld [vmem:[%s3 + $0x50] sm:$0xff]
        %v3303 = vld [vmem:[%s3 + $0x58] sm:$0xff]
        %v3304 = vld [vmem:[%s3 + $0x60] sm:$0xff]
        %v3305 = vld [vmem:[%s3 + $0x68] sm:$0xff]
        %v3306 = vld [vmem:[%s3 + $0x70] sm:$0xff]
        %v3307 = vld [vmem:[%s3 + $0x78] sm:$0xff]
        %v3308 = vunpack.c.l.bf16 %v3292
        %v3309 = vunpack.c.h.bf16 %v3292
        %v3310 = vunpack.c.l.bf16 %v3293
        %v3311 = vunpack.c.h.bf16 %v3293
        %v3312 = vunpack.c.l.bf16 %v3294
        %v3313 = vunpack.c.h.bf16 %v3294
        %v3314 = vunpack.c.l.bf16 %v3295
        %v3315 = vunpack.c.h.bf16 %v3295
        %v3316 = vunpack.c.l.bf16 %v3296
        %v3317 = vunpack.c.h.bf16 %v3296
        %v3318 = vunpack.c.l.bf16 %v3297
        %v3319 = vunpack.c.h.bf16 %v3297
        %v3320 = vunpack.c.l.bf16 %v3298
        %v3321 = vunpack.c.h.bf16 %v3298
        %v3322 = vunpack.c.l.bf16 %v3299
        %v3323 = vunpack.c.h.bf16 %v3299
        %v3324 = vunpack.c.l.bf16 %v3300
        %v3325 = vunpack.c.h.bf16 %v3300
        %v3326 = vunpack.c.l.bf16 %v3301
        %v3327 = vunpack.c.h.bf16 %v3301
        %v3328 = vunpack.c.l.bf16 %v3302
        %v3329 = vunpack.c.h.bf16 %v3302
        %v3330 = vunpack.c.l.bf16 %v3303
        %v3331 = vunpack.c.h.bf16 %v3303
        %v3332 = vunpack.c.l.bf16 %v3304
        %v3333 = vunpack.c.h.bf16 %v3304
        %v3334 = vunpack.c.l.bf16 %v3305
        %v3335 = vunpack.c.h.bf16 %v3305
        %v3336 = vunpack.c.l.bf16 %v3306
        %v3337 = vunpack.c.h.bf16 %v3306
        %v3338 = vunpack.c.l.bf16 %v3307
        %v3339 = vunpack.c.h.bf16 %v3307
        %v3340 = vmul.f32 %v3260, %v3308
        %v3341 = vmul.f32 %v3261, %v3309
        %v3342 = vmul.f32 %v3262, %v3310
        %v3343 = vmul.f32 %v3263, %v3311
        %v3344 = vmul.f32 %v3264, %v3312
        %v3345 = vmul.f32 %v3265, %v3313
        %v3346 = vmul.f32 %v3266, %v3314
        %v3347 = vmul.f32 %v3267, %v3315
        %v3348 = vmul.f32 %v3268, %v3316
        %v3349 = vmul.f32 %v3269, %v3317
        %v3350 = vmul.f32 %v3270, %v3318
        %v3351 = vmul.f32 %v3271, %v3319
        %v3352 = vmul.f32 %v3272, %v3320
        %v3353 = vmul.f32 %v3273, %v3321
        %v3354 = vmul.f32 %v3274, %v3322
        %v3355 = vmul.f32 %v3275, %v3323
        %v3356 = vmul.f32 %v3276, %v3324
        %v3357 = vmul.f32 %v3277, %v3325
        %v3358 = vmul.f32 %v3278, %v3326
        %v3359 = vmul.f32 %v3279, %v3327
        %v3360 = vmul.f32 %v3280, %v3328
        %v3361 = vmul.f32 %v3281, %v3329
        %v3362 = vmul.f32 %v3282, %v3330
        %v3363 = vmul.f32 %v3283, %v3331
        %v3364 = vmul.f32 %v3284, %v3332
        %v3365 = vmul.f32 %v3285, %v3333
        %v3366 = vmul.f32 %v3286, %v3334
        %v3367 = vmul.f32 %v3287, %v3335
        %v3368 = vmul.f32 %v3288, %v3336
        %v3369 = vmul.f32 %v3289, %v3337
        %v3370 = vmul.f32 %v3290, %v3338
        %v3371 = vmul.f32 %v3291, %v3339
        %v3372 = vld [vmem:[%s4] sm:$0xff]
        %v3373 = vld [vmem:[%s4 + $0x8] sm:$0xff]
        %v3374 = vld [vmem:[%s4 + $0x10] sm:$0xff]
        %v3375 = vld [vmem:[%s4 + $0x18] sm:$0xff]
        %v3376 = vld [vmem:[%s4 + $0x20] sm:$0xff]
        %v3377 = vld [vmem:[%s4 + $0x28] sm:$0xff]
        %v3378 = vld [vmem:[%s4 + $0x30] sm:$0xff]
        %v3379 = vld [vmem:[%s4 + $0x38] sm:$0xff]
        %v3380 = vld [vmem:[%s4 + $0x40] sm:$0xff]
        %v3381 = vld [vmem:[%s4 + $0x48] sm:$0xff]
        %v3382 = vld [vmem:[%s4 + $0x50] sm:$0xff]
        %v3383 = vld [vmem:[%s4 + $0x58] sm:$0xff]
        %v3384 = vld [vmem:[%s4 + $0x60] sm:$0xff]
        %v3385 = vld [vmem:[%s4 + $0x68] sm:$0xff]
        %v3386 = vld [vmem:[%s4 + $0x70] sm:$0xff]
        %v3387 = vld [vmem:[%s4 + $0x78] sm:$0xff]
        %v3388 = vunpack.c.l.bf16 %v3372
        %v3389 = vunpack.c.h.bf16 %v3372
        %v3390 = vunpack.c.l.bf16 %v3373
        %v3391 = vunpack.c.h.bf16 %v3373
        %v3392 = vunpack.c.l.bf16 %v3374
        %v3393 = vunpack.c.h.bf16 %v3374
        %v3394 = vunpack.c.l.bf16 %v3375
        %v3395 = vunpack.c.h.bf16 %v3375
        %v3396 = vunpack.c.l.bf16 %v3376
        %v3397 = vunpack.c.h.bf16 %v3376
        %v3398 = vunpack.c.l.bf16 %v3377
        %v3399 = vunpack.c.h.bf16 %v3377
        %v3400 = vunpack.c.l.bf16 %v3378
        %v3401 = vunpack.c.h.bf16 %v3378
        %v3402 = vunpack.c.l.bf16 %v3379
        %v3403 = vunpack.c.h.bf16 %v3379
        %v3404 = vunpack.c.l.bf16 %v3380
        %v3405 = vunpack.c.h.bf16 %v3380
        %v3406 = vunpack.c.l.bf16 %v3381
        %v3407 = vunpack.c.h.bf16 %v3381
        %v3408 = vunpack.c.l.bf16 %v3382
        %v3409 = vunpack.c.h.bf16 %v3382
        %v3410 = vunpack.c.l.bf16 %v3383
        %v3411 = vunpack.c.h.bf16 %v3383
        %v3412 = vunpack.c.l.bf16 %v3384
        %v3413 = vunpack.c.h.bf16 %v3384
        %v3414 = vunpack.c.l.bf16 %v3385
        %v3415 = vunpack.c.h.bf16 %v3385
        %v3416 = vunpack.c.l.bf16 %v3386
        %v3417 = vunpack.c.h.bf16 %v3386
        %v3418 = vunpack.c.l.bf16 %v3387
        %v3419 = vunpack.c.h.bf16 %v3387
        %v3420 = vadd.f32 %v3340, %v3388
        %v3421 = vadd.f32 %v3341, %v3389
        %v3422 = vadd.f32 %v3342, %v3390
        %v3423 = vadd.f32 %v3343, %v3391
        %v3424 = vadd.f32 %v3344, %v3392
        %v3425 = vadd.f32 %v3345, %v3393
        %v3426 = vadd.f32 %v3346, %v3394
        %v3427 = vadd.f32 %v3347, %v3395
        %v3428 = vadd.f32 %v3348, %v3396
        %v3429 = vadd.f32 %v3349, %v3397
        %v3430 = vadd.f32 %v3350, %v3398
        %v3431 = vadd.f32 %v3351, %v3399
        %v3432 = vadd.f32 %v3352, %v3400
        %v3433 = vadd.f32 %v3353, %v3401
        %v3434 = vadd.f32 %v3354, %v3402
        %v3435 = vadd.f32 %v3355, %v3403
        %v3436 = vadd.f32 %v3356, %v3404
        %v3437 = vadd.f32 %v3357, %v3405
        %v3438 = vadd.f32 %v3358, %v3406
        %v3439 = vadd.f32 %v3359, %v3407
        %v3440 = vadd.f32 %v3360, %v3408
        %v3441 = vadd.f32 %v3361, %v3409
        %v3442 = vadd.f32 %v3362, %v3410
        %v3443 = vadd.f32 %v3363, %v3411
        %v3444 = vadd.f32 %v3364, %v3412
        %v3445 = vadd.f32 %v3365, %v3413
        %v3446 = vadd.f32 %v3366, %v3414
        %v3447 = vadd.f32 %v3367, %v3415
        %v3448 = vadd.f32 %v3368, %v3416
        %v3449 = vadd.f32 %v3369, %v3417
        %v3450 = vadd.f32 %v3370, %v3418
        %v3451 = vadd.f32 %v3371, %v3419
        %v3452 = vxor.u32 %v3420, 2147483648
        %v3453 = vxor.u32 %v3421, 2147483648
        %v3454 = vxor.u32 %v3422, 2147483648
        %v3455 = vxor.u32 %v3423, 2147483648
        %v3456 = vxor.u32 %v3424, 2147483648
        %v3457 = vxor.u32 %v3425, 2147483648
        %v3458 = vxor.u32 %v3426, 2147483648
        %v3459 = vxor.u32 %v3427, 2147483648
        %v3460 = vmul.f32 %v3452, 1.442695
        %v3461 = vpow.pop %v3460
        %v3462 = vmul.f32 %v3453, 1.442695
        %v3463 = vpow.pop %v3462
        %v3464 = vmul.f32 %v3454, 1.442695
        %v3465 = vpow.pop %v3464
        %v3466 = vmul.f32 %v3455, 1.442695
        %v3467 = vpow.pop %v3466
        %v3468 = vmul.f32 %v3456, 1.442695
        %v3469 = vpow.pop %v3468
        %v3470 = vmul.f32 %v3457, 1.442695
        %v3471 = vpow.pop %v3470
        %v3472 = vmul.f32 %v3458, 1.442695
        %v3473 = vpow.pop %v3472
        %v3474 = vmul.f32 %v3459, 1.442695
        %v3475 = vpow.pop %v3474
        %v3476 = vadd.f32 %v3461, 1.0
        %v3477 = vadd.f32 %v3463, 1.0
        %v3478 = vadd.f32 %v3465, 1.0
        %v3479 = vadd.f32 %v3467, 1.0
        %v3480 = vadd.f32 %v3469, 1.0
        %v3481 = vadd.f32 %v3471, 1.0
        %v3482 = vadd.f32 %v3473, 1.0
        %v3483 = vadd.f32 %v3475, 1.0
        %v3484 = vrcp.pop %v3476
        %v3485 = vmul.f32 1.0, %v3484
        %v3486 = vrcp.pop %v3477
        %v3487 = vmul.f32 1.0, %v3486
        %v3488 = vrcp.pop %v3478
        %v3489 = vmul.f32 1.0, %v3488
        %v3490 = vrcp.pop %v3479
        %v3491 = vmul.f32 1.0, %v3490
        %v3492 = vrcp.pop %v3480
        %v3493 = vmul.f32 1.0, %v3492
        %v3494 = vrcp.pop %v3481
        %v3495 = vmul.f32 1.0, %v3494
        %v3496 = vrcp.pop %v3482
        %v3497 = vmul.f32 1.0, %v3496
        %v3498 = vrcp.pop %v3483
        %v3499 = vmul.f32 1.0, %v3498
        %v3500 = vxor.u32 %v3428, 2147483648
        %v3501 = vxor.u32 %v3429, 2147483648
        %v3502 = vxor.u32 %v3430, 2147483648
        %v3503 = vxor.u32 %v3431, 2147483648
        %v3504 = vxor.u32 %v3432, 2147483648
        %v3505 = vxor.u32 %v3433, 2147483648
        %v3506 = vxor.u32 %v3434, 2147483648
        %v3507 = vxor.u32 %v3435, 2147483648
        %v3508 = vmul.f32 %v3500, 1.442695
        %v3509 = vpow.pop %v3508
        %v3510 = vmul.f32 %v3501, 1.442695
        %v3511 = vpow.pop %v3510
        %v3512 = vmul.f32 %v3502, 1.442695
        %v3513 = vpow.pop %v3512
        %v3514 = vmul.f32 %v3503, 1.442695
        %v3515 = vpow.pop %v3514
        %v3516 = vmul.f32 %v3504, 1.442695
        %v3517 = vpow.pop %v3516
        %v3518 = vmul.f32 %v3505, 1.442695
        %v3519 = vpow.pop %v3518
        %v3520 = vmul.f32 %v3506, 1.442695
        %v3521 = vpow.pop %v3520
        %v3522 = vmul.f32 %v3507, 1.442695
        %v3523 = vpow.pop %v3522
        %v3524 = vadd.f32 %v3509, 1.0
        %v3525 = vadd.f32 %v3511, 1.0
        %v3526 = vadd.f32 %v3513, 1.0
        %v3527 = vadd.f32 %v3515, 1.0
        %v3528 = vadd.f32 %v3517, 1.0
        %v3529 = vadd.f32 %v3519, 1.0
        %v3530 = vadd.f32 %v3521, 1.0
        %v3531 = vadd.f32 %v3523, 1.0
        %v3532 = vrcp.pop %v3524
        %v3533 = vmul.f32 1.0, %v3532
        %v3534 = vrcp.pop %v3525
        %v3535 = vmul.f32 1.0, %v3534
        %v3536 = vrcp.pop %v3526
        %v3537 = vmul.f32 1.0, %v3536
        %v3538 = vrcp.pop %v3527
        %v3539 = vmul.f32 1.0, %v3538
        %v3540 = vrcp.pop %v3528
        %v3541 = vmul.f32 1.0, %v3540
        %v3542 = vrcp.pop %v3529
        %v3543 = vmul.f32 1.0, %v3542
        %v3544 = vrcp.pop %v3530
        %v3545 = vmul.f32 1.0, %v3544
        %v3546 = vrcp.pop %v3531
        %v3547 = vmul.f32 1.0, %v3546
        %v3548 = vxor.u32 %v3436, 2147483648
        %v3549 = vxor.u32 %v3437, 2147483648
        %v3550 = vxor.u32 %v3438, 2147483648
        %v3551 = vxor.u32 %v3439, 2147483648
        %v3552 = vxor.u32 %v3440, 2147483648
        %v3553 = vxor.u32 %v3441, 2147483648
        %v3554 = vxor.u32 %v3442, 2147483648
        %v3555 = vxor.u32 %v3443, 2147483648
        %v3556 = vmul.f32 %v3548, 1.442695
        %v3557 = vpow.pop %v3556
        %v3558 = vmul.f32 %v3549, 1.442695
        %v3559 = vpow.pop %v3558
        %v3560 = vmul.f32 %v3550, 1.442695
        %v3561 = vpow.pop %v3560
        %v3562 = vmul.f32 %v3551, 1.442695
        %v3563 = vpow.pop %v3562
        %v3564 = vmul.f32 %v3552, 1.442695
        %v3565 = vpow.pop %v3564
        %v3566 = vmul.f32 %v3553, 1.442695
        %v3567 = vpow.pop %v3566
        %v3568 = vmul.f32 %v3554, 1.442695
        %v3569 = vpow.pop %v3568
        %v3570 = vmul.f32 %v3555, 1.442695
        %v3571 = vpow.pop %v3570
        %v3572 = vadd.f32 %v3557, 1.0
        %v3573 = vadd.f32 %v3559, 1.0
        %v3574 = vadd.f32 %v3561, 1.0
        %v3575 = vadd.f32 %v3563, 1.0
        %v3576 = vadd.f32 %v3565, 1.0
        %v3577 = vadd.f32 %v3567, 1.0
        %v3578 = vadd.f32 %v3569, 1.0
        %v3579 = vadd.f32 %v3571, 1.0
        %v3580 = vrcp.pop %v3572
        %v3581 = vmul.f32 1.0, %v3580
        %v3582 = vrcp.pop %v3573
        %v3583 = vmul.f32 1.0, %v3582
        %v3584 = vrcp.pop %v3574
        %v3585 = vmul.f32 1.0, %v3584
        %v3586 = vrcp.pop %v3575
        %v3587 = vmul.f32 1.0, %v3586
        %v3588 = vrcp.pop %v3576
        %v3589 = vmul.f32 1.0, %v3588
        %v3590 = vrcp.pop %v3577
        %v3591 = vmul.f32 1.0, %v3590
        %v3592 = vrcp.pop %v3578
        %v3593 = vmul.f32 1.0, %v3592
        %v3594 = vrcp.pop %v3579
        %v3595 = vmul.f32 1.0, %v3594
        %v3596 = vtanh.pop %v3444
        %v3597 = vtanh.pop %v3445
        %v3598 = vtanh.pop %v3446
        %v3599 = vtanh.pop %v3447
        %v3600 = vtanh.pop %v3448
        %v3601 = vtanh.pop %v3449
        %v3602 = vtanh.pop %v3450
        %v3603 = vtanh.pop %v3451
        %v3604 = vld [vmem:[#allocation4] sm:$0xff]
        %v3605 = vld [vmem:[#allocation4 + $0x8] sm:$0xff]
        %v3606 = vld [vmem:[#allocation4 + $0x10] sm:$0xff]
        %v3607 = vld [vmem:[#allocation4 + $0x18] sm:$0xff]
        %v3608 = vld [vmem:[#allocation4 + $0x20] sm:$0xff]
        %v3609 = vld [vmem:[#allocation4 + $0x28] sm:$0xff]
        %v3610 = vld [vmem:[#allocation4 + $0x30] sm:$0xff]
        %v3611 = vld [vmem:[#allocation4 + $0x38] sm:$0xff]
        %v3612 = vmul.f32 %v3533, %v3604
        %v3613 = vmul.f32 %v3535, %v3605
        %v3614 = vmul.f32 %v3537, %v3606
        %v3615 = vmul.f32 %v3539, %v3607
        %v3616 = vmul.f32 %v3541, %v3608
        %v3617 = vmul.f32 %v3543, %v3609
        %v3618 = vmul.f32 %v3545, %v3610
        %v3619 = vmul.f32 %v3547, %v3611
        %v3620 = vmul.f32 %v3485, %v3596
        %v3621 = vmul.f32 %v3487, %v3597
        %v3622 = vmul.f32 %v3489, %v3598
        %v3623 = vmul.f32 %v3491, %v3599
        %v3624 = vmul.f32 %v3493, %v3600
        %v3625 = vmul.f32 %v3495, %v3601
        %v3626 = vmul.f32 %v3497, %v3602
        %v3627 = vmul.f32 %v3499, %v3603
        %v3628 = vadd.f32 %v3612, %v3620
        %v3629 = vadd.f32 %v3613, %v3621
        %v3630 = vadd.f32 %v3614, %v3622
        %v3631 = vadd.f32 %v3615, %v3623
        %v3632 = vadd.f32 %v3616, %v3624
        %v3633 = vadd.f32 %v3617, %v3625
        %v3634 = vadd.f32 %v3618, %v3626
        %v3635 = vadd.f32 %v3619, %v3627
        %v3636 = vtanh.pop %v3628
        %v3637 = vtanh.pop %v3629
        %v3638 = vtanh.pop %v3630
        %v3639 = vtanh.pop %v3631
        %v3640 = vtanh.pop %v3632
        %v3641 = vtanh.pop %v3633
        %v3642 = vtanh.pop %v3634
        %v3643 = vtanh.pop %v3635
        %v3644 = vmul.f32 %v3581, %v3636
        %v3645 = vmul.f32 %v3583, %v3637
        %v3646 = vmul.f32 %v3585, %v3638
        %v3647 = vmul.f32 %v3587, %v3639
        %v3648 = vmul.f32 %v3589, %v3640
        %v3649 = vmul.f32 %v3591, %v3641
        %v3650 = vmul.f32 %v3593, %v3642
        %v3651 = vmul.f32 %v3595, %v3643
        %v3652 = vadd.f32 %v3644, %v338
        %v3653 = vadd.f32 %v3645, %v339
        %v3654 = vadd.f32 %v3646, %v340
        %v3655 = vadd.f32 %v3647, %v341
        %v3656 = vadd.f32 %v3648, %v342
        %v3657 = vadd.f32 %v3649, %v343
        %v3658 = vadd.f32 %v3650, %v344
        %v3659 = vadd.f32 %v3651, %v345
        %3660 = vst [vmem:[#allocation3] sm:$0xff] %v3652
        %3661 = vst [vmem:[#allocation3 + $0x8] sm:$0xff] %v3653
        %3662 = vst [vmem:[#allocation3 + $0x10] sm:$0xff] %v3654
        %3663 = vst [vmem:[#allocation3 + $0x18] sm:$0xff] %v3655
        %3664 = vst [vmem:[#allocation3 + $0x20] sm:$0xff] %v3656
        %3665 = vst [vmem:[#allocation3 + $0x28] sm:$0xff] %v3657
        %3666 = vst [vmem:[#allocation3 + $0x30] sm:$0xff] %v3658
        %3667 = vst [vmem:[#allocation3 + $0x38] sm:$0xff] %v3659
        %3668 = vst [vmem:[#allocation4] sm:$0xff] %v3628
        %3669 = vst [vmem:[#allocation4 + $0x8] sm:$0xff] %v3629
        %3670 = vst [vmem:[#allocation4 + $0x10] sm:$0xff] %v3630
        %3671 = vst [vmem:[#allocation4 + $0x18] sm:$0xff] %v3631
        %3672 = vst [vmem:[#allocation4 + $0x20] sm:$0xff] %v3632
        %3673 = vst [vmem:[#allocation4 + $0x28] sm:$0xff] %v3633
        %3674 = vst [vmem:[#allocation4 + $0x30] sm:$0xff] %v3634
        %3675 = vst [vmem:[#allocation4 + $0x38] sm:$0xff] %v3635
        %3676 = vst [vmem:[%s298] sm:$0xff] %v3652
        %3677 = vst [vmem:[%s298 + $0x8] sm:$0xff] %v3653
        %3678 = vst [vmem:[%s298 + $0x10] sm:$0xff] %v3654
        %3679 = vst [vmem:[%s298 + $0x18] sm:$0xff] %v3655
        %3680 = vst [vmem:[%s298 + $0x20] sm:$0xff] %v3656
        %3681 = vst [vmem:[%s298 + $0x28] sm:$0xff] %v3657
        %3682 = vst [vmem:[%s298 + $0x30] sm:$0xff] %v3658
        %3683 = vst [vmem:[%s298 + $0x38] sm:$0xff] %v3659
        %3684 = vst [vmem:[%s280] sm:$0xff] %v3628
        %3685 = vst [vmem:[%s280 + $0x8] sm:$0xff] %v3629
        %3686 = vst [vmem:[%s280 + $0x10] sm:$0xff] %v3630
        %3687 = vst [vmem:[%s280 + $0x18] sm:$0xff] %v3631
        %3688 = vst [vmem:[%s280 + $0x20] sm:$0xff] %v3632
        %3689 = vst [vmem:[%s280 + $0x28] sm:$0xff] %v3633
        %3690 = vst [vmem:[%s280 + $0x30] sm:$0xff] %v3634
        %3691 = vst [vmem:[%s280 + $0x38] sm:$0xff] %v3635
        %p3692 = scmp.lt.s32.totalorder %s25, 1
        %s3693 = scalar_select %p3692, %s25, 1
        %p3694 = scmp.lt.s32.totalorder %s26, 3
        %s3695 = scalar_select %p3694, %s26, 3
        %s3696 = smul.addr %s3695, 8
        %s3697 = smul.addr %s3693, 32
        %s3698 = sadd.s32 %s3696, %s3697
        %s3699 = smul.addr %s3698, 8
        %s3700 = scalar_lea.vmem %s5, %s3699
        %s3701 = sand.u32 %s181, 1
        %s3702 = scalar_lea.sflag [#allocation6], %s3701
        %s3703 = sand.u32 %s181, 1
        %s3704 = smul.addr %s3703, 64
        %s3705 = scalar_lea.vmem [#allocation5], %s3704
        // Predicated region
        $region45: #{convlstm_forward.2} parent=39 // pred_check
          %p3706 = pneg %p165
        $region46: #{convlstm_forward.2} parent=39 // pred_check_branch
          %3708 = sbr.rel (%p3706) target = $region48
        $region47: #{convlstm_forward.2} parent=39 // pred_region
          _
        $region48: #{convlstm_forward.2} parent=39 // pred_fallthru
          _
        // Predicated region
        $region49: #{convlstm_forward.2} parent=39 // pred_check
          %p3709 = pneg %p191
        $region50: #{convlstm_forward.2} parent=39 // pred_check_branch
          %3711 = sbr.rel (%p3709) target = $region52
        $region51: #{convlstm_forward.2} parent=39 // pred_region
          %s3713 = ssub.s32 1024, 1024
          %3714 = vsyncadd %s3702, %s3713
          %s3715 = smul.addr %s25, 8
          %s3716 = smul.addr %s3715, 128
          %s3717 = scalar_lea.hbm %s6, %s3716
          %s3718 = sshll.u32 %s3705, 4
          %s3719 = int_to_ptr.vmem [resolvable:$true] %s3718
          %3724 = dma.vmem_to_hbm [thread:$0]  %s3719, 1024, %s3717, %s3702, 256, 256, 16
        $region52: #{convlstm_forward.2} parent=39 // pred_fallthru
          _
      $region40: #{convlstm_forward.2} parent=5 // pred_fallthru
        _
      %p3725 = scmp.le.s32.totalorder 2, %s16
      // Predicated region
      $region53: #{convlstm_forward.2} parent=5 // pred_check
        %p3726 = pneg %p3725
      $region54: #{convlstm_forward.2} parent=5 // pred_check_branch
        %3728 = sbr.rel (%p3726) target = $region56
      $region55: #{convlstm_forward.2} parent=5 // pred_region
        %s3729 = ssub.s32 %s16, 2
        // Predicated region
        $region57: #{convlstm_forward.2} parent=55 // pred_check
          %p3730 = pneg %p171
        $region58: #{convlstm_forward.2} parent=55 // pred_check_branch
          %3732 = sbr.rel (%p3730) target = $region60
        $region59: #{convlstm_forward.2} parent=55 // pred_region
          %p3733 = scmp.lt.s32.totalorder %s27, 1
          %s3734 = scalar_select %p3733, %s27, 1
          %p3735 = scmp.lt.s32.totalorder %s28, 3
          %s3736 = scalar_select %p3735, %s28, 3
          %s3737 = smul.addr %s3736, 8
          %s3738 = smul.addr %s3734, 32
          %s3739 = sadd.s32 %s3737, %s3738
          %s3740 = smul.addr %s3739, 8
          %s3741 = scalar_lea.vmem %s5, %s3740
        $region60: #{convlstm_forward.2} parent=55 // pred_fallthru
          _
        // Predicated region
        $region61: #{convlstm_forward.2} parent=55 // pred_check
          %p3742 = pneg %p197
        $region62: #{convlstm_forward.2} parent=55 // pred_check_branch
          %3744 = sbr.rel (%p3742) target = $region64
        $region63: #{convlstm_forward.2} parent=55 // pred_region
          %s3745 = sand.u32 %s182, 1
          %s3746 = scalar_lea.sflag [#allocation6], %s3745
          %s3747 = sand.u32 %s182, 1
          %s3748 = smul.addr %s3747, 64
          %s3749 = scalar_lea.vmem [#allocation5], %s3748
          %3750 = dma.done %s3746, 1024
        $region64: #{convlstm_forward.2} parent=55 // pred_fallthru
          _
      $region56: #{convlstm_forward.2} parent=5 // pred_fallthru
        _
    $region6: #{convlstm_forward.2} parent=1 // loop_footer
      %s20 = sadd.s32 1, %s16
    $region7: #{convlstm_forward.2} parent=1 // loop_footer_branch
      %15 = sbr.rel target = $region3
    $region8: #{convlstm_forward.2} parent=1 // loop_exit
      _
    %3751 = vsyncpa [#allocation6], 1
    %s3752 = scalar_lea.sflag [#allocation6], 1
    %3753 = vsyncpa %s3752, 1

// kernel: convlstm_forward.3
$region0: #{convlstm_forward.3}
  #allocation0 [shape = 'u32[]', space=smem, size = 0x4, offset = 0x4, fixed_abs, tag = 'smem constant byte address 0x4 - core index']
  #allocation1 [shape = 'u32[144,128]{1,0:T(1,128)}', space=vmem, size = 0x12000, scoped, tag = 'internal scratch']
  #allocation2 [shape = 'bf16[64,512]{1,0:T(16,128)(2,1)}', space=vmem, size = 0x10000, scoped, tag = 'scratch operand']
  #allocation3 [shape = 'f32[32,256]{1,0:T(8,128)}', space=vmem, size = 0x8000, scoped, tag = 'scratch operand']
  #allocation4 [shape = 'f32[32,256]{1,0:T(8,128)}', space=vmem, size = 0x8000, scoped, tag = 'scratch operand']
  %s0 = inlined_call_operand.vmem [shape: f32[2,4,32,256], index: 0, kind: input, shape index: {}]
  %s1 = inlined_call_operand.vmem [shape: bf16[9,128,64], index: 1, kind: input, shape index: {}]
  %s2 = inlined_call_operand.vmem [shape: f32[128,1], index: 2, kind: input, shape index: {}]
  %s3 = inlined_call_operand.vmem [shape: bf16[128,256], index: 3, kind: input, shape index: {}]
  %s4 = inlined_call_operand.vmem [shape: bf16[128,256], index: 4, kind: input, shape index: {}]
  %s5 = inlined_call_operand.vmem [shape: f32[2,4,32,256], index: 5, kind: output, shape index: {0}]
  %s6 = inlined_call_operand.vmem [shape: f32[2,32,256], index: 6, kind: output, shape index: {1}]
  %7 = xla_tuple %s5, %s6
  %s8 = sld [smem:[#allocation0]]
  $region65: #{convlstm_forward.3} parent=0
    _
  %s10 = ssub.s32 1, %s8
  %s11 = scalar_select 0, %s10, %s8
  loop: start=0, step=1, limit=10
  $region2: #{convlstm_forward.3} parent=0 // loop_pre_header
    _
  $region3: #{convlstm_forward.3} parent=0 // loop_header
    %s13 = sphi 0, %s17
    %p14 = scmp.ge.s32.totalorder %s13, 10
    %s20 = sphi 0, %s32
    %s21 = sphi 0, %s28
    %s22 = sphi 0, %s20
    %s23 = sphi 0, %s21
    %s24 = sphi 0, %s22
    %s25 = sphi 0, %s23
    %s37 = sphi 0, %s39
    %s40 = sphi 0, %s37
    %s41 = sphi 0, %s40
    %s57 = sphi 0, %s41
    %s61 = sphi 0, %s61
    %s63 = sphi 0, %s61
    %s64 = sphi 0, %s63
    %s78 = sphi 0, %s64
    %s82 = sphi 0, %s82
    %s84 = sphi 0, %s82
    %s85 = sphi 0, %s84
    %s99 = sphi 0, %s85
    %s103 = sphi 0, %s103
    %s105 = sphi 0, %s103
    %s106 = sphi 0, %s105
    %s120 = sphi 0, %s106
    %s124 = sphi 0, %s124
    %s126 = sphi 0, %s124
    %s127 = sphi 0, %s126
    %s141 = sphi 0, %s127
    %s149 = sphi 0, %s151
    %s152 = sphi 0, %s149
    %s153 = sphi 0, %s152
    %s169 = sphi 0, %s153
    %s175 = sphi 0, %s177
    %s178 = sphi 0, %s175
    %s179 = sphi 0, %s178
    %s195 = sphi 0, %s179
  $region4: #{convlstm_forward.3} parent=0 // loop_header_branch
    %16 = sbr.rel (%p14) target = $region8
  $region5: #{convlstm_forward.3} parent=0 // loop_body
    %s18 = ssub.s32 %s13, 1
    %s19 = ssub.s32 %s13, 2
    %s26 = sadd.s32 1, %s21
    %p27 = scmp.ge.s32.totalorder %s26, 4
    %s28 = scalar_select %p27, 0, %s26
    %s29 = sadd.s32 1, %s20
    %s30 = scalar_select %p27, %s29, %s20
    %p31 = scmp.ge.s32.totalorder %s30, 2
    %s32 = scalar_select %p31, 0, %s30
    %s33 = ssub.s32 %s20, %s32
    %s34 = ssub.s32 %s21, %s28
    %s35 = sor.u32 %s33, %s34
    %p36 = scmp.eq.s32.totalorder %s35, 0
    %s38 = sadd.s32 %s37, 1
    %s39 = scalar_select %p36, %s37, %s38
    %p42 = pneg %p36
    %p43 = scmp.eq.s32.totalorder %s13, 7
    %p44 = por %p42, %p43
    %p45 = scmp.ne.s32.totalorder %s37, %s40
    %p46 = scmp.eq.s32.totalorder %s13, 0
    %p47 = por %p45, %p46
    %p48 = scmp.ne.s32.totalorder %s37, %s40
    %p49 = scmp.eq.s32.totalorder %s18, 7
    %p50 = por %p48, %p49
    %p51 = scmp.ne.s32.totalorder %s40, %s41
    %p52 = scmp.eq.s32.totalorder %s18, 0
    %p53 = por %p51, %p52
    %p54 = scmp.ne.s32.totalorder %s40, %s41
    %p55 = scmp.eq.s32.totalorder %s19, 7
    %p56 = por %p54, %p55
    %p58 = scmp.ne.s32.totalorder %s41, %s57
    %p59 = scmp.eq.s32.totalorder %s19, 0
    %p60 = por %p58, %p59
    %s62 = sadd.s32 %s61, 1
    %p65 = scmp.eq.s32.totalorder %s13, 7
    %p66 = scmp.ne.s32.totalorder %s61, %s63
    %p67 = scmp.eq.s32.totalorder %s13, 0
    %p68 = por %p66, %p67
    %p69 = scmp.ne.s32.totalorder %s61, %s63
    %p70 = scmp.eq.s32.totalorder %s18, 7
    %p71 = por %p69, %p70
    %p72 = scmp.ne.s32.totalorder %s63, %s64
    %p73 = scmp.eq.s32.totalorder %s18, 0
    %p74 = por %p72, %p73
    %p75 = scmp.ne.s32.totalorder %s63, %s64
    %p76 = scmp.eq.s32.totalorder %s19, 7
    %p77 = por %p75, %p76
    %p79 = scmp.ne.s32.totalorder %s64, %s78
    %p80 = scmp.eq.s32.totalorder %s19, 0
    %p81 = por %p79, %p80
    %s83 = sadd.s32 %s82, 1
    %p86 = scmp.eq.s32.totalorder %s13, 7
    %p87 = scmp.ne.s32.totalorder %s82, %s84
    %p88 = scmp.eq.s32.totalorder %s13, 0
    %p89 = por %p87, %p88
    %p90 = scmp.ne.s32.totalorder %s82, %s84
    %p91 = scmp.eq.s32.totalorder %s18, 7
    %p92 = por %p90, %p91
    %p93 = scmp.ne.s32.totalorder %s84, %s85
    %p94 = scmp.eq.s32.totalorder %s18, 0
    %p95 = por %p93, %p94
    %p96 = scmp.ne.s32.totalorder %s84, %s85
    %p97 = scmp.eq.s32.totalorder %s19, 7
    %p98 = por %p96, %p97
    %p100 = scmp.ne.s32.totalorder %s85, %s99
    %p101 = scmp.eq.s32.totalorder %s19, 0
    %p102 = por %p100, %p101
    %s104 = sadd.s32 %s103, 1
    %p107 = scmp.eq.s32.totalorder %s13, 7
    %p108 = scmp.ne.s32.totalorder %s103, %s105
    %p109 = scmp.eq.s32.totalorder %s13, 0
    %p110 = por %p108, %p109
    %p111 = scmp.ne.s32.totalorder %s103, %s105
    %p112 = scmp.eq.s32.totalorder %s18, 7
    %p113 = por %p111, %p112
    %p114 = scmp.ne.s32.totalorder %s105, %s106
    %p115 = scmp.eq.s32.totalorder %s18, 0
    %p116 = por %p114, %p115
    %p117 = scmp.ne.s32.totalorder %s105, %s106
    %p118 = scmp.eq.s32.totalorder %s19, 7
    %p119 = por %p117, %p118
    %p121 = scmp.ne.s32.totalorder %s106, %s120
    %p122 = scmp.eq.s32.totalorder %s19, 0
    %p123 = por %p121, %p122
    %s125 = sadd.s32 %s124, 1
    %p128 = scmp.eq.s32.totalorder %s13, 7
    %p129 = scmp.ne.s32.totalorder %s124, %s126
    %p130 = scmp.eq.s32.totalorder %s13, 0
    %p131 = por %p129, %p130
    %p132 = scmp.ne.s32.totalorder %s124, %s126
    %p133 = scmp.eq.s32.totalorder %s18, 7
    %p134 = por %p132, %p133
    %p135 = scmp.ne.s32.totalorder %s126, %s127
    %p136 = scmp.eq.s32.totalorder %s18, 0
    %p137 = por %p135, %p136
    %p138 = scmp.ne.s32.totalorder %s126, %s127
    %p139 = scmp.eq.s32.totalorder %s19, 7
    %p140 = por %p138, %p139
    %p142 = scmp.ne.s32.totalorder %s127, %s141
    %p143 = scmp.eq.s32.totalorder %s19, 0
    %p144 = por %p142, %p143
    %s145 = ssub.s32 %s20, %s32
    %s146 = ssub.s32 %s21, %s28
    %s147 = sor.u32 %s145, %s146
    %p148 = scmp.eq.s32.totalorder %s147, 0
    %s150 = sadd.s32 %s149, 1
    %s151 = scalar_select %p148, %s149, %s150
    %p154 = pneg %p148
    %p155 = scmp.eq.s32.totalorder %s13, 7
    %p156 = por %p154, %p155
    %p157 = scmp.ne.s32.totalorder %s149, %s152
    %p158 = scmp.eq.s32.totalorder %s13, 0
    %p159 = por %p157, %p158
    %p160 = scmp.ne.s32.totalorder %s149, %s152
    %p161 = scmp.eq.s32.totalorder %s18, 7
    %p162 = por %p160, %p161
    %p163 = scmp.ne.s32.totalorder %s152, %s153
    %p164 = scmp.eq.s32.totalorder %s18, 0
    %p165 = por %p163, %p164
    %p166 = scmp.ne.s32.totalorder %s152, %s153
    %p167 = scmp.eq.s32.totalorder %s19, 7
    %p168 = por %p166, %p167
    %p170 = scmp.ne.s32.totalorder %s153, %s169
    %p171 = scmp.eq.s32.totalorder %s19, 0
    %p172 = por %p170, %p171
    %s173 = ssub.s32 %s20, %s32
    %p174 = scmp.eq.s32.totalorder %s173, 0
    %s176 = sadd.s32 %s175, 1
    %s177 = scalar_select %p174, %s175, %s176
    %p180 = pneg %p174
    %p181 = scmp.eq.s32.totalorder %s13, 7
    %p182 = por %p180, %p181
    %p183 = scmp.ne.s32.totalorder %s175, %s178
    %p184 = scmp.eq.s32.totalorder %s13, 0
    %p185 = por %p183, %p184
    %p186 = scmp.ne.s32.totalorder %s175, %s178
    %p187 = scmp.eq.s32.totalorder %s18, 7
    %p188 = por %p186, %p187
    %p189 = scmp.ne.s32.totalorder %s178, %s179
    %p190 = scmp.eq.s32.totalorder %s18, 0
    %p191 = por %p189, %p190
    %p192 = scmp.ne.s32.totalorder %s178, %s179
    %p193 = scmp.eq.s32.totalorder %s19, 7
    %p194 = por %p192, %p193
    %p196 = scmp.ne.s32.totalorder %s179, %s195
    %p197 = scmp.eq.s32.totalorder %s19, 0
    %p198 = por %p196, %p197
    %p199 = scmp.le.s32.totalorder 1, %s13
    %p200 = scmp.lt.s32.totalorder %s13, 9
    %p201 = pnand %p199, %p200
    %p202 = pneg %p201
    // Predicated region
    $region9: #{convlstm_forward.3} parent=5 // pred_check
      _
    $region10: #{convlstm_forward.3} parent=5 // pred_check_branch
      %204 = sbr.rel (%p201) target = $region12
    $region11: #{convlstm_forward.3} parent=5 // pred_region
      %s205 = ssub.s32 %s13, 1
      // Predicated region
      $region13: #{convlstm_forward.3} parent=11 // pred_check
        %p206 = pneg %p74
      $region14: #{convlstm_forward.3} parent=11 // pred_check_branch
        %208 = sbr.rel (%p206) target = $region16
      $region15: #{convlstm_forward.3} parent=11 // pred_region
        _
      $region16: #{convlstm_forward.3} parent=11 // pred_fallthru
        _
      // Predicated region
      $region17: #{convlstm_forward.3} parent=11 // pred_check
        %p209 = pneg %p95
      $region18: #{convlstm_forward.3} parent=11 // pred_check_branch
        %211 = sbr.rel (%p209) target = $region20
      $region19: #{convlstm_forward.3} parent=11 // pred_region
        _
      $region20: #{convlstm_forward.3} parent=11 // pred_fallthru
        _
      // Predicated region
      $region21: #{convlstm_forward.3} parent=11 // pred_check
        %p212 = pneg %p116
      $region22: #{convlstm_forward.3} parent=11 // pred_check_branch
        %214 = sbr.rel (%p212) target = $region24
      $region23: #{convlstm_forward.3} parent=11 // pred_region
        _
      $region24: #{convlstm_forward.3} parent=11 // pred_fallthru
        _
      // Predicated region
      $region25: #{convlstm_forward.3} parent=11 // pred_check
        %p215 = pneg %p137
      $region26: #{convlstm_forward.3} parent=11 // pred_check_branch
        %217 = sbr.rel (%p215) target = $region28
      $region27: #{convlstm_forward.3} parent=11 // pred_region
        _
      $region28: #{convlstm_forward.3} parent=11 // pred_fallthru
        _
    $region12: #{convlstm_forward.3} parent=5 // pred_fallthru
      _
    %p218 = scmp.lt.s32.totalorder %s13, 8
    // Predicated region
    $region29: #{convlstm_forward.3} parent=5 // pred_check
      %p219 = pneg %p218
    $region30: #{convlstm_forward.3} parent=5 // pred_check_branch
      %221 = sbr.rel (%p219) target = $region32
    $region31: #{convlstm_forward.3} parent=5 // pred_region
      // Predicated region
      $region33: #{convlstm_forward.3} parent=31 // pred_check
        %p222 = pneg %p47
      $region34: #{convlstm_forward.3} parent=31 // pred_check_branch
        %224 = sbr.rel (%p222) target = $region36
      $region35: #{convlstm_forward.3} parent=31 // pred_region
        %p225 = scmp.lt.s32.totalorder %s20, 1
        %s226 = scalar_select %p225, %s20, 1
        %p227 = scmp.lt.s32.totalorder %s21, 3
        %s228 = scalar_select %p227, %s21, 3
        %s229 = smul.addr %s228, 8
        %s230 = smul.addr %s226, 32
        %s231 = sadd.s32 %s229, %s230
        %s232 = smul.addr %s231, 8
        %s233 = scalar_lea.vmem %s0, %s232
      $region36: #{convlstm_forward.3} parent=31 // pred_fallthru
        _
    $region32: #{convlstm_forward.3} parent=5 // pred_fallthru
      _
    %p234 = scmp.le.s32.totalorder 1, %s13
    %p235 = scmp.lt.s32.totalorder %s13, 9
    %p236 = pnand %p234, %p235
    %p237 = pneg %p236
    // Predicated region
    $region37: #{convlstm_forward.3} parent=5 // pred_check
      _
    $region38: #{convlstm_forward.3} parent=5 // pred_check_branch
      %239 = sbr.rel (%p236) target = $region40
    $region39: #{convlstm_forward.3} parent=5 // pred_region
      %s240 = ssub.s32 %s13, 1
      %p241 = scmp.lt.s32.totalorder %s22, 1
      %s242 = scalar_select %p241, %s22, 1
      %p243 = scmp.lt.s32.totalorder %s23, 3
      %s244 = scalar_select %p243, %s23, 3
      %s245 = smul.addr %s244, 8
      %s246 = smul.addr %s242, 32
      %s247 = sadd.s32 %s245, %s246
      %s248 = smul.addr %s247, 8
      %s249 = scalar_lea.vmem %s0, %s248
      %p250 = pneg %p53
      %p251 = pneg %p50
      %p252 = pneg %p74
      %p253 = pneg %p71
      %p254 = pneg %p95
      %p255 = pneg %p92
      %p256 = pneg %p116
      %p257 = pneg %p113
      %p258 = pneg %p137
      %p259 = pneg %p134
      %p260 = pneg %p165
      %p261 = pneg %p162
      %p262 = scmp.lt.s32.totalorder %s22, 1
      %s263 = scalar_select %p262, %s22, 1
      %p264 = scmp.lt.s32.totalorder %s23, 3
      %s265 = scalar_select %p264, %s23, 3
      %s266 = smul.addr %s265, 8
      %s267 = smul.addr %s263, 32
      %s268 = sadd.s32 %s266, %s267
      %s269 = smul.addr %s268, 8
      %s270 = scalar_lea.vmem %s5, %s269
      %p271 = pneg %p191
      %p272 = pneg %p188
      %p273 = scmp.lt.s32.totalorder %s22, 1
      %s274 = scalar_select %p273, %s22, 1
      %s275 = smul.addr %s274, 8
      %s276 = smul.addr %s275, 8
      %s277 = scalar_lea.vmem %s6, %s276
      %p278 = scmp.lt.s32.totalorder %s22, 1
      %s279 = scalar_select %p278, %s22, 1
      %p280 = scmp.lt.s32.totalorder %s23, 3
      %s281 = scalar_select %p280, %s23, 3
      %s282 = smul.addr %s281, 8
      %s283 = smul.addr %s279, 32
      %s284 = sadd.s32 %s282, %s283
      %s285 = smul.addr %s284, 8
      %s286 = scalar_lea.vmem %s0, %s285
      %p287 = scmp.lt.s32.totalorder %s22, 1
      %s288 = scalar_select %p287, %s22, 1
      %p289 = scmp.lt.s32.totalorder %s23, 3
      %s290 = scalar_select %p289, %s23, 3
      %s291 = smul.addr %s290, 8
      %s292 = smul.addr %s288, 32
      %s293 = sadd.s32 %s291, %s292
      %s294 = smul.addr %s293, 8
      %s295 = scalar_lea.vmem %s5, %s294
      %p296 = scmp.lt.s32.totalorder %s22, 1
      %s297 = scalar_select %p296, %s22, 1
      %s298 = smul.addr %s297, 8
      %s299 = smul.addr %s298, 8
      %s300 = scalar_lea.vmem %s6, %s299
      %p304 = scmp.eq.s32.totalorder %s23, 0
      // Predicated region
      $region41: #{convlstm_forward.3} parent=39 // pred_check
        %p305 = pneg %p304
      $region42: #{convlstm_forward.3} parent=39 // pred_check_branch
        %307 = sbr.rel (%p305) target = $region44
      $region43: #{convlstm_forward.3} parent=39 // pred_region
        %308 = vst [vmem:[#allocation2] sm:$0xff] 0
        %309 = vst [vmem:[#allocation2 + $0x8] sm:$0xff] 0
        %310 = vst [vmem:[#allocation2 + $0x10] sm:$0xff] 0
        %311 = vst [vmem:[#allocation2 + $0x18] sm:$0xff] 0
        %312 = vst [vmem:[#allocation2 + $0x20] sm:$0xff] 0
        %313 = vst [vmem:[#allocation2 + $0x28] sm:$0xff] 0
        %314 = vst [vmem:[#allocation2 + $0x30] sm:$0xff] 0
        %315 = vst [vmem:[#allocation2 + $0x38] sm:$0xff] 0
        %316 = vst [vmem:[#allocation2 + $0x40] sm:$0xff] 0
        %317 = vst [vmem:[#allocation2 + $0x48] sm:$0xff] 0
        %318 = vst [vmem:[#allocation2 + $0x50] sm:$0xff] 0
        %319 = vst [vmem:[#allocation2 + $0x58] sm:$0xff] 0
        %320 = vst [vmem:[#allocation2 + $0x60] sm:$0xff] 0
        %321 = vst [vmem:[#allocation2 + $0x68] sm:$0xff] 0
        %322 = vst [vmem:[#allocation2 + $0x70] sm:$0xff] 0
        %323 = vst [vmem:[#allocation2 + $0x78] sm:$0xff] 0
        %324 = vst [vmem:[#allocation3] sm:$0xff] 0.0
        %325 = vst [vmem:[#allocation3 + $0x8] sm:$0xff] 0.0
        %326 = vst [vmem:[#allocation3 + $0x10] sm:$0xff] 0.0
        %327 = vst [vmem:[#allocation3 + $0x18] sm:$0xff] 0.0
        %328 = vst [vmem:[#allocation3 + $0x20] sm:$0xff] 0.0
        %329 = vst [vmem:[#allocation3 + $0x28] sm:$0xff] 0.0
        %330 = vst [vmem:[#allocation3 + $0x30] sm:$0xff] 0.0
        %331 = vst [vmem:[#allocation3 + $0x38] sm:$0xff] 0.0
        %332 = vst [vmem:[#allocation4] sm:$0xff] 0.0
        %333 = vst [vmem:[#allocation4 + $0x8] sm:$0xff] 0.0
        %334 = vst [vmem:[#allocation4 + $0x10] sm:$0xff] 0.0
        %335 = vst [vmem:[#allocation4 + $0x18] sm:$0xff] 0.0
        %336 = vst [vmem:[#allocation4 + $0x20] sm:$0xff] 0.0
        %337 = vst [vmem:[#allocation4 + $0x28] sm:$0xff] 0.0
        %338 = vst [vmem:[#allocation4 + $0x30] sm:$0xff] 0.0
        %339 = vst [vmem:[#allocation4 + $0x38] sm:$0xff] 0.0
      $region44: #{convlstm_forward.3} parent=39 // pred_fallthru
        _
      %v340 = vld [vmem:[%s286] sm:$0xff]
      %v341 = vld [vmem:[%s286 + $0x8] sm:$0xff]
      %v342 = vld [vmem:[%s286 + $0x10] sm:$0xff]
      %v343 = vld [vmem:[%s286 + $0x18] sm:$0xff]
      %v344 = vld [vmem:[%s286 + $0x20] sm:$0xff]
      %v345 = vld [vmem:[%s286 + $0x28] sm:$0xff]
      %v346 = vld [vmem:[%s286 + $0x30] sm:$0xff]
      %v347 = vld [vmem:[%s286 + $0x38] sm:$0xff]
      %v348 = vpack.c.bf16 %v342, %v340
      %v349 = vpack.c.bf16 %v343, %v341
      %v350 = vpack.c.bf16 %v346, %v344
      %v351 = vpack.c.bf16 %v347, %v345
      %352 = vst [vmem:[#allocation2 + $0x8] sm:$0xff] %v348
      %353 = vst [vmem:[#allocation2 + $0x10] sm:$0xff] %v349
      %354 = vst [vmem:[#allocation2 + $0x28] sm:$0xff] %v350
      %355 = vst [vmem:[#allocation2 + $0x30] sm:$0xff] %v351
      %v356 = vld [vmem:[#allocation3] sm:$0xff]
      %v357 = vld [vmem:[#allocation3 + $0x8] sm:$0xff]
      %v358 = vld [vmem:[#allocation3 + $0x10] sm:$0xff]
      %v359 = vld [vmem:[#allocation3 + $0x18] sm:$0xff]
      %v360 = vld [vmem:[#allocation3 + $0x20] sm:$0xff]
      %v361 = vld [vmem:[#allocation3 + $0x28] sm:$0xff]
      %v362 = vld [vmem:[#allocation3 + $0x30] sm:$0xff]
      %v363 = vld [vmem:[#allocation3 + $0x38] sm:$0xff]
      %v364 = vpack.c.bf16 %v358, %v356
      %v365 = vpack.c.bf16 %v359, %v357
      %v366 = vpack.c.bf16 %v362, %v360
      %v367 = vpack.c.bf16 %v363, %v361
      %368 = vst [vmem:[#allocation2 + $0x48] sm:$0xff] %v364
      %369 = vst [vmem:[#allocation2 + $0x50] sm:$0xff] %v365
      %370 = vst [vmem:[#allocation2 + $0x68] sm:$0xff] %v366
      %371 = vst [vmem:[#allocation2 + $0x70] sm:$0xff] %v367
      %v372 = vlaneseq
      %v373 = vand.u32 %v372, 127
      %v374 = vadd.s32 %v373, 128
      %vm375 = vcmp.lt.s32.totalorder %v373, 0
      %v376 = vsub.s32 0, %v373
      %v377 = vsel %vm375, %v376, %v373
      %v378 = vshrl.u32 %v377, 4
      %v379 = vand.u32 %v377, 15
      %v380 = vsub.s32 0, %v379
      %v381 = vsel %vm375, %v380, %v379
      %vm382 = vcmp.lt.s32.totalorder %v374, 0
      %v383 = vsub.s32 0, %v374
      %v384 = vsel %vm382, %v383, %v374
      %v385 = vshrl.u32 %v384, 4
      %v386 = vand.u32 %v384, 15
      %v387 = vsub.s32 0, %v386
      %v388 = vsel %vm382, %v387, %v386
      %vm389 = vcmp.ne.s32.totalorder %v381, 0
      %vm390 = vcmp.ne.s32.totalorder %v388, 0
      %vm391 = vcmp.lt.s32.totalorder %v381, 0
      %vm392 = vcmp.lt.s32.totalorder %v388, 0
      %vm393 = vmand %vm391, %vm389
      %vm394 = vmand %vm392, %vm390
      %v395 = vadd.s32 %v381, 16
      %v396 = vadd.s32 %v388, 16
      %v397 = vsel %vm393, %v395, %v381
      %v398 = vsel %vm394, %v396, %v388
      %v399 = vld [vmem:[#allocation2] sm:$0xff]
      %v400 = vld [vmem:[#allocation2 + $0x8] sm:$0xff]
      %v401 = vld [vmem:[#allocation2 + $0x10] sm:$0xff]
      %v402 = vld [vmem:[#allocation2 + $0x20] sm:$0xff]
      %v403 = vld [vmem:[#allocation2 + $0x28] sm:$0xff]
      %v404 = vld [vmem:[#allocation2 + $0x30] sm:$0xff]
      %v405 = vld [vmem:[#allocation2 + $0x40] sm:$0xff]
      %v406 = vld [vmem:[#allocation2 + $0x48] sm:$0xff]
      %v407 = vld [vmem:[#allocation2 + $0x50] sm:$0xff]
      %v408 = vld [vmem:[#allocation2 + $0x60] sm:$0xff]
      %v409 = vld [vmem:[#allocation2 + $0x68] sm:$0xff]
      %v410 = vld [vmem:[#allocation2 + $0x70] sm:$0xff]
      %v411 = vadd.s32 %v397, 4294967295
      %v412 = vadd.s32 %v398, 4294967295
      %vm413 = vcmp.ge.s32.totalorder %v411, 0
      %vm414 = vcmp.ge.s32.totalorder %v412, 0
      %vm415 = vcmp.le.s32.totalorder %v411, 15
      %vm416 = vcmp.le.s32.totalorder %v412, 15
      %vm417 = vmand %vm413, %vm415
      %vm418 = vmand %vm414, %vm416
      %v419 = vsel %vm417, 1, 0
      %v420 = vsel %vm418, 1, 0
      %vm421 = vcmp.eq.s32.totalorder %v419, 1
      %vm422 = vcmp.eq.s32.totalorder %v420, 1
      %vm423 = vmpackc.low %vm422, %vm421
      %v424 = vsel %vm423, 65537, 0
      %v425 = vlaneseq
      %v426 = vshrl.u32 %v425, 7
      %v427 = vsub.s32 0, %v426
      %v428 = vrot.slane %v424, %v427
      %v429 = vlaneseq
      %v430 = vshrl.u32 %v429, 7
      %v431 = vsub.s32 4, %v430
      %v432 = vrot.slane %v424, %v431
      %433 = vrot.lane.b32.xlu0 %v428, 111
      %v434 = vpop.permute.xlu0 %433
      %435 = vrot.lane.b32.xlu0 %v432, 111
      %v436 = vpop.permute.xlu0 %435
      %vm437 = vcmask 908288
      %v438 = vsel %vm437, %v434, %v436
      %vm439 = vcmp.ne.s16.totalorder %v434, 0
      %vm440 = vcmp.ne.s16.totalorder %v438, 0
      %vm441 = vcmp.ne.s16.totalorder %v436, 0
      %v442 = vsel %vm439, %v399, 0
      %v443 = vsel %vm440, %v400, 0
      %v444 = vsel %vm441, %v401, 0
      %v445 = vsel %vm439, %v402, 0
      %v446 = vsel %vm440, %v403, 0
      %v447 = vsel %vm441, %v404, 0
      %v448 = vsel %vm439, %v405, 0
      %v449 = vsel %vm440, %v406, 0
      %v450 = vsel %vm441, %v407, 0
      %v451 = vsel %vm439, %v408, 0
      %v452 = vsel %vm440, %v409, 0
      %v453 = vsel %vm441, %v410, 0
      %v454 = vld [vmem:[%s1] sm:$0xf]
      %v455 = vld [vmem:[%s1 + $0x4] sm:$0xf]
      %v456 = vld [vmem:[%s1 + $0x8] sm:$0xf]
      %v457 = vld [vmem:[%s1 + $0xc] sm:$0xf]
      %v458 = vld [vmem:[%s1 + $0x10] sm:$0xf]
      %v459 = vld [vmem:[%s1 + $0x14] sm:$0xf]
      %v460 = vld [vmem:[%s1 + $0x18] sm:$0xf]
      %v461 = vld [vmem:[%s1 + $0x1c] sm:$0xf]
      %v462 = vld [vmem:[%s1 + $0x20] sm:$0xf]
      %v463 = vld [vmem:[%s1 + $0x24] sm:$0xf]
      %v464 = vld [vmem:[%s1 + $0x28] sm:$0xf]
      %v465 = vld [vmem:[%s1 + $0x2c] sm:$0xf]
      %v466 = vld [vmem:[%s1 + $0x30] sm:$0xf]
      %v467 = vld [vmem:[%s1 + $0x34] sm:$0xf]
      %v468 = vld [vmem:[%s1 + $0x38] sm:$0xf]
      %v469 = vld [vmem:[%s1 + $0x3c] sm:$0xf]
      %s470 = scalar_lea.vmem %s1, 64
      %v471 = vld [vmem:[%s470] sm:$0xf]
      %v472 = vld [vmem:[%s470 + $0x4] sm:$0xf]
      %v473 = vld [vmem:[%s470 + $0x8] sm:$0xf]
      %v474 = vld [vmem:[%s470 + $0xc] sm:$0xf]
      %v475 = vld [vmem:[%s470 + $0x10] sm:$0xf]
      %v476 = vld [vmem:[%s470 + $0x14] sm:$0xf]
      %v477 = vld [vmem:[%s470 + $0x18] sm:$0xf]
      %v478 = vld [vmem:[%s470 + $0x1c] sm:$0xf]
      %v479 = vld [vmem:[%s470 + $0x20] sm:$0xf]
      %v480 = vld [vmem:[%s470 + $0x24] sm:$0xf]
      %v481 = vld [vmem:[%s470 + $0x28] sm:$0xf]
      %v482 = vld [vmem:[%s470 + $0x2c] sm:$0xf]
      %v483 = vld [vmem:[%s470 + $0x30] sm:$0xf]
      %v484 = vld [vmem:[%s470 + $0x34] sm:$0xf]
      %v485 = vld [vmem:[%s470 + $0x38] sm:$0xf]
      %v486 = vld [vmem:[%s470 + $0x3c] sm:$0xf]
      %v503 = vunpack.c.l.b16 %v471
      %v504 = vunpack.c.l.b16 %v472
      %v505 = vunpack.c.l.b16 %v473
      %v506 = vunpack.c.l.b16 %v474
      %v507 = vunpack.c.l.b16 %v475
      %v508 = vunpack.c.l.b16 %v476
      %v509 = vunpack.c.l.b16 %v477
      %v510 = vunpack.c.l.b16 %v478
      %v511 = vunpack.c.l.b16 %v479
      %v512 = vunpack.c.l.b16 %v480
      %v513 = vunpack.c.l.b16 %v481
      %v514 = vunpack.c.l.b16 %v482
      %v515 = vunpack.c.l.b16 %v483
      %v516 = vunpack.c.l.b16 %v484
      %v517 = vunpack.c.l.b16 %v485
      %v518 = vunpack.c.l.b16 %v486
      %v519 = vpack.c.b16 %v504, %v503
      %v520 = vpack.c.b16 %v506, %v505
      %v521 = vpack.c.b16 %v508, %v507
      %v522 = vpack.c.b16 %v510, %v509
      %v523 = vpack.c.b16 %v512, %v511
      %v524 = vpack.c.b16 %v514, %v513
      %v525 = vpack.c.b16 %v516, %v515
      %v526 = vpack.c.b16 %v518, %v517
      %539 = vrot.lane.b32.xlu0 %v399, 16
      %v540 = vpop.permute.xlu0 %539
      %541 = vrot.lane.b32.xlu0 %v400, 16
      %v542 = vpop.permute.xlu0 %541
      %543 = vrot.lane.b32.xlu0 %v401, 16
      %v544 = vpop.permute.xlu0 %543
      %545 = vrot.lane.b32.xlu0 %v402, 16
      %v546 = vpop.permute.xlu0 %545
      %547 = vrot.lane.b32.xlu0 %v403, 16
      %v548 = vpop.permute.xlu0 %547
      %549 = vrot.lane.b32.xlu0 %v404, 16
      %v550 = vpop.permute.xlu0 %549
      %551 = vrot.lane.b32.xlu0 %v405, 16
      %v552 = vpop.permute.xlu0 %551
      %553 = vrot.lane.b32.xlu0 %v406, 16
      %v554 = vpop.permute.xlu0 %553
      %555 = vrot.lane.b32.xlu0 %v407, 16
      %v556 = vpop.permute.xlu0 %555
      %557 = vrot.lane.b32.xlu0 %v408, 16
      %v558 = vpop.permute.xlu0 %557
      %559 = vrot.lane.b32.xlu0 %v409, 16
      %v560 = vpop.permute.xlu0 %559
      %561 = vrot.lane.b32.xlu0 %v410, 16
      %v562 = vpop.permute.xlu0 %561
      %vm563 = vcmask 130048
      %v564 = vsel %vm563, %v540, %v542
      %v565 = vsel %vm563, %v542, %v544
      %v566 = vsel %vm563, %v546, %v548
      %v567 = vsel %vm563, %v548, %v550
      %v568 = vsel %vm563, %v552, %v554
      %v569 = vsel %vm563, %v554, %v556
      %v570 = vsel %vm563, %v558, %v560
      %v571 = vsel %vm563, %v560, %v562
      %vm580 = vcmask 523264
      %v582 = vsel %vm580, %v519, 0
      %v585 = vsel %vm580, %v520, 0
      %v588 = vsel %vm580, %v521, 0
      %v591 = vsel %vm580, %v522, 0
      %v594 = vsel %vm580, %v523, 0
      %v597 = vsel %vm580, %v524, 0
      %v600 = vsel %vm580, %v525, 0
      %v603 = vsel %vm580, %v526, 0
      %605 = vmatprep.subr.bf16.mxu0 %v565
      %606 = vmatpush1.bf16.msra.mxu0 %v564
      %607 = vmatprep.subr.bf16.mxu0 %v567
      %608 = vmatpush1.bf16.msra.mxu0 %v566
      %609 = vmatprep.subr.bf16.mxu0 %v569
      %610 = vmatpush1.bf16.msra.mxu0 %v568
      %611 = vmatprep.subr.bf16.mxu0 %v571
      %612 = vmatpush1.bf16.msra.mxu0 %v570
      %613 = vmatprep.subr.bf16.mxu0 0
      %614 = vmatpush1.bf16.msra.mxu0 0
      %615 = vmatprep.subr.bf16.mxu0 0
      %616 = vmatpush1.bf16.msra.mxu0 0
      %617 = vmatprep.subr.bf16.mxu0 0
      %618 = vmatpush1.bf16.msra.mxu0 0
      %619 = vmatprep.subr.bf16.mxu0 0
      %620 = vmatpush1.bf16.msra.mxu0 0
      %621 = vmatprep.subr.bf16.mxu0 0
      %622 = vmatpush1.bf16.msra.mxu0 0
      %623 = vmatprep.subr.bf16.mxu0 0
      %624 = vmatpush1.bf16.msra.mxu0 0
      %625 = vmatprep.subr.bf16.mxu0 0
      %626 = vmatpush1.bf16.msra.mxu0 0
      %627 = vmatprep.subr.bf16.mxu0 0
      %628 = vmatpush1.bf16.msra.mxu0 0
      %629 = vmatprep.subr.bf16.mxu0 0
      %630 = vmatpush1.bf16.msra.mxu0 0
      %631 = vmatprep.subr.bf16.mxu0 0
      %632 = vmatpush1.bf16.msra.mxu0 0
      %633 = vmatprep.subr.bf16.mxu0 0
      %634 = vmatpush1.bf16.msra.mxu0 0
      %635 = vmatprep.subr.bf16.mxu0 0
      %636 = vmatpush1.bf16.msra.mxu0 0
      %637 = vmatprep.mubr.bf16.mxu0 0
      %638 = vmatmul.mubr.bf16.gmra.mrb[0].mxu0 %v582
      %v639 = vpop.f32.mrb[0].mxu0
      %v640 = vadd.f32 0.0, %v639
      %v641 = vpop.f32.mrb[0].mxu0
      %v642 = vadd.f32 0.0, %v641
      %v643 = vpop.f32.mrb[0].mxu0
      %v644 = vadd.f32 0.0, %v643
      %v645 = vpop.f32.mrb[0].mxu0
      %v646 = vadd.f32 0.0, %v645
      %647 = vmatprep.mubr.bf16.mxu0 0
      %648 = vmatmul.mubr.bf16.gmra.mrb[0].mxu0 %v585
      %v649 = vpop.f32.mrb[0].mxu0
      %v650 = vadd.f32 0.0, %v649
      %v651 = vpop.f32.mrb[0].mxu0
      %v652 = vadd.f32 0.0, %v651
      %v653 = vpop.f32.mrb[0].mxu0
      %v654 = vadd.f32 0.0, %v653
      %v655 = vpop.f32.mrb[0].mxu0
      %v656 = vadd.f32 0.0, %v655
      %657 = vmatprep.mubr.bf16.mxu0 0
      %658 = vmatmul.mubr.bf16.gmra.mrb[0].mxu0 %v588
      %v659 = vpop.f32.mrb[0].mxu0
      %v660 = vadd.f32 0.0, %v659
      %v661 = vpop.f32.mrb[0].mxu0
      %v662 = vadd.f32 0.0, %v661
      %v663 = vpop.f32.mrb[0].mxu0
      %v664 = vadd.f32 0.0, %v663
      %v665 = vpop.f32.mrb[0].mxu0
      %v666 = vadd.f32 0.0, %v665
      %667 = vmatprep.mubr.bf16.mxu0 0
      %668 = vmatmul.mubr.bf16.gmra.mrb[0].mxu0 %v591
      %v669 = vpop.f32.mrb[0].mxu0
      %v670 = vadd.f32 0.0, %v669
      %v671 = vpop.f32.mrb[0].mxu0
      %v672 = vadd.f32 0.0, %v671
      %v673 = vpop.f32.mrb[0].mxu0
      %v674 = vadd.f32 0.0, %v673
      %v675 = vpop.f32.mrb[0].mxu0
      %v676 = vadd.f32 0.0, %v675
      %677 = vmatprep.mubr.bf16.mxu0 0
      %678 = vmatmul.mubr.bf16.gmra.mrb[0].mxu0 %v594
      %v679 = vpop.f32.mrb[0].mxu0
      %v680 = vadd.f32 0.0, %v679
      %v681 = vpop.f32.mrb[0].mxu0
      %v682 = vadd.f32 0.0, %v681
      %v683 = vpop.f32.mrb[0].mxu0
      %v684 = vadd.f32 0.0, %v683
      %v685 = vpop.f32.mrb[0].mxu0
      %v686 = vadd.f32 0.0, %v685
      %687 = vmatprep.mubr.bf16.mxu0 0
      %688 = vmatmul.mubr.bf16.gmra.mrb[0].mxu0 %v597
      %v689 = vpop.f32.mrb[0].mxu0
      %v690 = vadd.f32 0.0, %v689
      %v691 = vpop.f32.mrb[0].mxu0
      %v692 = vadd.f32 0.0, %v691
      %v693 = vpop.f32.mrb[0].mxu0
      %v694 = vadd.f32 0.0, %v693
      %v695 = vpop.f32.mrb[0].mxu0
      %v696 = vadd.f32 0.0, %v695
      %697 = vmatprep.mubr.bf16.mxu0 0
      %698 = vmatmul.mubr.bf16.gmra.mrb[0].mxu0 %v600
      %v699 = vpop.f32.mrb[0].mxu0
      %v700 = vadd.f32 0.0, %v699
      %v701 = vpop.f32.mrb[0].mxu0
      %v702 = vadd.f32 0.0, %v701
      %v703 = vpop.f32.mrb[0].mxu0
      %v704 = vadd.f32 0.0, %v703
      %v705 = vpop.f32.mrb[0].mxu0
      %v706 = vadd.f32 0.0, %v705
      %707 = vmatprep.mubr.bf16.mxu0 0
      %708 = vmatmul.mubr.bf16.gmra.mrb[0].mxu0 %v603
      %v709 = vpop.f32.mrb[0].mxu0
      %v710 = vadd.f32 0.0, %v709
      %v711 = vpop.f32.mrb[0].mxu0
      %v712 = vadd.f32 0.0, %v711
      %v713 = vpop.f32.mrb[0].mxu0
      %v714 = vadd.f32 0.0, %v713
      %v715 = vpop.f32.mrb[0].mxu0
      %v716 = vadd.f32 0.0, %v715
      %717 = vdwg.mxu0
      %v734 = vunpack.c.l.b16 %v454
      %v735 = vunpack.c.l.b16 %v455
      %v736 = vunpack.c.l.b16 %v456
      %v737 = vunpack.c.l.b16 %v457
      %v738 = vunpack.c.l.b16 %v458
      %v739 = vunpack.c.l.b16 %v459
      %v740 = vunpack.c.l.b16 %v460
      %v741 = vunpack.c.l.b16 %v461
      %v742 = vunpack.c.l.b16 %v462
      %v743 = vunpack.c.l.b16 %v463
      %v744 = vunpack.c.l.b16 %v464
      %v745 = vunpack.c.l.b16 %v465
      %v746 = vunpack.c.l.b16 %v466
      %v747 = vunpack.c.l.b16 %v467
      %v748 = vunpack.c.l.b16 %v468
      %v749 = vunpack.c.l.b16 %v469
      %v750 = vpack.c.b16 %v735, %v734
      %v751 = vpack.c.b16 %v737, %v736
      %v752 = vpack.c.b16 %v739, %v738
      %v753 = vpack.c.b16 %v741, %v740
      %v754 = vpack.c.b16 %v743, %v742
      %v755 = vpack.c.b16 %v745, %v744
      %v756 = vpack.c.b16 %v747, %v746
      %v757 = vpack.c.b16 %v749, %v748
      %770 = vrot.lane.b32.xlu0 %v442, 17
      %v771 = vpop.permute.xlu0 %770
      %772 = vrot.lane.b32.xlu0 %v443, 17
      %v773 = vpop.permute.xlu0 %772
      %774 = vrot.lane.b32.xlu0 %v444, 17
      %v775 = vpop.permute.xlu0 %774
      %776 = vrot.lane.b32.xlu0 %v445, 17
      %v777 = vpop.permute.xlu0 %776
      %778 = vrot.lane.b32.xlu0 %v446, 17
      %v779 = vpop.permute.xlu0 %778
      %780 = vrot.lane.b32.xlu0 %v447, 17
      %v781 = vpop.permute.xlu0 %780
      %782 = vrot.lane.b32.xlu0 %v448, 17
      %v783 = vpop.permute.xlu0 %782
      %784 = vrot.lane.b32.xlu0 %v449, 17
      %v785 = vpop.permute.xlu0 %784
      %786 = vrot.lane.b32.xlu0 %v450, 17
      %v787 = vpop.permute.xlu0 %786
      %788 = vrot.lane.b32.xlu0 %v451, 17
      %v789 = vpop.permute.xlu0 %788
      %790 = vrot.lane.b32.xlu0 %v452, 17
      %v791 = vpop.permute.xlu0 %790
      %792 = vrot.lane.b32.xlu0 %v453, 17
      %v793 = vpop.permute.xlu0 %792
      %vm794 = vcmask 138240
      %v795 = vsel %vm794, %v771, %v773
      %v796 = vsel %vm794, %v773, %v775
      %v797 = vsel %vm794, %v777, %v779
      %v798 = vsel %vm794, %v779, %v781
      %v799 = vsel %vm794, %v783, %v785
      %v800 = vsel %vm794, %v785, %v787
      %v801 = vsel %vm794, %v789, %v791
      %v802 = vsel %vm794, %v791, %v793
      %v812 = vsel %vm580, %v750, 0
      %v815 = vsel %vm580, %v751, 0
      %v818 = vsel %vm580, %v752, 0
      %v821 = vsel %vm580, %v753, 0
      %v824 = vsel %vm580, %v754, 0
      %v827 = vsel %vm580, %v755, 0
      %v830 = vsel %vm580, %v756, 0
      %v833 = vsel %vm580, %v757, 0
      %835 = vmatprep.subr.bf16.mxu0 %v796
      %836 = vmatpush1.bf16.msra.mxu0 %v795
      %837 = vmatprep.subr.bf16.mxu0 %v798
      %838 = vmatpush1.bf16.msra.mxu0 %v797
      %839 = vmatprep.subr.bf16.mxu0 %v800
      %840 = vmatpush1.bf16.msra.mxu0 %v799
      %841 = vmatprep.subr.bf16.mxu0 %v802
      %842 = vmatpush1.bf16.msra.mxu0 %v801
      %843 = vmatprep.subr.bf16.mxu0 0
      %844 = vmatpush1.bf16.msra.mxu0 0
      %845 = vmatprep.subr.bf16.mxu0 0
      %846 = vmatpush1.bf16.msra.mxu0 0
      %847 = vmatprep.subr.bf16.mxu0 0
      %848 = vmatpush1.bf16.msra.mxu0 0
      %849 = vmatprep.subr.bf16.mxu0 0
      %850 = vmatpush1.bf16.msra.mxu0 0
      %851 = vmatprep.subr.bf16.mxu0 0
      %852 = vmatpush1.bf16.msra.mxu0 0
      %853 = vmatprep.subr.bf16.mxu0 0
      %854 = vmatpush1.bf16.msra.mxu0 0
      %855 = vmatprep.subr.bf16.mxu0 0
      %856 = vmatpush1.bf16.msra.mxu0 0
      %857 = vmatprep.subr.bf16.mxu0 0
      %858 = vmatpush1.bf16.msra.mxu0 0
      %859 = vmatprep.subr.bf16.mxu0 0
      %860 = vmatpush1.bf16.msra.mxu0 0
      %861 = vmatprep.subr.bf16.mxu0 0
      %862 = vmatpush1.bf16.msra.mxu0 0
      %863 = vmatprep.subr.bf16.mxu0 0
      %864 = vmatpush1.bf16.msra.mxu0 0
      %865 = vmatprep.subr.bf16.mxu0 0
      %866 = vmatpush1.bf16.msra.mxu0 0
      %867 = vmatprep.mubr.bf16.mxu0 0
      %868 = vmatmul.mubr.bf16.gmra.mrb[0].mxu0 %v812
      %v869 = vpop.f32.mrb[0].mxu0
      %v870 = vadd.f32 %v640, %v869
      %v871 = vpop.f32.mrb[0].mxu0
      %v872 = vadd.f32 %v642, %v871
      %v873 = vpop.f32.mrb[0].mxu0
      %v874 = vadd.f32 %v644, %v873
      %v875 = vpop.f32.mrb[0].mxu0
      %v876 = vadd.f32 %v646, %v875
      %877 = vmatprep.mubr.bf16.mxu0 0
      %878 = vmatmul.mubr.bf16.gmra.mrb[0].mxu0 %v815
      %v879 = vpop.f32.mrb[0].mxu0
      %v880 = vadd.f32 %v650, %v879
      %v881 = vpop.f32.mrb[0].mxu0
      %v882 = vadd.f32 %v652, %v881
      %v883 = vpop.f32.mrb[0].mxu0
      %v884 = vadd.f32 %v654, %v883
      %v885 = vpop.f32.mrb[0].mxu0
      %v886 = vadd.f32 %v656, %v885
      %887 = vmatprep.mubr.bf16.mxu0 0
      %888 = vmatmul.mubr.bf16.gmra.mrb[0].mxu0 %v818
      %v889 = vpop.f32.mrb[0].mxu0
      %v890 = vadd.f32 %v660, %v889
      %v891 = vpop.f32.mrb[0].mxu0
      %v892 = vadd.f32 %v662, %v891
      %v893 = vpop.f32.mrb[0].mxu0
      %v894 = vadd.f32 %v664, %v893
      %v895 = vpop.f32.mrb[0].mxu0
      %v896 = vadd.f32 %v666, %v895
      %897 = vmatprep.mubr.bf16.mxu0 0
      %898 = vmatmul.mubr.bf16.gmra.mrb[0].mxu0 %v821
      %v899 = vpop.f32.mrb[0].mxu0
      %v900 = vadd.f32 %v670, %v899
      %v901 = vpop.f32.mrb[0].mxu0
      %v902 = vadd.f32 %v672, %v901
      %v903 = vpop.f32.mrb[0].mxu0
      %v904 = vadd.f32 %v674, %v903
      %v905 = vpop.f32.mrb[0].mxu0
      %v906 = vadd.f32 %v676, %v905
      %907 = vmatprep.mubr.bf16.mxu0 0
      %908 = vmatmul.mubr.bf16.gmra.mrb[0].mxu0 %v824
      %v909 = vpop.f32.mrb[0].mxu0
      %v910 = vadd.f32 %v680, %v909
      %v911 = vpop.f32.mrb[0].mxu0
      %v912 = vadd.f32 %v682, %v911
      %v913 = vpop.f32.mrb[0].mxu0
      %v914 = vadd.f32 %v684, %v913
      %v915 = vpop.f32.mrb[0].mxu0
      %v916 = vadd.f32 %v686, %v915
      %917 = vmatprep.mubr.bf16.mxu0 0
      %918 = vmatmul.mubr.bf16.gmra.mrb[0].mxu0 %v827
      %v919 = vpop.f32.mrb[0].mxu0
      %v920 = vadd.f32 %v690, %v919
      %v921 = vpop.f32.mrb[0].mxu0
      %v922 = vadd.f32 %v692, %v921
      %v923 = vpop.f32.mrb[0].mxu0
      %v924 = vadd.f32 %v694, %v923
      %v925 = vpop.f32.mrb[0].mxu0
      %v926 = vadd.f32 %v696, %v925
      %927 = vmatprep.mubr.bf16.mxu0 0
      %928 = vmatmul.mubr.bf16.gmra.mrb[0].mxu0 %v830
      %v929 = vpop.f32.mrb[0].mxu0
      %v930 = vadd.f32 %v700, %v929
      %v931 = vpop.f32.mrb[0].mxu0
      %v932 = vadd.f32 %v702, %v931
      %v933 = vpop.f32.mrb[0].mxu0
      %v934 = vadd.f32 %v704, %v933
      %v935 = vpop.f32.mrb[0].mxu0
      %v936 = vadd.f32 %v706, %v935
      %937 = vmatprep.mubr.bf16.mxu0 0
      %938 = vmatmul.mubr.bf16.gmra.mrb[0].mxu0 %v833
      %v939 = vpop.f32.mrb[0].mxu0
      %v940 = vadd.f32 %v710, %v939
      %v941 = vpop.f32.mrb[0].mxu0
      %v942 = vadd.f32 %v712, %v941
      %v943 = vpop.f32.mrb[0].mxu0
      %v944 = vadd.f32 %v714, %v943
      %v945 = vpop.f32.mrb[0].mxu0
      %v946 = vadd.f32 %v716, %v945
      %947 = vdwg.mxu0
      %v948 = vadd.s32 %v397, 1
      %v949 = vadd.s32 %v398, 1
      %vm950 = vcmp.ge.s32.totalorder %v948, 0
      %vm951 = vcmp.ge.s32.totalorder %v949, 0
      %vm952 = vcmp.le.s32.totalorder %v948, 15
      %vm953 = vcmp.le.s32.totalorder %v949, 15
      %vm954 = vmand %vm950, %vm952
      %vm955 = vmand %vm951, %vm953
      %v956 = vsel %vm954, 1, 0
      %v957 = vsel %vm955, 1, 0
      %vm958 = vcmp.eq.s32.totalorder %v956, 1
      %vm959 = vcmp.eq.s32.totalorder %v957, 1
      %vm960 = vmpackc.low %vm959, %vm958
      %v961 = vsel %vm960, 65537, 0
      %v962 = vlaneseq
      %v963 = vshrl.u32 %v962, 7
      %v964 = vsub.s32 0, %v963
      %v965 = vrot.slane %v961, %v964
      %v966 = vlaneseq
      %v967 = vshrl.u32 %v966, 7
      %v968 = vsub.s32 4, %v967
      %v969 = vrot.slane %v961, %v968
      %970 = vrot.lane.b32.xlu0 %v965, 113
      %v971 = vpop.permute.xlu0 %970
      %972 = vrot.lane.b32.xlu0 %v969, 113
      %v973 = vpop.permute.xlu0 %972
      %vm974 = vcmask 924672
      %v975 = vsel %vm974, %v971, %v973
      %vm976 = vcmp.ne.s16.totalorder %v971, 0
      %vm977 = vcmp.ne.s16.totalorder %v975, 0
      %vm978 = vcmp.ne.s16.totalorder %v973, 0
      %v979 = vsel %vm976, %v399, 0
      %v980 = vsel %vm977, %v400, 0
      %v981 = vsel %vm978, %v401, 0
      %v982 = vsel %vm976, %v402, 0
      %v983 = vsel %vm977, %v403, 0
      %v984 = vsel %vm978, %v404, 0
      %v985 = vsel %vm976, %v405, 0
      %v986 = vsel %vm977, %v406, 0
      %v987 = vsel %vm978, %v407, 0
      %v988 = vsel %vm976, %v408, 0
      %v989 = vsel %vm977, %v409, 0
      %v990 = vsel %vm978, %v410, 0
      %s991 = scalar_lea.vmem %s1, 128
      %v992 = vld [vmem:[%s991] sm:$0xf]
      %v993 = vld [vmem:[%s991 + $0x4] sm:$0xf]
      %v994 = vld [vmem:[%s991 + $0x8] sm:$0xf]
      %v995 = vld [vmem:[%s991 + $0xc] sm:$0xf]
      %v996 = vld [vmem:[%s991 + $0x10] sm:$0xf]
      %v997 = vld [vmem:[%s991 + $0x14] sm:$0xf]
      %v998 = vld [vmem:[%s991 + $0x18] sm:$0xf]
      %v999 = vld [vmem:[%s991 + $0x1c] sm:$0xf]
      %v1000 = vld [vmem:[%s991 + $0x20] sm:$0xf]
      %v1001 = vld [vmem:[%s991 + $0x24] sm:$0xf]
      %v1002 = vld [vmem:[%s991 + $0x28] sm:$0xf]
      %v1003 = vld [vmem:[%s991 + $0x2c] sm:$0xf]
      %v1004 = vld [vmem:[%s991 + $0x30] sm:$0xf]
      %v1005 = vld [vmem:[%s991 + $0x34] sm:$0xf]
      %v1006 = vld [vmem:[%s991 + $0x38] sm:$0xf]
      %v1007 = vld [vmem:[%s991 + $0x3c] sm:$0xf]
      %v1024 = vunpack.c.l.b16 %v992
      %v1025 = vunpack.c.l.b16 %v993
      %v1026 = vunpack.c.l.b16 %v994
      %v1027 = vunpack.c.l.b16 %v995
      %v1028 = vunpack.c.l.b16 %v996
      %v1029 = vunpack.c.l.b16 %v997
      %v1030 = vunpack.c.l.b16 %v998
      %v1031 = vunpack.c.l.b16 %v999
      %v1032 = vunpack.c.l.b16 %v1000
      %v1033 = vunpack.c.l.b16 %v1001
      %v1034 = vunpack.c.l.b16 %v1002
      %v1035 = vunpack.c.l.b16 %v1003
      %v1036 = vunpack.c.l.b16 %v1004
      %v1037 = vunpack.c.l.b16 %v1005
      %v1038 = vunpack.c.l.b16 %v1006
      %v1039 = vunpack.c.l.b16 %v1007
      %v1040 = vpack.c.b16 %v1025, %v1024
      %v1041 = vpack.c.b16 %v1027, %v1026
      %v1042 = vpack.c.b16 %v1029, %v1028
      %v1043 = vpack.c.b16 %v1031, %v1030
      %v1044 = vpack.c.b16 %v1033, %v1032
      %v1045 = vpack.c.b16 %v1035, %v1034
      %v1046 = vpack.c.b16 %v1037, %v1036
      %v1047 = vpack.c.b16 %v1039, %v1038
      %1060 = vrot.lane.b32.xlu0 %v979, 15
      %v1061 = vpop.permute.xlu0 %1060
      %1062 = vrot.lane.b32.xlu0 %v980, 15
      %v1063 = vpop.permute.xlu0 %1062
      %1064 = vrot.lane.b32.xlu0 %v981, 15
      %v1065 = vpop.permute.xlu0 %1064
      %1066 = vrot.lane.b32.xlu0 %v982, 15
      %v1067 = vpop.permute.xlu0 %1066
      %1068 = vrot.lane.b32.xlu0 %v983, 15
      %v1069 = vpop.permute.xlu0 %1068
      %1070 = vrot.lane.b32.xlu0 %v984, 15
      %v1071 = vpop.permute.xlu0 %1070
      %1072 = vrot.lane.b32.xlu0 %v985, 15
      %v1073 = vpop.permute.xlu0 %1072
      %1074 = vrot.lane.b32.xlu0 %v986, 15
      %v1075 = vpop.permute.xlu0 %1074
      %1076 = vrot.lane.b32.xlu0 %v987, 15
      %v1077 = vpop.permute.xlu0 %1076
      %1078 = vrot.lane.b32.xlu0 %v988, 15
      %v1079 = vpop.permute.xlu0 %1078
      %1080 = vrot.lane.b32.xlu0 %v989, 15
      %v1081 = vpop.permute.xlu0 %1080
      %1082 = vrot.lane.b32.xlu0 %v990, 15
      %v1083 = vpop.permute.xlu0 %1082
      %vm1084 = vcmask 121856
      %v1085 = vsel %vm1084, %v1061, %v1063
      %v1086 = vsel %vm1084, %v1063, %v1065
      %v1087 = vsel %vm1084, %v1067, %v1069
      %v1088 = vsel %vm1084, %v1069, %v1071
      %v1089 = vsel %vm1084, %v1073, %v1075
      %v1090 = vsel %vm1084, %v1075, %v1077
      %v1091 = vsel %vm1084, %v1079, %v1081
      %v1092 = vsel %vm1084, %v1081, %v1083
      %v1102 = vsel %vm580, %v1040, 0
      %v1105 = vsel %vm580, %v1041, 0
      %v1108 = vsel %vm580, %v1042, 0
      %v1111 = vsel %vm580, %v1043, 0
      %v1114 = vsel %vm580, %v1044, 0
      %v1117 = vsel %vm580, %v1045, 0
      %v1120 = vsel %vm580, %v1046, 0
      %v1123 = vsel %vm580, %v1047, 0
      %1125 = vmatprep.subr.bf16.mxu0 %v1086
      %1126 = vmatpush1.bf16.msra.mxu0 %v1085
      %1127 = vmatprep.subr.bf16.mxu0 %v1088
      %1128 = vmatpush1.bf16.msra.mxu0 %v1087
      %1129 = vmatprep.subr.bf16.mxu0 %v1090
      %1130 = vmatpush1.bf16.msra.mxu0 %v1089
      %1131 = vmatprep.subr.bf16.mxu0 %v1092
      %1132 = vmatpush1.bf16.msra.mxu0 %v1091
      %1133 = vmatprep.subr.bf16.mxu0 0
      %1134 = vmatpush1.bf16.msra.mxu0 0
      %1135 = vmatprep.subr.bf16.mxu0 0
      %1136 = vmatpush1.bf16.msra.mxu0 0
      %1137 = vmatprep.subr.bf16.mxu0 0
      %1138 = vmatpush1.bf16.msra.mxu0 0
      %1139 = vmatprep.subr.bf16.mxu0 0
      %1140 = vmatpush1.bf16.msra.mxu0 0
      %1141 = vmatprep.subr.bf16.mxu0 0
      %1142 = vmatpush1.bf16.msra.mxu0 0
      %1143 = vmatprep.subr.bf16.mxu0 0
      %1144 = vmatpush1.bf16.msra.mxu0 0
      %1145 = vmatprep.subr.bf16.mxu0 0
      %1146 = vmatpush1.bf16.msra.mxu0 0
      %1147 = vmatprep.subr.bf16.mxu0 0
      %1148 = vmatpush1.bf16.msra.mxu0 0
      %1149 = vmatprep.subr.bf16.mxu0 0
      %1150 = vmatpush1.bf16.msra.mxu0 0
      %1151 = vmatprep.subr.bf16.mxu0 0
      %1152 = vmatpush1.bf16.msra.mxu0 0
      %1153 = vmatprep.subr.bf16.mxu0 0
      %1154 = vmatpush1.bf16.msra.mxu0 0
      %1155 = vmatprep.subr.bf16.mxu0 0
      %1156 = vmatpush1.bf16.msra.mxu0 0
      %1157 = vmatprep.mubr.bf16.mxu0 0
      %1158 = vmatmul.mubr.bf16.gmra.mrb[0].mxu0 %v1102
      %v1159 = vpop.f32.mrb[0].mxu0
      %v1160 = vadd.f32 0.0, %v1159
      %v1161 = vpop.f32.mrb[0].mxu0
      %v1162 = vadd.f32 0.0, %v1161
      %v1163 = vpop.f32.mrb[0].mxu0
      %v1164 = vadd.f32 0.0, %v1163
      %v1165 = vpop.f32.mrb[0].mxu0
      %v1166 = vadd.f32 0.0, %v1165
      %1167 = vmatprep.mubr.bf16.mxu0 0
      %1168 = vmatmul.mubr.bf16.gmra.mrb[0].mxu0 %v1105
      %v1169 = vpop.f32.mrb[0].mxu0
      %v1170 = vadd.f32 0.0, %v1169
      %v1171 = vpop.f32.mrb[0].mxu0
      %v1172 = vadd.f32 0.0, %v1171
      %v1173 = vpop.f32.mrb[0].mxu0
      %v1174 = vadd.f32 0.0, %v1173
      %v1175 = vpop.f32.mrb[0].mxu0
      %v1176 = vadd.f32 0.0, %v1175
      %1177 = vmatprep.mubr.bf16.mxu0 0
      %1178 = vmatmul.mubr.bf16.gmra.mrb[0].mxu0 %v1108
      %v1179 = vpop.f32.mrb[0].mxu0
      %v1180 = vadd.f32 0.0, %v1179
      %v1181 = vpop.f32.mrb[0].mxu0
      %v1182 = vadd.f32 0.0, %v1181
      %v1183 = vpop.f32.mrb[0].mxu0
      %v1184 = vadd.f32 0.0, %v1183
      %v1185 = vpop.f32.mrb[0].mxu0
      %v1186 = vadd.f32 0.0, %v1185
      %1187 = vmatprep.mubr.bf16.mxu0 0
      %1188 = vmatmul.mubr.bf16.gmra.mrb[0].mxu0 %v1111
      %v1189 = vpop.f32.mrb[0].mxu0
      %v1190 = vadd.f32 0.0, %v1189
      %v1191 = vpop.f32.mrb[0].mxu0
      %v1192 = vadd.f32 0.0, %v1191
      %v1193 = vpop.f32.mrb[0].mxu0
      %v1194 = vadd.f32 0.0, %v1193
      %v1195 = vpop.f32.mrb[0].mxu0
      %v1196 = vadd.f32 0.0, %v1195
      %1197 = vmatprep.mubr.bf16.mxu0 0
      %1198 = vmatmul.mubr.bf16.gmra.mrb[0].mxu0 %v1114
      %v1199 = vpop.f32.mrb[0].mxu0
      %v1200 = vadd.f32 0.0, %v1199
      %v1201 = vpop.f32.mrb[0].mxu0
      %v1202 = vadd.f32 0.0, %v1201
      %v1203 = vpop.f32.mrb[0].mxu0
      %v1204 = vadd.f32 0.0, %v1203
      %v1205 = vpop.f32.mrb[0].mxu0
      %v1206 = vadd.f32 0.0, %v1205
      %1207 = vmatprep.mubr.bf16.mxu0 0
      %1208 = vmatmul.mubr.bf16.gmra.mrb[0].mxu0 %v1117
      %v1209 = vpop.f32.mrb[0].mxu0
      %v1210 = vadd.f32 0.0, %v1209
      %v1211 = vpop.f32.mrb[0].mxu0
      %v1212 = vadd.f32 0.0, %v1211
      %v1213 = vpop.f32.mrb[0].mxu0
      %v1214 = vadd.f32 0.0, %v1213
      %v1215 = vpop.f32.mrb[0].mxu0
      %v1216 = vadd.f32 0.0, %v1215
      %1217 = vmatprep.mubr.bf16.mxu0 0
      %1218 = vmatmul.mubr.bf16.gmra.mrb[0].mxu0 %v1120
      %v1219 = vpop.f32.mrb[0].mxu0
      %v1220 = vadd.f32 0.0, %v1219
      %v1221 = vpop.f32.mrb[0].mxu0
      %v1222 = vadd.f32 0.0, %v1221
      %v1223 = vpop.f32.mrb[0].mxu0
      %v1224 = vadd.f32 0.0, %v1223
      %v1225 = vpop.f32.mrb[0].mxu0
      %v1226 = vadd.f32 0.0, %v1225
      %1227 = vmatprep.mubr.bf16.mxu0 0
      %1228 = vmatmul.mubr.bf16.gmra.mrb[0].mxu0 %v1123
      %v1229 = vpop.f32.mrb[0].mxu0
      %v1230 = vadd.f32 0.0, %v1229
      %v1231 = vpop.f32.mrb[0].mxu0
      %v1232 = vadd.f32 0.0, %v1231
      %v1233 = vpop.f32.mrb[0].mxu0
      %v1234 = vadd.f32 0.0, %v1233
      %v1235 = vpop.f32.mrb[0].mxu0
      %v1236 = vadd.f32 0.0, %v1235
      %1237 = vdwg.mxu0
      %v1238 = vadd.f32 %v870, %v1160
      %v1239 = vadd.f32 %v872, %v1162
      %v1240 = vadd.f32 %v874, %v1164
      %v1241 = vadd.f32 %v876, %v1166
      %v1242 = vadd.f32 %v880, %v1170
      %v1243 = vadd.f32 %v882, %v1172
      %v1244 = vadd.f32 %v884, %v1174
      %v1245 = vadd.f32 %v886, %v1176
      %v1246 = vadd.f32 %v890, %v1180
      %v1247 = vadd.f32 %v892, %v1182
      %v1248 = vadd.f32 %v894, %v1184
      %v1249 = vadd.f32 %v896, %v1186
      %v1250 = vadd.f32 %v900, %v1190
      %v1251 = vadd.f32 %v902, %v1192
      %v1252 = vadd.f32 %v904, %v1194
      %v1253 = vadd.f32 %v906, %v1196
      %v1254 = vadd.f32 %v910, %v1200
      %v1255 = vadd.f32 %v912, %v1202
      %v1256 = vadd.f32 %v914, %v1204
      %v1257 = vadd.f32 %v916, %v1206
      %v1258 = vadd.f32 %v920, %v1210
      %v1259 = vadd.f32 %v922, %v1212
      %v1260 = vadd.f32 %v924, %v1214
      %v1261 = vadd.f32 %v926, %v1216
      %v1262 = vadd.f32 %v930, %v1220
      %v1263 = vadd.f32 %v932, %v1222
      %v1264 = vadd.f32 %v934, %v1224
      %v1265 = vadd.f32 %v936, %v1226
      %v1266 = vadd.f32 %v940, %v1230
      %v1267 = vadd.f32 %v942, %v1232
      %v1268 = vadd.f32 %v944, %v1234
      %v1269 = vadd.f32 %v946, %v1236
      %1270 = vrot.lane.b32.xlu0 %v428, 127
      %v1271 = vpop.permute.xlu0 %1270
      %1272 = vrot.lane.b32.xlu0 %v432, 127
      %v1273 = vpop.permute.xlu0 %1272
      %vm1274 = vcmask 1039360
      %v1275 = vsel %vm1274, %v1271, %v1273
      %vm1276 = vcmp.ne.s16.totalorder %v1271, 0
      %vm1277 = vcmp.ne.s16.totalorder %v1275, 0
      %vm1278 = vcmp.ne.s16.totalorder %v1273, 0
      %v1279 = vsel %vm1276, %v399, 0
      %v1280 = vsel %vm1277, %v400, 0
      %v1281 = vsel %vm1278, %v401, 0
      %v1282 = vsel %vm1276, %v402, 0
      %v1283 = vsel %vm1277, %v403, 0
      %v1284 = vsel %vm1278, %v404, 0
      %v1285 = vsel %vm1276, %v405, 0
      %v1286 = vsel %vm1277, %v406, 0
      %v1287 = vsel %vm1278, %v407, 0
      %v1288 = vsel %vm1276, %v408, 0
      %v1289 = vsel %vm1277, %v409, 0
      %v1290 = vsel %vm1278, %v410, 0
      %s1291 = scalar_lea.vmem %s1, 192
      %v1292 = vld [vmem:[%s1291] sm:$0xf]
      %v1293 = vld [vmem:[%s1291 + $0x4] sm:$0xf]
      %v1294 = vld [vmem:[%s1291 + $0x8] sm:$0xf]
      %v1295 = vld [vmem:[%s1291 + $0xc] sm:$0xf]
      %v1296 = vld [vmem:[%s1291 + $0x10] sm:$0xf]
      %v1297 = vld [vmem:[%s1291 + $0x14] sm:$0xf]
      %v1298 = vld [vmem:[%s1291 + $0x18] sm:$0xf]
      %v1299 = vld [vmem:[%s1291 + $0x1c] sm:$0xf]
      %v1300 = vld [vmem:[%s1291 + $0x20] sm:$0xf]
      %v1301 = vld [vmem:[%s1291 + $0x24] sm:$0xf]
      %v1302 = vld [vmem:[%s1291 + $0x28] sm:$0xf]
      %v1303 = vld [vmem:[%s1291 + $0x2c] sm:$0xf]
      %v1304 = vld [vmem:[%s1291 + $0x30] sm:$0xf]
      %v1305 = vld [vmem:[%s1291 + $0x34] sm:$0xf]
      %v1306 = vld [vmem:[%s1291 + $0x38] sm:$0xf]
      %v1307 = vld [vmem:[%s1291 + $0x3c] sm:$0xf]
      %v1324 = vunpack.c.l.b16 %v1292
      %v1325 = vunpack.c.l.b16 %v1293
      %v1326 = vunpack.c.l.b16 %v1294
      %v1327 = vunpack.c.l.b16 %v1295
      %v1328 = vunpack.c.l.b16 %v1296
      %v1329 = vunpack.c.l.b16 %v1297
      %v1330 = vunpack.c.l.b16 %v1298
      %v1331 = vunpack.c.l.b16 %v1299
      %v1332 = vunpack.c.l.b16 %v1300
      %v1333 = vunpack.c.l.b16 %v1301
      %v1334 = vunpack.c.l.b16 %v1302
      %v1335 = vunpack.c.l.b16 %v1303
      %v1336 = vunpack.c.l.b16 %v1304
      %v1337 = vunpack.c.l.b16 %v1305
      %v1338 = vunpack.c.l.b16 %v1306
      %v1339 = vunpack.c.l.b16 %v1307
      %v1340 = vpack.c.b16 %v1325, %v1324
      %v1341 = vpack.c.b16 %v1327, %v1326
      %v1342 = vpack.c.b16 %v1329, %v1328
      %v1343 = vpack.c.b16 %v1331, %v1330
      %v1344 = vpack.c.b16 %v1333, %v1332
      %v1345 = vpack.c.b16 %v1335, %v1334
      %v1346 = vpack.c.b16 %v1337, %v1336
      %v1347 = vpack.c.b16 %v1339, %v1338
      %1360 = vrot.lane.b32.xlu0 %v1279, 1
      %v1361 = vpop.permute.xlu0 %1360
      %1362 = vrot.lane.b32.xlu0 %v1280, 1
      %v1363 = vpop.permute.xlu0 %1362
      %1364 = vrot.lane.b32.xlu0 %v1281, 1
      %v1365 = vpop.permute.xlu0 %1364
      %1366 = vrot.lane.b32.xlu0 %v1282, 1
      %v1367 = vpop.permute.xlu0 %1366
      %1368 = vrot.lane.b32.xlu0 %v1283, 1
      %v1369 = vpop.permute.xlu0 %1368
      %1370 = vrot.lane.b32.xlu0 %v1284, 1
      %v1371 = vpop.permute.xlu0 %1370
      %1372 = vrot.lane.b32.xlu0 %v1285, 1
      %v1373 = vpop.permute.xlu0 %1372
      %1374 = vrot.lane.b32.xlu0 %v1286, 1
      %v1375 = vpop.permute.xlu0 %1374
      %1376 = vrot.lane.b32.xlu0 %v1287, 1
      %v1377 = vpop.permute.xlu0 %1376
      %1378 = vrot.lane.b32.xlu0 %v1288, 1
      %v1379 = vpop.permute.xlu0 %1378
      %1380 = vrot.lane.b32.xlu0 %v1289, 1
      %v1381 = vpop.permute.xlu0 %1380
      %1382 = vrot.lane.b32.xlu0 %v1290, 1
      %v1383 = vpop.permute.xlu0 %1382
      %vm1384 = vcmask 7168
      %v1385 = vsel %vm1384, %v1361, %v1363
      %v1386 = vsel %vm1384, %v1363, %v1365
      %v1387 = vsel %vm1384, %v1367, %v1369
      %v1388 = vsel %vm1384, %v1369, %v1371
      %v1389 = vsel %vm1384, %v1373, %v1375
      %v1390 = vsel %vm1384, %v1375, %v1377
      %v1391 = vsel %vm1384, %v1379, %v1381
      %v1392 = vsel %vm1384, %v1381, %v1383
      %v1402 = vsel %vm580, %v1340, 0
      %v1405 = vsel %vm580, %v1341, 0
      %v1408 = vsel %vm580, %v1342, 0
      %v1411 = vsel %vm580, %v1343, 0
      %v1414 = vsel %vm580, %v1344, 0
      %v1417 = vsel %vm580, %v1345, 0
      %v1420 = vsel %vm580, %v1346, 0
      %v1423 = vsel %vm580, %v1347, 0
      %1425 = vmatprep.subr.bf16.mxu0 %v1386
      %1426 = vmatpush1.bf16.msra.mxu0 %v1385
      %1427 = vmatprep.subr.bf16.mxu0 %v1388
      %1428 = vmatpush1.bf16.msra.mxu0 %v1387
      %1429 = vmatprep.subr.bf16.mxu0 %v1390
      %1430 = vmatpush1.bf16.msra.mxu0 %v1389
      %1431 = vmatprep.subr.bf16.mxu0 %v1392
      %1432 = vmatpush1.bf16.msra.mxu0 %v1391
      %1433 = vmatprep.subr.bf16.mxu0 0
      %1434 = vmatpush1.bf16.msra.mxu0 0
      %1435 = vmatprep.subr.bf16.mxu0 0
      %1436 = vmatpush1.bf16.msra.mxu0 0
      %1437 = vmatprep.subr.bf16.mxu0 0
      %1438 = vmatpush1.bf16.msra.mxu0 0
      %1439 = vmatprep.subr.bf16.mxu0 0
      %1440 = vmatpush1.bf16.msra.mxu0 0
      %1441 = vmatprep.subr.bf16.mxu0 0
      %1442 = vmatpush1.bf16.msra.mxu0 0
      %1443 = vmatprep.subr.bf16.mxu0 0
      %1444 = vmatpush1.bf16.msra.mxu0 0
      %1445 = vmatprep.subr.bf16.mxu0 0
      %1446 = vmatpush1.bf16.msra.mxu0 0
      %1447 = vmatprep.subr.bf16.mxu0 0
      %1448 = vmatpush1.bf16.msra.mxu0 0
      %1449 = vmatprep.subr.bf16.mxu0 0
      %1450 = vmatpush1.bf16.msra.mxu0 0
      %1451 = vmatprep.subr.bf16.mxu0 0
      %1452 = vmatpush1.bf16.msra.mxu0 0
      %1453 = vmatprep.subr.bf16.mxu0 0
      %1454 = vmatpush1.bf16.msra.mxu0 0
      %1455 = vmatprep.subr.bf16.mxu0 0
      %1456 = vmatpush1.bf16.msra.mxu0 0
      %1457 = vmatprep.mubr.bf16.mxu0 0
      %1458 = vmatmul.mubr.bf16.gmra.mrb[0].mxu0 %v1402
      %v1459 = vpop.f32.mrb[0].mxu0
      %v1460 = vadd.f32 0.0, %v1459
      %v1461 = vpop.f32.mrb[0].mxu0
      %v1462 = vadd.f32 0.0, %v1461
      %v1463 = vpop.f32.mrb[0].mxu0
      %v1464 = vadd.f32 0.0, %v1463
      %v1465 = vpop.f32.mrb[0].mxu0
      %v1466 = vadd.f32 0.0, %v1465
      %1467 = vmatprep.mubr.bf16.mxu0 0
      %1468 = vmatmul.mubr.bf16.gmra.mrb[0].mxu0 %v1405
      %v1469 = vpop.f32.mrb[0].mxu0
      %v1470 = vadd.f32 0.0, %v1469
      %v1471 = vpop.f32.mrb[0].mxu0
      %v1472 = vadd.f32 0.0, %v1471
      %v1473 = vpop.f32.mrb[0].mxu0
      %v1474 = vadd.f32 0.0, %v1473
      %v1475 = vpop.f32.mrb[0].mxu0
      %v1476 = vadd.f32 0.0, %v1475
      %1477 = vmatprep.mubr.bf16.mxu0 0
      %1478 = vmatmul.mubr.bf16.gmra.mrb[0].mxu0 %v1408
      %v1479 = vpop.f32.mrb[0].mxu0
      %v1480 = vadd.f32 0.0, %v1479
      %v1481 = vpop.f32.mrb[0].mxu0
      %v1482 = vadd.f32 0.0, %v1481
      %v1483 = vpop.f32.mrb[0].mxu0
      %v1484 = vadd.f32 0.0, %v1483
      %v1485 = vpop.f32.mrb[0].mxu0
      %v1486 = vadd.f32 0.0, %v1485
      %1487 = vmatprep.mubr.bf16.mxu0 0
      %1488 = vmatmul.mubr.bf16.gmra.mrb[0].mxu0 %v1411
      %v1489 = vpop.f32.mrb[0].mxu0
      %v1490 = vadd.f32 0.0, %v1489
      %v1491 = vpop.f32.mrb[0].mxu0
      %v1492 = vadd.f32 0.0, %v1491
      %v1493 = vpop.f32.mrb[0].mxu0
      %v1494 = vadd.f32 0.0, %v1493
      %v1495 = vpop.f32.mrb[0].mxu0
      %v1496 = vadd.f32 0.0, %v1495
      %1497 = vmatprep.mubr.bf16.mxu0 0
      %1498 = vmatmul.mubr.bf16.gmra.mrb[0].mxu0 %v1414
      %v1499 = vpop.f32.mrb[0].mxu0
      %v1500 = vadd.f32 0.0, %v1499
      %v1501 = vpop.f32.mrb[0].mxu0
      %v1502 = vadd.f32 0.0, %v1501
      %v1503 = vpop.f32.mrb[0].mxu0
      %v1504 = vadd.f32 0.0, %v1503
      %v1505 = vpop.f32.mrb[0].mxu0
      %v1506 = vadd.f32 0.0, %v1505
      %1507 = vmatprep.mubr.bf16.mxu0 0
      %1508 = vmatmul.mubr.bf16.gmra.mrb[0].mxu0 %v1417
      %v1509 = vpop.f32.mrb[0].mxu0
      %v1510 = vadd.f32 0.0, %v1509
      %v1511 = vpop.f32.mrb[0].mxu0
      %v1512 = vadd.f32 0.0, %v1511
      %v1513 = vpop.f32.mrb[0].mxu0
      %v1514 = vadd.f32 0.0, %v1513
      %v1515 = vpop.f32.mrb[0].mxu0
      %v1516 = vadd.f32 0.0, %v1515
      %1517 = vmatprep.mubr.bf16.mxu0 0
      %1518 = vmatmul.mubr.bf16.gmra.mrb[0].mxu0 %v1420
      %v1519 = vpop.f32.mrb[0].mxu0
      %v1520 = vadd.f32 0.0, %v1519
      %v1521 = vpop.f32.mrb[0].mxu0
      %v1522 = vadd.f32 0.0, %v1521
      %v1523 = vpop.f32.mrb[0].mxu0
      %v1524 = vadd.f32 0.0, %v1523
      %v1525 = vpop.f32.mrb[0].mxu0
      %v1526 = vadd.f32 0.0, %v1525
      %1527 = vmatprep.mubr.bf16.mxu0 0
      %1528 = vmatmul.mubr.bf16.gmra.mrb[0].mxu0 %v1423
      %v1529 = vpop.f32.mrb[0].mxu0
      %v1530 = vadd.f32 0.0, %v1529
      %v1531 = vpop.f32.mrb[0].mxu0
      %v1532 = vadd.f32 0.0, %v1531
      %v1533 = vpop.f32.mrb[0].mxu0
      %v1534 = vadd.f32 0.0, %v1533
      %v1535 = vpop.f32.mrb[0].mxu0
      %v1536 = vadd.f32 0.0, %v1535
      %1537 = vdwg.mxu0
      %v1538 = vadd.f32 %v1238, %v1460
      %v1539 = vadd.f32 %v1239, %v1462
      %v1540 = vadd.f32 %v1240, %v1464
      %v1541 = vadd.f32 %v1241, %v1466
      %v1542 = vadd.f32 %v1242, %v1470
      %v1543 = vadd.f32 %v1243, %v1472
      %v1544 = vadd.f32 %v1244, %v1474
      %v1545 = vadd.f32 %v1245, %v1476
      %v1546 = vadd.f32 %v1246, %v1480
      %v1547 = vadd.f32 %v1247, %v1482
      %v1548 = vadd.f32 %v1248, %v1484
      %v1549 = vadd.f32 %v1249, %v1486
      %v1550 = vadd.f32 %v1250, %v1490
      %v1551 = vadd.f32 %v1251, %v1492
      %v1552 = vadd.f32 %v1252, %v1494
      %v1553 = vadd.f32 %v1253, %v1496
      %v1554 = vadd.f32 %v1254, %v1500
      %v1555 = vadd.f32 %v1255, %v1502
      %v1556 = vadd.f32 %v1256, %v1504
      %v1557 = vadd.f32 %v1257, %v1506
      %v1558 = vadd.f32 %v1258, %v1510
      %v1559 = vadd.f32 %v1259, %v1512
      %v1560 = vadd.f32 %v1260, %v1514
      %v1561 = vadd.f32 %v1261, %v1516
      %v1562 = vadd.f32 %v1262, %v1520
      %v1563 = vadd.f32 %v1263, %v1522
      %v1564 = vadd.f32 %v1264, %v1524
      %v1565 = vadd.f32 %v1265, %v1526
      %v1566 = vadd.f32 %v1266, %v1530
      %v1567 = vadd.f32 %v1267, %v1532
      %v1568 = vadd.f32 %v1268, %v1534
      %v1569 = vadd.f32 %v1269, %v1536
      %s1570 = scalar_lea.vmem %s1, 256
      %v1571 = vld [vmem:[%s1570] sm:$0xf]
      %v1572 = vld [vmem:[%s1570 + $0x4] sm:$0xf]
      %v1573 = vld [vmem:[%s1570 + $0x8] sm:$0xf]
      %v1574 = vld [vmem:[%s1570 + $0xc] sm:$0xf]
      %v1575 = vld [vmem:[%s1570 + $0x10] sm:$0xf]
      %v1576 = vld [vmem:[%s1570 + $0x14] sm:$0xf]
      %v1577 = vld [vmem:[%s1570 + $0x18] sm:$0xf]
      %v1578 = vld [vmem:[%s1570 + $0x1c] sm:$0xf]
      %v1579 = vld [vmem:[%s1570 + $0x20] sm:$0xf]
      %v1580 = vld [vmem:[%s1570 + $0x24] sm:$0xf]
      %v1581 = vld [vmem:[%s1570 + $0x28] sm:$0xf]
      %v1582 = vld [vmem:[%s1570 + $0x2c] sm:$0xf]
      %v1583 = vld [vmem:[%s1570 + $0x30] sm:$0xf]
      %v1584 = vld [vmem:[%s1570 + $0x34] sm:$0xf]
      %v1585 = vld [vmem:[%s1570 + $0x38] sm:$0xf]
      %v1586 = vld [vmem:[%s1570 + $0x3c] sm:$0xf]
      %v1603 = vunpack.c.l.b16 %v1571
      %v1604 = vunpack.c.l.b16 %v1572
      %v1605 = vunpack.c.l.b16 %v1573
      %v1606 = vunpack.c.l.b16 %v1574
      %v1607 = vunpack.c.l.b16 %v1575
      %v1608 = vunpack.c.l.b16 %v1576
      %v1609 = vunpack.c.l.b16 %v1577
      %v1610 = vunpack.c.l.b16 %v1578
      %v1611 = vunpack.c.l.b16 %v1579
      %v1612 = vunpack.c.l.b16 %v1580
      %v1613 = vunpack.c.l.b16 %v1581
      %v1614 = vunpack.c.l.b16 %v1582
      %v1615 = vunpack.c.l.b16 %v1583
      %v1616 = vunpack.c.l.b16 %v1584
      %v1617 = vunpack.c.l.b16 %v1585
      %v1618 = vunpack.c.l.b16 %v1586
      %v1619 = vpack.c.b16 %v1604, %v1603
      %v1620 = vpack.c.b16 %v1606, %v1605
      %v1621 = vpack.c.b16 %v1608, %v1607
      %v1622 = vpack.c.b16 %v1610, %v1609
      %v1623 = vpack.c.b16 %v1612, %v1611
      %v1624 = vpack.c.b16 %v1614, %v1613
      %v1625 = vpack.c.b16 %v1616, %v1615
      %v1626 = vpack.c.b16 %v1618, %v1617
      %v1628 = vsel %vm580, %v1619, 0
      %v1631 = vsel %vm580, %v1620, 0
      %v1634 = vsel %vm580, %v1621, 0
      %v1637 = vsel %vm580, %v1622, 0
      %v1640 = vsel %vm580, %v1623, 0
      %v1643 = vsel %vm580, %v1624, 0
      %v1646 = vsel %vm580, %v1625, 0
      %v1649 = vsel %vm580, %v1626, 0
      %1651 = vmatprep.subr.bf16.mxu0 %v401
      %1652 = vmatpush1.bf16.msra.mxu0 %v400
      %1653 = vmatprep.subr.bf16.mxu0 %v404
      %1654 = vmatpush1.bf16.msra.mxu0 %v403
      %1655 = vmatprep.subr.bf16.mxu0 %v407
      %1656 = vmatpush1.bf16.msra.mxu0 %v406
      %1657 = vmatprep.subr.bf16.mxu0 %v410
      %1658 = vmatpush1.bf16.msra.mxu0 %v409
      %1659 = vmatprep.subr.bf16.mxu0 0
      %1660 = vmatpush1.bf16.msra.mxu0 0
      %1661 = vmatprep.subr.bf16.mxu0 0
      %1662 = vmatpush1.bf16.msra.mxu0 0
      %1663 = vmatprep.subr.bf16.mxu0 0
      %1664 = vmatpush1.bf16.msra.mxu0 0
      %1665 = vmatprep.subr.bf16.mxu0 0
      %1666 = vmatpush1.bf16.msra.mxu0 0
      %1667 = vmatprep.subr.bf16.mxu0 0
      %1668 = vmatpush1.bf16.msra.mxu0 0
      %1669 = vmatprep.subr.bf16.mxu0 0
      %1670 = vmatpush1.bf16.msra.mxu0 0
      %1671 = vmatprep.subr.bf16.mxu0 0
      %1672 = vmatpush1.bf16.msra.mxu0 0
      %1673 = vmatprep.subr.bf16.mxu0 0
      %1674 = vmatpush1.bf16.msra.mxu0 0
      %1675 = vmatprep.subr.bf16.mxu0 0
      %1676 = vmatpush1.bf16.msra.mxu0 0
      %1677 = vmatprep.subr.bf16.mxu0 0
      %1678 = vmatpush1.bf16.msra.mxu0 0
      %1679 = vmatprep.subr.bf16.mxu0 0
      %1680 = vmatpush1.bf16.msra.mxu0 0
      %1681 = vmatprep.subr.bf16.mxu0 0
      %1682 = vmatpush1.bf16.msra.mxu0 0
      %1683 = vmatprep.mubr.bf16.mxu0 0
      %1684 = vmatmul.mubr.bf16.gmra.mrb[0].mxu0 %v1628
      %v1685 = vpop.f32.mrb[0].mxu0
      %v1686 = vadd.f32 0.0, %v1685
      %v1687 = vpop.f32.mrb[0].mxu0
      %v1688 = vadd.f32 0.0, %v1687
      %v1689 = vpop.f32.mrb[0].mxu0
      %v1690 = vadd.f32 0.0, %v1689
      %v1691 = vpop.f32.mrb[0].mxu0
      %v1692 = vadd.f32 0.0, %v1691
      %1693 = vmatprep.mubr.bf16.mxu0 0
      %1694 = vmatmul.mubr.bf16.gmra.mrb[0].mxu0 %v1631
      %v1695 = vpop.f32.mrb[0].mxu0
      %v1696 = vadd.f32 0.0, %v1695
      %v1697 = vpop.f32.mrb[0].mxu0
      %v1698 = vadd.f32 0.0, %v1697
      %v1699 = vpop.f32.mrb[0].mxu0
      %v1700 = vadd.f32 0.0, %v1699
      %v1701 = vpop.f32.mrb[0].mxu0
      %v1702 = vadd.f32 0.0, %v1701
      %1703 = vmatprep.mubr.bf16.mxu0 0
      %1704 = vmatmul.mubr.bf16.gmra.mrb[0].mxu0 %v1634
      %v1705 = vpop.f32.mrb[0].mxu0
      %v1706 = vadd.f32 0.0, %v1705
      %v1707 = vpop.f32.mrb[0].mxu0
      %v1708 = vadd.f32 0.0, %v1707
      %v1709 = vpop.f32.mrb[0].mxu0
      %v1710 = vadd.f32 0.0, %v1709
      %v1711 = vpop.f32.mrb[0].mxu0
      %v1712 = vadd.f32 0.0, %v1711
      %1713 = vmatprep.mubr.bf16.mxu0 0
      %1714 = vmatmul.mubr.bf16.gmra.mrb[0].mxu0 %v1637
      %v1715 = vpop.f32.mrb[0].mxu0
      %v1716 = vadd.f32 0.0, %v1715
      %v1717 = vpop.f32.mrb[0].mxu0
      %v1718 = vadd.f32 0.0, %v1717
      %v1719 = vpop.f32.mrb[0].mxu0
      %v1720 = vadd.f32 0.0, %v1719
      %v1721 = vpop.f32.mrb[0].mxu0
      %v1722 = vadd.f32 0.0, %v1721
      %1723 = vmatprep.mubr.bf16.mxu0 0
      %1724 = vmatmul.mubr.bf16.gmra.mrb[0].mxu0 %v1640
      %v1725 = vpop.f32.mrb[0].mxu0
      %v1726 = vadd.f32 0.0, %v1725
      %v1727 = vpop.f32.mrb[0].mxu0
      %v1728 = vadd.f32 0.0, %v1727
      %v1729 = vpop.f32.mrb[0].mxu0
      %v1730 = vadd.f32 0.0, %v1729
      %v1731 = vpop.f32.mrb[0].mxu0
      %v1732 = vadd.f32 0.0, %v1731
      %1733 = vmatprep.mubr.bf16.mxu0 0
      %1734 = vmatmul.mubr.bf16.gmra.mrb[0].mxu0 %v1643
      %v1735 = vpop.f32.mrb[0].mxu0
      %v1736 = vadd.f32 0.0, %v1735
      %v1737 = vpop.f32.mrb[0].mxu0
      %v1738 = vadd.f32 0.0, %v1737
      %v1739 = vpop.f32.mrb[0].mxu0
      %v1740 = vadd.f32 0.0, %v1739
      %v1741 = vpop.f32.mrb[0].mxu0
      %v1742 = vadd.f32 0.0, %v1741
      %1743 = vmatprep.mubr.bf16.mxu0 0
      %1744 = vmatmul.mubr.bf16.gmra.mrb[0].mxu0 %v1646
      %v1745 = vpop.f32.mrb[0].mxu0
      %v1746 = vadd.f32 0.0, %v1745
      %v1747 = vpop.f32.mrb[0].mxu0
      %v1748 = vadd.f32 0.0, %v1747
      %v1749 = vpop.f32.mrb[0].mxu0
      %v1750 = vadd.f32 0.0, %v1749
      %v1751 = vpop.f32.mrb[0].mxu0
      %v1752 = vadd.f32 0.0, %v1751
      %1753 = vmatprep.mubr.bf16.mxu0 0
      %1754 = vmatmul.mubr.bf16.gmra.mrb[0].mxu0 %v1649
      %v1755 = vpop.f32.mrb[0].mxu0
      %v1756 = vadd.f32 0.0, %v1755
      %v1757 = vpop.f32.mrb[0].mxu0
      %v1758 = vadd.f32 0.0, %v1757
      %v1759 = vpop.f32.mrb[0].mxu0
      %v1760 = vadd.f32 0.0, %v1759
      %v1761 = vpop.f32.mrb[0].mxu0
      %v1762 = vadd.f32 0.0, %v1761
      %1763 = vdwg.mxu0
      %v1764 = vadd.f32 %v1538, %v1686
      %v1765 = vadd.f32 %v1539, %v1688
      %v1766 = vadd.f32 %v1540, %v1690
      %v1767 = vadd.f32 %v1541, %v1692
      %v1768 = vadd.f32 %v1542, %v1696
      %v1769 = vadd.f32 %v1543, %v1698
      %v1770 = vadd.f32 %v1544, %v1700
      %v1771 = vadd.f32 %v1545, %v1702
      %v1772 = vadd.f32 %v1546, %v1706
      %v1773 = vadd.f32 %v1547, %v1708
      %v1774 = vadd.f32 %v1548, %v1710
      %v1775 = vadd.f32 %v1549, %v1712
      %v1776 = vadd.f32 %v1550, %v1716
      %v1777 = vadd.f32 %v1551, %v1718
      %v1778 = vadd.f32 %v1552, %v1720
      %v1779 = vadd.f32 %v1553, %v1722
      %v1780 = vadd.f32 %v1554, %v1726
      %v1781 = vadd.f32 %v1555, %v1728
      %v1782 = vadd.f32 %v1556, %v1730
      %v1783 = vadd.f32 %v1557, %v1732
      %v1784 = vadd.f32 %v1558, %v1736
      %v1785 = vadd.f32 %v1559, %v1738
      %v1786 = vadd.f32 %v1560, %v1740
      %v1787 = vadd.f32 %v1561, %v1742
      %v1788 = vadd.f32 %v1562, %v1746
      %v1789 = vadd.f32 %v1563, %v1748
      %v1790 = vadd.f32 %v1564, %v1750
      %v1791 = vadd.f32 %v1565, %v1752
      %v1792 = vadd.f32 %v1566, %v1756
      %v1793 = vadd.f32 %v1567, %v1758
      %v1794 = vadd.f32 %v1568, %v1760
      %v1795 = vadd.f32 %v1569, %v1762
      %v1796 = vld [vmem:[#allocation2 + $0x8] sm:$0xff]
      %v1797 = vld [vmem:[#allocation2 + $0x10] sm:$0xff]
      %v1798 = vld [vmem:[#allocation2 + $0x18] sm:$0xff]
      %v1799 = vld [vmem:[#allocation2 + $0x28] sm:$0xff]
      %v1800 = vld [vmem:[#allocation2 + $0x30] sm:$0xff]
      %v1801 = vld [vmem:[#allocation2 + $0x38] sm:$0xff]
      %v1802 = vld [vmem:[#allocation2 + $0x48] sm:$0xff]
      %v1803 = vld [vmem:[#allocation2 + $0x50] sm:$0xff]
      %v1804 = vld [vmem:[#allocation2 + $0x58] sm:$0xff]
      %v1805 = vld [vmem:[#allocation2 + $0x68] sm:$0xff]
      %v1806 = vld [vmem:[#allocation2 + $0x70] sm:$0xff]
      %v1807 = vld [vmem:[#allocation2 + $0x78] sm:$0xff]
      %1808 = vrot.lane.b32.xlu0 %v965, 1
      %v1809 = vpop.permute.xlu0 %1808
      %1810 = vrot.lane.b32.xlu0 %v969, 1
      %v1811 = vpop.permute.xlu0 %1810
      %v1812 = vsel %vm1384, %v1809, %v1811
      %vm1813 = vcmp.ne.s16.totalorder %v1809, 0
      %vm1814 = vcmp.ne.s16.totalorder %v1812, 0
      %vm1815 = vcmp.ne.s16.totalorder %v1811, 0
      %v1816 = vsel %vm1813, %v1796, 0
      %v1817 = vsel %vm1814, %v1797, 0
      %v1818 = vsel %vm1815, %v1798, 0
      %v1819 = vsel %vm1813, %v1799, 0
      %v1820 = vsel %vm1814, %v1800, 0
      %v1821 = vsel %vm1815, %v1801, 0
      %v1822 = vsel %vm1813, %v1802, 0
      %v1823 = vsel %vm1814, %v1803, 0
      %v1824 = vsel %vm1815, %v1804, 0
      %v1825 = vsel %vm1813, %v1805, 0
      %v1826 = vsel %vm1814, %v1806, 0
      %v1827 = vsel %vm1815, %v1807, 0
      %s1828 = scalar_lea.vmem %s1, 320
      %v1829 = vld [vmem:[%s1828] sm:$0xf]
      %v1830 = vld [vmem:[%s1828 + $0x4] sm:$0xf]
      %v1831 = vld [vmem:[%s1828 + $0x8] sm:$0xf]
      %v1832 = vld [vmem:[%s1828 + $0xc] sm:$0xf]
      %v1833 = vld [vmem:[%s1828 + $0x10] sm:$0xf]
      %v1834 = vld [vmem:[%s1828 + $0x14] sm:$0xf]
      %v1835 = vld [vmem:[%s1828 + $0x18] sm:$0xf]
      %v1836 = vld [vmem:[%s1828 + $0x1c] sm:$0xf]
      %v1837 = vld [vmem:[%s1828 + $0x20] sm:$0xf]
      %v1838 = vld [vmem:[%s1828 + $0x24] sm:$0xf]
      %v1839 = vld [vmem:[%s1828 + $0x28] sm:$0xf]
      %v1840 = vld [vmem:[%s1828 + $0x2c] sm:$0xf]
      %v1841 = vld [vmem:[%s1828 + $0x30] sm:$0xf]
      %v1842 = vld [vmem:[%s1828 + $0x34] sm:$0xf]
      %v1843 = vld [vmem:[%s1828 + $0x38] sm:$0xf]
      %v1844 = vld [vmem:[%s1828 + $0x3c] sm:$0xf]
      %v1861 = vunpack.c.l.b16 %v1829
      %v1862 = vunpack.c.l.b16 %v1830
      %v1863 = vunpack.c.l.b16 %v1831
      %v1864 = vunpack.c.l.b16 %v1832
      %v1865 = vunpack.c.l.b16 %v1833
      %v1866 = vunpack.c.l.b16 %v1834
      %v1867 = vunpack.c.l.b16 %v1835
      %v1868 = vunpack.c.l.b16 %v1836
      %v1869 = vunpack.c.l.b16 %v1837
      %v1870 = vunpack.c.l.b16 %v1838
      %v1871 = vunpack.c.l.b16 %v1839
      %v1872 = vunpack.c.l.b16 %v1840
      %v1873 = vunpack.c.l.b16 %v1841
      %v1874 = vunpack.c.l.b16 %v1842
      %v1875 = vunpack.c.l.b16 %v1843
      %v1876 = vunpack.c.l.b16 %v1844
      %v1877 = vpack.c.b16 %v1862, %v1861
      %v1878 = vpack.c.b16 %v1864, %v1863
      %v1879 = vpack.c.b16 %v1866, %v1865
      %v1880 = vpack.c.b16 %v1868, %v1867
      %v1881 = vpack.c.b16 %v1870, %v1869
      %v1882 = vpack.c.b16 %v1872, %v1871
      %v1883 = vpack.c.b16 %v1874, %v1873
      %v1884 = vpack.c.b16 %v1876, %v1875
      %1897 = vrot.lane.b32.xlu0 %v1816, 127
      %v1898 = vpop.permute.xlu0 %1897
      %1899 = vrot.lane.b32.xlu0 %v1817, 127
      %v1900 = vpop.permute.xlu0 %1899
      %1901 = vrot.lane.b32.xlu0 %v1818, 127
      %v1902 = vpop.permute.xlu0 %1901
      %1903 = vrot.lane.b32.xlu0 %v1819, 127
      %v1904 = vpop.permute.xlu0 %1903
      %1905 = vrot.lane.b32.xlu0 %v1820, 127
      %v1906 = vpop.permute.xlu0 %1905
      %1907 = vrot.lane.b32.xlu0 %v1821, 127
      %v1908 = vpop.permute.xlu0 %1907
      %1909 = vrot.lane.b32.xlu0 %v1822, 127
      %v1910 = vpop.permute.xlu0 %1909
      %1911 = vrot.lane.b32.xlu0 %v1823, 127
      %v1912 = vpop.permute.xlu0 %1911
      %1913 = vrot.lane.b32.xlu0 %v1824, 127
      %v1914 = vpop.permute.xlu0 %1913
      %1915 = vrot.lane.b32.xlu0 %v1825, 127
      %v1916 = vpop.permute.xlu0 %1915
      %1917 = vrot.lane.b32.xlu0 %v1826, 127
      %v1918 = vpop.permute.xlu0 %1917
      %1919 = vrot.lane.b32.xlu0 %v1827, 127
      %v1920 = vpop.permute.xlu0 %1919
      %v1921 = vsel %vm1274, %v1898, %v1900
      %v1922 = vsel %vm1274, %v1900, %v1902
      %v1923 = vsel %vm1274, %v1904, %v1906
      %v1924 = vsel %vm1274, %v1906, %v1908
      %v1925 = vsel %vm1274, %v1910, %v1912
      %v1926 = vsel %vm1274, %v1912, %v1914
      %v1927 = vsel %vm1274, %v1916, %v1918
      %v1928 = vsel %vm1274, %v1918, %v1920
      %v1938 = vsel %vm580, %v1877, 0
      %v1941 = vsel %vm580, %v1878, 0
      %v1944 = vsel %vm580, %v1879, 0
      %v1947 = vsel %vm580, %v1880, 0
      %v1950 = vsel %vm580, %v1881, 0
      %v1953 = vsel %vm580, %v1882, 0
      %v1956 = vsel %vm580, %v1883, 0
      %v1959 = vsel %vm580, %v1884, 0
      %1961 = vmatprep.subr.bf16.mxu0 %v1922
      %1962 = vmatpush1.bf16.msra.mxu0 %v1921
      %1963 = vmatprep.subr.bf16.mxu0 %v1924
      %1964 = vmatpush1.bf16.msra.mxu0 %v1923
      %1965 = vmatprep.subr.bf16.mxu0 %v1926
      %1966 = vmatpush1.bf16.msra.mxu0 %v1925
      %1967 = vmatprep.subr.bf16.mxu0 %v1928
      %1968 = vmatpush1.bf16.msra.mxu0 %v1927
      %1969 = vmatprep.subr.bf16.mxu0 0
      %1970 = vmatpush1.bf16.msra.mxu0 0
      %1971 = vmatprep.subr.bf16.mxu0 0
      %1972 = vmatpush1.bf16.msra.mxu0 0
      %1973 = vmatprep.subr.bf16.mxu0 0
      %1974 = vmatpush1.bf16.msra.mxu0 0
      %1975 = vmatprep.subr.bf16.mxu0 0
      %1976 = vmatpush1.bf16.msra.mxu0 0
      %1977 = vmatprep.subr.bf16.mxu0 0
      %1978 = vmatpush1.bf16.msra.mxu0 0
      %1979 = vmatprep.subr.bf16.mxu0 0
      %1980 = vmatpush1.bf16.msra.mxu0 0
      %1981 = vmatprep.subr.bf16.mxu0 0
      %1982 = vmatpush1.bf16.msra.mxu0 0
      %1983 = vmatprep.subr.bf16.mxu0 0
      %1984 = vmatpush1.bf16.msra.mxu0 0
      %1985 = vmatprep.subr.bf16.mxu0 0
      %1986 = vmatpush1.bf16.msra.mxu0 0
      %1987 = vmatprep.subr.bf16.mxu0 0
      %1988 = vmatpush1.bf16.msra.mxu0 0
      %1989 = vmatprep.subr.bf16.mxu0 0
      %1990 = vmatpush1.bf16.msra.mxu0 0
      %1991 = vmatprep.subr.bf16.mxu0 0
      %1992 = vmatpush1.bf16.msra.mxu0 0
      %1993 = vmatprep.mubr.bf16.mxu0 0
      %1994 = vmatmul.mubr.bf16.gmra.mrb[0].mxu0 %v1938
      %v1995 = vpop.f32.mrb[0].mxu0
      %v1996 = vadd.f32 0.0, %v1995
      %v1997 = vpop.f32.mrb[0].mxu0
      %v1998 = vadd.f32 0.0, %v1997
      %v1999 = vpop.f32.mrb[0].mxu0
      %v2000 = vadd.f32 0.0, %v1999
      %v2001 = vpop.f32.mrb[0].mxu0
      %v2002 = vadd.f32 0.0, %v2001
      %2003 = vmatprep.mubr.bf16.mxu0 0
      %2004 = vmatmul.mubr.bf16.gmra.mrb[0].mxu0 %v1941
      %v2005 = vpop.f32.mrb[0].mxu0
      %v2006 = vadd.f32 0.0, %v2005
      %v2007 = vpop.f32.mrb[0].mxu0
      %v2008 = vadd.f32 0.0, %v2007
      %v2009 = vpop.f32.mrb[0].mxu0
      %v2010 = vadd.f32 0.0, %v2009
      %v2011 = vpop.f32.mrb[0].mxu0
      %v2012 = vadd.f32 0.0, %v2011
      %2013 = vmatprep.mubr.bf16.mxu0 0
      %2014 = vmatmul.mubr.bf16.gmra.mrb[0].mxu0 %v1944
      %v2015 = vpop.f32.mrb[0].mxu0
      %v2016 = vadd.f32 0.0, %v2015
      %v2017 = vpop.f32.mrb[0].mxu0
      %v2018 = vadd.f32 0.0, %v2017
      %v2019 = vpop.f32.mrb[0].mxu0
      %v2020 = vadd.f32 0.0, %v2019
      %v2021 = vpop.f32.mrb[0].mxu0
      %v2022 = vadd.f32 0.0, %v2021
      %2023 = vmatprep.mubr.bf16.mxu0 0
      %2024 = vmatmul.mubr.bf16.gmra.mrb[0].mxu0 %v1947
      %v2025 = vpop.f32.mrb[0].mxu0
      %v2026 = vadd.f32 0.0, %v2025
      %v2027 = vpop.f32.mrb[0].mxu0
      %v2028 = vadd.f32 0.0, %v2027
      %v2029 = vpop.f32.mrb[0].mxu0
      %v2030 = vadd.f32 0.0, %v2029
      %v2031 = vpop.f32.mrb[0].mxu0
      %v2032 = vadd.f32 0.0, %v2031
      %2033 = vmatprep.mubr.bf16.mxu0 0
      %2034 = vmatmul.mubr.bf16.gmra.mrb[0].mxu0 %v1950
      %v2035 = vpop.f32.mrb[0].mxu0
      %v2036 = vadd.f32 0.0, %v2035
      %v2037 = vpop.f32.mrb[0].mxu0
      %v2038 = vadd.f32 0.0, %v2037
      %v2039 = vpop.f32.mrb[0].mxu0
      %v2040 = vadd.f32 0.0, %v2039
      %v2041 = vpop.f32.mrb[0].mxu0
      %v2042 = vadd.f32 0.0, %v2041
      %2043 = vmatprep.mubr.bf16.mxu0 0
      %2044 = vmatmul.mubr.bf16.gmra.mrb[0].mxu0 %v1953
      %v2045 = vpop.f32.mrb[0].mxu0
      %v2046 = vadd.f32 0.0, %v2045
      %v2047 = vpop.f32.mrb[0].mxu0
      %v2048 = vadd.f32 0.0, %v2047
      %v2049 = vpop.f32.mrb[0].mxu0
      %v2050 = vadd.f32 0.0, %v2049
      %v2051 = vpop.f32.mrb[0].mxu0
      %v2052 = vadd.f32 0.0, %v2051
      %2053 = vmatprep.mubr.bf16.mxu0 0
      %2054 = vmatmul.mubr.bf16.gmra.mrb[0].mxu0 %v1956
      %v2055 = vpop.f32.mrb[0].mxu0
      %v2056 = vadd.f32 0.0, %v2055
      %v2057 = vpop.f32.mrb[0].mxu0
      %v2058 = vadd.f32 0.0, %v2057
      %v2059 = vpop.f32.mrb[0].mxu0
      %v2060 = vadd.f32 0.0, %v2059
      %v2061 = vpop.f32.mrb[0].mxu0
      %v2062 = vadd.f32 0.0, %v2061
      %2063 = vmatprep.mubr.bf16.mxu0 0
      %2064 = vmatmul.mubr.bf16.gmra.mrb[0].mxu0 %v1959
      %v2065 = vpop.f32.mrb[0].mxu0
      %v2066 = vadd.f32 0.0, %v2065
      %v2067 = vpop.f32.mrb[0].mxu0
      %v2068 = vadd.f32 0.0, %v2067
      %v2069 = vpop.f32.mrb[0].mxu0
      %v2070 = vadd.f32 0.0, %v2069
      %v2071 = vpop.f32.mrb[0].mxu0
      %v2072 = vadd.f32 0.0, %v2071
      %2073 = vdwg.mxu0
      %v2074 = vadd.f32 %v1764, %v1996
      %v2075 = vadd.f32 %v1765, %v1998
      %v2076 = vadd.f32 %v1766, %v2000
      %v2077 = vadd.f32 %v1767, %v2002
      %v2078 = vadd.f32 %v1768, %v2006
      %v2079 = vadd.f32 %v1769, %v2008
      %v2080 = vadd.f32 %v1770, %v2010
      %v2081 = vadd.f32 %v1771, %v2012
      %v2082 = vadd.f32 %v1772, %v2016
      %v2083 = vadd.f32 %v1773, %v2018
      %v2084 = vadd.f32 %v1774, %v2020
      %v2085 = vadd.f32 %v1775, %v2022
      %v2086 = vadd.f32 %v1776, %v2026
      %v2087 = vadd.f32 %v1777, %v2028
      %v2088 = vadd.f32 %v1778, %v2030
      %v2089 = vadd.f32 %v1779, %v2032
      %v2090 = vadd.f32 %v1780, %v2036
      %v2091 = vadd.f32 %v1781, %v2038
      %v2092 = vadd.f32 %v1782, %v2040
      %v2093 = vadd.f32 %v1783, %v2042
      %v2094 = vadd.f32 %v1784, %v2046
      %v2095 = vadd.f32 %v1785, %v2048
      %v2096 = vadd.f32 %v1786, %v2050
      %v2097 = vadd.f32 %v1787, %v2052
      %v2098 = vadd.f32 %v1788, %v2056
      %v2099 = vadd.f32 %v1789, %v2058
      %v2100 = vadd.f32 %v1790, %v2060
      %v2101 = vadd.f32 %v1791, %v2062
      %v2102 = vadd.f32 %v1792, %v2066
      %v2103 = vadd.f32 %v1793, %v2068
      %v2104 = vadd.f32 %v1794, %v2070
      %v2105 = vadd.f32 %v1795, %v2072
      %2106 = vrot.lane.b32.xlu0 %v428, 15
      %v2107 = vpop.permute.xlu0 %2106
      %2108 = vrot.lane.b32.xlu0 %v432, 15
      %v2109 = vpop.permute.xlu0 %2108
      %v2110 = vsel %vm1084, %v2107, %v2109
      %vm2111 = vcmp.ne.s16.totalorder %v2107, 0
      %vm2112 = vcmp.ne.s16.totalorder %v2110, 0
      %vm2113 = vcmp.ne.s16.totalorder %v2109, 0
      %v2114 = vsel %vm2111, %v1796, 0
      %v2115 = vsel %vm2112, %v1797, 0
      %v2116 = vsel %vm2113, %v1798, 0
      %v2117 = vsel %vm2111, %v1799, 0
      %v2118 = vsel %vm2112, %v1800, 0
      %v2119 = vsel %vm2113, %v1801, 0
      %v2120 = vsel %vm2111, %v1802, 0
      %v2121 = vsel %vm2112, %v1803, 0
      %v2122 = vsel %vm2113, %v1804, 0
      %v2123 = vsel %vm2111, %v1805, 0
      %v2124 = vsel %vm2112, %v1806, 0
      %v2125 = vsel %vm2113, %v1807, 0
      %s2126 = scalar_lea.vmem %s1, 384
      %v2127 = vld [vmem:[%s2126] sm:$0xf]
      %v2128 = vld [vmem:[%s2126 + $0x4] sm:$0xf]
      %v2129 = vld [vmem:[%s2126 + $0x8] sm:$0xf]
      %v2130 = vld [vmem:[%s2126 + $0xc] sm:$0xf]
      %v2131 = vld [vmem:[%s2126 + $0x10] sm:$0xf]
      %v2132 = vld [vmem:[%s2126 + $0x14] sm:$0xf]
      %v2133 = vld [vmem:[%s2126 + $0x18] sm:$0xf]
      %v2134 = vld [vmem:[%s2126 + $0x1c] sm:$0xf]
      %v2135 = vld [vmem:[%s2126 + $0x20] sm:$0xf]
      %v2136 = vld [vmem:[%s2126 + $0x24] sm:$0xf]
      %v2137 = vld [vmem:[%s2126 + $0x28] sm:$0xf]
      %v2138 = vld [vmem:[%s2126 + $0x2c] sm:$0xf]
      %v2139 = vld [vmem:[%s2126 + $0x30] sm:$0xf]
      %v2140 = vld [vmem:[%s2126 + $0x34] sm:$0xf]
      %v2141 = vld [vmem:[%s2126 + $0x38] sm:$0xf]
      %v2142 = vld [vmem:[%s2126 + $0x3c] sm:$0xf]
      %v2159 = vunpack.c.l.b16 %v2127
      %v2160 = vunpack.c.l.b16 %v2128
      %v2161 = vunpack.c.l.b16 %v2129
      %v2162 = vunpack.c.l.b16 %v2130
      %v2163 = vunpack.c.l.b16 %v2131
      %v2164 = vunpack.c.l.b16 %v2132
      %v2165 = vunpack.c.l.b16 %v2133
      %v2166 = vunpack.c.l.b16 %v2134
      %v2167 = vunpack.c.l.b16 %v2135
      %v2168 = vunpack.c.l.b16 %v2136
      %v2169 = vunpack.c.l.b16 %v2137
      %v2170 = vunpack.c.l.b16 %v2138
      %v2171 = vunpack.c.l.b16 %v2139
      %v2172 = vunpack.c.l.b16 %v2140
      %v2173 = vunpack.c.l.b16 %v2141
      %v2174 = vunpack.c.l.b16 %v2142
      %v2175 = vpack.c.b16 %v2160, %v2159
      %v2176 = vpack.c.b16 %v2162, %v2161
      %v2177 = vpack.c.b16 %v2164, %v2163
      %v2178 = vpack.c.b16 %v2166, %v2165
      %v2179 = vpack.c.b16 %v2168, %v2167
      %v2180 = vpack.c.b16 %v2170, %v2169
      %v2181 = vpack.c.b16 %v2172, %v2171
      %v2182 = vpack.c.b16 %v2174, %v2173
      %2195 = vrot.lane.b32.xlu0 %v2114, 113
      %v2196 = vpop.permute.xlu0 %2195
      %2197 = vrot.lane.b32.xlu0 %v2115, 113
      %v2198 = vpop.permute.xlu0 %2197
      %2199 = vrot.lane.b32.xlu0 %v2116, 113
      %v2200 = vpop.permute.xlu0 %2199
      %2201 = vrot.lane.b32.xlu0 %v2117, 113
      %v2202 = vpop.permute.xlu0 %2201
      %2203 = vrot.lane.b32.xlu0 %v2118, 113
      %v2204 = vpop.permute.xlu0 %2203
      %2205 = vrot.lane.b32.xlu0 %v2119, 113
      %v2206 = vpop.permute.xlu0 %2205
      %2207 = vrot.lane.b32.xlu0 %v2120, 113
      %v2208 = vpop.permute.xlu0 %2207
      %2209 = vrot.lane.b32.xlu0 %v2121, 113
      %v2210 = vpop.permute.xlu0 %2209
      %2211 = vrot.lane.b32.xlu0 %v2122, 113
      %v2212 = vpop.permute.xlu0 %2211
      %2213 = vrot.lane.b32.xlu0 %v2123, 113
      %v2214 = vpop.permute.xlu0 %2213
      %2215 = vrot.lane.b32.xlu0 %v2124, 113
      %v2216 = vpop.permute.xlu0 %2215
      %2217 = vrot.lane.b32.xlu0 %v2125, 113
      %v2218 = vpop.permute.xlu0 %2217
      %v2219 = vsel %vm974, %v2196, %v2198
      %v2220 = vsel %vm974, %v2198, %v2200
      %v2221 = vsel %vm974, %v2202, %v2204
      %v2222 = vsel %vm974, %v2204, %v2206
      %v2223 = vsel %vm974, %v2208, %v2210
      %v2224 = vsel %vm974, %v2210, %v2212
      %v2225 = vsel %vm974, %v2214, %v2216
      %v2226 = vsel %vm974, %v2216, %v2218
      %v2236 = vsel %vm580, %v2175, 0
      %v2239 = vsel %vm580, %v2176, 0
      %v2242 = vsel %vm580, %v2177, 0
      %v2245 = vsel %vm580, %v2178, 0
      %v2248 = vsel %vm580, %v2179, 0
      %v2251 = vsel %vm580, %v2180, 0
      %v2254 = vsel %vm580, %v2181, 0
      %v2257 = vsel %vm580, %v2182, 0
      %2259 = vmatprep.subr.bf16.mxu0 %v2220
      %2260 = vmatpush1.bf16.msra.mxu0 %v2219
      %2261 = vmatprep.subr.bf16.mxu0 %v2222
      %2262 = vmatpush1.bf16.msra.mxu0 %v2221
      %2263 = vmatprep.subr.bf16.mxu0 %v2224
      %2264 = vmatpush1.bf16.msra.mxu0 %v2223
      %2265 = vmatprep.subr.bf16.mxu0 %v2226
      %2266 = vmatpush1.bf16.msra.mxu0 %v2225
      %2267 = vmatprep.subr.bf16.mxu0 0
      %2268 = vmatpush1.bf16.msra.mxu0 0
      %2269 = vmatprep.subr.bf16.mxu0 0
      %2270 = vmatpush1.bf16.msra.mxu0 0
      %2271 = vmatprep.subr.bf16.mxu0 0
      %2272 = vmatpush1.bf16.msra.mxu0 0
      %2273 = vmatprep.subr.bf16.mxu0 0
      %2274 = vmatpush1.bf16.msra.mxu0 0
      %2275 = vmatprep.subr.bf16.mxu0 0
      %2276 = vmatpush1.bf16.msra.mxu0 0
      %2277 = vmatprep.subr.bf16.mxu0 0
      %2278 = vmatpush1.bf16.msra.mxu0 0
      %2279 = vmatprep.subr.bf16.mxu0 0
      %2280 = vmatpush1.bf16.msra.mxu0 0
      %2281 = vmatprep.subr.bf16.mxu0 0
      %2282 = vmatpush1.bf16.msra.mxu0 0
      %2283 = vmatprep.subr.bf16.mxu0 0
      %2284 = vmatpush1.bf16.msra.mxu0 0
      %2285 = vmatprep.subr.bf16.mxu0 0
      %2286 = vmatpush1.bf16.msra.mxu0 0
      %2287 = vmatprep.subr.bf16.mxu0 0
      %2288 = vmatpush1.bf16.msra.mxu0 0
      %2289 = vmatprep.subr.bf16.mxu0 0
      %2290 = vmatpush1.bf16.msra.mxu0 0
      %2291 = vmatprep.mubr.bf16.mxu0 0
      %2292 = vmatmul.mubr.bf16.gmra.mrb[0].mxu0 %v2236
      %v2293 = vpop.f32.mrb[0].mxu0
      %v2294 = vadd.f32 0.0, %v2293
      %v2295 = vpop.f32.mrb[0].mxu0
      %v2296 = vadd.f32 0.0, %v2295
      %v2297 = vpop.f32.mrb[0].mxu0
      %v2298 = vadd.f32 0.0, %v2297
      %v2299 = vpop.f32.mrb[0].mxu0
      %v2300 = vadd.f32 0.0, %v2299
      %2301 = vmatprep.mubr.bf16.mxu0 0
      %2302 = vmatmul.mubr.bf16.gmra.mrb[0].mxu0 %v2239
      %v2303 = vpop.f32.mrb[0].mxu0
      %v2304 = vadd.f32 0.0, %v2303
      %v2305 = vpop.f32.mrb[0].mxu0
      %v2306 = vadd.f32 0.0, %v2305
      %v2307 = vpop.f32.mrb[0].mxu0
      %v2308 = vadd.f32 0.0, %v2307
      %v2309 = vpop.f32.mrb[0].mxu0
      %v2310 = vadd.f32 0.0, %v2309
      %2311 = vmatprep.mubr.bf16.mxu0 0
      %2312 = vmatmul.mubr.bf16.gmra.mrb[0].mxu0 %v2242
      %v2313 = vpop.f32.mrb[0].mxu0
      %v2314 = vadd.f32 0.0, %v2313
      %v2315 = vpop.f32.mrb[0].mxu0
      %v2316 = vadd.f32 0.0, %v2315
      %v2317 = vpop.f32.mrb[0].mxu0
      %v2318 = vadd.f32 0.0, %v2317
      %v2319 = vpop.f32.mrb[0].mxu0
      %v2320 = vadd.f32 0.0, %v2319
      %2321 = vmatprep.mubr.bf16.mxu0 0
      %2322 = vmatmul.mubr.bf16.gmra.mrb[0].mxu0 %v2245
      %v2323 = vpop.f32.mrb[0].mxu0
      %v2324 = vadd.f32 0.0, %v2323
      %v2325 = vpop.f32.mrb[0].mxu0
      %v2326 = vadd.f32 0.0, %v2325
      %v2327 = vpop.f32.mrb[0].mxu0
      %v2328 = vadd.f32 0.0, %v2327
      %v2329 = vpop.f32.mrb[0].mxu0
      %v2330 = vadd.f32 0.0, %v2329
      %2331 = vmatprep.mubr.bf16.mxu0 0
      %2332 = vmatmul.mubr.bf16.gmra.mrb[0].mxu0 %v2248
      %v2333 = vpop.f32.mrb[0].mxu0
      %v2334 = vadd.f32 0.0, %v2333
      %v2335 = vpop.f32.mrb[0].mxu0
      %v2336 = vadd.f32 0.0, %v2335
      %v2337 = vpop.f32.mrb[0].mxu0
      %v2338 = vadd.f32 0.0, %v2337
      %v2339 = vpop.f32.mrb[0].mxu0
      %v2340 = vadd.f32 0.0, %v2339
      %2341 = vmatprep.mubr.bf16.mxu0 0
      %2342 = vmatmul.mubr.bf16.gmra.mrb[0].mxu0 %v2251
      %v2343 = vpop.f32.mrb[0].mxu0
      %v2344 = vadd.f32 0.0, %v2343
      %v2345 = vpop.f32.mrb[0].mxu0
      %v2346 = vadd.f32 0.0, %v2345
      %v2347 = vpop.f32.mrb[0].mxu0
      %v2348 = vadd.f32 0.0, %v2347
      %v2349 = vpop.f32.mrb[0].mxu0
      %v2350 = vadd.f32 0.0, %v2349
      %2351 = vmatprep.mubr.bf16.mxu0 0
      %2352 = vmatmul.mubr.bf16.gmra.mrb[0].mxu0 %v2254
      %v2353 = vpop.f32.mrb[0].mxu0
      %v2354 = vadd.f32 0.0, %v2353
      %v2355 = vpop.f32.mrb[0].mxu0
      %v2356 = vadd.f32 0.0, %v2355
      %v2357 = vpop.f32.mrb[0].mxu0
      %v2358 = vadd.f32 0.0, %v2357
      %v2359 = vpop.f32.mrb[0].mxu0
      %v2360 = vadd.f32 0.0, %v2359
      %2361 = vmatprep.mubr.bf16.mxu0 0
      %2362 = vmatmul.mubr.bf16.gmra.mrb[0].mxu0 %v2257
      %v2363 = vpop.f32.mrb[0].mxu0
      %v2364 = vadd.f32 0.0, %v2363
      %v2365 = vpop.f32.mrb[0].mxu0
      %v2366 = vadd.f32 0.0, %v2365
      %v2367 = vpop.f32.mrb[0].mxu0
      %v2368 = vadd.f32 0.0, %v2367
      %v2369 = vpop.f32.mrb[0].mxu0
      %v2370 = vadd.f32 0.0, %v2369
      %2371 = vdwg.mxu0
      %v2372 = vadd.f32 %v2074, %v2294
      %v2373 = vadd.f32 %v2075, %v2296
      %v2374 = vadd.f32 %v2076, %v2298
      %v2375 = vadd.f32 %v2077, %v2300
      %v2376 = vadd.f32 %v2078, %v2304
      %v2377 = vadd.f32 %v2079, %v2306
      %v2378 = vadd.f32 %v2080, %v2308
      %v2379 = vadd.f32 %v2081, %v2310
      %v2380 = vadd.f32 %v2082, %v2314
      %v2381 = vadd.f32 %v2083, %v2316
      %v2382 = vadd.f32 %v2084, %v2318
      %v2383 = vadd.f32 %v2085, %v2320
      %v2384 = vadd.f32 %v2086, %v2324
      %v2385 = vadd.f32 %v2087, %v2326
      %v2386 = vadd.f32 %v2088, %v2328
      %v2387 = vadd.f32 %v2089, %v2330
      %v2388 = vadd.f32 %v2090, %v2334
      %v2389 = vadd.f32 %v2091, %v2336
      %v2390 = vadd.f32 %v2092, %v2338
      %v2391 = vadd.f32 %v2093, %v2340
      %v2392 = vadd.f32 %v2094, %v2344
      %v2393 = vadd.f32 %v2095, %v2346
      %v2394 = vadd.f32 %v2096, %v2348
      %v2395 = vadd.f32 %v2097, %v2350
      %v2396 = vadd.f32 %v2098, %v2354
      %v2397 = vadd.f32 %v2099, %v2356
      %v2398 = vadd.f32 %v2100, %v2358
      %v2399 = vadd.f32 %v2101, %v2360
      %v2400 = vadd.f32 %v2102, %v2364
      %v2401 = vadd.f32 %v2103, %v2366
      %v2402 = vadd.f32 %v2104, %v2368
      %v2403 = vadd.f32 %v2105, %v2370
      %s2404 = scalar_lea.vmem %s1, 448
      %v2405 = vld [vmem:[%s2404] sm:$0xf]
      %v2406 = vld [vmem:[%s2404 + $0x4] sm:$0xf]
      %v2407 = vld [vmem:[%s2404 + $0x8] sm:$0xf]
      %v2408 = vld [vmem:[%s2404 + $0xc] sm:$0xf]
      %v2409 = vld [vmem:[%s2404 + $0x10] sm:$0xf]
      %v2410 = vld [vmem:[%s2404 + $0x14] sm:$0xf]
      %v2411 = vld [vmem:[%s2404 + $0x18] sm:$0xf]
      %v2412 = vld [vmem:[%s2404 + $0x1c] sm:$0xf]
      %v2413 = vld [vmem:[%s2404 + $0x20] sm:$0xf]
      %v2414 = vld [vmem:[%s2404 + $0x24] sm:$0xf]
      %v2415 = vld [vmem:[%s2404 + $0x28] sm:$0xf]
      %v2416 = vld [vmem:[%s2404 + $0x2c] sm:$0xf]
      %v2417 = vld [vmem:[%s2404 + $0x30] sm:$0xf]
      %v2418 = vld [vmem:[%s2404 + $0x34] sm:$0xf]
      %v2419 = vld [vmem:[%s2404 + $0x38] sm:$0xf]
      %v2420 = vld [vmem:[%s2404 + $0x3c] sm:$0xf]
      %v2437 = vunpack.c.l.b16 %v2405
      %v2438 = vunpack.c.l.b16 %v2406
      %v2439 = vunpack.c.l.b16 %v2407
      %v2440 = vunpack.c.l.b16 %v2408
      %v2441 = vunpack.c.l.b16 %v2409
      %v2442 = vunpack.c.l.b16 %v2410
      %v2443 = vunpack.c.l.b16 %v2411
      %v2444 = vunpack.c.l.b16 %v2412
      %v2445 = vunpack.c.l.b16 %v2413
      %v2446 = vunpack.c.l.b16 %v2414
      %v2447 = vunpack.c.l.b16 %v2415
      %v2448 = vunpack.c.l.b16 %v2416
      %v2449 = vunpack.c.l.b16 %v2417
      %v2450 = vunpack.c.l.b16 %v2418
      %v2451 = vunpack.c.l.b16 %v2419
      %v2452 = vunpack.c.l.b16 %v2420
      %v2453 = vpack.c.b16 %v2438, %v2437
      %v2454 = vpack.c.b16 %v2440, %v2439
      %v2455 = vpack.c.b16 %v2442, %v2441
      %v2456 = vpack.c.b16 %v2444, %v2443
      %v2457 = vpack.c.b16 %v2446, %v2445
      %v2458 = vpack.c.b16 %v2448, %v2447
      %v2459 = vpack.c.b16 %v2450, %v2449
      %v2460 = vpack.c.b16 %v2452, %v2451
      %2473 = vrot.lane.b32.xlu0 %v1796, 112
      %v2474 = vpop.permute.xlu0 %2473
      %2475 = vrot.lane.b32.xlu0 %v1797, 112
      %v2476 = vpop.permute.xlu0 %2475
      %2477 = vrot.lane.b32.xlu0 %v1798, 112
      %v2478 = vpop.permute.xlu0 %2477
      %2479 = vrot.lane.b32.xlu0 %v1799, 112
      %v2480 = vpop.permute.xlu0 %2479
      %2481 = vrot.lane.b32.xlu0 %v1800, 112
      %v2482 = vpop.permute.xlu0 %2481
      %2483 = vrot.lane.b32.xlu0 %v1801, 112
      %v2484 = vpop.permute.xlu0 %2483
      %2485 = vrot.lane.b32.xlu0 %v1802, 112
      %v2486 = vpop.permute.xlu0 %2485
      %2487 = vrot.lane.b32.xlu0 %v1803, 112
      %v2488 = vpop.permute.xlu0 %2487
      %2489 = vrot.lane.b32.xlu0 %v1804, 112
      %v2490 = vpop.permute.xlu0 %2489
      %2491 = vrot.lane.b32.xlu0 %v1805, 112
      %v2492 = vpop.permute.xlu0 %2491
      %2493 = vrot.lane.b32.xlu0 %v1806, 112
      %v2494 = vpop.permute.xlu0 %2493
      %2495 = vrot.lane.b32.xlu0 %v1807, 112
      %v2496 = vpop.permute.xlu0 %2495
      %vm2497 = vcmask 916480
      %v2498 = vsel %vm2497, %v2474, %v2476
      %v2499 = vsel %vm2497, %v2476, %v2478
      %v2500 = vsel %vm2497, %v2480, %v2482
      %v2501 = vsel %vm2497, %v2482, %v2484
      %v2502 = vsel %vm2497, %v2486, %v2488
      %v2503 = vsel %vm2497, %v2488, %v2490
      %v2504 = vsel %vm2497, %v2492, %v2494
      %v2505 = vsel %vm2497, %v2494, %v2496
      %v2515 = vsel %vm580, %v2453, 0
      %v2518 = vsel %vm580, %v2454, 0
      %v2521 = vsel %vm580, %v2455, 0
      %v2524 = vsel %vm580, %v2456, 0
      %v2527 = vsel %vm580, %v2457, 0
      %v2530 = vsel %vm580, %v2458, 0
      %v2533 = vsel %vm580, %v2459, 0
      %v2536 = vsel %vm580, %v2460, 0
      %2538 = vmatprep.subr.bf16.mxu0 %v2499
      %2539 = vmatpush1.bf16.msra.mxu0 %v2498
      %2540 = vmatprep.subr.bf16.mxu0 %v2501
      %2541 = vmatpush1.bf16.msra.mxu0 %v2500
      %2542 = vmatprep.subr.bf16.mxu0 %v2503
      %2543 = vmatpush1.bf16.msra.mxu0 %v2502
      %2544 = vmatprep.subr.bf16.mxu0 %v2505
      %2545 = vmatpush1.bf16.msra.mxu0 %v2504
      %2546 = vmatprep.subr.bf16.mxu0 0
      %2547 = vmatpush1.bf16.msra.mxu0 0
      %2548 = vmatprep.subr.bf16.mxu0 0
      %2549 = vmatpush1.bf16.msra.mxu0 0
      %2550 = vmatprep.subr.bf16.mxu0 0
      %2551 = vmatpush1.bf16.msra.mxu0 0
      %2552 = vmatprep.subr.bf16.mxu0 0
      %2553 = vmatpush1.bf16.msra.mxu0 0
      %2554 = vmatprep.subr.bf16.mxu0 0
      %2555 = vmatpush1.bf16.msra.mxu0 0
      %2556 = vmatprep.subr.bf16.mxu0 0
      %2557 = vmatpush1.bf16.msra.mxu0 0
      %2558 = vmatprep.subr.bf16.mxu0 0
      %2559 = vmatpush1.bf16.msra.mxu0 0
      %2560 = vmatprep.subr.bf16.mxu0 0
      %2561 = vmatpush1.bf16.msra.mxu0 0
      %2562 = vmatprep.subr.bf16.mxu0 0
      %2563 = vmatpush1.bf16.msra.mxu0 0
      %2564 = vmatprep.subr.bf16.mxu0 0
      %2565 = vmatpush1.bf16.msra.mxu0 0
      %2566 = vmatprep.subr.bf16.mxu0 0
      %2567 = vmatpush1.bf16.msra.mxu0 0
      %2568 = vmatprep.subr.bf16.mxu0 0
      %2569 = vmatpush1.bf16.msra.mxu0 0
      %2570 = vmatprep.mubr.bf16.mxu0 0
      %2571 = vmatmul.mubr.bf16.gmra.mrb[0].mxu0 %v2515
      %v2572 = vpop.f32.mrb[0].mxu0
      %v2573 = vadd.f32 0.0, %v2572
      %v2574 = vpop.f32.mrb[0].mxu0
      %v2575 = vadd.f32 0.0, %v2574
      %v2576 = vpop.f32.mrb[0].mxu0
      %v2577 = vadd.f32 0.0, %v2576
      %v2578 = vpop.f32.mrb[0].mxu0
      %v2579 = vadd.f32 0.0, %v2578
      %2580 = vmatprep.mubr.bf16.mxu0 0
      %2581 = vmatmul.mubr.bf16.gmra.mrb[0].mxu0 %v2518
      %v2582 = vpop.f32.mrb[0].mxu0
      %v2583 = vadd.f32 0.0, %v2582
      %v2584 = vpop.f32.mrb[0].mxu0
      %v2585 = vadd.f32 0.0, %v2584
      %v2586 = vpop.f32.mrb[0].mxu0
      %v2587 = vadd.f32 0.0, %v2586
      %v2588 = vpop.f32.mrb[0].mxu0
      %v2589 = vadd.f32 0.0, %v2588
      %2590 = vmatprep.mubr.bf16.mxu0 0
      %2591 = vmatmul.mubr.bf16.gmra.mrb[0].mxu0 %v2521
      %v2592 = vpop.f32.mrb[0].mxu0
      %v2593 = vadd.f32 0.0, %v2592
      %v2594 = vpop.f32.mrb[0].mxu0
      %v2595 = vadd.f32 0.0, %v2594
      %v2596 = vpop.f32.mrb[0].mxu0
      %v2597 = vadd.f32 0.0, %v2596
      %v2598 = vpop.f32.mrb[0].mxu0
      %v2599 = vadd.f32 0.0, %v2598
      %2600 = vmatprep.mubr.bf16.mxu0 0
      %2601 = vmatmul.mubr.bf16.gmra.mrb[0].mxu0 %v2524
      %v2602 = vpop.f32.mrb[0].mxu0
      %v2603 = vadd.f32 0.0, %v2602
      %v2604 = vpop.f32.mrb[0].mxu0
      %v2605 = vadd.f32 0.0, %v2604
      %v2606 = vpop.f32.mrb[0].mxu0
      %v2607 = vadd.f32 0.0, %v2606
      %v2608 = vpop.f32.mrb[0].mxu0
      %v2609 = vadd.f32 0.0, %v2608
      %2610 = vmatprep.mubr.bf16.mxu0 0
      %2611 = vmatmul.mubr.bf16.gmra.mrb[0].mxu0 %v2527
      %v2612 = vpop.f32.mrb[0].mxu0
      %v2613 = vadd.f32 0.0, %v2612
      %v2614 = vpop.f32.mrb[0].mxu0
      %v2615 = vadd.f32 0.0, %v2614
      %v2616 = vpop.f32.mrb[0].mxu0
      %v2617 = vadd.f32 0.0, %v2616
      %v2618 = vpop.f32.mrb[0].mxu0
      %v2619 = vadd.f32 0.0, %v2618
      %2620 = vmatprep.mubr.bf16.mxu0 0
      %2621 = vmatmul.mubr.bf16.gmra.mrb[0].mxu0 %v2530
      %v2622 = vpop.f32.mrb[0].mxu0
      %v2623 = vadd.f32 0.0, %v2622
      %v2624 = vpop.f32.mrb[0].mxu0
      %v2625 = vadd.f32 0.0, %v2624
      %v2626 = vpop.f32.mrb[0].mxu0
      %v2627 = vadd.f32 0.0, %v2626
      %v2628 = vpop.f32.mrb[0].mxu0
      %v2629 = vadd.f32 0.0, %v2628
      %2630 = vmatprep.mubr.bf16.mxu0 0
      %2631 = vmatmul.mubr.bf16.gmra.mrb[0].mxu0 %v2533
      %v2632 = vpop.f32.mrb[0].mxu0
      %v2633 = vadd.f32 0.0, %v2632
      %v2634 = vpop.f32.mrb[0].mxu0
      %v2635 = vadd.f32 0.0, %v2634
      %v2636 = vpop.f32.mrb[0].mxu0
      %v2637 = vadd.f32 0.0, %v2636
      %v2638 = vpop.f32.mrb[0].mxu0
      %v2639 = vadd.f32 0.0, %v2638
      %2640 = vmatprep.mubr.bf16.mxu0 0
      %2641 = vmatmul.mubr.bf16.gmra.mrb[0].mxu0 %v2536
      %v2642 = vpop.f32.mrb[0].mxu0
      %v2643 = vadd.f32 0.0, %v2642
      %v2644 = vpop.f32.mrb[0].mxu0
      %v2645 = vadd.f32 0.0, %v2644
      %v2646 = vpop.f32.mrb[0].mxu0
      %v2647 = vadd.f32 0.0, %v2646
      %v2648 = vpop.f32.mrb[0].mxu0
      %v2649 = vadd.f32 0.0, %v2648
      %2650 = vdwg.mxu0
      %v2651 = vadd.f32 %v2372, %v2573
      %v2652 = vadd.f32 %v2373, %v2575
      %v2653 = vadd.f32 %v2374, %v2577
      %v2654 = vadd.f32 %v2375, %v2579
      %v2655 = vadd.f32 %v2376, %v2583
      %v2656 = vadd.f32 %v2377, %v2585
      %v2657 = vadd.f32 %v2378, %v2587
      %v2658 = vadd.f32 %v2379, %v2589
      %v2659 = vadd.f32 %v2380, %v2593
      %v2660 = vadd.f32 %v2381, %v2595
      %v2661 = vadd.f32 %v2382, %v2597
      %v2662 = vadd.f32 %v2383, %v2599
      %v2663 = vadd.f32 %v2384, %v2603
      %v2664 = vadd.f32 %v2385, %v2605
      %v2665 = vadd.f32 %v2386, %v2607
      %v2666 = vadd.f32 %v2387, %v2609
      %v2667 = vadd.f32 %v2388, %v2613
      %v2668 = vadd.f32 %v2389, %v2615
      %v2669 = vadd.f32 %v2390, %v2617
      %v2670 = vadd.f32 %v2391, %v2619
      %v2671 = vadd.f32 %v2392, %v2623
      %v2672 = vadd.f32 %v2393, %v2625
      %v2673 = vadd.f32 %v2394, %v2627
      %v2674 = vadd.f32 %v2395, %v2629
      %v2675 = vadd.f32 %v2396, %v2633
      %v2676 = vadd.f32 %v2397, %v2635
      %v2677 = vadd.f32 %v2398, %v2637
      %v2678 = vadd.f32 %v2399, %v2639
      %v2679 = vadd.f32 %v2400, %v2643
      %v2680 = vadd.f32 %v2401, %v2645
      %v2681 = vadd.f32 %v2402, %v2647
      %v2682 = vadd.f32 %v2403, %v2649
      %2683 = vrot.lane.b32.xlu0 %v965, 17
      %v2684 = vpop.permute.xlu0 %2683
      %2685 = vrot.lane.b32.xlu0 %v969, 17
      %v2686 = vpop.permute.xlu0 %2685
      %v2687 = vsel %vm794, %v2684, %v2686
      %vm2688 = vcmp.ne.s16.totalorder %v2684, 0
      %vm2689 = vcmp.ne.s16.totalorder %v2687, 0
      %vm2690 = vcmp.ne.s16.totalorder %v2686, 0
      %v2691 = vsel %vm2688, %v1796, 0
      %v2692 = vsel %vm2689, %v1797, 0
      %v2693 = vsel %vm2690, %v1798, 0
      %v2694 = vsel %vm2688, %v1799, 0
      %v2695 = vsel %vm2689, %v1800, 0
      %v2696 = vsel %vm2690, %v1801, 0
      %v2697 = vsel %vm2688, %v1802, 0
      %v2698 = vsel %vm2689, %v1803, 0
      %v2699 = vsel %vm2690, %v1804, 0
      %v2700 = vsel %vm2688, %v1805, 0
      %v2701 = vsel %vm2689, %v1806, 0
      %v2702 = vsel %vm2690, %v1807, 0
      %s2703 = scalar_lea.vmem %s1, 512
      %v2704 = vld [vmem:[%s2703] sm:$0xf]
      %v2705 = vld [vmem:[%s2703 + $0x4] sm:$0xf]
      %v2706 = vld [vmem:[%s2703 + $0x8] sm:$0xf]
      %v2707 = vld [vmem:[%s2703 + $0xc] sm:$0xf]
      %v2708 = vld [vmem:[%s2703 + $0x10] sm:$0xf]
      %v2709 = vld [vmem:[%s2703 + $0x14] sm:$0xf]
      %v2710 = vld [vmem:[%s2703 + $0x18] sm:$0xf]
      %v2711 = vld [vmem:[%s2703 + $0x1c] sm:$0xf]
      %v2712 = vld [vmem:[%s2703 + $0x20] sm:$0xf]
      %v2713 = vld [vmem:[%s2703 + $0x24] sm:$0xf]
      %v2714 = vld [vmem:[%s2703 + $0x28] sm:$0xf]
      %v2715 = vld [vmem:[%s2703 + $0x2c] sm:$0xf]
      %v2716 = vld [vmem:[%s2703 + $0x30] sm:$0xf]
      %v2717 = vld [vmem:[%s2703 + $0x34] sm:$0xf]
      %v2718 = vld [vmem:[%s2703 + $0x38] sm:$0xf]
      %v2719 = vld [vmem:[%s2703 + $0x3c] sm:$0xf]
      %v2736 = vunpack.c.l.b16 %v2704
      %v2737 = vunpack.c.l.b16 %v2705
      %v2738 = vunpack.c.l.b16 %v2706
      %v2739 = vunpack.c.l.b16 %v2707
      %v2740 = vunpack.c.l.b16 %v2708
      %v2741 = vunpack.c.l.b16 %v2709
      %v2742 = vunpack.c.l.b16 %v2710
      %v2743 = vunpack.c.l.b16 %v2711
      %v2744 = vunpack.c.l.b16 %v2712
      %v2745 = vunpack.c.l.b16 %v2713
      %v2746 = vunpack.c.l.b16 %v2714
      %v2747 = vunpack.c.l.b16 %v2715
      %v2748 = vunpack.c.l.b16 %v2716
      %v2749 = vunpack.c.l.b16 %v2717
      %v2750 = vunpack.c.l.b16 %v2718
      %v2751 = vunpack.c.l.b16 %v2719
      %v2752 = vpack.c.b16 %v2737, %v2736
      %v2753 = vpack.c.b16 %v2739, %v2738
      %v2754 = vpack.c.b16 %v2741, %v2740
      %v2755 = vpack.c.b16 %v2743, %v2742
      %v2756 = vpack.c.b16 %v2745, %v2744
      %v2757 = vpack.c.b16 %v2747, %v2746
      %v2758 = vpack.c.b16 %v2749, %v2748
      %v2759 = vpack.c.b16 %v2751, %v2750
      %2772 = vrot.lane.b32.xlu0 %v2691, 111
      %v2773 = vpop.permute.xlu0 %2772
      %2774 = vrot.lane.b32.xlu0 %v2692, 111
      %v2775 = vpop.permute.xlu0 %2774
      %2776 = vrot.lane.b32.xlu0 %v2693, 111
      %v2777 = vpop.permute.xlu0 %2776
      %2778 = vrot.lane.b32.xlu0 %v2694, 111
      %v2779 = vpop.permute.xlu0 %2778
      %2780 = vrot.lane.b32.xlu0 %v2695, 111
      %v2781 = vpop.permute.xlu0 %2780
      %2782 = vrot.lane.b32.xlu0 %v2696, 111
      %v2783 = vpop.permute.xlu0 %2782
      %2784 = vrot.lane.b32.xlu0 %v2697, 111
      %v2785 = vpop.permute.xlu0 %2784
      %2786 = vrot.lane.b32.xlu0 %v2698, 111
      %v2787 = vpop.permute.xlu0 %2786
      %2788 = vrot.lane.b32.xlu0 %v2699, 111
      %v2789 = vpop.permute.xlu0 %2788
      %2790 = vrot.lane.b32.xlu0 %v2700, 111
      %v2791 = vpop.permute.xlu0 %2790
      %2792 = vrot.lane.b32.xlu0 %v2701, 111
      %v2793 = vpop.permute.xlu0 %2792
      %2794 = vrot.lane.b32.xlu0 %v2702, 111
      %v2795 = vpop.permute.xlu0 %2794
      %v2796 = vsel %vm437, %v2773, %v2775
      %v2797 = vsel %vm437, %v2775, %v2777
      %v2798 = vsel %vm437, %v2779, %v2781
      %v2799 = vsel %vm437, %v2781, %v2783
      %v2800 = vsel %vm437, %v2785, %v2787
      %v2801 = vsel %vm437, %v2787, %v2789
      %v2802 = vsel %vm437, %v2791, %v2793
      %v2803 = vsel %vm437, %v2793, %v2795
      %v2813 = vsel %vm580, %v2752, 0
      %v2816 = vsel %vm580, %v2753, 0
      %v2819 = vsel %vm580, %v2754, 0
      %v2822 = vsel %vm580, %v2755, 0
      %v2825 = vsel %vm580, %v2756, 0
      %v2828 = vsel %vm580, %v2757, 0
      %v2831 = vsel %vm580, %v2758, 0
      %v2834 = vsel %vm580, %v2759, 0
      %2836 = vmatprep.subr.bf16.mxu0 %v2797
      %2837 = vmatpush1.bf16.msra.mxu0 %v2796
      %2838 = vmatprep.subr.bf16.mxu0 %v2799
      %2839 = vmatpush1.bf16.msra.mxu0 %v2798
      %2840 = vmatprep.subr.bf16.mxu0 %v2801
      %2841 = vmatpush1.bf16.msra.mxu0 %v2800
      %2842 = vmatprep.subr.bf16.mxu0 %v2803
      %2843 = vmatpush1.bf16.msra.mxu0 %v2802
      %2844 = vmatprep.subr.bf16.mxu0 0
      %2845 = vmatpush1.bf16.msra.mxu0 0
      %2846 = vmatprep.subr.bf16.mxu0 0
      %2847 = vmatpush1.bf16.msra.mxu0 0
      %2848 = vmatprep.subr.bf16.mxu0 0
      %2849 = vmatpush1.bf16.msra.mxu0 0
      %2850 = vmatprep.subr.bf16.mxu0 0
      %2851 = vmatpush1.bf16.msra.mxu0 0
      %2852 = vmatprep.subr.bf16.mxu0 0
      %2853 = vmatpush1.bf16.msra.mxu0 0
      %2854 = vmatprep.subr.bf16.mxu0 0
      %2855 = vmatpush1.bf16.msra.mxu0 0
      %2856 = vmatprep.subr.bf16.mxu0 0
      %2857 = vmatpush1.bf16.msra.mxu0 0
      %2858 = vmatprep.subr.bf16.mxu0 0
      %2859 = vmatpush1.bf16.msra.mxu0 0
      %2860 = vmatprep.subr.bf16.mxu0 0
      %2861 = vmatpush1.bf16.msra.mxu0 0
      %2862 = vmatprep.subr.bf16.mxu0 0
      %2863 = vmatpush1.bf16.msra.mxu0 0
      %2864 = vmatprep.subr.bf16.mxu0 0
      %2865 = vmatpush1.bf16.msra.mxu0 0
      %2866 = vmatprep.subr.bf16.mxu0 0
      %2867 = vmatpush1.bf16.msra.mxu0 0
      %2868 = vmatprep.mubr.bf16.mxu0 0
      %2869 = vmatmul.mubr.bf16.gmra.mrb[0].mxu0 %v2813
      %v2870 = vpop.f32.mrb[0].mxu0
      %v2871 = vadd.f32 0.0, %v2870
      %v2872 = vpop.f32.mrb[0].mxu0
      %v2873 = vadd.f32 0.0, %v2872
      %v2874 = vpop.f32.mrb[0].mxu0
      %v2875 = vadd.f32 0.0, %v2874
      %v2876 = vpop.f32.mrb[0].mxu0
      %v2877 = vadd.f32 0.0, %v2876
      %2878 = vmatprep.mubr.bf16.mxu0 0
      %2879 = vmatmul.mubr.bf16.gmra.mrb[0].mxu0 %v2816
      %v2880 = vpop.f32.mrb[0].mxu0
      %v2881 = vadd.f32 0.0, %v2880
      %v2882 = vpop.f32.mrb[0].mxu0
      %v2883 = vadd.f32 0.0, %v2882
      %v2884 = vpop.f32.mrb[0].mxu0
      %v2885 = vadd.f32 0.0, %v2884
      %v2886 = vpop.f32.mrb[0].mxu0
      %v2887 = vadd.f32 0.0, %v2886
      %2888 = vmatprep.mubr.bf16.mxu0 0
      %2889 = vmatmul.mubr.bf16.gmra.mrb[0].mxu0 %v2819
      %v2890 = vpop.f32.mrb[0].mxu0
      %v2891 = vadd.f32 0.0, %v2890
      %v2892 = vpop.f32.mrb[0].mxu0
      %v2893 = vadd.f32 0.0, %v2892
      %v2894 = vpop.f32.mrb[0].mxu0
      %v2895 = vadd.f32 0.0, %v2894
      %v2896 = vpop.f32.mrb[0].mxu0
      %v2897 = vadd.f32 0.0, %v2896
      %2898 = vmatprep.mubr.bf16.mxu0 0
      %2899 = vmatmul.mubr.bf16.gmra.mrb[0].mxu0 %v2822
      %v2900 = vpop.f32.mrb[0].mxu0
      %v2901 = vadd.f32 0.0, %v2900
      %v2902 = vpop.f32.mrb[0].mxu0
      %v2903 = vadd.f32 0.0, %v2902
      %v2904 = vpop.f32.mrb[0].mxu0
      %v2905 = vadd.f32 0.0, %v2904
      %v2906 = vpop.f32.mrb[0].mxu0
      %v2907 = vadd.f32 0.0, %v2906
      %2908 = vmatprep.mubr.bf16.mxu0 0
      %2909 = vmatmul.mubr.bf16.gmra.mrb[0].mxu0 %v2825
      %v2910 = vpop.f32.mrb[0].mxu0
      %v2911 = vadd.f32 0.0, %v2910
      %v2912 = vpop.f32.mrb[0].mxu0
      %v2913 = vadd.f32 0.0, %v2912
      %v2914 = vpop.f32.mrb[0].mxu0
      %v2915 = vadd.f32 0.0, %v2914
      %v2916 = vpop.f32.mrb[0].mxu0
      %v2917 = vadd.f32 0.0, %v2916
      %2918 = vmatprep.mubr.bf16.mxu0 0
      %2919 = vmatmul.mubr.bf16.gmra.mrb[0].mxu0 %v2828
      %v2920 = vpop.f32.mrb[0].mxu0
      %v2921 = vadd.f32 0.0, %v2920
      %v2922 = vpop.f32.mrb[0].mxu0
      %v2923 = vadd.f32 0.0, %v2922
      %v2924 = vpop.f32.mrb[0].mxu0
      %v2925 = vadd.f32 0.0, %v2924
      %v2926 = vpop.f32.mrb[0].mxu0
      %v2927 = vadd.f32 0.0, %v2926
      %2928 = vmatprep.mubr.bf16.mxu0 0
      %2929 = vmatmul.mubr.bf16.gmra.mrb[0].mxu0 %v2831
      %v2930 = vpop.f32.mrb[0].mxu0
      %v2931 = vadd.f32 0.0, %v2930
      %v2932 = vpop.f32.mrb[0].mxu0
      %v2933 = vadd.f32 0.0, %v2932
      %v2934 = vpop.f32.mrb[0].mxu0
      %v2935 = vadd.f32 0.0, %v2934
      %v2936 = vpop.f32.mrb[0].mxu0
      %v2937 = vadd.f32 0.0, %v2936
      %2938 = vmatprep.mubr.bf16.mxu0 0
      %2939 = vmatmul.mubr.bf16.gmra.mrb[0].mxu0 %v2834
      %v2940 = vpop.f32.mrb[0].mxu0
      %v2941 = vadd.f32 0.0, %v2940
      %v2942 = vpop.f32.mrb[0].mxu0
      %v2943 = vadd.f32 0.0, %v2942
      %v2944 = vpop.f32.mrb[0].mxu0
      %v2945 = vadd.f32 0.0, %v2944
      %v2946 = vpop.f32.mrb[0].mxu0
      %v2947 = vadd.f32 0.0, %v2946
      %2948 = vdwg.mxu0
      %v2949 = vadd.f32 %v2651, %v2871
      %v2950 = vadd.f32 %v2652, %v2873
      %v2951 = vadd.f32 %v2653, %v2875
      %v2952 = vadd.f32 %v2654, %v2877
      %v2953 = vadd.f32 %v2655, %v2881
      %v2954 = vadd.f32 %v2656, %v2883
      %v2955 = vadd.f32 %v2657, %v2885
      %v2956 = vadd.f32 %v2658, %v2887
      %v2957 = vadd.f32 %v2659, %v2891
      %v2958 = vadd.f32 %v2660, %v2893
      %v2959 = vadd.f32 %v2661, %v2895
      %v2960 = vadd.f32 %v2662, %v2897
      %v2961 = vadd.f32 %v2663, %v2901
      %v2962 = vadd.f32 %v2664, %v2903
      %v2963 = vadd.f32 %v2665, %v2905
      %v2964 = vadd.f32 %v2666, %v2907
      %v2965 = vadd.f32 %v2667, %v2911
      %v2966 = vadd.f32 %v2668, %v2913
      %v2967 = vadd.f32 %v2669, %v2915
      %v2968 = vadd.f32 %v2670, %v2917
      %v2969 = vadd.f32 %v2671, %v2921
      %v2970 = vadd.f32 %v2672, %v2923
      %v2971 = vadd.f32 %v2673, %v2925
      %v2972 = vadd.f32 %v2674, %v2927
      %v2973 = vadd.f32 %v2675, %v2931
      %v2974 = vadd.f32 %v2676, %v2933
      %v2975 = vadd.f32 %v2677, %v2935
      %v2976 = vadd.f32 %v2678, %v2937
      %v2977 = vadd.f32 %v2679, %v2941
      %v2978 = vadd.f32 %v2680, %v2943
      %v2979 = vadd.f32 %v2681, %v2945
      %v2980 = vadd.f32 %v2682, %v2947
      %v2981 = vld [vmem:[%s2] sm:$0xff]
      %v2982 = vld [vmem:[%s2 + $0x8] sm:$0xff]
      %v2983 = vld [vmem:[%s2 + $0x10] sm:$0xff]
      %v2984 = vld [vmem:[%s2 + $0x18] sm:$0xff]
      %v2985 = vld [vmem:[%s2 + $0x20] sm:$0xff]
      %v2986 = vld [vmem:[%s2 + $0x28] sm:$0xff]
      %v2987 = vld [vmem:[%s2 + $0x30] sm:$0xff]
      %v2988 = vld [vmem:[%s2 + $0x38] sm:$0xff]
      %v2989 = vld [vmem:[%s2 + $0x40] sm:$0xff]
      %v2990 = vld [vmem:[%s2 + $0x48] sm:$0xff]
      %v2991 = vld [vmem:[%s2 + $0x50] sm:$0xff]
      %v2992 = vld [vmem:[%s2 + $0x58] sm:$0xff]
      %v2993 = vld [vmem:[%s2 + $0x60] sm:$0xff]
      %v2994 = vld [vmem:[%s2 + $0x68] sm:$0xff]
      %v2995 = vld [vmem:[%s2 + $0x70] sm:$0xff]
      %v2996 = vld [vmem:[%s2 + $0x78] sm:$0xff]
      %2998 = vset.pattern.permute.xlu0 0
      %2999 = vperm.xlu0 %2998, %v2981
      %v3000 = vpop.permute.xlu0 %2999
      %3003 = vset.pattern.permute.xlu0 0
      %3004 = vperm.xlu0 %3003, %v2982
      %v3005 = vpop.permute.xlu0 %3004
      %3008 = vset.pattern.permute.xlu0 0
      %3009 = vperm.xlu0 %3008, %v2983
      %v3010 = vpop.permute.xlu0 %3009
      %3013 = vset.pattern.permute.xlu0 0
      %3014 = vperm.xlu0 %3013, %v2984
      %v3015 = vpop.permute.xlu0 %3014
      %3018 = vset.pattern.permute.xlu0 0
      %3019 = vperm.xlu0 %3018, %v2985
      %v3020 = vpop.permute.xlu0 %3019
      %3023 = vset.pattern.permute.xlu0 0
      %3024 = vperm.xlu0 %3023, %v2986
      %v3025 = vpop.permute.xlu0 %3024
      %3028 = vset.pattern.permute.xlu0 0
      %3029 = vperm.xlu0 %3028, %v2987
      %v3030 = vpop.permute.xlu0 %3029
      %3033 = vset.pattern.permute.xlu0 0
      %3034 = vperm.xlu0 %3033, %v2988
      %v3035 = vpop.permute.xlu0 %3034
      %3038 = vset.pattern.permute.xlu0 0
      %3039 = vperm.xlu0 %3038, %v2989
      %v3040 = vpop.permute.xlu0 %3039
      %3043 = vset.pattern.permute.xlu0 0
      %3044 = vperm.xlu0 %3043, %v2990
      %v3045 = vpop.permute.xlu0 %3044
      %3048 = vset.pattern.permute.xlu0 0
      %3049 = vperm.xlu0 %3048, %v2991
      %v3050 = vpop.permute.xlu0 %3049
      %3053 = vset.pattern.permute.xlu0 0
      %3054 = vperm.xlu0 %3053, %v2992
      %v3055 = vpop.permute.xlu0 %3054
      %3058 = vset.pattern.permute.xlu0 0
      %3059 = vperm.xlu0 %3058, %v2993
      %v3060 = vpop.permute.xlu0 %3059
      %3063 = vset.pattern.permute.xlu0 0
      %3064 = vperm.xlu0 %3063, %v2994
      %v3065 = vpop.permute.xlu0 %3064
      %3068 = vset.pattern.permute.xlu0 0
      %3069 = vperm.xlu0 %3068, %v2995
      %v3070 = vpop.permute.xlu0 %3069
      %3073 = vset.pattern.permute.xlu0 0
      %3074 = vperm.xlu0 %3073, %v2996
      %v3075 = vpop.permute.xlu0 %3074
      %v3077 = vadd.f32 %v2949, %v3000
      %v3078 = vadd.f32 %v2950, %v3000
      %v3079 = vadd.f32 %v2951, %v3005
      %v3080 = vadd.f32 %v2952, %v3005
      %v3081 = vadd.f32 %v2953, %v3010
      %v3082 = vadd.f32 %v2954, %v3010
      %v3083 = vadd.f32 %v2955, %v3015
      %v3084 = vadd.f32 %v2956, %v3015
      %v3085 = vadd.f32 %v2957, %v3020
      %v3086 = vadd.f32 %v2958, %v3020
      %v3087 = vadd.f32 %v2959, %v3025
      %v3088 = vadd.f32 %v2960, %v3025
      %v3089 = vadd.f32 %v2961, %v3030
      %v3090 = vadd.f32 %v2962, %v3030
      %v3091 = vadd.f32 %v2963, %v3035
      %v3092 = vadd.f32 %v2964, %v3035
      %v3093 = vadd.f32 %v2965, %v3040
      %v3094 = vadd.f32 %v2966, %v3040
      %v3095 = vadd.f32 %v2967, %v3045
      %v3096 = vadd.f32 %v2968, %v3045
      %v3097 = vadd.f32 %v2969, %v3050
      %v3098 = vadd.f32 %v2970, %v3050
      %v3099 = vadd.f32 %v2971, %v3055
      %v3100 = vadd.f32 %v2972, %v3055
      %v3101 = vadd.f32 %v2973, %v3060
      %v3102 = vadd.f32 %v2974, %v3060
      %v3103 = vadd.f32 %v2975, %v3065
      %v3104 = vadd.f32 %v2976, %v3065
      %v3105 = vadd.f32 %v2977, %v3070
      %v3106 = vadd.f32 %v2978, %v3070
      %v3107 = vadd.f32 %v2979, %v3075
      %v3108 = vadd.f32 %v2980, %v3075
      %v3109 = vadd.f32 %v3077, %v3078
      %v3110 = vadd.f32 %v3109, %v3079
      %v3111 = vadd.f32 %v3110, %v3080
      %v3112 = vadd.f32 %v3111, %v3081
      %v3113 = vadd.f32 %v3112, %v3082
      %v3114 = vadd.f32 %v3113, %v3083
      %v3115 = vadd.f32 %v3114, %v3084
      %v3116 = vadd.f32 %v3115, %v3085
      %v3117 = vadd.f32 %v3116, %v3086
      %v3118 = vadd.f32 %v3117, %v3087
      %v3119 = vadd.f32 %v3118, %v3088
      %v3120 = vadd.f32 %v3119, %v3089
      %v3121 = vadd.f32 %v3120, %v3090
      %v3122 = vadd.f32 %v3121, %v3091
      %v3123 = vadd.f32 %v3122, %v3092
      %v3124 = vadd.f32 %v3123, %v3093
      %v3125 = vadd.f32 %v3124, %v3094
      %v3126 = vadd.f32 %v3125, %v3095
      %v3127 = vadd.f32 %v3126, %v3096
      %v3128 = vadd.f32 %v3127, %v3097
      %v3129 = vadd.f32 %v3128, %v3098
      %v3130 = vadd.f32 %v3129, %v3099
      %v3131 = vadd.f32 %v3130, %v3100
      %v3132 = vadd.f32 %v3131, %v3101
      %v3133 = vadd.f32 %v3132, %v3102
      %v3134 = vadd.f32 %v3133, %v3103
      %v3135 = vadd.f32 %v3134, %v3104
      %v3136 = vadd.f32 %v3135, %v3105
      %v3137 = vadd.f32 %v3136, %v3106
      %v3138 = vadd.f32 %v3137, %v3107
      %v3139 = vadd.f32 %v3138, %v3108
      %3140 = vadd.xlane.f32.xlu0 %v3139
      %v3141 = vpop.xlane.xlu0 %3140
      %v3142 = vrot.slane %v3141, 4
      %v3143 = vadd.f32 %v3141, %v3142
      %v3144 = vrot.slane %v3143, 2
      %v3145 = vadd.f32 %v3143, %v3144
      %v3146 = vrot.slane %v3145, 1
      %v3147 = vadd.f32 %v3145, %v3146
      %s3148 = vtos %v3147
      %v3149 = vstv %s3148
      %v3150 = vmul.f32 %v3077, %v3077
      %v3151 = vmul.f32 %v3078, %v3078
      %v3152 = vmul.f32 %v3079, %v3079
      %v3153 = vmul.f32 %v3080, %v3080
      %v3154 = vmul.f32 %v3081, %v3081
      %v3155 = vmul.f32 %v3082, %v3082
      %v3156 = vmul.f32 %v3083, %v3083
      %v3157 = vmul.f32 %v3084, %v3084
      %v3158 = vmul.f32 %v3085, %v3085
      %v3159 = vmul.f32 %v3086, %v3086
      %v3160 = vmul.f32 %v3087, %v3087
      %v3161 = vmul.f32 %v3088, %v3088
      %v3162 = vmul.f32 %v3089, %v3089
      %v3163 = vmul.f32 %v3090, %v3090
      %v3164 = vmul.f32 %v3091, %v3091
      %v3165 = vmul.f32 %v3092, %v3092
      %v3166 = vmul.f32 %v3093, %v3093
      %v3167 = vmul.f32 %v3094, %v3094
      %v3168 = vmul.f32 %v3095, %v3095
      %v3169 = vmul.f32 %v3096, %v3096
      %v3170 = vmul.f32 %v3097, %v3097
      %v3171 = vmul.f32 %v3098, %v3098
      %v3172 = vmul.f32 %v3099, %v3099
      %v3173 = vmul.f32 %v3100, %v3100
      %v3174 = vmul.f32 %v3101, %v3101
      %v3175 = vmul.f32 %v3102, %v3102
      %v3176 = vmul.f32 %v3103, %v3103
      %v3177 = vmul.f32 %v3104, %v3104
      %v3178 = vmul.f32 %v3105, %v3105
      %v3179 = vmul.f32 %v3106, %v3106
      %v3180 = vmul.f32 %v3107, %v3107
      %v3181 = vmul.f32 %v3108, %v3108
      %v3182 = vadd.f32 %v3150, %v3151
      %v3183 = vadd.f32 %v3182, %v3152
      %v3184 = vadd.f32 %v3183, %v3153
      %v3185 = vadd.f32 %v3184, %v3154
      %v3186 = vadd.f32 %v3185, %v3155
      %v3187 = vadd.f32 %v3186, %v3156
      %v3188 = vadd.f32 %v3187, %v3157
      %v3189 = vadd.f32 %v3188, %v3158
      %v3190 = vadd.f32 %v3189, %v3159
      %v3191 = vadd.f32 %v3190, %v3160
      %v3192 = vadd.f32 %v3191, %v3161
      %v3193 = vadd.f32 %v3192, %v3162
      %v3194 = vadd.f32 %v3193, %v3163
      %v3195 = vadd.f32 %v3194, %v3164
      %v3196 = vadd.f32 %v3195, %v3165
      %v3197 = vadd.f32 %v3196, %v3166
      %v3198 = vadd.f32 %v3197, %v3167
      %v3199 = vadd.f32 %v3198, %v3168
      %v3200 = vadd.f32 %v3199, %v3169
      %v3201 = vadd.f32 %v3200, %v3170
      %v3202 = vadd.f32 %v3201, %v3171
      %v3203 = vadd.f32 %v3202, %v3172
      %v3204 = vadd.f32 %v3203, %v3173
      %v3205 = vadd.f32 %v3204, %v3174
      %v3206 = vadd.f32 %v3205, %v3175
      %v3207 = vadd.f32 %v3206, %v3176
      %v3208 = vadd.f32 %v3207, %v3177
      %v3209 = vadd.f32 %v3208, %v3178
      %v3210 = vadd.f32 %v3209, %v3179
      %v3211 = vadd.f32 %v3210, %v3180
      %v3212 = vadd.f32 %v3211, %v3181
      %3213 = vadd.xlane.f32.xlu0 %v3212
      %v3214 = vpop.xlane.xlu0 %3213
      %v3215 = vrot.slane %v3214, 4
      %v3216 = vadd.f32 %v3214, %v3215
      %v3217 = vrot.slane %v3216, 2
      %v3218 = vadd.f32 %v3216, %v3217
      %v3219 = vrot.slane %v3218, 1
      %v3220 = vadd.f32 %v3218, %v3219
      %s3221 = vtos %v3220
      %v3222 = vstv %s3221
      %v3223 = vrcp.pop 32768.0
      %v3224 = vmul.f32 %v3149, %v3223
      %v3225 = vmul.f32 %v3222, %v3223
      %v3226 = vmul.f32 %v3224, %v3224
      %v3227 = vsub.f32 %v3225, %v3226
      %v3228 = vsub.f32 %v3077, %v3224
      %v3229 = vsub.f32 %v3078, %v3224
      %v3230 = vsub.f32 %v3079, %v3224
      %v3231 = vsub.f32 %v3080, %v3224
      %v3232 = vsub.f32 %v3081, %v3224
      %v3233 = vsub.f32 %v3082, %v3224
      %v3234 = vsub.f32 %v3083, %v3224
      %v3235 = vsub.f32 %v3084, %v3224
      %v3236 = vsub.f32 %v3085, %v3224
      %v3237 = vsub.f32 %v3086, %v3224
      %v3238 = vsub.f32 %v3087, %v3224
      %v3239 = vsub.f32 %v3088, %v3224
      %v3240 = vsub.f32 %v3089, %v3224
      %v3241 = vsub.f32 %v3090, %v3224
      %v3242 = vsub.f32 %v3091, %v3224
      %v3243 = vsub.f32 %v3092, %v3224
      %v3244 = vsub.f32 %v3093, %v3224
      %v3245 = vsub.f32 %v3094, %v3224
      %v3246 = vsub.f32 %v3095, %v3224
      %v3247 = vsub.f32 %v3096, %v3224
      %v3248 = vsub.f32 %v3097, %v3224
      %v3249 = vsub.f32 %v3098, %v3224
      %v3250 = vsub.f32 %v3099, %v3224
      %v3251 = vsub.f32 %v3100, %v3224
      %v3252 = vsub.f32 %v3101, %v3224
      %v3253 = vsub.f32 %v3102, %v3224
      %v3254 = vsub.f32 %v3103, %v3224
      %v3255 = vsub.f32 %v3104, %v3224
      %v3256 = vsub.f32 %v3105, %v3224
      %v3257 = vsub.f32 %v3106, %v3224
      %v3258 = vsub.f32 %v3107, %v3224
      %v3259 = vsub.f32 %v3108, %v3224
      %v3260 = vadd.f32 %v3227, 1e-05
      %v3261 = vrsqrt.pop %v3260
      %v3262 = vmul.f32 %v3228, %v3261
      %v3263 = vmul.f32 %v3229, %v3261
      %v3264 = vmul.f32 %v3230, %v3261
      %v3265 = vmul.f32 %v3231, %v3261
      %v3266 = vmul.f32 %v3232, %v3261
      %v3267 = vmul.f32 %v3233, %v3261
      %v3268 = vmul.f32 %v3234, %v3261
      %v3269 = vmul.f32 %v3235, %v3261
      %v3270 = vmul.f32 %v3236, %v3261
      %v3271 = vmul.f32 %v3237, %v3261
      %v3272 = vmul.f32 %v3238, %v3261
      %v3273 = vmul.f32 %v3239, %v3261
      %v3274 = vmul.f32 %v3240, %v3261
      %v3275 = vmul.f32 %v3241, %v3261
      %v3276 = vmul.f32 %v3242, %v3261
      %v3277 = vmul.f32 %v3243, %v3261
      %v3278 = vmul.f32 %v3244, %v3261
      %v3279 = vmul.f32 %v3245, %v3261
      %v3280 = vmul.f32 %v3246, %v3261
      %v3281 = vmul.f32 %v3247, %v3261
      %v3282 = vmul.f32 %v3248, %v3261
      %v3283 = vmul.f32 %v3249, %v3261
      %v3284 = vmul.f32 %v3250, %v3261
      %v3285 = vmul.f32 %v3251, %v3261
      %v3286 = vmul.f32 %v3252, %v3261
      %v3287 = vmul.f32 %v3253, %v3261
      %v3288 = vmul.f32 %v3254, %v3261
      %v3289 = vmul.f32 %v3255, %v3261
      %v3290 = vmul.f32 %v3256, %v3261
      %v3291 = vmul.f32 %v3257, %v3261
      %v3292 = vmul.f32 %v3258, %v3261
      %v3293 = vmul.f32 %v3259, %v3261
      %v3294 = vld [vmem:[%s3] sm:$0xff]
      %v3295 = vld [vmem:[%s3 + $0x8] sm:$0xff]
      %v3296 = vld [vmem:[%s3 + $0x10] sm:$0xff]
      %v3297 = vld [vmem:[%s3 + $0x18] sm:$0xff]
      %v3298 = vld [vmem:[%s3 + $0x20] sm:$0xff]
      %v3299 = vld [vmem:[%s3 + $0x28] sm:$0xff]
      %v3300 = vld [vmem:[%s3 + $0x30] sm:$0xff]
      %v3301 = vld [vmem:[%s3 + $0x38] sm:$0xff]
      %v3302 = vld [vmem:[%s3 + $0x40] sm:$0xff]
      %v3303 = vld [vmem:[%s3 + $0x48] sm:$0xff]
      %v3304 = vld [vmem:[%s3 + $0x50] sm:$0xff]
      %v3305 = vld [vmem:[%s3 + $0x58] sm:$0xff]
      %v3306 = vld [vmem:[%s3 + $0x60] sm:$0xff]
      %v3307 = vld [vmem:[%s3 + $0x68] sm:$0xff]
      %v3308 = vld [vmem:[%s3 + $0x70] sm:$0xff]
      %v3309 = vld [vmem:[%s3 + $0x78] sm:$0xff]
      %v3310 = vunpack.c.l.bf16 %v3294
      %v3311 = vunpack.c.h.bf16 %v3294
      %v3312 = vunpack.c.l.bf16 %v3295
      %v3313 = vunpack.c.h.bf16 %v3295
      %v3314 = vunpack.c.l.bf16 %v3296
      %v3315 = vunpack.c.h.bf16 %v3296
      %v3316 = vunpack.c.l.bf16 %v3297
      %v3317 = vunpack.c.h.bf16 %v3297
      %v3318 = vunpack.c.l.bf16 %v3298
      %v3319 = vunpack.c.h.bf16 %v3298
      %v3320 = vunpack.c.l.bf16 %v3299
      %v3321 = vunpack.c.h.bf16 %v3299
      %v3322 = vunpack.c.l.bf16 %v3300
      %v3323 = vunpack.c.h.bf16 %v3300
      %v3324 = vunpack.c.l.bf16 %v3301
      %v3325 = vunpack.c.h.bf16 %v3301
      %v3326 = vunpack.c.l.bf16 %v3302
      %v3327 = vunpack.c.h.bf16 %v3302
      %v3328 = vunpack.c.l.bf16 %v3303
      %v3329 = vunpack.c.h.bf16 %v3303
      %v3330 = vunpack.c.l.bf16 %v3304
      %v3331 = vunpack.c.h.bf16 %v3304
      %v3332 = vunpack.c.l.bf16 %v3305
      %v3333 = vunpack.c.h.bf16 %v3305
      %v3334 = vunpack.c.l.bf16 %v3306
      %v3335 = vunpack.c.h.bf16 %v3306
      %v3336 = vunpack.c.l.bf16 %v3307
      %v3337 = vunpack.c.h.bf16 %v3307
      %v3338 = vunpack.c.l.bf16 %v3308
      %v3339 = vunpack.c.h.bf16 %v3308
      %v3340 = vunpack.c.l.bf16 %v3309
      %v3341 = vunpack.c.h.bf16 %v3309
      %v3342 = vmul.f32 %v3262, %v3310
      %v3343 = vmul.f32 %v3263, %v3311
      %v3344 = vmul.f32 %v3264, %v3312
      %v3345 = vmul.f32 %v3265, %v3313
      %v3346 = vmul.f32 %v3266, %v3314
      %v3347 = vmul.f32 %v3267, %v3315
      %v3348 = vmul.f32 %v3268, %v3316
      %v3349 = vmul.f32 %v3269, %v3317
      %v3350 = vmul.f32 %v3270, %v3318
      %v3351 = vmul.f32 %v3271, %v3319
      %v3352 = vmul.f32 %v3272, %v3320
      %v3353 = vmul.f32 %v3273, %v3321
      %v3354 = vmul.f32 %v3274, %v3322
      %v3355 = vmul.f32 %v3275, %v3323
      %v3356 = vmul.f32 %v3276, %v3324
      %v3357 = vmul.f32 %v3277, %v3325
      %v3358 = vmul.f32 %v3278, %v3326
      %v3359 = vmul.f32 %v3279, %v3327
      %v3360 = vmul.f32 %v3280, %v3328
      %v3361 = vmul.f32 %v3281, %v3329
      %v3362 = vmul.f32 %v3282, %v3330
      %v3363 = vmul.f32 %v3283, %v3331
      %v3364 = vmul.f32 %v3284, %v3332
      %v3365 = vmul.f32 %v3285, %v3333
      %v3366 = vmul.f32 %v3286, %v3334
      %v3367 = vmul.f32 %v3287, %v3335
      %v3368 = vmul.f32 %v3288, %v3336
      %v3369 = vmul.f32 %v3289, %v3337
      %v3370 = vmul.f32 %v3290, %v3338
      %v3371 = vmul.f32 %v3291, %v3339
      %v3372 = vmul.f32 %v3292, %v3340
      %v3373 = vmul.f32 %v3293, %v3341
      %v3374 = vld [vmem:[%s4] sm:$0xff]
      %v3375 = vld [vmem:[%s4 + $0x8] sm:$0xff]
      %v3376 = vld [vmem:[%s4 + $0x10] sm:$0xff]
      %v3377 = vld [vmem:[%s4 + $0x18] sm:$0xff]
      %v3378 = vld [vmem:[%s4 + $0x20] sm:$0xff]
      %v3379 = vld [vmem:[%s4 + $0x28] sm:$0xff]
      %v3380 = vld [vmem:[%s4 + $0x30] sm:$0xff]
      %v3381 = vld [vmem:[%s4 + $0x38] sm:$0xff]
      %v3382 = vld [vmem:[%s4 + $0x40] sm:$0xff]
      %v3383 = vld [vmem:[%s4 + $0x48] sm:$0xff]
      %v3384 = vld [vmem:[%s4 + $0x50] sm:$0xff]
      %v3385 = vld [vmem:[%s4 + $0x58] sm:$0xff]
      %v3386 = vld [vmem:[%s4 + $0x60] sm:$0xff]
      %v3387 = vld [vmem:[%s4 + $0x68] sm:$0xff]
      %v3388 = vld [vmem:[%s4 + $0x70] sm:$0xff]
      %v3389 = vld [vmem:[%s4 + $0x78] sm:$0xff]
      %v3390 = vunpack.c.l.bf16 %v3374
      %v3391 = vunpack.c.h.bf16 %v3374
      %v3392 = vunpack.c.l.bf16 %v3375
      %v3393 = vunpack.c.h.bf16 %v3375
      %v3394 = vunpack.c.l.bf16 %v3376
      %v3395 = vunpack.c.h.bf16 %v3376
      %v3396 = vunpack.c.l.bf16 %v3377
      %v3397 = vunpack.c.h.bf16 %v3377
      %v3398 = vunpack.c.l.bf16 %v3378
      %v3399 = vunpack.c.h.bf16 %v3378
      %v3400 = vunpack.c.l.bf16 %v3379
      %v3401 = vunpack.c.h.bf16 %v3379
      %v3402 = vunpack.c.l.bf16 %v3380
      %v3403 = vunpack.c.h.bf16 %v3380
      %v3404 = vunpack.c.l.bf16 %v3381
      %v3405 = vunpack.c.h.bf16 %v3381
      %v3406 = vunpack.c.l.bf16 %v3382
      %v3407 = vunpack.c.h.bf16 %v3382
      %v3408 = vunpack.c.l.bf16 %v3383
      %v3409 = vunpack.c.h.bf16 %v3383
      %v3410 = vunpack.c.l.bf16 %v3384
      %v3411 = vunpack.c.h.bf16 %v3384
      %v3412 = vunpack.c.l.bf16 %v3385
      %v3413 = vunpack.c.h.bf16 %v3385
      %v3414 = vunpack.c.l.bf16 %v3386
      %v3415 = vunpack.c.h.bf16 %v3386
      %v3416 = vunpack.c.l.bf16 %v3387
      %v3417 = vunpack.c.h.bf16 %v3387
      %v3418 = vunpack.c.l.bf16 %v3388
      %v3419 = vunpack.c.h.bf16 %v3388
      %v3420 = vunpack.c.l.bf16 %v3389
      %v3421 = vunpack.c.h.bf16 %v3389
      %v3422 = vadd.f32 %v3342, %v3390
      %v3423 = vadd.f32 %v3343, %v3391
      %v3424 = vadd.f32 %v3344, %v3392
      %v3425 = vadd.f32 %v3345, %v3393
      %v3426 = vadd.f32 %v3346, %v3394
      %v3427 = vadd.f32 %v3347, %v3395
      %v3428 = vadd.f32 %v3348, %v3396
      %v3429 = vadd.f32 %v3349, %v3397
      %v3430 = vadd.f32 %v3350, %v3398
      %v3431 = vadd.f32 %v3351, %v3399
      %v3432 = vadd.f32 %v3352, %v3400
      %v3433 = vadd.f32 %v3353, %v3401
      %v3434 = vadd.f32 %v3354, %v3402
      %v3435 = vadd.f32 %v3355, %v3403
      %v3436 = vadd.f32 %v3356, %v3404
      %v3437 = vadd.f32 %v3357, %v3405
      %v3438 = vadd.f32 %v3358, %v3406
      %v3439 = vadd.f32 %v3359, %v3407
      %v3440 = vadd.f32 %v3360, %v3408
      %v3441 = vadd.f32 %v3361, %v3409
      %v3442 = vadd.f32 %v3362, %v3410
      %v3443 = vadd.f32 %v3363, %v3411
      %v3444 = vadd.f32 %v3364, %v3412
      %v3445 = vadd.f32 %v3365, %v3413
      %v3446 = vadd.f32 %v3366, %v3414
      %v3447 = vadd.f32 %v3367, %v3415
      %v3448 = vadd.f32 %v3368, %v3416
      %v3449 = vadd.f32 %v3369, %v3417
      %v3450 = vadd.f32 %v3370, %v3418
      %v3451 = vadd.f32 %v3371, %v3419
      %v3452 = vadd.f32 %v3372, %v3420
      %v3453 = vadd.f32 %v3373, %v3421
      %v3454 = vxor.u32 %v3422, 2147483648
      %v3455 = vxor.u32 %v3423, 2147483648
      %v3456 = vxor.u32 %v3424, 2147483648
      %v3457 = vxor.u32 %v3425, 2147483648
      %v3458 = vxor.u32 %v3426, 2147483648
      %v3459 = vxor.u32 %v3427, 2147483648
      %v3460 = vxor.u32 %v3428, 2147483648
      %v3461 = vxor.u32 %v3429, 2147483648
      %v3462 = vmul.f32 %v3454, 1.442695
      %v3463 = vpow.pop %v3462
      %v3464 = vmul.f32 %v3455, 1.442695
      %v3465 = vpow.pop %v3464
      %v3466 = vmul.f32 %v3456, 1.442695
      %v3467 = vpow.pop %v3466
      %v3468 = vmul.f32 %v3457, 1.442695
      %v3469 = vpow.pop %v3468
      %v3470 = vmul.f32 %v3458, 1.442695
      %v3471 = vpow.pop %v3470
      %v3472 = vmul.f32 %v3459, 1.442695
      %v3473 = vpow.pop %v3472
      %v3474 = vmul.f32 %v3460, 1.442695
      %v3475 = vpow.pop %v3474
      %v3476 = vmul.f32 %v3461, 1.442695
      %v3477 = vpow.pop %v3476
      %v3478 = vadd.f32 %v3463, 1.0
      %v3479 = vadd.f32 %v3465, 1.0
      %v3480 = vadd.f32 %v3467, 1.0
      %v3481 = vadd.f32 %v3469, 1.0
      %v3482 = vadd.f32 %v3471, 1.0
      %v3483 = vadd.f32 %v3473, 1.0
      %v3484 = vadd.f32 %v3475, 1.0
      %v3485 = vadd.f32 %v3477, 1.0
      %v3486 = vrcp.pop %v3478
      %v3487 = vmul.f32 1.0, %v3486
      %v3488 = vrcp.pop %v3479
      %v3489 = vmul.f32 1.0, %v3488
      %v3490 = vrcp.pop %v3480
      %v3491 = vmul.f32 1.0, %v3490
      %v3492 = vrcp.pop %v3481
      %v3493 = vmul.f32 1.0, %v3492
      %v3494 = vrcp.pop %v3482
      %v3495 = vmul.f32 1.0, %v3494
      %v3496 = vrcp.pop %v3483
      %v3497 = vmul.f32 1.0, %v3496
      %v3498 = vrcp.pop %v3484
      %v3499 = vmul.f32 1.0, %v3498
      %v3500 = vrcp.pop %v3485
      %v3501 = vmul.f32 1.0, %v3500
      %v3502 = vxor.u32 %v3430, 2147483648
      %v3503 = vxor.u32 %v3431, 2147483648
      %v3504 = vxor.u32 %v3432, 2147483648
      %v3505 = vxor.u32 %v3433, 2147483648
      %v3506 = vxor.u32 %v3434, 2147483648
      %v3507 = vxor.u32 %v3435, 2147483648
      %v3508 = vxor.u32 %v3436, 2147483648
      %v3509 = vxor.u32 %v3437, 2147483648
      %v3510 = vmul.f32 %v3502, 1.442695
      %v3511 = vpow.pop %v3510
      %v3512 = vmul.f32 %v3503, 1.442695
      %v3513 = vpow.pop %v3512
      %v3514 = vmul.f32 %v3504, 1.442695
      %v3515 = vpow.pop %v3514
      %v3516 = vmul.f32 %v3505, 1.442695
      %v3517 = vpow.pop %v3516
      %v3518 = vmul.f32 %v3506, 1.442695
      %v3519 = vpow.pop %v3518
      %v3520 = vmul.f32 %v3507, 1.442695
      %v3521 = vpow.pop %v3520
      %v3522 = vmul.f32 %v3508, 1.442695
      %v3523 = vpow.pop %v3522
      %v3524 = vmul.f32 %v3509, 1.442695
      %v3525 = vpow.pop %v3524
      %v3526 = vadd.f32 %v3511, 1.0
      %v3527 = vadd.f32 %v3513, 1.0
      %v3528 = vadd.f32 %v3515, 1.0
      %v3529 = vadd.f32 %v3517, 1.0
      %v3530 = vadd.f32 %v3519, 1.0
      %v3531 = vadd.f32 %v3521, 1.0
      %v3532 = vadd.f32 %v3523, 1.0
      %v3533 = vadd.f32 %v3525, 1.0
      %v3534 = vrcp.pop %v3526
      %v3535 = vmul.f32 1.0, %v3534
      %v3536 = vrcp.pop %v3527
      %v3537 = vmul.f32 1.0, %v3536
      %v3538 = vrcp.pop %v3528
      %v3539 = vmul.f32 1.0, %v3538
      %v3540 = vrcp.pop %v3529
      %v3541 = vmul.f32 1.0, %v3540
      %v3542 = vrcp.pop %v3530
      %v3543 = vmul.f32 1.0, %v3542
      %v3544 = vrcp.pop %v3531
      %v3545 = vmul.f32 1.0, %v3544
      %v3546 = vrcp.pop %v3532
      %v3547 = vmul.f32 1.0, %v3546
      %v3548 = vrcp.pop %v3533
      %v3549 = vmul.f32 1.0, %v3548
      %v3550 = vxor.u32 %v3438, 2147483648
      %v3551 = vxor.u32 %v3439, 2147483648
      %v3552 = vxor.u32 %v3440, 2147483648
      %v3553 = vxor.u32 %v3441, 2147483648
      %v3554 = vxor.u32 %v3442, 2147483648
      %v3555 = vxor.u32 %v3443, 2147483648
      %v3556 = vxor.u32 %v3444, 2147483648
      %v3557 = vxor.u32 %v3445, 2147483648
      %v3558 = vmul.f32 %v3550, 1.442695
      %v3559 = vpow.pop %v3558
      %v3560 = vmul.f32 %v3551, 1.442695
      %v3561 = vpow.pop %v3560
      %v3562 = vmul.f32 %v3552, 1.442695
      %v3563 = vpow.pop %v3562
      %v3564 = vmul.f32 %v3553, 1.442695
      %v3565 = vpow.pop %v3564
      %v3566 = vmul.f32 %v3554, 1.442695
      %v3567 = vpow.pop %v3566
      %v3568 = vmul.f32 %v3555, 1.442695
      %v3569 = vpow.pop %v3568
      %v3570 = vmul.f32 %v3556, 1.442695
      %v3571 = vpow.pop %v3570
      %v3572 = vmul.f32 %v3557, 1.442695
      %v3573 = vpow.pop %v3572
      %v3574 = vadd.f32 %v3559, 1.0
      %v3575 = vadd.f32 %v3561, 1.0
      %v3576 = vadd.f32 %v3563, 1.0
      %v3577 = vadd.f32 %v3565, 1.0
      %v3578 = vadd.f32 %v3567, 1.0
      %v3579 = vadd.f32 %v3569, 1.0
      %v3580 = vadd.f32 %v3571, 1.0
      %v3581 = vadd.f32 %v3573, 1.0
      %v3582 = vrcp.pop %v3574
      %v3583 = vmul.f32 1.0, %v3582
      %v3584 = vrcp.pop %v3575
      %v3585 = vmul.f32 1.0, %v3584
      %v3586 = vrcp.pop %v3576
      %v3587 = vmul.f32 1.0, %v3586
      %v3588 = vrcp.pop %v3577
      %v3589 = vmul.f32 1.0, %v3588
      %v3590 = vrcp.pop %v3578
      %v3591 = vmul.f32 1.0, %v3590
      %v3592 = vrcp.pop %v3579
      %v3593 = vmul.f32 1.0, %v3592
      %v3594 = vrcp.pop %v3580
      %v3595 = vmul.f32 1.0, %v3594
      %v3596 = vrcp.pop %v3581
      %v3597 = vmul.f32 1.0, %v3596
      %v3598 = vtanh.pop %v3446
      %v3599 = vtanh.pop %v3447
      %v3600 = vtanh.pop %v3448
      %v3601 = vtanh.pop %v3449
      %v3602 = vtanh.pop %v3450
      %v3603 = vtanh.pop %v3451
      %v3604 = vtanh.pop %v3452
      %v3605 = vtanh.pop %v3453
      %v3606 = vld [vmem:[#allocation4] sm:$0xff]
      %v3607 = vld [vmem:[#allocation4 + $0x8] sm:$0xff]
      %v3608 = vld [vmem:[#allocation4 + $0x10] sm:$0xff]
      %v3609 = vld [vmem:[#allocation4 + $0x18] sm:$0xff]
      %v3610 = vld [vmem:[#allocation4 + $0x20] sm:$0xff]
      %v3611 = vld [vmem:[#allocation4 + $0x28] sm:$0xff]
      %v3612 = vld [vmem:[#allocation4 + $0x30] sm:$0xff]
      %v3613 = vld [vmem:[#allocation4 + $0x38] sm:$0xff]
      %v3614 = vmul.f32 %v3535, %v3606
      %v3615 = vmul.f32 %v3537, %v3607
      %v3616 = vmul.f32 %v3539, %v3608
      %v3617 = vmul.f32 %v3541, %v3609
      %v3618 = vmul.f32 %v3543, %v3610
      %v3619 = vmul.f32 %v3545, %v3611
      %v3620 = vmul.f32 %v3547, %v3612
      %v3621 = vmul.f32 %v3549, %v3613
      %v3622 = vmul.f32 %v3487, %v3598
      %v3623 = vmul.f32 %v3489, %v3599
      %v3624 = vmul.f32 %v3491, %v3600
      %v3625 = vmul.f32 %v3493, %v3601
      %v3626 = vmul.f32 %v3495, %v3602
      %v3627 = vmul.f32 %v3497, %v3603
      %v3628 = vmul.f32 %v3499, %v3604
      %v3629 = vmul.f32 %v3501, %v3605
      %v3630 = vadd.f32 %v3614, %v3622
      %v3631 = vadd.f32 %v3615, %v3623
      %v3632 = vadd.f32 %v3616, %v3624
      %v3633 = vadd.f32 %v3617, %v3625
      %v3634 = vadd.f32 %v3618, %v3626
      %v3635 = vadd.f32 %v3619, %v3627
      %v3636 = vadd.f32 %v3620, %v3628
      %v3637 = vadd.f32 %v3621, %v3629
      %v3638 = vtanh.pop %v3630
      %v3639 = vtanh.pop %v3631
      %v3640 = vtanh.pop %v3632
      %v3641 = vtanh.pop %v3633
      %v3642 = vtanh.pop %v3634
      %v3643 = vtanh.pop %v3635
      %v3644 = vtanh.pop %v3636
      %v3645 = vtanh.pop %v3637
      %v3646 = vmul.f32 %v3583, %v3638
      %v3647 = vmul.f32 %v3585, %v3639
      %v3648 = vmul.f32 %v3587, %v3640
      %v3649 = vmul.f32 %v3589, %v3641
      %v3650 = vmul.f32 %v3591, %v3642
      %v3651 = vmul.f32 %v3593, %v3643
      %v3652 = vmul.f32 %v3595, %v3644
      %v3653 = vmul.f32 %v3597, %v3645
      %v3654 = vadd.f32 %v3646, %v340
      %v3655 = vadd.f32 %v3647, %v341
      %v3656 = vadd.f32 %v3648, %v342
      %v3657 = vadd.f32 %v3649, %v343
      %v3658 = vadd.f32 %v3650, %v344
      %v3659 = vadd.f32 %v3651, %v345
      %v3660 = vadd.f32 %v3652, %v346
      %v3661 = vadd.f32 %v3653, %v347
      %3662 = vst [vmem:[#allocation3] sm:$0xff] %v3654
      %3663 = vst [vmem:[#allocation3 + $0x8] sm:$0xff] %v3655
      %3664 = vst [vmem:[#allocation3 + $0x10] sm:$0xff] %v3656
      %3665 = vst [vmem:[#allocation3 + $0x18] sm:$0xff] %v3657
      %3666 = vst [vmem:[#allocation3 + $0x20] sm:$0xff] %v3658
      %3667 = vst [vmem:[#allocation3 + $0x28] sm:$0xff] %v3659
      %3668 = vst [vmem:[#allocation3 + $0x30] sm:$0xff] %v3660
      %3669 = vst [vmem:[#allocation3 + $0x38] sm:$0xff] %v3661
      %3670 = vst [vmem:[#allocation4] sm:$0xff] %v3630
      %3671 = vst [vmem:[#allocation4 + $0x8] sm:$0xff] %v3631
      %3672 = vst [vmem:[#allocation4 + $0x10] sm:$0xff] %v3632
      %3673 = vst [vmem:[#allocation4 + $0x18] sm:$0xff] %v3633
      %3674 = vst [vmem:[#allocation4 + $0x20] sm:$0xff] %v3634
      %3675 = vst [vmem:[#allocation4 + $0x28] sm:$0xff] %v3635
      %3676 = vst [vmem:[#allocation4 + $0x30] sm:$0xff] %v3636
      %3677 = vst [vmem:[#allocation4 + $0x38] sm:$0xff] %v3637
      %3678 = vst [vmem:[%s295] sm:$0xff] %v3654
      %3679 = vst [vmem:[%s295 + $0x8] sm:$0xff] %v3655
      %3680 = vst [vmem:[%s295 + $0x10] sm:$0xff] %v3656
      %3681 = vst [vmem:[%s295 + $0x18] sm:$0xff] %v3657
      %3682 = vst [vmem:[%s295 + $0x20] sm:$0xff] %v3658
      %3683 = vst [vmem:[%s295 + $0x28] sm:$0xff] %v3659
      %3684 = vst [vmem:[%s295 + $0x30] sm:$0xff] %v3660
      %3685 = vst [vmem:[%s295 + $0x38] sm:$0xff] %v3661
      %3686 = vst [vmem:[%s300] sm:$0xff] %v3630
      %3687 = vst [vmem:[%s300 + $0x8] sm:$0xff] %v3631
      %3688 = vst [vmem:[%s300 + $0x10] sm:$0xff] %v3632
      %3689 = vst [vmem:[%s300 + $0x18] sm:$0xff] %v3633
      %3690 = vst [vmem:[%s300 + $0x20] sm:$0xff] %v3634
      %3691 = vst [vmem:[%s300 + $0x28] sm:$0xff] %v3635
      %3692 = vst [vmem:[%s300 + $0x30] sm:$0xff] %v3636
      %3693 = vst [vmem:[%s300 + $0x38] sm:$0xff] %v3637
      %p3694 = scmp.lt.s32.totalorder %s22, 1
      %s3695 = scalar_select %p3694, %s22, 1
      %p3696 = scmp.lt.s32.totalorder %s23, 3
      %s3697 = scalar_select %p3696, %s23, 3
      %s3698 = smul.addr %s3697, 8
      %s3699 = smul.addr %s3695, 32
      %s3700 = sadd.s32 %s3698, %s3699
      %s3701 = smul.addr %s3700, 8
      %s3702 = scalar_lea.vmem %s5, %s3701
      %p3703 = scmp.lt.s32.totalorder %s22, 1
      %s3704 = scalar_select %p3703, %s22, 1
      %s3705 = smul.addr %s3704, 8
      %s3706 = smul.addr %s3705, 8
      %s3707 = scalar_lea.vmem %s6, %s3706
      // Predicated region
      $region45: #{convlstm_forward.3} parent=39 // pred_check
        %p3708 = pneg %p162
      $region46: #{convlstm_forward.3} parent=39 // pred_check_branch
        %3710 = sbr.rel (%p3708) target = $region48
      $region47: #{convlstm_forward.3} parent=39 // pred_region
        _
      $region48: #{convlstm_forward.3} parent=39 // pred_fallthru
        _
      // Predicated region
      $region49: #{convlstm_forward.3} parent=39 // pred_check
        %p3711 = pneg %p188
      $region50: #{convlstm_forward.3} parent=39 // pred_check_branch
        %3713 = sbr.rel (%p3711) target = $region52
      $region51: #{convlstm_forward.3} parent=39 // pred_region
        _
      $region52: #{convlstm_forward.3} parent=39 // pred_fallthru
        _
    $region40: #{convlstm_forward.3} parent=5 // pred_fallthru
      _
    %p3714 = scmp.le.s32.totalorder 2, %s13
    // Predicated region
    $region53: #{convlstm_forward.3} parent=5 // pred_check
      %p3715 = pneg %p3714
    $region54: #{convlstm_forward.3} parent=5 // pred_check_branch
      %3717 = sbr.rel (%p3715) target = $region56
    $region55: #{convlstm_forward.3} parent=5 // pred_region
      %s3718 = ssub.s32 %s13, 2
      // Predicated region
      $region57: #{convlstm_forward.3} parent=55 // pred_check
        %p3719 = pneg %p168
      $region58: #{convlstm_forward.3} parent=55 // pred_check_branch
        %3721 = sbr.rel (%p3719) target = $region60
      $region59: #{convlstm_forward.3} parent=55 // pred_region
        %p3722 = scmp.lt.s32.totalorder %s24, 1
        %s3723 = scalar_select %p3722, %s24, 1
        %p3724 = scmp.lt.s32.totalorder %s25, 3
        %s3725 = scalar_select %p3724, %s25, 3
        %s3726 = smul.addr %s3725, 8
        %s3727 = smul.addr %s3723, 32
        %s3728 = sadd.s32 %s3726, %s3727
        %s3729 = smul.addr %s3728, 8
        %s3730 = scalar_lea.vmem %s5, %s3729
      $region60: #{convlstm_forward.3} parent=55 // pred_fallthru
        _
      // Predicated region
      $region61: #{convlstm_forward.3} parent=55 // pred_check
        %p3731 = pneg %p194
      $region62: #{convlstm_forward.3} parent=55 // pred_check_branch
        %3733 = sbr.rel (%p3731) target = $region64
      $region63: #{convlstm_forward.3} parent=55 // pred_region
        %p3734 = scmp.lt.s32.totalorder %s24, 1
        %s3735 = scalar_select %p3734, %s24, 1
        %s3736 = smul.addr %s3735, 8
        %s3737 = smul.addr %s3736, 8
        %s3738 = scalar_lea.vmem %s6, %s3737
      $region64: #{convlstm_forward.3} parent=55 // pred_fallthru
        _
    $region56: #{convlstm_forward.3} parent=5 // pred_fallthru
      _
  $region6: #{convlstm_forward.3} parent=0 // loop_footer
    %s17 = sadd.s32 1, %s13
  $region7: #{convlstm_forward.3} parent=0 // loop_footer_branch
    %12 = sbr.rel target = $region3
  $region8: #{convlstm_forward.3} parent=0 // loop_exit
    _

</llo_original>
